<compile_context>
chip_gen: v7x
topology: tpu7x:2x2x1
jax: 0.10.0
libtpu: 0.0.40
codegen_flags: <defaults>
</compile_context>

<pallas_src>
import functools

import jax
import jax.numpy as jnp
from jax.experimental import pallas as pl
from jax.experimental.pallas import tpu as pltpu

NEG_SLOPE = 0.01   # LeakyReLU slope in Conv2dK3P1Act
N_BLOCKS = 3       # Residual blocks inside ResidualInResidual
N_SLOTS = 5        # concat slots per block: [x, f1, f2, f3, f4]


def _round_up(v, m):
    return (v + m - 1) // m * m


# ----------------------------------------------------------------------------
# Fused RRDB kernel: one batch element per grid step, everything in VMEM.
# ----------------------------------------------------------------------------
def _rrdb_kernel(x_ref, mask_ref, w_ref, b_ref, o_ref, r_ref, *,
                 C, SLOT, PFL, WP, scale):
    # x_ref   : (1, C, PFL)  f32   zero-padded input, flattened padded spatial
    # mask_ref: (1, PFL)     f32   interior mask (precomputed on host)
    # w_ref   : (n_convs, C, K) bf16  slot-major packed im2col weights
    # b_ref   : (n_convs, C, 1) f32   biases (conv_final pre-scaled by `scale`)
    # o_ref   : (1, C, PFL)  f32
    # r_ref   : (K, PFL)           rolled-im2col scratch (bf16 when C%16==0)
    mask = mask_ref[...]                               # grid-invariant, hoisted

    # Pad rows (C..SLOT within each slot/tap group) only exist when C % 8 != 0
    # (never at production C=64).  They are covered by zero weight columns, but
    # uninitialized VMEM could hold NaN (0*NaN=NaN), so zero them.  Per-step
    # (not program_id==0) so every TensorCore of a sharded grid is safe.
    if SLOT > C:
        r_ref[...] = jnp.zeros_like(r_ref)

    # Flat-index offsets of the 9 taps.  For interior pixels p, p + off never
    # wraps around the PFL-wide buffer, so a rotate gives the exact shift.
    offs = [(kh - 1) * WP + (kw - 1) for kh in range(3) for kw in range(3)]

    def append(val, slot):
        # val: (C, PFL) f32, already zero outside the image interior.
        val = val.astype(r_ref.dtype)
        for tap, off in enumerate(offs):
            shift = (-off) % PFL                       # jnp.roll semantics
            rolled = pltpu.roll(val, shift, axis=1) if shift else val
            r0 = (slot * 9 + tap) * SLOT               # slot-major rows
            r_ref[r0:r0 + C, :] = rolled

    x0 = x_ref[0].astype(jnp.float32)                  # (C, PFL)
    y = x0
    k_idx = 0
    for _blk in range(N_BLOCKS):
        append(y, 0)                                   # slot 0 = block input
        for j in range(N_SLOTS):
            kj = (j + 1) * 9 * SLOT                    # static valid prefix
            rhs = r_ref[:kj, :]
            if r_ref.dtype != jnp.bfloat16:
                rhs = rhs.astype(jnp.bfloat16)         # MXU-native operands
            acc = jnp.dot(w_ref[k_idx, :, :kj], rhs,
                          preferred_element_type=jnp.float32)   # (C, PFL) f32
            acc = acc + b_ref[k_idx]                   # (C, 1) lane-broadcast
            if j < N_SLOTS - 1:
                acc = jnp.maximum(acc, NEG_SLOPE * acc)          # LeakyReLU
                acc = acc * mask                       # keep padding at zero
                append(acc, j + 1)                     # f_{j+1} joins concat
            else:
                y = acc * mask + y    # residual; `scale` folded into w/b
            k_idx += 1
    o_ref[0] = (y * scale + x0).astype(o_ref.dtype)    # outer residual


# ----------------------------------------------------------------------------
# Weight packing: (3,3,Cin,C) HWIO -> (C, K) slab matching the slot-major
# rolled-im2col row layout.  conv_final's weights/bias absorb the residual
# scale so the kernel epilogue saves one full-tile multiply per block.
# ----------------------------------------------------------------------------
def _pack_params(params, C, SLOT, K, scale, w_dtype):
    ws, bs = [], []
    for block in params:
        for j, (w, b) in enumerate(block):      # w: (3, 3, cin, C), b: (C,)
            cin = w.shape[2]
            wk = jnp.zeros((C, K), jnp.float32)
            for kh in range(3):
                for kw in range(3):
                    tap = kh * 3 + kw
                    for slot in range(cin // C):
                        col0 = (slot * 9 + tap) * SLOT
                        chunk = w[kh, kw, slot * C:(slot + 1) * C, :]  # (C, C)
                        wk = wk.at[:, col0:col0 + C].set(jnp.transpose(chunk))
            bb = b
            if j == N_SLOTS - 1:                # conv_final: fold residual scale
                wk = wk * scale
                bb = b * scale
            ws.append(wk)
            bs.append(bb.reshape(C, 1))
    return (jnp.stack(ws).astype(w_dtype),
            jnp.stack(bs).astype(jnp.float32))


# ----------------------------------------------------------------------------
# Wrapper: layout prep (one pad + flatten), mask precompute, pallas_call.
# ----------------------------------------------------------------------------
def residual_in_residual_forward(x_nchw, params, scale):
    """ResidualInResidual forward.  x_nchw: (N, C, H, W) float32 (NCHW)."""
    N, C, H, W = x_nchw.shape
    HP, WP = H + 2, W + 2
    PF = HP * WP                       # flattened padded spatial size
    PFL = _round_up(PF, 128)           # lane-dense (multiple of 128)
    SLOT = _round_up(C, 8)             # row stride per (slot, tap) group
    K = 9 * N_SLOTS * SLOT
    n_convs = N_BLOCKS * N_SLOTS
    # bf16 scratch only when packed-bf16 stores stay tile-aligned (C % 16 == 0,
    # always true at production C=64); otherwise keep f32 storage and cast to
    # bf16 only at the matmul boundary.
    r_dtype = jnp.bfloat16 if C % 16 == 0 else jnp.float32

    # One-time zero-pad + flatten of the input (the only HBM-side prep op).
    xp = jnp.pad(x_nchw, ((0, 0), (0, 0), (1, 1), (1, 1))).reshape(N, C, PF)
    xp = jnp.pad(xp, ((0, 0), (0, 0), (0, PFL - PF)))

    # Grid-invariant interior mask, computed once on the host side.
    pos = jnp.arange(PFL, dtype=jnp.int32)
    hh, ww = pos // WP, pos % WP
    mask = (((hh >= 1) & (hh <= H) & (ww >= 1) & (ww <= W))
            .astype(jnp.float32).reshape(1, PFL))

    w_packed, b_packed = _pack_params(params, C, SLOT, K, float(scale),
                                      jnp.bfloat16)

    kernel = functools.partial(_rrdb_kernel, C=C, SLOT=SLOT, PFL=PFL, WP=WP,
                               scale=float(scale))

    out_flat = pl.pallas_call(
        kernel,
        out_shape=jax.ShapeDtypeStruct((N, C, PFL), x_nchw.dtype),
        grid_spec=pltpu.PrefetchScalarGridSpec(
            num_scalar_prefetch=0,
            grid=(N,),
            in_specs=[
                pl.BlockSpec((1, C, PFL), lambda n: (n, 0, 0)),
                pl.BlockSpec((1, PFL), lambda n: (0, 0)),
                pl.BlockSpec((n_convs, C, K), lambda n: (0, 0, 0)),
                pl.BlockSpec((n_convs, C, 1), lambda n: (0, 0, 0)),
            ],
            out_specs=pl.BlockSpec((1, C, PFL), lambda n: (n, 0, 0)),
            scratch_shapes=[pltpu.VMEM((K, PFL), r_dtype)],
        ),
        compiler_params=pltpu.CompilerParams(
            dimension_semantics=("parallel",)),
    )(xp, mask, w_packed, b_packed)

    # Strip the zero padding / lane filler back to (N, C, H, W).
    return out_flat[:, :, :PF].reshape(N, C, HP, WP)[:, :, 1:-1, 1:-1]


# ----------------------------------------------------------------------------
# Deterministic synthetic parameters (same structure as the PyTorch module)
# ----------------------------------------------------------------------------
def _make_conv_params(key, cin, cout):
    kw_key, kb_key = jax.random.split(key)
    fan_in = cin * 9
    bound = 1.0 / jnp.sqrt(fan_in)
    w = jax.random.uniform(kw_key, (3, 3, cin, cout), jnp.float32,
                           minval=-bound, maxval=bound)
    b = jax.random.uniform(kb_key, (cout,), jnp.float32,
                           minval=-bound, maxval=bound)
    return w, b


def make_rrdb_params(key, in_channels):
    """3 Residual blocks; each has conv1..conv4 (+LeakyReLU) and conv_final."""
    params = []
    for _ in range(N_BLOCKS):
        block = []
        for j in range(N_SLOTS):
            key, sub = jax.random.split(key)
            block.append(_make_conv_params(sub, (j + 1) * in_channels,
                                           in_channels))
        params.append(block)
    return params


# ----------------------------------------------------------------------------
# Pure-JAX reference (for correctness check)
# ----------------------------------------------------------------------------
def _ref_conv3x3(x_nhwc, w, b, apply_act):
    y = jax.lax.conv_general_dilated(
        x_nhwc, w, window_strides=(1, 1), padding=((1, 1), (1, 1)),
        dimension_numbers=("NHWC", "HWIO", "NHWC"))
    y = y + b[None, None, None, :]
    if apply_act:
        y = jnp.where(y >= 0, y, NEG_SLOPE * y)
    return y


def _ref_forward(x_nchw, params, scale):
    x = jnp.transpose(x_nchw, (0, 2, 3, 1))
    y = x
    for block in params:
        (w1, b1), (w2, b2), (w3, b3), (w4, b4), (wf, bf) = block
        f1 = _ref_conv3x3(y, w1, b1, True)
        c1 = jnp.concatenate([y, f1], axis=-1)
        f2 = _ref_conv3x3(c1, w2, b2, True)
        c2 = jnp.concatenate([c1, f2], axis=-1)
        f3 = _ref_conv3x3(c2, w3, b3, True)
        c3 = jnp.concatenate([c2, f3], axis=-1)
        f4 = _ref_conv3x3(c3, w4, b4, True)
        c4 = jnp.concatenate([c3, f4], axis=-1)
        ff = _ref_conv3x3(c4, wf, bf, False)
        y = ff * scale + y
    y = y * scale + x
    return jnp.transpose(y, (0, 3, 1, 2))


# ----------------------------------------------------------------------------
if __name__ == "__main__":
    key = jax.random.PRNGKey(0)
    key_x, key_p = jax.random.split(key)

    N, C, H, W = 2, 4, 16, 16            # NCHW, matches the PyTorch module
    scale = 0.2                          # residual scale (register_buffer)

    x = jax.random.normal(key_x, (N, C, H, W), dtype=jnp.float32)
    params = make_rrdb_params(key_p, C)

    out = jax.block_until_ready(residual_in_residual_forward(x, params, scale))
    ref = jax.block_until_ready(_ref_forward(x, params, scale))

    assert out.shape == (N, C, H, W)
    # bf16 MXU operands through 15 chained convs -> relaxed tolerance vs f32 ref
    assert jnp.allclose(out, ref, atol=5e-2, rtol=5e-2), "mismatch vs reference"

    print("KERNEL_OK")
</pallas_src>

<mosaic_0001>
module attributes {stable_mosaic.version = 11 : i64} {
  func.func @_rrdb_kernel(%arg0: i32, %arg1: memref<1x4x384xf32, #tpu.memory_space<vmem>>, %arg2: memref<1x384xf32, #tpu.memory_space<vmem>>, %arg3: memref<15x4x360xbf16, #tpu.memory_space<vmem>>, %arg4: memref<15x4x1xf32, #tpu.memory_space<vmem>>, %arg5: memref<1x4x384xf32, #tpu.memory_space<vmem>>, %arg6: memref<360x384xf32, #tpu.memory_space<vmem>>) attributes {dimension_semantics = [#tpu.dimension_semantics<parallel>], iteration_bounds = array<i64: 2>, scalar_prefetch = 0 : i64, scratch_operands = 1 : i64, tpu.core_type = #tpu.core_type<tc>, window_params = [{transform_indices = @transform_0, window_bounds = array<i64: 1, 4, 384>}, {pipeline_mode = #tpu.pipeline_mode<synchronous>, transform_indices = @transform_1, window_bounds = array<i64: 1, 384>}, {pipeline_mode = #tpu.pipeline_mode<synchronous>, transform_indices = @transform_2, window_bounds = array<i64: 15, 4, 360>}, {pipeline_mode = #tpu.pipeline_mode<synchronous>, transform_indices = @transform_3, window_bounds = array<i64: 15, 4, 1>}, {transform_indices = @transform_4, window_bounds = array<i64: 1, 4, 384>}]} {
    %c0 = arith.constant 0 : index
    %c0_0 = arith.constant 0 : index
    %0 = vector.load %arg2[%c0, %c0_0] : memref<1x384xf32, #tpu.memory_space<vmem>>, vector<1x384xf32>
    %cst = arith.constant 0.000000e+00 : f32
    %1 = vector.broadcast %cst : f32 to vector<360x384xf32>
    %c0_1 = arith.constant 0 : index
    %c0_2 = arith.constant 0 : index
    %2 = vector.load %arg6[%c0_1, %c0_2] : memref<360x384xf32, #tpu.memory_space<vmem>>, vector<360x384xf32>
    tpu.vector_store %arg6[%c0_1, %c0_2], %1 {strides = array<i32>} : memref<360x384xf32, #tpu.memory_space<vmem>>, vector<360x384xf32>,
    %c0_3 = arith.constant 0 : index
    %c0_4 = arith.constant 0 : index
    %c0_5 = arith.constant 0 : index
    %3 = vector.load %arg1[%c0_3, %c0_4, %c0_5] : memref<1x4x384xf32, #tpu.memory_space<vmem>>, vector<1x4x384xf32>
    %4 = vector.shape_cast %3 : vector<1x4x384xf32> to vector<4x384xf32>
    %c19_i32 = arith.constant 19 : i32
    %5 = tpu.dynamic_rotate %4 by %c19_i32 dim 1 : vector<4x384xf32>, i32 -> vector<4x384xf32>
    %c0_6 = arith.constant 0 : index
    %c0_7 = arith.constant 0 : index
    %6 = vector.load %arg6[%c0_6, %c0_7] : memref<360x384xf32, #tpu.memory_space<vmem>>, vector<4x384xf32>
    tpu.vector_store %arg6[%c0_6, %c0_7], %5 {strides = array<i32>} : memref<360x384xf32, #tpu.memory_space<vmem>>, vector<4x384xf32>,
    %c18_i32 = arith.constant 18 : i32
    %7 = tpu.dynamic_rotate %4 by %c18_i32 dim 1 : vector<4x384xf32>, i32 -> vector<4x384xf32>
    %c8 = arith.constant 8 : index
    %c0_8 = arith.constant 0 : index
    %8 = vector.load %arg6[%c8, %c0_8] : memref<360x384xf32, #tpu.memory_space<vmem>>, vector<4x384xf32>
    tpu.vector_store %arg6[%c8, %c0_8], %7 {strides = array<i32>} : memref<360x384xf32, #tpu.memory_space<vmem>>, vector<4x384xf32>,
    %c17_i32 = arith.constant 17 : i32
    %9 = tpu.dynamic_rotate %4 by %c17_i32 dim 1 : vector<4x384xf32>, i32 -> vector<4x384xf32>
    %c16 = arith.constant 16 : index
    %c0_9 = arith.constant 0 : index
    %10 = vector.load %arg6[%c16, %c0_9] : memref<360x384xf32, #tpu.memory_space<vmem>>, vector<4x384xf32>
    tpu.vector_store %arg6[%c16, %c0_9], %9 {strides = array<i32>} : memref<360x384xf32, #tpu.memory_space<vmem>>, vector<4x384xf32>,
    %c1_i32 = arith.constant 1 : i32
    %11 = tpu.dynamic_rotate %4 by %c1_i32 dim 1 : vector<4x384xf32>, i32 -> vector<4x384xf32>
    %c24 = arith.constant 24 : index
    %c0_10 = arith.constant 0 : index
    %12 = vector.load %arg6[%c24, %c0_10] : memref<360x384xf32, #tpu.memory_space<vmem>>, vector<4x384xf32>
    tpu.vector_store %arg6[%c24, %c0_10], %11 {strides = array<i32>} : memref<360x384xf32, #tpu.memory_space<vmem>>, vector<4x384xf32>,
    %c32 = arith.constant 32 : index
    %c0_11 = arith.constant 0 : index
    %13 = vector.load %arg6[%c32, %c0_11] : memref<360x384xf32, #tpu.memory_space<vmem>>, vector<4x384xf32>
    tpu.vector_store %arg6[%c32, %c0_11], %4 {strides = array<i32>} : memref<360x384xf32, #tpu.memory_space<vmem>>, vector<4x384xf32>,
    %c383_i32 = arith.constant 383 : i32
    %14 = tpu.dynamic_rotate %4 by %c383_i32 dim 1 : vector<4x384xf32>, i32 -> vector<4x384xf32>
    %c40 = arith.constant 40 : index
    %c0_12 = arith.constant 0 : index
    %15 = vector.load %arg6[%c40, %c0_12] : memref<360x384xf32, #tpu.memory_space<vmem>>, vector<4x384xf32>
    tpu.vector_store %arg6[%c40, %c0_12], %14 {strides = array<i32>} : memref<360x384xf32, #tpu.memory_space<vmem>>, vector<4x384xf32>,
    %c367_i32 = arith.constant 367 : i32
    %16 = tpu.dynamic_rotate %4 by %c367_i32 dim 1 : vector<4x384xf32>, i32 -> vector<4x384xf32>
    %c48 = arith.constant 48 : index
    %c0_13 = arith.constant 0 : index
    %17 = vector.load %arg6[%c48, %c0_13] : memref<360x384xf32, #tpu.memory_space<vmem>>, vector<4x384xf32>
    tpu.vector_store %arg6[%c48, %c0_13], %16 {strides = array<i32>} : memref<360x384xf32, #tpu.memory_space<vmem>>, vector<4x384xf32>,
    %c366_i32 = arith.constant 366 : i32
    %18 = tpu.dynamic_rotate %4 by %c366_i32 dim 1 : vector<4x384xf32>, i32 -> vector<4x384xf32>
    %c56 = arith.constant 56 : index
    %c0_14 = arith.constant 0 : index
    %19 = vector.load %arg6[%c56, %c0_14] : memref<360x384xf32, #tpu.memory_space<vmem>>, vector<4x384xf32>
    tpu.vector_store %arg6[%c56, %c0_14], %18 {strides = array<i32>} : memref<360x384xf32, #tpu.memory_space<vmem>>, vector<4x384xf32>,
    %c365_i32 = arith.constant 365 : i32
    %20 = tpu.dynamic_rotate %4 by %c365_i32 dim 1 : vector<4x384xf32>, i32 -> vector<4x384xf32>
    %c64 = arith.constant 64 : index
    %c0_15 = arith.constant 0 : index
    %21 = vector.load %arg6[%c64, %c0_15] : memref<360x384xf32, #tpu.memory_space<vmem>>, vector<4x384xf32>
    tpu.vector_store %arg6[%c64, %c0_15], %20 {strides = array<i32>} : memref<360x384xf32, #tpu.memory_space<vmem>>, vector<4x384xf32>,
    %c0_16 = arith.constant 0 : index
    %c0_17 = arith.constant 0 : index
    %22 = vector.load %arg6[%c0_16, %c0_17] : memref<360x384xf32, #tpu.memory_space<vmem>>, vector<72x384xf32>
    %23 = arith.truncf %22 : vector<72x384xf32> to vector<72x384xbf16>
    %c0_18 = arith.constant 0 : index
    %c0_19 = arith.constant 0 : index
    %c0_20 = arith.constant 0 : index
    %24 = vector.load %arg3[%c0_18, %c0_19, %c0_20] : memref<15x4x360xbf16, #tpu.memory_space<vmem>>, vector<1x4x72xbf16>
    %25 = vector.shape_cast %24 : vector<1x4x72xbf16> to vector<4x72xbf16>
    %cst_21 = arith.constant dense<0.000000e+00> : vector<4x384xf32>
    %26 = tpu.matmul %25, %23, %cst_21 {dimension_numbers = #tpu.dot_dimension_numbers<[1], [0], [0], [1], [0, 0, 1, 1], [], []>} : vector<4x72xbf16>, vector<72x384xbf16>, vector<4x384xf32> -> vector<4x384xf32>
    %c0_22 = arith.constant 0 : index
    %c0_23 = arith.constant 0 : index
    %c0_24 = arith.constant 0 : index
    %27 = vector.load %arg4[%c0_22, %c0_23, %c0_24] : memref<15x4x1xf32, #tpu.memory_space<vmem>>, vector<1x4x1xf32>
    %28 = vector.shape_cast %27 : vector<1x4x1xf32> to vector<4x1xf32>
    %29 = vector.broadcast %28 : vector<4x1xf32> to vector<4x384xf32>
    %30 = arith.addf %26, %29 : vector<4x384xf32>
    %cst_25 = arith.constant 0.00999999977 : f32
    %31 = vector.broadcast %cst_25 : f32 to vector<4x384xf32>
    %32 = arith.mulf %31, %30 : vector<4x384xf32>
    %33 = arith.maximumf %30, %32 : vector<4x384xf32>
    %34 = vector.broadcast %0 : vector<1x384xf32> to vector<4x384xf32>
    %35 = arith.mulf %33, %34 : vector<4x384xf32>
    %c19_i32_26 = arith.constant 19 : i32
    %36 = tpu.dynamic_rotate %35 by %c19_i32_26 dim 1 : vector<4x384xf32>, i32 -> vector<4x384xf32>
    %c72 = arith.constant 72 : index
    %c0_27 = arith.constant 0 : index
    %37 = vector.load %arg6[%c72, %c0_27] : memref<360x384xf32, #tpu.memory_space<vmem>>, vector<4x384xf32>
    tpu.vector_store %arg6[%c72, %c0_27], %36 {strides = array<i32>} : memref<360x384xf32, #tpu.memory_space<vmem>>, vector<4x384xf32>,
    %c18_i32_28 = arith.constant 18 : i32
    %38 = tpu.dynamic_rotate %35 by %c18_i32_28 dim 1 : vector<4x384xf32>, i32 -> vector<4x384xf32>
    %c80 = arith.constant 80 : index
    %c0_29 = arith.constant 0 : index
    %39 = vector.load %arg6[%c80, %c0_29] : memref<360x384xf32, #tpu.memory_space<vmem>>, vector<4x384xf32>
    tpu.vector_store %arg6[%c80, %c0_29], %38 {strides = array<i32>} : memref<360x384xf32, #tpu.memory_space<vmem>>, vector<4x384xf32>,
    %c17_i32_30 = arith.constant 17 : i32
    %40 = tpu.dynamic_rotate %35 by %c17_i32_30 dim 1 : vector<4x384xf32>, i32 -> vector<4x384xf32>
    %c88 = arith.constant 88 : index
    %c0_31 = arith.constant 0 : index
    %41 = vector.load %arg6[%c88, %c0_31] : memref<360x384xf32, #tpu.memory_space<vmem>>, vector<4x384xf32>
    tpu.vector_store %arg6[%c88, %c0_31], %40 {strides = array<i32>} : memref<360x384xf32, #tpu.memory_space<vmem>>, vector<4x384xf32>,
    %c1_i32_32 = arith.constant 1 : i32
    %42 = tpu.dynamic_rotate %35 by %c1_i32_32 dim 1 : vector<4x384xf32>, i32 -> vector<4x384xf32>
    %c96 = arith.constant 96 : index
    %c0_33 = arith.constant 0 : index
    %43 = vector.load %arg6[%c96, %c0_33] : memref<360x384xf32, #tpu.memory_space<vmem>>, vector<4x384xf32>
    tpu.vector_store %arg6[%c96, %c0_33], %42 {strides = array<i32>} : memref<360x384xf32, #tpu.memory_space<vmem>>, vector<4x384xf32>,
    %c104 = arith.constant 104 : index
    %c0_34 = arith.constant 0 : index
    %44 = vector.load %arg6[%c104, %c0_34] : memref<360x384xf32, #tpu.memory_space<vmem>>, vector<4x384xf32>
    tpu.vector_store %arg6[%c104, %c0_34], %35 {strides = array<i32>} : memref<360x384xf32, #tpu.memory_space<vmem>>, vector<4x384xf32>,
    %c383_i32_35 = arith.constant 383 : i32
    %45 = tpu.dynamic_rotate %35 by %c383_i32_35 dim 1 : vector<4x384xf32>, i32 -> vector<4x384xf32>
    %c112 = arith.constant 112 : index
    %c0_36 = arith.constant 0 : index
    %46 = vector.load %arg6[%c112, %c0_36] : memref<360x384xf32, #tpu.memory_space<vmem>>, vector<4x384xf32>
    tpu.vector_store %arg6[%c112, %c0_36], %45 {strides = array<i32>} : memref<360x384xf32, #tpu.memory_space<vmem>>, vector<4x384xf32>,
    %c367_i32_37 = arith.constant 367 : i32
    %47 = tpu.dynamic_rotate %35 by %c367_i32_37 dim 1 : vector<4x384xf32>, i32 -> vector<4x384xf32>
    %c120 = arith.constant 120 : index
    %c0_38 = arith.constant 0 : index
    %48 = vector.load %arg6[%c120, %c0_38] : memref<360x384xf32, #tpu.memory_space<vmem>>, vector<4x384xf32>
    tpu.vector_store %arg6[%c120, %c0_38], %47 {strides = array<i32>} : memref<360x384xf32, #tpu.memory_space<vmem>>, vector<4x384xf32>,
    %c366_i32_39 = arith.constant 366 : i32
    %49 = tpu.dynamic_rotate %35 by %c366_i32_39 dim 1 : vector<4x384xf32>, i32 -> vector<4x384xf32>
    %c128 = arith.constant 128 : index
    %c0_40 = arith.constant 0 : index
    %50 = vector.load %arg6[%c128, %c0_40] : memref<360x384xf32, #tpu.memory_space<vmem>>, vector<4x384xf32>
    tpu.vector_store %arg6[%c128, %c0_40], %49 {strides = array<i32>} : memref<360x384xf32, #tpu.memory_space<vmem>>, vector<4x384xf32>,
    %c365_i32_41 = arith.constant 365 : i32
    %51 = tpu.dynamic_rotate %35 by %c365_i32_41 dim 1 : vector<4x384xf32>, i32 -> vector<4x384xf32>
    %c136 = arith.constant 136 : index
    %c0_42 = arith.constant 0 : index
    %52 = vector.load %arg6[%c136, %c0_42] : memref<360x384xf32, #tpu.memory_space<vmem>>, vector<4x384xf32>
    tpu.vector_store %arg6[%c136, %c0_42], %51 {strides = array<i32>} : memref<360x384xf32, #tpu.memory_space<vmem>>, vector<4x384xf32>,
    %c0_43 = arith.constant 0 : index
    %c0_44 = arith.constant 0 : index
    %53 = vector.load %arg6[%c0_43, %c0_44] : memref<360x384xf32, #tpu.memory_space<vmem>>, vector<144x384xf32>
    %54 = arith.truncf %53 : vector<144x384xf32> to vector<144x384xbf16>
    %c1 = arith.constant 1 : index
    %c0_45 = arith.constant 0 : index
    %c0_46 = arith.constant 0 : index
    %55 = vector.load %arg3[%c1, %c0_45, %c0_46] : memref<15x4x360xbf16, #tpu.memory_space<vmem>>, vector<1x4x144xbf16>
    %56 = vector.shape_cast %55 : vector<1x4x144xbf16> to vector<4x144xbf16>
    %cst_47 = arith.constant dense<0.000000e+00> : vector<4x384xf32>
    %57 = tpu.matmul %56, %54, %cst_47 {dimension_numbers = #tpu.dot_dimension_numbers<[1], [0], [0], [1], [0, 0, 1, 1], [], []>} : vector<4x144xbf16>, vector<144x384xbf16>, vector<4x384xf32> -> vector<4x384xf32>
    %c1_48 = arith.constant 1 : index
    %c0_49 = arith.constant 0 : index
    %c0_50 = arith.constant 0 : index
    %58 = vector.load %arg4[%c1_48, %c0_49, %c0_50] : memref<15x4x1xf32, #tpu.memory_space<vmem>>, vector<1x4x1xf32>
    %59 = vector.shape_cast %58 : vector<1x4x1xf32> to vector<4x1xf32>
    %60 = vector.broadcast %59 : vector<4x1xf32> to vector<4x384xf32>
    %61 = arith.addf %57, %60 : vector<4x384xf32>
    %cst_51 = arith.constant 0.00999999977 : f32
    %62 = vector.broadcast %cst_51 : f32 to vector<4x384xf32>
    %63 = arith.mulf %62, %61 : vector<4x384xf32>
    %64 = arith.maximumf %61, %63 : vector<4x384xf32>
    %65 = vector.broadcast %0 : vector<1x384xf32> to vector<4x384xf32>
    %66 = arith.mulf %64, %65 : vector<4x384xf32>
    %c19_i32_52 = arith.constant 19 : i32
    %67 = tpu.dynamic_rotate %66 by %c19_i32_52 dim 1 : vector<4x384xf32>, i32 -> vector<4x384xf32>
    %c144 = arith.constant 144 : index
    %c0_53 = arith.constant 0 : index
    %68 = vector.load %arg6[%c144, %c0_53] : memref<360x384xf32, #tpu.memory_space<vmem>>, vector<4x384xf32>
    tpu.vector_store %arg6[%c144, %c0_53], %67 {strides = array<i32>} : memref<360x384xf32, #tpu.memory_space<vmem>>, vector<4x384xf32>,
    %c18_i32_54 = arith.constant 18 : i32
    %69 = tpu.dynamic_rotate %66 by %c18_i32_54 dim 1 : vector<4x384xf32>, i32 -> vector<4x384xf32>
    %c152 = arith.constant 152 : index
    %c0_55 = arith.constant 0 : index
    %70 = vector.load %arg6[%c152, %c0_55] : memref<360x384xf32, #tpu.memory_space<vmem>>, vector<4x384xf32>
    tpu.vector_store %arg6[%c152, %c0_55], %69 {strides = array<i32>} : memref<360x384xf32, #tpu.memory_space<vmem>>, vector<4x384xf32>,
    %c17_i32_56 = arith.constant 17 : i32
    %71 = tpu.dynamic_rotate %66 by %c17_i32_56 dim 1 : vector<4x384xf32>, i32 -> vector<4x384xf32>
    %c160 = arith.constant 160 : index
    %c0_57 = arith.constant 0 : index
    %72 = vector.load %arg6[%c160, %c0_57] : memref<360x384xf32, #tpu.memory_space<vmem>>, vector<4x384xf32>
    tpu.vector_store %arg6[%c160, %c0_57], %71 {strides = array<i32>} : memref<360x384xf32, #tpu.memory_space<vmem>>, vector<4x384xf32>,
    %c1_i32_58 = arith.constant 1 : i32
    %73 = tpu.dynamic_rotate %66 by %c1_i32_58 dim 1 : vector<4x384xf32>, i32 -> vector<4x384xf32>
    %c168 = arith.constant 168 : index
    %c0_59 = arith.constant 0 : index
    %74 = vector.load %arg6[%c168, %c0_59] : memref<360x384xf32, #tpu.memory_space<vmem>>, vector<4x384xf32>
    tpu.vector_store %arg6[%c168, %c0_59], %73 {strides = array<i32>} : memref<360x384xf32, #tpu.memory_space<vmem>>, vector<4x384xf32>,
    %c176 = arith.constant 176 : index
    %c0_60 = arith.constant 0 : index
    %75 = vector.load %arg6[%c176, %c0_60] : memref<360x384xf32, #tpu.memory_space<vmem>>, vector<4x384xf32>
    tpu.vector_store %arg6[%c176, %c0_60], %66 {strides = array<i32>} : memref<360x384xf32, #tpu.memory_space<vmem>>, vector<4x384xf32>,
    %c383_i32_61 = arith.constant 383 : i32
    %76 = tpu.dynamic_rotate %66 by %c383_i32_61 dim 1 : vector<4x384xf32>, i32 -> vector<4x384xf32>
    %c184 = arith.constant 184 : index
    %c0_62 = arith.constant 0 : index
    %77 = vector.load %arg6[%c184, %c0_62] : memref<360x384xf32, #tpu.memory_space<vmem>>, vector<4x384xf32>
    tpu.vector_store %arg6[%c184, %c0_62], %76 {strides = array<i32>} : memref<360x384xf32, #tpu.memory_space<vmem>>, vector<4x384xf32>,
    %c367_i32_63 = arith.constant 367 : i32
    %78 = tpu.dynamic_rotate %66 by %c367_i32_63 dim 1 : vector<4x384xf32>, i32 -> vector<4x384xf32>
    %c192 = arith.constant 192 : index
    %c0_64 = arith.constant 0 : index
    %79 = vector.load %arg6[%c192, %c0_64] : memref<360x384xf32, #tpu.memory_space<vmem>>, vector<4x384xf32>
    tpu.vector_store %arg6[%c192, %c0_64], %78 {strides = array<i32>} : memref<360x384xf32, #tpu.memory_space<vmem>>, vector<4x384xf32>,
    %c366_i32_65 = arith.constant 366 : i32
    %80 = tpu.dynamic_rotate %66 by %c366_i32_65 dim 1 : vector<4x384xf32>, i32 -> vector<4x384xf32>
    %c200 = arith.constant 200 : index
    %c0_66 = arith.constant 0 : index
    %81 = vector.load %arg6[%c200, %c0_66] : memref<360x384xf32, #tpu.memory_space<vmem>>, vector<4x384xf32>
    tpu.vector_store %arg6[%c200, %c0_66], %80 {strides = array<i32>} : memref<360x384xf32, #tpu.memory_space<vmem>>, vector<4x384xf32>,
    %c365_i32_67 = arith.constant 365 : i32
    %82 = tpu.dynamic_rotate %66 by %c365_i32_67 dim 1 : vector<4x384xf32>, i32 -> vector<4x384xf32>
    %c208 = arith.constant 208 : index
    %c0_68 = arith.constant 0 : index
    %83 = vector.load %arg6[%c208, %c0_68] : memref<360x384xf32, #tpu.memory_space<vmem>>, vector<4x384xf32>
    tpu.vector_store %arg6[%c208, %c0_68], %82 {strides = array<i32>} : memref<360x384xf32, #tpu.memory_space<vmem>>, vector<4x384xf32>,
    %c0_69 = arith.constant 0 : index
    %c0_70 = arith.constant 0 : index
    %84 = vector.load %arg6[%c0_69, %c0_70] : memref<360x384xf32, #tpu.memory_space<vmem>>, vector<216x384xf32>
    %85 = arith.truncf %84 : vector<216x384xf32> to vector<216x384xbf16>
    %c2 = arith.constant 2 : index
    %c0_71 = arith.constant 0 : index
    %c0_72 = arith.constant 0 : index
    %86 = vector.load %arg3[%c2, %c0_71, %c0_72] : memref<15x4x360xbf16, #tpu.memory_space<vmem>>, vector<1x4x216xbf16>
    %87 = vector.shape_cast %86 : vector<1x4x216xbf16> to vector<4x216xbf16>
    %cst_73 = arith.constant dense<0.000000e+00> : vector<4x384xf32>
    %88 = tpu.matmul %87, %85, %cst_73 {dimension_numbers = #tpu.dot_dimension_numbers<[1], [0], [0], [1], [0, 0, 1, 1], [], []>} : vector<4x216xbf16>, vector<216x384xbf16>, vector<4x384xf32> -> vector<4x384xf32>
    %c2_74 = arith.constant 2 : index
    %c0_75 = arith.constant 0 : index
    %c0_76 = arith.constant 0 : index
    %89 = vector.load %arg4[%c2_74, %c0_75, %c0_76] : memref<15x4x1xf32, #tpu.memory_space<vmem>>, vector<1x4x1xf32>
    %90 = vector.shape_cast %89 : vector<1x4x1xf32> to vector<4x1xf32>
    %91 = vector.broadcast %90 : vector<4x1xf32> to vector<4x384xf32>
    %92 = arith.addf %88, %91 : vector<4x384xf32>
    %cst_77 = arith.constant 0.00999999977 : f32
    %93 = vector.broadcast %cst_77 : f32 to vector<4x384xf32>
    %94 = arith.mulf %93, %92 : vector<4x384xf32>
    %95 = arith.maximumf %92, %94 : vector<4x384xf32>
    %96 = vector.broadcast %0 : vector<1x384xf32> to vector<4x384xf32>
    %97 = arith.mulf %95, %96 : vector<4x384xf32>
    %c19_i32_78 = arith.constant 19 : i32
    %98 = tpu.dynamic_rotate %97 by %c19_i32_78 dim 1 : vector<4x384xf32>, i32 -> vector<4x384xf32>
    %c216 = arith.constant 216 : index
    %c0_79 = arith.constant 0 : index
    %99 = vector.load %arg6[%c216, %c0_79] : memref<360x384xf32, #tpu.memory_space<vmem>>, vector<4x384xf32>
    tpu.vector_store %arg6[%c216, %c0_79], %98 {strides = array<i32>} : memref<360x384xf32, #tpu.memory_space<vmem>>, vector<4x384xf32>,
    %c18_i32_80 = arith.constant 18 : i32
    %100 = tpu.dynamic_rotate %97 by %c18_i32_80 dim 1 : vector<4x384xf32>, i32 -> vector<4x384xf32>
    %c224 = arith.constant 224 : index
    %c0_81 = arith.constant 0 : index
    %101 = vector.load %arg6[%c224, %c0_81] : memref<360x384xf32, #tpu.memory_space<vmem>>, vector<4x384xf32>
    tpu.vector_store %arg6[%c224, %c0_81], %100 {strides = array<i32>} : memref<360x384xf32, #tpu.memory_space<vmem>>, vector<4x384xf32>,
    %c17_i32_82 = arith.constant 17 : i32
    %102 = tpu.dynamic_rotate %97 by %c17_i32_82 dim 1 : vector<4x384xf32>, i32 -> vector<4x384xf32>
    %c232 = arith.constant 232 : index
    %c0_83 = arith.constant 0 : index
    %103 = vector.load %arg6[%c232, %c0_83] : memref<360x384xf32, #tpu.memory_space<vmem>>, vector<4x384xf32>
    tpu.vector_store %arg6[%c232, %c0_83], %102 {strides = array<i32>} : memref<360x384xf32, #tpu.memory_space<vmem>>, vector<4x384xf32>,
    %c1_i32_84 = arith.constant 1 : i32
    %104 = tpu.dynamic_rotate %97 by %c1_i32_84 dim 1 : vector<4x384xf32>, i32 -> vector<4x384xf32>
    %c240 = arith.constant 240 : index
    %c0_85 = arith.constant 0 : index
    %105 = vector.load %arg6[%c240, %c0_85] : memref<360x384xf32, #tpu.memory_space<vmem>>, vector<4x384xf32>
    tpu.vector_store %arg6[%c240, %c0_85], %104 {strides = array<i32>} : memref<360x384xf32, #tpu.memory_space<vmem>>, vector<4x384xf32>,
    %c248 = arith.constant 248 : index
    %c0_86 = arith.constant 0 : index
    %106 = vector.load %arg6[%c248, %c0_86] : memref<360x384xf32, #tpu.memory_space<vmem>>, vector<4x384xf32>
    tpu.vector_store %arg6[%c248, %c0_86], %97 {strides = array<i32>} : memref<360x384xf32, #tpu.memory_space<vmem>>, vector<4x384xf32>,
    %c383_i32_87 = arith.constant 383 : i32
    %107 = tpu.dynamic_rotate %97 by %c383_i32_87 dim 1 : vector<4x384xf32>, i32 -> vector<4x384xf32>
    %c256 = arith.constant 256 : index
    %c0_88 = arith.constant 0 : index
    %108 = vector.load %arg6[%c256, %c0_88] : memref<360x384xf32, #tpu.memory_space<vmem>>, vector<4x384xf32>
    tpu.vector_store %arg6[%c256, %c0_88], %107 {strides = array<i32>} : memref<360x384xf32, #tpu.memory_space<vmem>>, vector<4x384xf32>,
    %c367_i32_89 = arith.constant 367 : i32
    %109 = tpu.dynamic_rotate %97 by %c367_i32_89 dim 1 : vector<4x384xf32>, i32 -> vector<4x384xf32>
    %c264 = arith.constant 264 : index
    %c0_90 = arith.constant 0 : index
    %110 = vector.load %arg6[%c264, %c0_90] : memref<360x384xf32, #tpu.memory_space<vmem>>, vector<4x384xf32>
    tpu.vector_store %arg6[%c264, %c0_90], %109 {strides = array<i32>} : memref<360x384xf32, #tpu.memory_space<vmem>>, vector<4x384xf32>,
    %c366_i32_91 = arith.constant 366 : i32
    %111 = tpu.dynamic_rotate %97 by %c366_i32_91 dim 1 : vector<4x384xf32>, i32 -> vector<4x384xf32>
    %c272 = arith.constant 272 : index
    %c0_92 = arith.constant 0 : index
    %112 = vector.load %arg6[%c272, %c0_92] : memref<360x384xf32, #tpu.memory_space<vmem>>, vector<4x384xf32>
    tpu.vector_store %arg6[%c272, %c0_92], %111 {strides = array<i32>} : memref<360x384xf32, #tpu.memory_space<vmem>>, vector<4x384xf32>,
    %c365_i32_93 = arith.constant 365 : i32
    %113 = tpu.dynamic_rotate %97 by %c365_i32_93 dim 1 : vector<4x384xf32>, i32 -> vector<4x384xf32>
    %c280 = arith.constant 280 : index
    %c0_94 = arith.constant 0 : index
    %114 = vector.load %arg6[%c280, %c0_94] : memref<360x384xf32, #tpu.memory_space<vmem>>, vector<4x384xf32>
    tpu.vector_store %arg6[%c280, %c0_94], %113 {strides = array<i32>} : memref<360x384xf32, #tpu.memory_space<vmem>>, vector<4x384xf32>,
    %c0_95 = arith.constant 0 : index
    %c0_96 = arith.constant 0 : index
    %115 = vector.load %arg6[%c0_95, %c0_96] : memref<360x384xf32, #tpu.memory_space<vmem>>, vector<288x384xf32>
    %116 = arith.truncf %115 : vector<288x384xf32> to vector<288x384xbf16>
    %c3 = arith.constant 3 : index
    %c0_97 = arith.constant 0 : index
    %c0_98 = arith.constant 0 : index
    %117 = vector.load %arg3[%c3, %c0_97, %c0_98] : memref<15x4x360xbf16, #tpu.memory_space<vmem>>, vector<1x4x288xbf16>
    %118 = vector.shape_cast %117 : vector<1x4x288xbf16> to vector<4x288xbf16>
    %cst_99 = arith.constant dense<0.000000e+00> : vector<4x384xf32>
    %119 = tpu.matmul %118, %116, %cst_99 {dimension_numbers = #tpu.dot_dimension_numbers<[1], [0], [0], [1], [0, 0, 1, 1], [], []>} : vector<4x288xbf16>, vector<288x384xbf16>, vector<4x384xf32> -> vector<4x384xf32>
    %c3_100 = arith.constant 3 : index
    %c0_101 = arith.constant 0 : index
    %c0_102 = arith.constant 0 : index
    %120 = vector.load %arg4[%c3_100, %c0_101, %c0_102] : memref<15x4x1xf32, #tpu.memory_space<vmem>>, vector<1x4x1xf32>
    %121 = vector.shape_cast %120 : vector<1x4x1xf32> to vector<4x1xf32>
    %122 = vector.broadcast %121 : vector<4x1xf32> to vector<4x384xf32>
    %123 = arith.addf %119, %122 : vector<4x384xf32>
    %cst_103 = arith.constant 0.00999999977 : f32
    %124 = vector.broadcast %cst_103 : f32 to vector<4x384xf32>
    %125 = arith.mulf %124, %123 : vector<4x384xf32>
    %126 = arith.maximumf %123, %125 : vector<4x384xf32>
    %127 = vector.broadcast %0 : vector<1x384xf32> to vector<4x384xf32>
    %128 = arith.mulf %126, %127 : vector<4x384xf32>
    %c19_i32_104 = arith.constant 19 : i32
    %129 = tpu.dynamic_rotate %128 by %c19_i32_104 dim 1 : vector<4x384xf32>, i32 -> vector<4x384xf32>
    %c288 = arith.constant 288 : index
    %c0_105 = arith.constant 0 : index
    %130 = vector.load %arg6[%c288, %c0_105] : memref<360x384xf32, #tpu.memory_space<vmem>>, vector<4x384xf32>
    tpu.vector_store %arg6[%c288, %c0_105], %129 {strides = array<i32>} : memref<360x384xf32, #tpu.memory_space<vmem>>, vector<4x384xf32>,
    %c18_i32_106 = arith.constant 18 : i32
    %131 = tpu.dynamic_rotate %128 by %c18_i32_106 dim 1 : vector<4x384xf32>, i32 -> vector<4x384xf32>
    %c296 = arith.constant 296 : index
    %c0_107 = arith.constant 0 : index
    %132 = vector.load %arg6[%c296, %c0_107] : memref<360x384xf32, #tpu.memory_space<vmem>>, vector<4x384xf32>
    tpu.vector_store %arg6[%c296, %c0_107], %131 {strides = array<i32>} : memref<360x384xf32, #tpu.memory_space<vmem>>, vector<4x384xf32>,
    %c17_i32_108 = arith.constant 17 : i32
    %133 = tpu.dynamic_rotate %128 by %c17_i32_108 dim 1 : vector<4x384xf32>, i32 -> vector<4x384xf32>
    %c304 = arith.constant 304 : index
    %c0_109 = arith.constant 0 : index
    %134 = vector.load %arg6[%c304, %c0_109] : memref<360x384xf32, #tpu.memory_space<vmem>>, vector<4x384xf32>
    tpu.vector_store %arg6[%c304, %c0_109], %133 {strides = array<i32>} : memref<360x384xf32, #tpu.memory_space<vmem>>, vector<4x384xf32>,
    %c1_i32_110 = arith.constant 1 : i32
    %135 = tpu.dynamic_rotate %128 by %c1_i32_110 dim 1 : vector<4x384xf32>, i32 -> vector<4x384xf32>
    %c312 = arith.constant 312 : index
    %c0_111 = arith.constant 0 : index
    %136 = vector.load %arg6[%c312, %c0_111] : memref<360x384xf32, #tpu.memory_space<vmem>>, vector<4x384xf32>
    tpu.vector_store %arg6[%c312, %c0_111], %135 {strides = array<i32>} : memref<360x384xf32, #tpu.memory_space<vmem>>, vector<4x384xf32>,
    %c320 = arith.constant 320 : index
    %c0_112 = arith.constant 0 : index
    %137 = vector.load %arg6[%c320, %c0_112] : memref<360x384xf32, #tpu.memory_space<vmem>>, vector<4x384xf32>
    tpu.vector_store %arg6[%c320, %c0_112], %128 {strides = array<i32>} : memref<360x384xf32, #tpu.memory_space<vmem>>, vector<4x384xf32>,
    %c383_i32_113 = arith.constant 383 : i32
    %138 = tpu.dynamic_rotate %128 by %c383_i32_113 dim 1 : vector<4x384xf32>, i32 -> vector<4x384xf32>
    %c328 = arith.constant 328 : index
    %c0_114 = arith.constant 0 : index
    %139 = vector.load %arg6[%c328, %c0_114] : memref<360x384xf32, #tpu.memory_space<vmem>>, vector<4x384xf32>
    tpu.vector_store %arg6[%c328, %c0_114], %138 {strides = array<i32>} : memref<360x384xf32, #tpu.memory_space<vmem>>, vector<4x384xf32>,
    %c367_i32_115 = arith.constant 367 : i32
    %140 = tpu.dynamic_rotate %128 by %c367_i32_115 dim 1 : vector<4x384xf32>, i32 -> vector<4x384xf32>
    %c336 = arith.constant 336 : index
    %c0_116 = arith.constant 0 : index
    %141 = vector.load %arg6[%c336, %c0_116] : memref<360x384xf32, #tpu.memory_space<vmem>>, vector<4x384xf32>
    tpu.vector_store %arg6[%c336, %c0_116], %140 {strides = array<i32>} : memref<360x384xf32, #tpu.memory_space<vmem>>, vector<4x384xf32>,
    %c366_i32_117 = arith.constant 366 : i32
    %142 = tpu.dynamic_rotate %128 by %c366_i32_117 dim 1 : vector<4x384xf32>, i32 -> vector<4x384xf32>
    %c344 = arith.constant 344 : index
    %c0_118 = arith.constant 0 : index
    %143 = vector.load %arg6[%c344, %c0_118] : memref<360x384xf32, #tpu.memory_space<vmem>>, vector<4x384xf32>
    tpu.vector_store %arg6[%c344, %c0_118], %142 {strides = array<i32>} : memref<360x384xf32, #tpu.memory_space<vmem>>, vector<4x384xf32>,
    %c365_i32_119 = arith.constant 365 : i32
    %144 = tpu.dynamic_rotate %128 by %c365_i32_119 dim 1 : vector<4x384xf32>, i32 -> vector<4x384xf32>
    %c352 = arith.constant 352 : index
    %c0_120 = arith.constant 0 : index
    %145 = vector.load %arg6[%c352, %c0_120] : memref<360x384xf32, #tpu.memory_space<vmem>>, vector<4x384xf32>
    tpu.vector_store %arg6[%c352, %c0_120], %144 {strides = array<i32>} : memref<360x384xf32, #tpu.memory_space<vmem>>, vector<4x384xf32>,
    %c0_121 = arith.constant 0 : index
    %c0_122 = arith.constant 0 : index
    %146 = vector.load %arg6[%c0_121, %c0_122] : memref<360x384xf32, #tpu.memory_space<vmem>>, vector<360x384xf32>
    %147 = arith.truncf %146 : vector<360x384xf32> to vector<360x384xbf16>
    %c4 = arith.constant 4 : index
    %c0_123 = arith.constant 0 : index
    %c0_124 = arith.constant 0 : index
    %148 = vector.load %arg3[%c4, %c0_123, %c0_124] : memref<15x4x360xbf16, #tpu.memory_space<vmem>>, vector<1x4x360xbf16>
    %149 = vector.shape_cast %148 : vector<1x4x360xbf16> to vector<4x360xbf16>
    %cst_125 = arith.constant dense<0.000000e+00> : vector<4x384xf32>
    %150 = tpu.matmul %149, %147, %cst_125 {dimension_numbers = #tpu.dot_dimension_numbers<[1], [0], [0], [1], [0, 0, 1, 1], [], []>} : vector<4x360xbf16>, vector<360x384xbf16>, vector<4x384xf32> -> vector<4x384xf32>
    %c4_126 = arith.constant 4 : index
    %c0_127 = arith.constant 0 : index
    %c0_128 = arith.constant 0 : index
    %151 = vector.load %arg4[%c4_126, %c0_127, %c0_128] : memref<15x4x1xf32, #tpu.memory_space<vmem>>, vector<1x4x1xf32>
    %152 = vector.shape_cast %151 : vector<1x4x1xf32> to vector<4x1xf32>
    %153 = vector.broadcast %152 : vector<4x1xf32> to vector<4x384xf32>
    %154 = arith.addf %150, %153 : vector<4x384xf32>
    %155 = vector.broadcast %0 : vector<1x384xf32> to vector<4x384xf32>
    %156 = arith.mulf %154, %155 : vector<4x384xf32>
    %157 = arith.addf %156, %4 : vector<4x384xf32>
    %c19_i32_129 = arith.constant 19 : i32
    %158 = tpu.dynamic_rotate %157 by %c19_i32_129 dim 1 : vector<4x384xf32>, i32 -> vector<4x384xf32>
    %c0_130 = arith.constant 0 : index
    %c0_131 = arith.constant 0 : index
    %159 = vector.load %arg6[%c0_130, %c0_131] : memref<360x384xf32, #tpu.memory_space<vmem>>, vector<4x384xf32>
    tpu.vector_store %arg6[%c0_130, %c0_131], %158 {strides = array<i32>} : memref<360x384xf32, #tpu.memory_space<vmem>>, vector<4x384xf32>,
    %c18_i32_132 = arith.constant 18 : i32
    %160 = tpu.dynamic_rotate %157 by %c18_i32_132 dim 1 : vector<4x384xf32>, i32 -> vector<4x384xf32>
    %c8_133 = arith.constant 8 : index
    %c0_134 = arith.constant 0 : index
    %161 = vector.load %arg6[%c8_133, %c0_134] : memref<360x384xf32, #tpu.memory_space<vmem>>, vector<4x384xf32>
    tpu.vector_store %arg6[%c8_133, %c0_134], %160 {strides = array<i32>} : memref<360x384xf32, #tpu.memory_space<vmem>>, vector<4x384xf32>,
    %c17_i32_135 = arith.constant 17 : i32
    %162 = tpu.dynamic_rotate %157 by %c17_i32_135 dim 1 : vector<4x384xf32>, i32 -> vector<4x384xf32>
    %c16_136 = arith.constant 16 : index
    %c0_137 = arith.constant 0 : index
    %163 = vector.load %arg6[%c16_136, %c0_137] : memref<360x384xf32, #tpu.memory_space<vmem>>, vector<4x384xf32>
    tpu.vector_store %arg6[%c16_136, %c0_137], %162 {strides = array<i32>} : memref<360x384xf32, #tpu.memory_space<vmem>>, vector<4x384xf32>,
    %c1_i32_138 = arith.constant 1 : i32
    %164 = tpu.dynamic_rotate %157 by %c1_i32_138 dim 1 : vector<4x384xf32>, i32 -> vector<4x384xf32>
    %c24_139 = arith.constant 24 : index
    %c0_140 = arith.constant 0 : index
    %165 = vector.load %arg6[%c24_139, %c0_140] : memref<360x384xf32, #tpu.memory_space<vmem>>, vector<4x384xf32>
    tpu.vector_store %arg6[%c24_139, %c0_140], %164 {strides = array<i32>} : memref<360x384xf32, #tpu.memory_space<vmem>>, vector<4x384xf32>,
    %c32_141 = arith.constant 32 : index
    %c0_142 = arith.constant 0 : index
    %166 = vector.load %arg6[%c32_141, %c0_142] : memref<360x384xf32, #tpu.memory_space<vmem>>, vector<4x384xf32>
    tpu.vector_store %arg6[%c32_141, %c0_142], %157 {strides = array<i32>} : memref<360x384xf32, #tpu.memory_space<vmem>>, vector<4x384xf32>,
    %c383_i32_143 = arith.constant 383 : i32
    %167 = tpu.dynamic_rotate %157 by %c383_i32_143 dim 1 : vector<4x384xf32>, i32 -> vector<4x384xf32>
    %c40_144 = arith.constant 40 : index
    %c0_145 = arith.constant 0 : index
    %168 = vector.load %arg6[%c40_144, %c0_145] : memref<360x384xf32, #tpu.memory_space<vmem>>, vector<4x384xf32>
    tpu.vector_store %arg6[%c40_144, %c0_145], %167 {strides = array<i32>} : memref<360x384xf32, #tpu.memory_space<vmem>>, vector<4x384xf32>,
    %c367_i32_146 = arith.constant 367 : i32
    %169 = tpu.dynamic_rotate %157 by %c367_i32_146 dim 1 : vector<4x384xf32>, i32 -> vector<4x384xf32>
    %c48_147 = arith.constant 48 : index
    %c0_148 = arith.constant 0 : index
    %170 = vector.load %arg6[%c48_147, %c0_148] : memref<360x384xf32, #tpu.memory_space<vmem>>, vector<4x384xf32>
    tpu.vector_store %arg6[%c48_147, %c0_148], %169 {strides = array<i32>} : memref<360x384xf32, #tpu.memory_space<vmem>>, vector<4x384xf32>,
    %c366_i32_149 = arith.constant 366 : i32
    %171 = tpu.dynamic_rotate %157 by %c366_i32_149 dim 1 : vector<4x384xf32>, i32 -> vector<4x384xf32>
    %c56_150 = arith.constant 56 : index
    %c0_151 = arith.constant 0 : index
    %172 = vector.load %arg6[%c56_150, %c0_151] : memref<360x384xf32, #tpu.memory_space<vmem>>, vector<4x384xf32>
    tpu.vector_store %arg6[%c56_150, %c0_151], %171 {strides = array<i32>} : memref<360x384xf32, #tpu.memory_space<vmem>>, vector<4x384xf32>,
    %c365_i32_152 = arith.constant 365 : i32
    %173 = tpu.dynamic_rotate %157 by %c365_i32_152 dim 1 : vector<4x384xf32>, i32 -> vector<4x384xf32>
    %c64_153 = arith.constant 64 : index
    %c0_154 = arith.constant 0 : index
    %174 = vector.load %arg6[%c64_153, %c0_154] : memref<360x384xf32, #tpu.memory_space<vmem>>, vector<4x384xf32>
    tpu.vector_store %arg6[%c64_153, %c0_154], %173 {strides = array<i32>} : memref<360x384xf32, #tpu.memory_space<vmem>>, vector<4x384xf32>,
    %c0_155 = arith.constant 0 : index
    %c0_156 = arith.constant 0 : index
    %175 = vector.load %arg6[%c0_155, %c0_156] : memref<360x384xf32, #tpu.memory_space<vmem>>, vector<72x384xf32>
    %176 = arith.truncf %175 : vector<72x384xf32> to vector<72x384xbf16>
    %c5 = arith.constant 5 : index
    %c0_157 = arith.constant 0 : index
    %c0_158 = arith.constant 0 : index
    %177 = vector.load %arg3[%c5, %c0_157, %c0_158] : memref<15x4x360xbf16, #tpu.memory_space<vmem>>, vector<1x4x72xbf16>
    %178 = vector.shape_cast %177 : vector<1x4x72xbf16> to vector<4x72xbf16>
    %cst_159 = arith.constant dense<0.000000e+00> : vector<4x384xf32>
    %179 = tpu.matmul %178, %176, %cst_159 {dimension_numbers = #tpu.dot_dimension_numbers<[1], [0], [0], [1], [0, 0, 1, 1], [], []>} : vector<4x72xbf16>, vector<72x384xbf16>, vector<4x384xf32> -> vector<4x384xf32>
    %c5_160 = arith.constant 5 : index
    %c0_161 = arith.constant 0 : index
    %c0_162 = arith.constant 0 : index
    %180 = vector.load %arg4[%c5_160, %c0_161, %c0_162] : memref<15x4x1xf32, #tpu.memory_space<vmem>>, vector<1x4x1xf32>
    %181 = vector.shape_cast %180 : vector<1x4x1xf32> to vector<4x1xf32>
    %182 = vector.broadcast %181 : vector<4x1xf32> to vector<4x384xf32>
    %183 = arith.addf %179, %182 : vector<4x384xf32>
    %cst_163 = arith.constant 0.00999999977 : f32
    %184 = vector.broadcast %cst_163 : f32 to vector<4x384xf32>
    %185 = arith.mulf %184, %183 : vector<4x384xf32>
    %186 = arith.maximumf %183, %185 : vector<4x384xf32>
    %187 = vector.broadcast %0 : vector<1x384xf32> to vector<4x384xf32>
    %188 = arith.mulf %186, %187 : vector<4x384xf32>
    %c19_i32_164 = arith.constant 19 : i32
    %189 = tpu.dynamic_rotate %188 by %c19_i32_164 dim 1 : vector<4x384xf32>, i32 -> vector<4x384xf32>
    %c72_165 = arith.constant 72 : index
    %c0_166 = arith.constant 0 : index
    %190 = vector.load %arg6[%c72_165, %c0_166] : memref<360x384xf32, #tpu.memory_space<vmem>>, vector<4x384xf32>
    tpu.vector_store %arg6[%c72_165, %c0_166], %189 {strides = array<i32>} : memref<360x384xf32, #tpu.memory_space<vmem>>, vector<4x384xf32>,
    %c18_i32_167 = arith.constant 18 : i32
    %191 = tpu.dynamic_rotate %188 by %c18_i32_167 dim 1 : vector<4x384xf32>, i32 -> vector<4x384xf32>
    %c80_168 = arith.constant 80 : index
    %c0_169 = arith.constant 0 : index
    %192 = vector.load %arg6[%c80_168, %c0_169] : memref<360x384xf32, #tpu.memory_space<vmem>>, vector<4x384xf32>
    tpu.vector_store %arg6[%c80_168, %c0_169], %191 {strides = array<i32>} : memref<360x384xf32, #tpu.memory_space<vmem>>, vector<4x384xf32>,
    %c17_i32_170 = arith.constant 17 : i32
    %193 = tpu.dynamic_rotate %188 by %c17_i32_170 dim 1 : vector<4x384xf32>, i32 -> vector<4x384xf32>
    %c88_171 = arith.constant 88 : index
    %c0_172 = arith.constant 0 : index
    %194 = vector.load %arg6[%c88_171, %c0_172] : memref<360x384xf32, #tpu.memory_space<vmem>>, vector<4x384xf32>
    tpu.vector_store %arg6[%c88_171, %c0_172], %193 {strides = array<i32>} : memref<360x384xf32, #tpu.memory_space<vmem>>, vector<4x384xf32>,
    %c1_i32_173 = arith.constant 1 : i32
    %195 = tpu.dynamic_rotate %188 by %c1_i32_173 dim 1 : vector<4x384xf32>, i32 -> vector<4x384xf32>
    %c96_174 = arith.constant 96 : index
    %c0_175 = arith.constant 0 : index
    %196 = vector.load %arg6[%c96_174, %c0_175] : memref<360x384xf32, #tpu.memory_space<vmem>>, vector<4x384xf32>
    tpu.vector_store %arg6[%c96_174, %c0_175], %195 {strides = array<i32>} : memref<360x384xf32, #tpu.memory_space<vmem>>, vector<4x384xf32>,
    %c104_176 = arith.constant 104 : index
    %c0_177 = arith.constant 0 : index
    %197 = vector.load %arg6[%c104_176, %c0_177] : memref<360x384xf32, #tpu.memory_space<vmem>>, vector<4x384xf32>
    tpu.vector_store %arg6[%c104_176, %c0_177], %188 {strides = array<i32>} : memref<360x384xf32, #tpu.memory_space<vmem>>, vector<4x384xf32>,
    %c383_i32_178 = arith.constant 383 : i32
    %198 = tpu.dynamic_rotate %188 by %c383_i32_178 dim 1 : vector<4x384xf32>, i32 -> vector<4x384xf32>
    %c112_179 = arith.constant 112 : index
    %c0_180 = arith.constant 0 : index
    %199 = vector.load %arg6[%c112_179, %c0_180] : memref<360x384xf32, #tpu.memory_space<vmem>>, vector<4x384xf32>
    tpu.vector_store %arg6[%c112_179, %c0_180], %198 {strides = array<i32>} : memref<360x384xf32, #tpu.memory_space<vmem>>, vector<4x384xf32>,
    %c367_i32_181 = arith.constant 367 : i32
    %200 = tpu.dynamic_rotate %188 by %c367_i32_181 dim 1 : vector<4x384xf32>, i32 -> vector<4x384xf32>
    %c120_182 = arith.constant 120 : index
    %c0_183 = arith.constant 0 : index
    %201 = vector.load %arg6[%c120_182, %c0_183] : memref<360x384xf32, #tpu.memory_space<vmem>>, vector<4x384xf32>
    tpu.vector_store %arg6[%c120_182, %c0_183], %200 {strides = array<i32>} : memref<360x384xf32, #tpu.memory_space<vmem>>, vector<4x384xf32>,
    %c366_i32_184 = arith.constant 366 : i32
    %202 = tpu.dynamic_rotate %188 by %c366_i32_184 dim 1 : vector<4x384xf32>, i32 -> vector<4x384xf32>
    %c128_185 = arith.constant 128 : index
    %c0_186 = arith.constant 0 : index
    %203 = vector.load %arg6[%c128_185, %c0_186] : memref<360x384xf32, #tpu.memory_space<vmem>>, vector<4x384xf32>
    tpu.vector_store %arg6[%c128_185, %c0_186], %202 {strides = array<i32>} : memref<360x384xf32, #tpu.memory_space<vmem>>, vector<4x384xf32>,
    %c365_i32_187 = arith.constant 365 : i32
    %204 = tpu.dynamic_rotate %188 by %c365_i32_187 dim 1 : vector<4x384xf32>, i32 -> vector<4x384xf32>
    %c136_188 = arith.constant 136 : index
    %c0_189 = arith.constant 0 : index
    %205 = vector.load %arg6[%c136_188, %c0_189] : memref<360x384xf32, #tpu.memory_space<vmem>>, vector<4x384xf32>
    tpu.vector_store %arg6[%c136_188, %c0_189], %204 {strides = array<i32>} : memref<360x384xf32, #tpu.memory_space<vmem>>, vector<4x384xf32>,
    %c0_190 = arith.constant 0 : index
    %c0_191 = arith.constant 0 : index
    %206 = vector.load %arg6[%c0_190, %c0_191] : memref<360x384xf32, #tpu.memory_space<vmem>>, vector<144x384xf32>
    %207 = arith.truncf %206 : vector<144x384xf32> to vector<144x384xbf16>
    %c6 = arith.constant 6 : index
    %c0_192 = arith.constant 0 : index
    %c0_193 = arith.constant 0 : index
    %208 = vector.load %arg3[%c6, %c0_192, %c0_193] : memref<15x4x360xbf16, #tpu.memory_space<vmem>>, vector<1x4x144xbf16>
    %209 = vector.shape_cast %208 : vector<1x4x144xbf16> to vector<4x144xbf16>
    %cst_194 = arith.constant dense<0.000000e+00> : vector<4x384xf32>
    %210 = tpu.matmul %209, %207, %cst_194 {dimension_numbers = #tpu.dot_dimension_numbers<[1], [0], [0], [1], [0, 0, 1, 1], [], []>} : vector<4x144xbf16>, vector<144x384xbf16>, vector<4x384xf32> -> vector<4x384xf32>
    %c6_195 = arith.constant 6 : index
    %c0_196 = arith.constant 0 : index
    %c0_197 = arith.constant 0 : index
    %211 = vector.load %arg4[%c6_195, %c0_196, %c0_197] : memref<15x4x1xf32, #tpu.memory_space<vmem>>, vector<1x4x1xf32>
    %212 = vector.shape_cast %211 : vector<1x4x1xf32> to vector<4x1xf32>
    %213 = vector.broadcast %212 : vector<4x1xf32> to vector<4x384xf32>
    %214 = arith.addf %210, %213 : vector<4x384xf32>
    %cst_198 = arith.constant 0.00999999977 : f32
    %215 = vector.broadcast %cst_198 : f32 to vector<4x384xf32>
    %216 = arith.mulf %215, %214 : vector<4x384xf32>
    %217 = arith.maximumf %214, %216 : vector<4x384xf32>
    %218 = vector.broadcast %0 : vector<1x384xf32> to vector<4x384xf32>
    %219 = arith.mulf %217, %218 : vector<4x384xf32>
    %c19_i32_199 = arith.constant 19 : i32
    %220 = tpu.dynamic_rotate %219 by %c19_i32_199 dim 1 : vector<4x384xf32>, i32 -> vector<4x384xf32>
    %c144_200 = arith.constant 144 : index
    %c0_201 = arith.constant 0 : index
    %221 = vector.load %arg6[%c144_200, %c0_201] : memref<360x384xf32, #tpu.memory_space<vmem>>, vector<4x384xf32>
    tpu.vector_store %arg6[%c144_200, %c0_201], %220 {strides = array<i32>} : memref<360x384xf32, #tpu.memory_space<vmem>>, vector<4x384xf32>,
    %c18_i32_202 = arith.constant 18 : i32
    %222 = tpu.dynamic_rotate %219 by %c18_i32_202 dim 1 : vector<4x384xf32>, i32 -> vector<4x384xf32>
    %c152_203 = arith.constant 152 : index
    %c0_204 = arith.constant 0 : index
    %223 = vector.load %arg6[%c152_203, %c0_204] : memref<360x384xf32, #tpu.memory_space<vmem>>, vector<4x384xf32>
    tpu.vector_store %arg6[%c152_203, %c0_204], %222 {strides = array<i32>} : memref<360x384xf32, #tpu.memory_space<vmem>>, vector<4x384xf32>,
    %c17_i32_205 = arith.constant 17 : i32
    %224 = tpu.dynamic_rotate %219 by %c17_i32_205 dim 1 : vector<4x384xf32>, i32 -> vector<4x384xf32>
    %c160_206 = arith.constant 160 : index
    %c0_207 = arith.constant 0 : index
    %225 = vector.load %arg6[%c160_206, %c0_207] : memref<360x384xf32, #tpu.memory_space<vmem>>, vector<4x384xf32>
    tpu.vector_store %arg6[%c160_206, %c0_207], %224 {strides = array<i32>} : memref<360x384xf32, #tpu.memory_space<vmem>>, vector<4x384xf32>,
    %c1_i32_208 = arith.constant 1 : i32
    %226 = tpu.dynamic_rotate %219 by %c1_i32_208 dim 1 : vector<4x384xf32>, i32 -> vector<4x384xf32>
    %c168_209 = arith.constant 168 : index
    %c0_210 = arith.constant 0 : index
    %227 = vector.load %arg6[%c168_209, %c0_210] : memref<360x384xf32, #tpu.memory_space<vmem>>, vector<4x384xf32>
    tpu.vector_store %arg6[%c168_209, %c0_210], %226 {strides = array<i32>} : memref<360x384xf32, #tpu.memory_space<vmem>>, vector<4x384xf32>,
    %c176_211 = arith.constant 176 : index
    %c0_212 = arith.constant 0 : index
    %228 = vector.load %arg6[%c176_211, %c0_212] : memref<360x384xf32, #tpu.memory_space<vmem>>, vector<4x384xf32>
    tpu.vector_store %arg6[%c176_211, %c0_212], %219 {strides = array<i32>} : memref<360x384xf32, #tpu.memory_space<vmem>>, vector<4x384xf32>,
    %c383_i32_213 = arith.constant 383 : i32
    %229 = tpu.dynamic_rotate %219 by %c383_i32_213 dim 1 : vector<4x384xf32>, i32 -> vector<4x384xf32>
    %c184_214 = arith.constant 184 : index
    %c0_215 = arith.constant 0 : index
    %230 = vector.load %arg6[%c184_214, %c0_215] : memref<360x384xf32, #tpu.memory_space<vmem>>, vector<4x384xf32>
    tpu.vector_store %arg6[%c184_214, %c0_215], %229 {strides = array<i32>} : memref<360x384xf32, #tpu.memory_space<vmem>>, vector<4x384xf32>,
    %c367_i32_216 = arith.constant 367 : i32
    %231 = tpu.dynamic_rotate %219 by %c367_i32_216 dim 1 : vector<4x384xf32>, i32 -> vector<4x384xf32>
    %c192_217 = arith.constant 192 : index
    %c0_218 = arith.constant 0 : index
    %232 = vector.load %arg6[%c192_217, %c0_218] : memref<360x384xf32, #tpu.memory_space<vmem>>, vector<4x384xf32>
    tpu.vector_store %arg6[%c192_217, %c0_218], %231 {strides = array<i32>} : memref<360x384xf32, #tpu.memory_space<vmem>>, vector<4x384xf32>,
    %c366_i32_219 = arith.constant 366 : i32
    %233 = tpu.dynamic_rotate %219 by %c366_i32_219 dim 1 : vector<4x384xf32>, i32 -> vector<4x384xf32>
    %c200_220 = arith.constant 200 : index
    %c0_221 = arith.constant 0 : index
    %234 = vector.load %arg6[%c200_220, %c0_221] : memref<360x384xf32, #tpu.memory_space<vmem>>, vector<4x384xf32>
    tpu.vector_store %arg6[%c200_220, %c0_221], %233 {strides = array<i32>} : memref<360x384xf32, #tpu.memory_space<vmem>>, vector<4x384xf32>,
    %c365_i32_222 = arith.constant 365 : i32
    %235 = tpu.dynamic_rotate %219 by %c365_i32_222 dim 1 : vector<4x384xf32>, i32 -> vector<4x384xf32>
    %c208_223 = arith.constant 208 : index
    %c0_224 = arith.constant 0 : index
    %236 = vector.load %arg6[%c208_223, %c0_224] : memref<360x384xf32, #tpu.memory_space<vmem>>, vector<4x384xf32>
    tpu.vector_store %arg6[%c208_223, %c0_224], %235 {strides = array<i32>} : memref<360x384xf32, #tpu.memory_space<vmem>>, vector<4x384xf32>,
    %c0_225 = arith.constant 0 : index
    %c0_226 = arith.constant 0 : index
    %237 = vector.load %arg6[%c0_225, %c0_226] : memref<360x384xf32, #tpu.memory_space<vmem>>, vector<216x384xf32>
    %238 = arith.truncf %237 : vector<216x384xf32> to vector<216x384xbf16>
    %c7 = arith.constant 7 : index
    %c0_227 = arith.constant 0 : index
    %c0_228 = arith.constant 0 : index
    %239 = vector.load %arg3[%c7, %c0_227, %c0_228] : memref<15x4x360xbf16, #tpu.memory_space<vmem>>, vector<1x4x216xbf16>
    %240 = vector.shape_cast %239 : vector<1x4x216xbf16> to vector<4x216xbf16>
    %cst_229 = arith.constant dense<0.000000e+00> : vector<4x384xf32>
    %241 = tpu.matmul %240, %238, %cst_229 {dimension_numbers = #tpu.dot_dimension_numbers<[1], [0], [0], [1], [0, 0, 1, 1], [], []>} : vector<4x216xbf16>, vector<216x384xbf16>, vector<4x384xf32> -> vector<4x384xf32>
    %c7_230 = arith.constant 7 : index
    %c0_231 = arith.constant 0 : index
    %c0_232 = arith.constant 0 : index
    %242 = vector.load %arg4[%c7_230, %c0_231, %c0_232] : memref<15x4x1xf32, #tpu.memory_space<vmem>>, vector<1x4x1xf32>
    %243 = vector.shape_cast %242 : vector<1x4x1xf32> to vector<4x1xf32>
    %244 = vector.broadcast %243 : vector<4x1xf32> to vector<4x384xf32>
    %245 = arith.addf %241, %244 : vector<4x384xf32>
    %cst_233 = arith.constant 0.00999999977 : f32
    %246 = vector.broadcast %cst_233 : f32 to vector<4x384xf32>
    %247 = arith.mulf %246, %245 : vector<4x384xf32>
    %248 = arith.maximumf %245, %247 : vector<4x384xf32>
    %249 = vector.broadcast %0 : vector<1x384xf32> to vector<4x384xf32>
    %250 = arith.mulf %248, %249 : vector<4x384xf32>
    %c19_i32_234 = arith.constant 19 : i32
    %251 = tpu.dynamic_rotate %250 by %c19_i32_234 dim 1 : vector<4x384xf32>, i32 -> vector<4x384xf32>
    %c216_235 = arith.constant 216 : index
    %c0_236 = arith.constant 0 : index
    %252 = vector.load %arg6[%c216_235, %c0_236] : memref<360x384xf32, #tpu.memory_space<vmem>>, vector<4x384xf32>
    tpu.vector_store %arg6[%c216_235, %c0_236], %251 {strides = array<i32>} : memref<360x384xf32, #tpu.memory_space<vmem>>, vector<4x384xf32>,
    %c18_i32_237 = arith.constant 18 : i32
    %253 = tpu.dynamic_rotate %250 by %c18_i32_237 dim 1 : vector<4x384xf32>, i32 -> vector<4x384xf32>
    %c224_238 = arith.constant 224 : index
    %c0_239 = arith.constant 0 : index
    %254 = vector.load %arg6[%c224_238, %c0_239] : memref<360x384xf32, #tpu.memory_space<vmem>>, vector<4x384xf32>
    tpu.vector_store %arg6[%c224_238, %c0_239], %253 {strides = array<i32>} : memref<360x384xf32, #tpu.memory_space<vmem>>, vector<4x384xf32>,
    %c17_i32_240 = arith.constant 17 : i32
    %255 = tpu.dynamic_rotate %250 by %c17_i32_240 dim 1 : vector<4x384xf32>, i32 -> vector<4x384xf32>
    %c232_241 = arith.constant 232 : index
    %c0_242 = arith.constant 0 : index
    %256 = vector.load %arg6[%c232_241, %c0_242] : memref<360x384xf32, #tpu.memory_space<vmem>>, vector<4x384xf32>
    tpu.vector_store %arg6[%c232_241, %c0_242], %255 {strides = array<i32>} : memref<360x384xf32, #tpu.memory_space<vmem>>, vector<4x384xf32>,
    %c1_i32_243 = arith.constant 1 : i32
    %257 = tpu.dynamic_rotate %250 by %c1_i32_243 dim 1 : vector<4x384xf32>, i32 -> vector<4x384xf32>
    %c240_244 = arith.constant 240 : index
    %c0_245 = arith.constant 0 : index
    %258 = vector.load %arg6[%c240_244, %c0_245] : memref<360x384xf32, #tpu.memory_space<vmem>>, vector<4x384xf32>
    tpu.vector_store %arg6[%c240_244, %c0_245], %257 {strides = array<i32>} : memref<360x384xf32, #tpu.memory_space<vmem>>, vector<4x384xf32>,
    %c248_246 = arith.constant 248 : index
    %c0_247 = arith.constant 0 : index
    %259 = vector.load %arg6[%c248_246, %c0_247] : memref<360x384xf32, #tpu.memory_space<vmem>>, vector<4x384xf32>
    tpu.vector_store %arg6[%c248_246, %c0_247], %250 {strides = array<i32>} : memref<360x384xf32, #tpu.memory_space<vmem>>, vector<4x384xf32>,
    %c383_i32_248 = arith.constant 383 : i32
    %260 = tpu.dynamic_rotate %250 by %c383_i32_248 dim 1 : vector<4x384xf32>, i32 -> vector<4x384xf32>
    %c256_249 = arith.constant 256 : index
    %c0_250 = arith.constant 0 : index
    %261 = vector.load %arg6[%c256_249, %c0_250] : memref<360x384xf32, #tpu.memory_space<vmem>>, vector<4x384xf32>
    tpu.vector_store %arg6[%c256_249, %c0_250], %260 {strides = array<i32>} : memref<360x384xf32, #tpu.memory_space<vmem>>, vector<4x384xf32>,
    %c367_i32_251 = arith.constant 367 : i32
    %262 = tpu.dynamic_rotate %250 by %c367_i32_251 dim 1 : vector<4x384xf32>, i32 -> vector<4x384xf32>
    %c264_252 = arith.constant 264 : index
    %c0_253 = arith.constant 0 : index
    %263 = vector.load %arg6[%c264_252, %c0_253] : memref<360x384xf32, #tpu.memory_space<vmem>>, vector<4x384xf32>
    tpu.vector_store %arg6[%c264_252, %c0_253], %262 {strides = array<i32>} : memref<360x384xf32, #tpu.memory_space<vmem>>, vector<4x384xf32>,
    %c366_i32_254 = arith.constant 366 : i32
    %264 = tpu.dynamic_rotate %250 by %c366_i32_254 dim 1 : vector<4x384xf32>, i32 -> vector<4x384xf32>
    %c272_255 = arith.constant 272 : index
    %c0_256 = arith.constant 0 : index
    %265 = vector.load %arg6[%c272_255, %c0_256] : memref<360x384xf32, #tpu.memory_space<vmem>>, vector<4x384xf32>
    tpu.vector_store %arg6[%c272_255, %c0_256], %264 {strides = array<i32>} : memref<360x384xf32, #tpu.memory_space<vmem>>, vector<4x384xf32>,
    %c365_i32_257 = arith.constant 365 : i32
    %266 = tpu.dynamic_rotate %250 by %c365_i32_257 dim 1 : vector<4x384xf32>, i32 -> vector<4x384xf32>
    %c280_258 = arith.constant 280 : index
    %c0_259 = arith.constant 0 : index
    %267 = vector.load %arg6[%c280_258, %c0_259] : memref<360x384xf32, #tpu.memory_space<vmem>>, vector<4x384xf32>
    tpu.vector_store %arg6[%c280_258, %c0_259], %266 {strides = array<i32>} : memref<360x384xf32, #tpu.memory_space<vmem>>, vector<4x384xf32>,
    %c0_260 = arith.constant 0 : index
    %c0_261 = arith.constant 0 : index
    %268 = vector.load %arg6[%c0_260, %c0_261] : memref<360x384xf32, #tpu.memory_space<vmem>>, vector<288x384xf32>
    %269 = arith.truncf %268 : vector<288x384xf32> to vector<288x384xbf16>
    %c8_262 = arith.constant 8 : index
    %c0_263 = arith.constant 0 : index
    %c0_264 = arith.constant 0 : index
    %270 = vector.load %arg3[%c8_262, %c0_263, %c0_264] : memref<15x4x360xbf16, #tpu.memory_space<vmem>>, vector<1x4x288xbf16>
    %271 = vector.shape_cast %270 : vector<1x4x288xbf16> to vector<4x288xbf16>
    %cst_265 = arith.constant dense<0.000000e+00> : vector<4x384xf32>
    %272 = tpu.matmul %271, %269, %cst_265 {dimension_numbers = #tpu.dot_dimension_numbers<[1], [0], [0], [1], [0, 0, 1, 1], [], []>} : vector<4x288xbf16>, vector<288x384xbf16>, vector<4x384xf32> -> vector<4x384xf32>
    %c8_266 = arith.constant 8 : index
    %c0_267 = arith.constant 0 : index
    %c0_268 = arith.constant 0 : index
    %273 = vector.load %arg4[%c8_266, %c0_267, %c0_268] : memref<15x4x1xf32, #tpu.memory_space<vmem>>, vector<1x4x1xf32>
    %274 = vector.shape_cast %273 : vector<1x4x1xf32> to vector<4x1xf32>
    %275 = vector.broadcast %274 : vector<4x1xf32> to vector<4x384xf32>
    %276 = arith.addf %272, %275 : vector<4x384xf32>
    %cst_269 = arith.constant 0.00999999977 : f32
    %277 = vector.broadcast %cst_269 : f32 to vector<4x384xf32>
    %278 = arith.mulf %277, %276 : vector<4x384xf32>
    %279 = arith.maximumf %276, %278 : vector<4x384xf32>
    %280 = vector.broadcast %0 : vector<1x384xf32> to vector<4x384xf32>
    %281 = arith.mulf %279, %280 : vector<4x384xf32>
    %c19_i32_270 = arith.constant 19 : i32
    %282 = tpu.dynamic_rotate %281 by %c19_i32_270 dim 1 : vector<4x384xf32>, i32 -> vector<4x384xf32>
    %c288_271 = arith.constant 288 : index
    %c0_272 = arith.constant 0 : index
    %283 = vector.load %arg6[%c288_271, %c0_272] : memref<360x384xf32, #tpu.memory_space<vmem>>, vector<4x384xf32>
    tpu.vector_store %arg6[%c288_271, %c0_272], %282 {strides = array<i32>} : memref<360x384xf32, #tpu.memory_space<vmem>>, vector<4x384xf32>,
    %c18_i32_273 = arith.constant 18 : i32
    %284 = tpu.dynamic_rotate %281 by %c18_i32_273 dim 1 : vector<4x384xf32>, i32 -> vector<4x384xf32>
    %c296_274 = arith.constant 296 : index
    %c0_275 = arith.constant 0 : index
    %285 = vector.load %arg6[%c296_274, %c0_275] : memref<360x384xf32, #tpu.memory_space<vmem>>, vector<4x384xf32>
    tpu.vector_store %arg6[%c296_274, %c0_275], %284 {strides = array<i32>} : memref<360x384xf32, #tpu.memory_space<vmem>>, vector<4x384xf32>,
    %c17_i32_276 = arith.constant 17 : i32
    %286 = tpu.dynamic_rotate %281 by %c17_i32_276 dim 1 : vector<4x384xf32>, i32 -> vector<4x384xf32>
    %c304_277 = arith.constant 304 : index
    %c0_278 = arith.constant 0 : index
    %287 = vector.load %arg6[%c304_277, %c0_278] : memref<360x384xf32, #tpu.memory_space<vmem>>, vector<4x384xf32>
    tpu.vector_store %arg6[%c304_277, %c0_278], %286 {strides = array<i32>} : memref<360x384xf32, #tpu.memory_space<vmem>>, vector<4x384xf32>,
    %c1_i32_279 = arith.constant 1 : i32
    %288 = tpu.dynamic_rotate %281 by %c1_i32_279 dim 1 : vector<4x384xf32>, i32 -> vector<4x384xf32>
    %c312_280 = arith.constant 312 : index
    %c0_281 = arith.constant 0 : index
    %289 = vector.load %arg6[%c312_280, %c0_281] : memref<360x384xf32, #tpu.memory_space<vmem>>, vector<4x384xf32>
    tpu.vector_store %arg6[%c312_280, %c0_281], %288 {strides = array<i32>} : memref<360x384xf32, #tpu.memory_space<vmem>>, vector<4x384xf32>,
    %c320_282 = arith.constant 320 : index
    %c0_283 = arith.constant 0 : index
    %290 = vector.load %arg6[%c320_282, %c0_283] : memref<360x384xf32, #tpu.memory_space<vmem>>, vector<4x384xf32>
    tpu.vector_store %arg6[%c320_282, %c0_283], %281 {strides = array<i32>} : memref<360x384xf32, #tpu.memory_space<vmem>>, vector<4x384xf32>,
    %c383_i32_284 = arith.constant 383 : i32
    %291 = tpu.dynamic_rotate %281 by %c383_i32_284 dim 1 : vector<4x384xf32>, i32 -> vector<4x384xf32>
    %c328_285 = arith.constant 328 : index
    %c0_286 = arith.constant 0 : index
    %292 = vector.load %arg6[%c328_285, %c0_286] : memref<360x384xf32, #tpu.memory_space<vmem>>, vector<4x384xf32>
    tpu.vector_store %arg6[%c328_285, %c0_286], %291 {strides = array<i32>} : memref<360x384xf32, #tpu.memory_space<vmem>>, vector<4x384xf32>,
    %c367_i32_287 = arith.constant 367 : i32
    %293 = tpu.dynamic_rotate %281 by %c367_i32_287 dim 1 : vector<4x384xf32>, i32 -> vector<4x384xf32>
    %c336_288 = arith.constant 336 : index
    %c0_289 = arith.constant 0 : index
    %294 = vector.load %arg6[%c336_288, %c0_289] : memref<360x384xf32, #tpu.memory_space<vmem>>, vector<4x384xf32>
    tpu.vector_store %arg6[%c336_288, %c0_289], %293 {strides = array<i32>} : memref<360x384xf32, #tpu.memory_space<vmem>>, vector<4x384xf32>,
    %c366_i32_290 = arith.constant 366 : i32
    %295 = tpu.dynamic_rotate %281 by %c366_i32_290 dim 1 : vector<4x384xf32>, i32 -> vector<4x384xf32>
    %c344_291 = arith.constant 344 : index
    %c0_292 = arith.constant 0 : index
    %296 = vector.load %arg6[%c344_291, %c0_292] : memref<360x384xf32, #tpu.memory_space<vmem>>, vector<4x384xf32>
    tpu.vector_store %arg6[%c344_291, %c0_292], %295 {strides = array<i32>} : memref<360x384xf32, #tpu.memory_space<vmem>>, vector<4x384xf32>,
    %c365_i32_293 = arith.constant 365 : i32
    %297 = tpu.dynamic_rotate %281 by %c365_i32_293 dim 1 : vector<4x384xf32>, i32 -> vector<4x384xf32>
    %c352_294 = arith.constant 352 : index
    %c0_295 = arith.constant 0 : index
    %298 = vector.load %arg6[%c352_294, %c0_295] : memref<360x384xf32, #tpu.memory_space<vmem>>, vector<4x384xf32>
    tpu.vector_store %arg6[%c352_294, %c0_295], %297 {strides = array<i32>} : memref<360x384xf32, #tpu.memory_space<vmem>>, vector<4x384xf32>,
    %c0_296 = arith.constant 0 : index
    %c0_297 = arith.constant 0 : index
    %299 = vector.load %arg6[%c0_296, %c0_297] : memref<360x384xf32, #tpu.memory_space<vmem>>, vector<360x384xf32>
    %300 = arith.truncf %299 : vector<360x384xf32> to vector<360x384xbf16>
    %c9 = arith.constant 9 : index
    %c0_298 = arith.constant 0 : index
    %c0_299 = arith.constant 0 : index
    %301 = vector.load %arg3[%c9, %c0_298, %c0_299] : memref<15x4x360xbf16, #tpu.memory_space<vmem>>, vector<1x4x360xbf16>
    %302 = vector.shape_cast %301 : vector<1x4x360xbf16> to vector<4x360xbf16>
    %cst_300 = arith.constant dense<0.000000e+00> : vector<4x384xf32>
    %303 = tpu.matmul %302, %300, %cst_300 {dimension_numbers = #tpu.dot_dimension_numbers<[1], [0], [0], [1], [0, 0, 1, 1], [], []>} : vector<4x360xbf16>, vector<360x384xbf16>, vector<4x384xf32> -> vector<4x384xf32>
    %c9_301 = arith.constant 9 : index
    %c0_302 = arith.constant 0 : index
    %c0_303 = arith.constant 0 : index
    %304 = vector.load %arg4[%c9_301, %c0_302, %c0_303] : memref<15x4x1xf32, #tpu.memory_space<vmem>>, vector<1x4x1xf32>
    %305 = vector.shape_cast %304 : vector<1x4x1xf32> to vector<4x1xf32>
    %306 = vector.broadcast %305 : vector<4x1xf32> to vector<4x384xf32>
    %307 = arith.addf %303, %306 : vector<4x384xf32>
    %308 = vector.broadcast %0 : vector<1x384xf32> to vector<4x384xf32>
    %309 = arith.mulf %307, %308 : vector<4x384xf32>
    %310 = arith.addf %309, %157 : vector<4x384xf32>
    %c19_i32_304 = arith.constant 19 : i32
    %311 = tpu.dynamic_rotate %310 by %c19_i32_304 dim 1 : vector<4x384xf32>, i32 -> vector<4x384xf32>
    %c0_305 = arith.constant 0 : index
    %c0_306 = arith.constant 0 : index
    %312 = vector.load %arg6[%c0_305, %c0_306] : memref<360x384xf32, #tpu.memory_space<vmem>>, vector<4x384xf32>
    tpu.vector_store %arg6[%c0_305, %c0_306], %311 {strides = array<i32>} : memref<360x384xf32, #tpu.memory_space<vmem>>, vector<4x384xf32>,
    %c18_i32_307 = arith.constant 18 : i32
    %313 = tpu.dynamic_rotate %310 by %c18_i32_307 dim 1 : vector<4x384xf32>, i32 -> vector<4x384xf32>
    %c8_308 = arith.constant 8 : index
    %c0_309 = arith.constant 0 : index
    %314 = vector.load %arg6[%c8_308, %c0_309] : memref<360x384xf32, #tpu.memory_space<vmem>>, vector<4x384xf32>
    tpu.vector_store %arg6[%c8_308, %c0_309], %313 {strides = array<i32>} : memref<360x384xf32, #tpu.memory_space<vmem>>, vector<4x384xf32>,
    %c17_i32_310 = arith.constant 17 : i32
    %315 = tpu.dynamic_rotate %310 by %c17_i32_310 dim 1 : vector<4x384xf32>, i32 -> vector<4x384xf32>
    %c16_311 = arith.constant 16 : index
    %c0_312 = arith.constant 0 : index
    %316 = vector.load %arg6[%c16_311, %c0_312] : memref<360x384xf32, #tpu.memory_space<vmem>>, vector<4x384xf32>
    tpu.vector_store %arg6[%c16_311, %c0_312], %315 {strides = array<i32>} : memref<360x384xf32, #tpu.memory_space<vmem>>, vector<4x384xf32>,
    %c1_i32_313 = arith.constant 1 : i32
    %317 = tpu.dynamic_rotate %310 by %c1_i32_313 dim 1 : vector<4x384xf32>, i32 -> vector<4x384xf32>
    %c24_314 = arith.constant 24 : index
    %c0_315 = arith.constant 0 : index
    %318 = vector.load %arg6[%c24_314, %c0_315] : memref<360x384xf32, #tpu.memory_space<vmem>>, vector<4x384xf32>
    tpu.vector_store %arg6[%c24_314, %c0_315], %317 {strides = array<i32>} : memref<360x384xf32, #tpu.memory_space<vmem>>, vector<4x384xf32>,
    %c32_316 = arith.constant 32 : index
    %c0_317 = arith.constant 0 : index
    %319 = vector.load %arg6[%c32_316, %c0_317] : memref<360x384xf32, #tpu.memory_space<vmem>>, vector<4x384xf32>
    tpu.vector_store %arg6[%c32_316, %c0_317], %310 {strides = array<i32>} : memref<360x384xf32, #tpu.memory_space<vmem>>, vector<4x384xf32>,
    %c383_i32_318 = arith.constant 383 : i32
    %320 = tpu.dynamic_rotate %310 by %c383_i32_318 dim 1 : vector<4x384xf32>, i32 -> vector<4x384xf32>
    %c40_319 = arith.constant 40 : index
    %c0_320 = arith.constant 0 : index
    %321 = vector.load %arg6[%c40_319, %c0_320] : memref<360x384xf32, #tpu.memory_space<vmem>>, vector<4x384xf32>
    tpu.vector_store %arg6[%c40_319, %c0_320], %320 {strides = array<i32>} : memref<360x384xf32, #tpu.memory_space<vmem>>, vector<4x384xf32>,
    %c367_i32_321 = arith.constant 367 : i32
    %322 = tpu.dynamic_rotate %310 by %c367_i32_321 dim 1 : vector<4x384xf32>, i32 -> vector<4x384xf32>
    %c48_322 = arith.constant 48 : index
    %c0_323 = arith.constant 0 : index
    %323 = vector.load %arg6[%c48_322, %c0_323] : memref<360x384xf32, #tpu.memory_space<vmem>>, vector<4x384xf32>
    tpu.vector_store %arg6[%c48_322, %c0_323], %322 {strides = array<i32>} : memref<360x384xf32, #tpu.memory_space<vmem>>, vector<4x384xf32>,
    %c366_i32_324 = arith.constant 366 : i32
    %324 = tpu.dynamic_rotate %310 by %c366_i32_324 dim 1 : vector<4x384xf32>, i32 -> vector<4x384xf32>
    %c56_325 = arith.constant 56 : index
    %c0_326 = arith.constant 0 : index
    %325 = vector.load %arg6[%c56_325, %c0_326] : memref<360x384xf32, #tpu.memory_space<vmem>>, vector<4x384xf32>
    tpu.vector_store %arg6[%c56_325, %c0_326], %324 {strides = array<i32>} : memref<360x384xf32, #tpu.memory_space<vmem>>, vector<4x384xf32>,
    %c365_i32_327 = arith.constant 365 : i32
    %326 = tpu.dynamic_rotate %310 by %c365_i32_327 dim 1 : vector<4x384xf32>, i32 -> vector<4x384xf32>
    %c64_328 = arith.constant 64 : index
    %c0_329 = arith.constant 0 : index
    %327 = vector.load %arg6[%c64_328, %c0_329] : memref<360x384xf32, #tpu.memory_space<vmem>>, vector<4x384xf32>
    tpu.vector_store %arg6[%c64_328, %c0_329], %326 {strides = array<i32>} : memref<360x384xf32, #tpu.memory_space<vmem>>, vector<4x384xf32>,
    %c0_330 = arith.constant 0 : index
    %c0_331 = arith.constant 0 : index
    %328 = vector.load %arg6[%c0_330, %c0_331] : memref<360x384xf32, #tpu.memory_space<vmem>>, vector<72x384xf32>
    %329 = arith.truncf %328 : vector<72x384xf32> to vector<72x384xbf16>
    %c10 = arith.constant 10 : index
    %c0_332 = arith.constant 0 : index
    %c0_333 = arith.constant 0 : index
    %330 = vector.load %arg3[%c10, %c0_332, %c0_333] : memref<15x4x360xbf16, #tpu.memory_space<vmem>>, vector<1x4x72xbf16>
    %331 = vector.shape_cast %330 : vector<1x4x72xbf16> to vector<4x72xbf16>
    %cst_334 = arith.constant dense<0.000000e+00> : vector<4x384xf32>
    %332 = tpu.matmul %331, %329, %cst_334 {dimension_numbers = #tpu.dot_dimension_numbers<[1], [0], [0], [1], [0, 0, 1, 1], [], []>} : vector<4x72xbf16>, vector<72x384xbf16>, vector<4x384xf32> -> vector<4x384xf32>
    %c10_335 = arith.constant 10 : index
    %c0_336 = arith.constant 0 : index
    %c0_337 = arith.constant 0 : index
    %333 = vector.load %arg4[%c10_335, %c0_336, %c0_337] : memref<15x4x1xf32, #tpu.memory_space<vmem>>, vector<1x4x1xf32>
    %334 = vector.shape_cast %333 : vector<1x4x1xf32> to vector<4x1xf32>
    %335 = vector.broadcast %334 : vector<4x1xf32> to vector<4x384xf32>
    %336 = arith.addf %332, %335 : vector<4x384xf32>
    %cst_338 = arith.constant 0.00999999977 : f32
    %337 = vector.broadcast %cst_338 : f32 to vector<4x384xf32>
    %338 = arith.mulf %337, %336 : vector<4x384xf32>
    %339 = arith.maximumf %336, %338 : vector<4x384xf32>
    %340 = vector.broadcast %0 : vector<1x384xf32> to vector<4x384xf32>
    %341 = arith.mulf %339, %340 : vector<4x384xf32>
    %c19_i32_339 = arith.constant 19 : i32
    %342 = tpu.dynamic_rotate %341 by %c19_i32_339 dim 1 : vector<4x384xf32>, i32 -> vector<4x384xf32>
    %c72_340 = arith.constant 72 : index
    %c0_341 = arith.constant 0 : index
    %343 = vector.load %arg6[%c72_340, %c0_341] : memref<360x384xf32, #tpu.memory_space<vmem>>, vector<4x384xf32>
    tpu.vector_store %arg6[%c72_340, %c0_341], %342 {strides = array<i32>} : memref<360x384xf32, #tpu.memory_space<vmem>>, vector<4x384xf32>,
    %c18_i32_342 = arith.constant 18 : i32
    %344 = tpu.dynamic_rotate %341 by %c18_i32_342 dim 1 : vector<4x384xf32>, i32 -> vector<4x384xf32>
    %c80_343 = arith.constant 80 : index
    %c0_344 = arith.constant 0 : index
    %345 = vector.load %arg6[%c80_343, %c0_344] : memref<360x384xf32, #tpu.memory_space<vmem>>, vector<4x384xf32>
    tpu.vector_store %arg6[%c80_343, %c0_344], %344 {strides = array<i32>} : memref<360x384xf32, #tpu.memory_space<vmem>>, vector<4x384xf32>,
    %c17_i32_345 = arith.constant 17 : i32
    %346 = tpu.dynamic_rotate %341 by %c17_i32_345 dim 1 : vector<4x384xf32>, i32 -> vector<4x384xf32>
    %c88_346 = arith.constant 88 : index
    %c0_347 = arith.constant 0 : index
    %347 = vector.load %arg6[%c88_346, %c0_347] : memref<360x384xf32, #tpu.memory_space<vmem>>, vector<4x384xf32>
    tpu.vector_store %arg6[%c88_346, %c0_347], %346 {strides = array<i32>} : memref<360x384xf32, #tpu.memory_space<vmem>>, vector<4x384xf32>,
    %c1_i32_348 = arith.constant 1 : i32
    %348 = tpu.dynamic_rotate %341 by %c1_i32_348 dim 1 : vector<4x384xf32>, i32 -> vector<4x384xf32>
    %c96_349 = arith.constant 96 : index
    %c0_350 = arith.constant 0 : index
    %349 = vector.load %arg6[%c96_349, %c0_350] : memref<360x384xf32, #tpu.memory_space<vmem>>, vector<4x384xf32>
    tpu.vector_store %arg6[%c96_349, %c0_350], %348 {strides = array<i32>} : memref<360x384xf32, #tpu.memory_space<vmem>>, vector<4x384xf32>,
    %c104_351 = arith.constant 104 : index
    %c0_352 = arith.constant 0 : index
    %350 = vector.load %arg6[%c104_351, %c0_352] : memref<360x384xf32, #tpu.memory_space<vmem>>, vector<4x384xf32>
    tpu.vector_store %arg6[%c104_351, %c0_352], %341 {strides = array<i32>} : memref<360x384xf32, #tpu.memory_space<vmem>>, vector<4x384xf32>,
    %c383_i32_353 = arith.constant 383 : i32
    %351 = tpu.dynamic_rotate %341 by %c383_i32_353 dim 1 : vector<4x384xf32>, i32 -> vector<4x384xf32>
    %c112_354 = arith.constant 112 : index
    %c0_355 = arith.constant 0 : index
    %352 = vector.load %arg6[%c112_354, %c0_355] : memref<360x384xf32, #tpu.memory_space<vmem>>, vector<4x384xf32>
    tpu.vector_store %arg6[%c112_354, %c0_355], %351 {strides = array<i32>} : memref<360x384xf32, #tpu.memory_space<vmem>>, vector<4x384xf32>,
    %c367_i32_356 = arith.constant 367 : i32
    %353 = tpu.dynamic_rotate %341 by %c367_i32_356 dim 1 : vector<4x384xf32>, i32 -> vector<4x384xf32>
    %c120_357 = arith.constant 120 : index
    %c0_358 = arith.constant 0 : index
    %354 = vector.load %arg6[%c120_357, %c0_358] : memref<360x384xf32, #tpu.memory_space<vmem>>, vector<4x384xf32>
    tpu.vector_store %arg6[%c120_357, %c0_358], %353 {strides = array<i32>} : memref<360x384xf32, #tpu.memory_space<vmem>>, vector<4x384xf32>,
    %c366_i32_359 = arith.constant 366 : i32
    %355 = tpu.dynamic_rotate %341 by %c366_i32_359 dim 1 : vector<4x384xf32>, i32 -> vector<4x384xf32>
    %c128_360 = arith.constant 128 : index
    %c0_361 = arith.constant 0 : index
    %356 = vector.load %arg6[%c128_360, %c0_361] : memref<360x384xf32, #tpu.memory_space<vmem>>, vector<4x384xf32>
    tpu.vector_store %arg6[%c128_360, %c0_361], %355 {strides = array<i32>} : memref<360x384xf32, #tpu.memory_space<vmem>>, vector<4x384xf32>,
    %c365_i32_362 = arith.constant 365 : i32
    %357 = tpu.dynamic_rotate %341 by %c365_i32_362 dim 1 : vector<4x384xf32>, i32 -> vector<4x384xf32>
    %c136_363 = arith.constant 136 : index
    %c0_364 = arith.constant 0 : index
    %358 = vector.load %arg6[%c136_363, %c0_364] : memref<360x384xf32, #tpu.memory_space<vmem>>, vector<4x384xf32>
    tpu.vector_store %arg6[%c136_363, %c0_364], %357 {strides = array<i32>} : memref<360x384xf32, #tpu.memory_space<vmem>>, vector<4x384xf32>,
    %c0_365 = arith.constant 0 : index
    %c0_366 = arith.constant 0 : index
    %359 = vector.load %arg6[%c0_365, %c0_366] : memref<360x384xf32, #tpu.memory_space<vmem>>, vector<144x384xf32>
    %360 = arith.truncf %359 : vector<144x384xf32> to vector<144x384xbf16>
    %c11 = arith.constant 11 : index
    %c0_367 = arith.constant 0 : index
    %c0_368 = arith.constant 0 : index
    %361 = vector.load %arg3[%c11, %c0_367, %c0_368] : memref<15x4x360xbf16, #tpu.memory_space<vmem>>, vector<1x4x144xbf16>
    %362 = vector.shape_cast %361 : vector<1x4x144xbf16> to vector<4x144xbf16>
    %cst_369 = arith.constant dense<0.000000e+00> : vector<4x384xf32>
    %363 = tpu.matmul %362, %360, %cst_369 {dimension_numbers = #tpu.dot_dimension_numbers<[1], [0], [0], [1], [0, 0, 1, 1], [], []>} : vector<4x144xbf16>, vector<144x384xbf16>, vector<4x384xf32> -> vector<4x384xf32>
    %c11_370 = arith.constant 11 : index
    %c0_371 = arith.constant 0 : index
    %c0_372 = arith.constant 0 : index
    %364 = vector.load %arg4[%c11_370, %c0_371, %c0_372] : memref<15x4x1xf32, #tpu.memory_space<vmem>>, vector<1x4x1xf32>
    %365 = vector.shape_cast %364 : vector<1x4x1xf32> to vector<4x1xf32>
    %366 = vector.broadcast %365 : vector<4x1xf32> to vector<4x384xf32>
    %367 = arith.addf %363, %366 : vector<4x384xf32>
    %cst_373 = arith.constant 0.00999999977 : f32
    %368 = vector.broadcast %cst_373 : f32 to vector<4x384xf32>
    %369 = arith.mulf %368, %367 : vector<4x384xf32>
    %370 = arith.maximumf %367, %369 : vector<4x384xf32>
    %371 = vector.broadcast %0 : vector<1x384xf32> to vector<4x384xf32>
    %372 = arith.mulf %370, %371 : vector<4x384xf32>
    %c19_i32_374 = arith.constant 19 : i32
    %373 = tpu.dynamic_rotate %372 by %c19_i32_374 dim 1 : vector<4x384xf32>, i32 -> vector<4x384xf32>
    %c144_375 = arith.constant 144 : index
    %c0_376 = arith.constant 0 : index
    %374 = vector.load %arg6[%c144_375, %c0_376] : memref<360x384xf32, #tpu.memory_space<vmem>>, vector<4x384xf32>
    tpu.vector_store %arg6[%c144_375, %c0_376], %373 {strides = array<i32>} : memref<360x384xf32, #tpu.memory_space<vmem>>, vector<4x384xf32>,
    %c18_i32_377 = arith.constant 18 : i32
    %375 = tpu.dynamic_rotate %372 by %c18_i32_377 dim 1 : vector<4x384xf32>, i32 -> vector<4x384xf32>
    %c152_378 = arith.constant 152 : index
    %c0_379 = arith.constant 0 : index
    %376 = vector.load %arg6[%c152_378, %c0_379] : memref<360x384xf32, #tpu.memory_space<vmem>>, vector<4x384xf32>
    tpu.vector_store %arg6[%c152_378, %c0_379], %375 {strides = array<i32>} : memref<360x384xf32, #tpu.memory_space<vmem>>, vector<4x384xf32>,
    %c17_i32_380 = arith.constant 17 : i32
    %377 = tpu.dynamic_rotate %372 by %c17_i32_380 dim 1 : vector<4x384xf32>, i32 -> vector<4x384xf32>
    %c160_381 = arith.constant 160 : index
    %c0_382 = arith.constant 0 : index
    %378 = vector.load %arg6[%c160_381, %c0_382] : memref<360x384xf32, #tpu.memory_space<vmem>>, vector<4x384xf32>
    tpu.vector_store %arg6[%c160_381, %c0_382], %377 {strides = array<i32>} : memref<360x384xf32, #tpu.memory_space<vmem>>, vector<4x384xf32>,
    %c1_i32_383 = arith.constant 1 : i32
    %379 = tpu.dynamic_rotate %372 by %c1_i32_383 dim 1 : vector<4x384xf32>, i32 -> vector<4x384xf32>
    %c168_384 = arith.constant 168 : index
    %c0_385 = arith.constant 0 : index
    %380 = vector.load %arg6[%c168_384, %c0_385] : memref<360x384xf32, #tpu.memory_space<vmem>>, vector<4x384xf32>
    tpu.vector_store %arg6[%c168_384, %c0_385], %379 {strides = array<i32>} : memref<360x384xf32, #tpu.memory_space<vmem>>, vector<4x384xf32>,
    %c176_386 = arith.constant 176 : index
    %c0_387 = arith.constant 0 : index
    %381 = vector.load %arg6[%c176_386, %c0_387] : memref<360x384xf32, #tpu.memory_space<vmem>>, vector<4x384xf32>
    tpu.vector_store %arg6[%c176_386, %c0_387], %372 {strides = array<i32>} : memref<360x384xf32, #tpu.memory_space<vmem>>, vector<4x384xf32>,
    %c383_i32_388 = arith.constant 383 : i32
    %382 = tpu.dynamic_rotate %372 by %c383_i32_388 dim 1 : vector<4x384xf32>, i32 -> vector<4x384xf32>
    %c184_389 = arith.constant 184 : index
    %c0_390 = arith.constant 0 : index
    %383 = vector.load %arg6[%c184_389, %c0_390] : memref<360x384xf32, #tpu.memory_space<vmem>>, vector<4x384xf32>
    tpu.vector_store %arg6[%c184_389, %c0_390], %382 {strides = array<i32>} : memref<360x384xf32, #tpu.memory_space<vmem>>, vector<4x384xf32>,
    %c367_i32_391 = arith.constant 367 : i32
    %384 = tpu.dynamic_rotate %372 by %c367_i32_391 dim 1 : vector<4x384xf32>, i32 -> vector<4x384xf32>
    %c192_392 = arith.constant 192 : index
    %c0_393 = arith.constant 0 : index
    %385 = vector.load %arg6[%c192_392, %c0_393] : memref<360x384xf32, #tpu.memory_space<vmem>>, vector<4x384xf32>
    tpu.vector_store %arg6[%c192_392, %c0_393], %384 {strides = array<i32>} : memref<360x384xf32, #tpu.memory_space<vmem>>, vector<4x384xf32>,
    %c366_i32_394 = arith.constant 366 : i32
    %386 = tpu.dynamic_rotate %372 by %c366_i32_394 dim 1 : vector<4x384xf32>, i32 -> vector<4x384xf32>
    %c200_395 = arith.constant 200 : index
    %c0_396 = arith.constant 0 : index
    %387 = vector.load %arg6[%c200_395, %c0_396] : memref<360x384xf32, #tpu.memory_space<vmem>>, vector<4x384xf32>
    tpu.vector_store %arg6[%c200_395, %c0_396], %386 {strides = array<i32>} : memref<360x384xf32, #tpu.memory_space<vmem>>, vector<4x384xf32>,
    %c365_i32_397 = arith.constant 365 : i32
    %388 = tpu.dynamic_rotate %372 by %c365_i32_397 dim 1 : vector<4x384xf32>, i32 -> vector<4x384xf32>
    %c208_398 = arith.constant 208 : index
    %c0_399 = arith.constant 0 : index
    %389 = vector.load %arg6[%c208_398, %c0_399] : memref<360x384xf32, #tpu.memory_space<vmem>>, vector<4x384xf32>
    tpu.vector_store %arg6[%c208_398, %c0_399], %388 {strides = array<i32>} : memref<360x384xf32, #tpu.memory_space<vmem>>, vector<4x384xf32>,
    %c0_400 = arith.constant 0 : index
    %c0_401 = arith.constant 0 : index
    %390 = vector.load %arg6[%c0_400, %c0_401] : memref<360x384xf32, #tpu.memory_space<vmem>>, vector<216x384xf32>
    %391 = arith.truncf %390 : vector<216x384xf32> to vector<216x384xbf16>
    %c12 = arith.constant 12 : index
    %c0_402 = arith.constant 0 : index
    %c0_403 = arith.constant 0 : index
    %392 = vector.load %arg3[%c12, %c0_402, %c0_403] : memref<15x4x360xbf16, #tpu.memory_space<vmem>>, vector<1x4x216xbf16>
    %393 = vector.shape_cast %392 : vector<1x4x216xbf16> to vector<4x216xbf16>
    %cst_404 = arith.constant dense<0.000000e+00> : vector<4x384xf32>
    %394 = tpu.matmul %393, %391, %cst_404 {dimension_numbers = #tpu.dot_dimension_numbers<[1], [0], [0], [1], [0, 0, 1, 1], [], []>} : vector<4x216xbf16>, vector<216x384xbf16>, vector<4x384xf32> -> vector<4x384xf32>
    %c12_405 = arith.constant 12 : index
    %c0_406 = arith.constant 0 : index
    %c0_407 = arith.constant 0 : index
    %395 = vector.load %arg4[%c12_405, %c0_406, %c0_407] : memref<15x4x1xf32, #tpu.memory_space<vmem>>, vector<1x4x1xf32>
    %396 = vector.shape_cast %395 : vector<1x4x1xf32> to vector<4x1xf32>
    %397 = vector.broadcast %396 : vector<4x1xf32> to vector<4x384xf32>
    %398 = arith.addf %394, %397 : vector<4x384xf32>
    %cst_408 = arith.constant 0.00999999977 : f32
    %399 = vector.broadcast %cst_408 : f32 to vector<4x384xf32>
    %400 = arith.mulf %399, %398 : vector<4x384xf32>
    %401 = arith.maximumf %398, %400 : vector<4x384xf32>
    %402 = vector.broadcast %0 : vector<1x384xf32> to vector<4x384xf32>
    %403 = arith.mulf %401, %402 : vector<4x384xf32>
    %c19_i32_409 = arith.constant 19 : i32
    %404 = tpu.dynamic_rotate %403 by %c19_i32_409 dim 1 : vector<4x384xf32>, i32 -> vector<4x384xf32>
    %c216_410 = arith.constant 216 : index
    %c0_411 = arith.constant 0 : index
    %405 = vector.load %arg6[%c216_410, %c0_411] : memref<360x384xf32, #tpu.memory_space<vmem>>, vector<4x384xf32>
    tpu.vector_store %arg6[%c216_410, %c0_411], %404 {strides = array<i32>} : memref<360x384xf32, #tpu.memory_space<vmem>>, vector<4x384xf32>,
    %c18_i32_412 = arith.constant 18 : i32
    %406 = tpu.dynamic_rotate %403 by %c18_i32_412 dim 1 : vector<4x384xf32>, i32 -> vector<4x384xf32>
    %c224_413 = arith.constant 224 : index
    %c0_414 = arith.constant 0 : index
    %407 = vector.load %arg6[%c224_413, %c0_414] : memref<360x384xf32, #tpu.memory_space<vmem>>, vector<4x384xf32>
    tpu.vector_store %arg6[%c224_413, %c0_414], %406 {strides = array<i32>} : memref<360x384xf32, #tpu.memory_space<vmem>>, vector<4x384xf32>,
    %c17_i32_415 = arith.constant 17 : i32
    %408 = tpu.dynamic_rotate %403 by %c17_i32_415 dim 1 : vector<4x384xf32>, i32 -> vector<4x384xf32>
    %c232_416 = arith.constant 232 : index
    %c0_417 = arith.constant 0 : index
    %409 = vector.load %arg6[%c232_416, %c0_417] : memref<360x384xf32, #tpu.memory_space<vmem>>, vector<4x384xf32>
    tpu.vector_store %arg6[%c232_416, %c0_417], %408 {strides = array<i32>} : memref<360x384xf32, #tpu.memory_space<vmem>>, vector<4x384xf32>,
    %c1_i32_418 = arith.constant 1 : i32
    %410 = tpu.dynamic_rotate %403 by %c1_i32_418 dim 1 : vector<4x384xf32>, i32 -> vector<4x384xf32>
    %c240_419 = arith.constant 240 : index
    %c0_420 = arith.constant 0 : index
    %411 = vector.load %arg6[%c240_419, %c0_420] : memref<360x384xf32, #tpu.memory_space<vmem>>, vector<4x384xf32>
    tpu.vector_store %arg6[%c240_419, %c0_420], %410 {strides = array<i32>} : memref<360x384xf32, #tpu.memory_space<vmem>>, vector<4x384xf32>,
    %c248_421 = arith.constant 248 : index
    %c0_422 = arith.constant 0 : index
    %412 = vector.load %arg6[%c248_421, %c0_422] : memref<360x384xf32, #tpu.memory_space<vmem>>, vector<4x384xf32>
    tpu.vector_store %arg6[%c248_421, %c0_422], %403 {strides = array<i32>} : memref<360x384xf32, #tpu.memory_space<vmem>>, vector<4x384xf32>,
    %c383_i32_423 = arith.constant 383 : i32
    %413 = tpu.dynamic_rotate %403 by %c383_i32_423 dim 1 : vector<4x384xf32>, i32 -> vector<4x384xf32>
    %c256_424 = arith.constant 256 : index
    %c0_425 = arith.constant 0 : index
    %414 = vector.load %arg6[%c256_424, %c0_425] : memref<360x384xf32, #tpu.memory_space<vmem>>, vector<4x384xf32>
    tpu.vector_store %arg6[%c256_424, %c0_425], %413 {strides = array<i32>} : memref<360x384xf32, #tpu.memory_space<vmem>>, vector<4x384xf32>,
    %c367_i32_426 = arith.constant 367 : i32
    %415 = tpu.dynamic_rotate %403 by %c367_i32_426 dim 1 : vector<4x384xf32>, i32 -> vector<4x384xf32>
    %c264_427 = arith.constant 264 : index
    %c0_428 = arith.constant 0 : index
    %416 = vector.load %arg6[%c264_427, %c0_428] : memref<360x384xf32, #tpu.memory_space<vmem>>, vector<4x384xf32>
    tpu.vector_store %arg6[%c264_427, %c0_428], %415 {strides = array<i32>} : memref<360x384xf32, #tpu.memory_space<vmem>>, vector<4x384xf32>,
    %c366_i32_429 = arith.constant 366 : i32
    %417 = tpu.dynamic_rotate %403 by %c366_i32_429 dim 1 : vector<4x384xf32>, i32 -> vector<4x384xf32>
    %c272_430 = arith.constant 272 : index
    %c0_431 = arith.constant 0 : index
    %418 = vector.load %arg6[%c272_430, %c0_431] : memref<360x384xf32, #tpu.memory_space<vmem>>, vector<4x384xf32>
    tpu.vector_store %arg6[%c272_430, %c0_431], %417 {strides = array<i32>} : memref<360x384xf32, #tpu.memory_space<vmem>>, vector<4x384xf32>,
    %c365_i32_432 = arith.constant 365 : i32
    %419 = tpu.dynamic_rotate %403 by %c365_i32_432 dim 1 : vector<4x384xf32>, i32 -> vector<4x384xf32>
    %c280_433 = arith.constant 280 : index
    %c0_434 = arith.constant 0 : index
    %420 = vector.load %arg6[%c280_433, %c0_434] : memref<360x384xf32, #tpu.memory_space<vmem>>, vector<4x384xf32>
    tpu.vector_store %arg6[%c280_433, %c0_434], %419 {strides = array<i32>} : memref<360x384xf32, #tpu.memory_space<vmem>>, vector<4x384xf32>,
    %c0_435 = arith.constant 0 : index
    %c0_436 = arith.constant 0 : index
    %421 = vector.load %arg6[%c0_435, %c0_436] : memref<360x384xf32, #tpu.memory_space<vmem>>, vector<288x384xf32>
    %422 = arith.truncf %421 : vector<288x384xf32> to vector<288x384xbf16>
    %c13 = arith.constant 13 : index
    %c0_437 = arith.constant 0 : index
    %c0_438 = arith.constant 0 : index
    %423 = vector.load %arg3[%c13, %c0_437, %c0_438] : memref<15x4x360xbf16, #tpu.memory_space<vmem>>, vector<1x4x288xbf16>
    %424 = vector.shape_cast %423 : vector<1x4x288xbf16> to vector<4x288xbf16>
    %cst_439 = arith.constant dense<0.000000e+00> : vector<4x384xf32>
    %425 = tpu.matmul %424, %422, %cst_439 {dimension_numbers = #tpu.dot_dimension_numbers<[1], [0], [0], [1], [0, 0, 1, 1], [], []>} : vector<4x288xbf16>, vector<288x384xbf16>, vector<4x384xf32> -> vector<4x384xf32>
    %c13_440 = arith.constant 13 : index
    %c0_441 = arith.constant 0 : index
    %c0_442 = arith.constant 0 : index
    %426 = vector.load %arg4[%c13_440, %c0_441, %c0_442] : memref<15x4x1xf32, #tpu.memory_space<vmem>>, vector<1x4x1xf32>
    %427 = vector.shape_cast %426 : vector<1x4x1xf32> to vector<4x1xf32>
    %428 = vector.broadcast %427 : vector<4x1xf32> to vector<4x384xf32>
    %429 = arith.addf %425, %428 : vector<4x384xf32>
    %cst_443 = arith.constant 0.00999999977 : f32
    %430 = vector.broadcast %cst_443 : f32 to vector<4x384xf32>
    %431 = arith.mulf %430, %429 : vector<4x384xf32>
    %432 = arith.maximumf %429, %431 : vector<4x384xf32>
    %433 = vector.broadcast %0 : vector<1x384xf32> to vector<4x384xf32>
    %434 = arith.mulf %432, %433 : vector<4x384xf32>
    %c19_i32_444 = arith.constant 19 : i32
    %435 = tpu.dynamic_rotate %434 by %c19_i32_444 dim 1 : vector<4x384xf32>, i32 -> vector<4x384xf32>
    %c288_445 = arith.constant 288 : index
    %c0_446 = arith.constant 0 : index
    %436 = vector.load %arg6[%c288_445, %c0_446] : memref<360x384xf32, #tpu.memory_space<vmem>>, vector<4x384xf32>
    tpu.vector_store %arg6[%c288_445, %c0_446], %435 {strides = array<i32>} : memref<360x384xf32, #tpu.memory_space<vmem>>, vector<4x384xf32>,
    %c18_i32_447 = arith.constant 18 : i32
    %437 = tpu.dynamic_rotate %434 by %c18_i32_447 dim 1 : vector<4x384xf32>, i32 -> vector<4x384xf32>
    %c296_448 = arith.constant 296 : index
    %c0_449 = arith.constant 0 : index
    %438 = vector.load %arg6[%c296_448, %c0_449] : memref<360x384xf32, #tpu.memory_space<vmem>>, vector<4x384xf32>
    tpu.vector_store %arg6[%c296_448, %c0_449], %437 {strides = array<i32>} : memref<360x384xf32, #tpu.memory_space<vmem>>, vector<4x384xf32>,
    %c17_i32_450 = arith.constant 17 : i32
    %439 = tpu.dynamic_rotate %434 by %c17_i32_450 dim 1 : vector<4x384xf32>, i32 -> vector<4x384xf32>
    %c304_451 = arith.constant 304 : index
    %c0_452 = arith.constant 0 : index
    %440 = vector.load %arg6[%c304_451, %c0_452] : memref<360x384xf32, #tpu.memory_space<vmem>>, vector<4x384xf32>
    tpu.vector_store %arg6[%c304_451, %c0_452], %439 {strides = array<i32>} : memref<360x384xf32, #tpu.memory_space<vmem>>, vector<4x384xf32>,
    %c1_i32_453 = arith.constant 1 : i32
    %441 = tpu.dynamic_rotate %434 by %c1_i32_453 dim 1 : vector<4x384xf32>, i32 -> vector<4x384xf32>
    %c312_454 = arith.constant 312 : index
    %c0_455 = arith.constant 0 : index
    %442 = vector.load %arg6[%c312_454, %c0_455] : memref<360x384xf32, #tpu.memory_space<vmem>>, vector<4x384xf32>
    tpu.vector_store %arg6[%c312_454, %c0_455], %441 {strides = array<i32>} : memref<360x384xf32, #tpu.memory_space<vmem>>, vector<4x384xf32>,
    %c320_456 = arith.constant 320 : index
    %c0_457 = arith.constant 0 : index
    %443 = vector.load %arg6[%c320_456, %c0_457] : memref<360x384xf32, #tpu.memory_space<vmem>>, vector<4x384xf32>
    tpu.vector_store %arg6[%c320_456, %c0_457], %434 {strides = array<i32>} : memref<360x384xf32, #tpu.memory_space<vmem>>, vector<4x384xf32>,
    %c383_i32_458 = arith.constant 383 : i32
    %444 = tpu.dynamic_rotate %434 by %c383_i32_458 dim 1 : vector<4x384xf32>, i32 -> vector<4x384xf32>
    %c328_459 = arith.constant 328 : index
    %c0_460 = arith.constant 0 : index
    %445 = vector.load %arg6[%c328_459, %c0_460] : memref<360x384xf32, #tpu.memory_space<vmem>>, vector<4x384xf32>
    tpu.vector_store %arg6[%c328_459, %c0_460], %444 {strides = array<i32>} : memref<360x384xf32, #tpu.memory_space<vmem>>, vector<4x384xf32>,
    %c367_i32_461 = arith.constant 367 : i32
    %446 = tpu.dynamic_rotate %434 by %c367_i32_461 dim 1 : vector<4x384xf32>, i32 -> vector<4x384xf32>
    %c336_462 = arith.constant 336 : index
    %c0_463 = arith.constant 0 : index
    %447 = vector.load %arg6[%c336_462, %c0_463] : memref<360x384xf32, #tpu.memory_space<vmem>>, vector<4x384xf32>
    tpu.vector_store %arg6[%c336_462, %c0_463], %446 {strides = array<i32>} : memref<360x384xf32, #tpu.memory_space<vmem>>, vector<4x384xf32>,
    %c366_i32_464 = arith.constant 366 : i32
    %448 = tpu.dynamic_rotate %434 by %c366_i32_464 dim 1 : vector<4x384xf32>, i32 -> vector<4x384xf32>
    %c344_465 = arith.constant 344 : index
    %c0_466 = arith.constant 0 : index
    %449 = vector.load %arg6[%c344_465, %c0_466] : memref<360x384xf32, #tpu.memory_space<vmem>>, vector<4x384xf32>
    tpu.vector_store %arg6[%c344_465, %c0_466], %448 {strides = array<i32>} : memref<360x384xf32, #tpu.memory_space<vmem>>, vector<4x384xf32>,
    %c365_i32_467 = arith.constant 365 : i32
    %450 = tpu.dynamic_rotate %434 by %c365_i32_467 dim 1 : vector<4x384xf32>, i32 -> vector<4x384xf32>
    %c352_468 = arith.constant 352 : index
    %c0_469 = arith.constant 0 : index
    %451 = vector.load %arg6[%c352_468, %c0_469] : memref<360x384xf32, #tpu.memory_space<vmem>>, vector<4x384xf32>
    tpu.vector_store %arg6[%c352_468, %c0_469], %450 {strides = array<i32>} : memref<360x384xf32, #tpu.memory_space<vmem>>, vector<4x384xf32>,
    %c0_470 = arith.constant 0 : index
    %c0_471 = arith.constant 0 : index
    %452 = vector.load %arg6[%c0_470, %c0_471] : memref<360x384xf32, #tpu.memory_space<vmem>>, vector<360x384xf32>
    %453 = arith.truncf %452 : vector<360x384xf32> to vector<360x384xbf16>
    %c14 = arith.constant 14 : index
    %c0_472 = arith.constant 0 : index
    %c0_473 = arith.constant 0 : index
    %454 = vector.load %arg3[%c14, %c0_472, %c0_473] : memref<15x4x360xbf16, #tpu.memory_space<vmem>>, vector<1x4x360xbf16>
    %455 = vector.shape_cast %454 : vector<1x4x360xbf16> to vector<4x360xbf16>
    %cst_474 = arith.constant dense<0.000000e+00> : vector<4x384xf32>
    %456 = tpu.matmul %455, %453, %cst_474 {dimension_numbers = #tpu.dot_dimension_numbers<[1], [0], [0], [1], [0, 0, 1, 1], [], []>} : vector<4x360xbf16>, vector<360x384xbf16>, vector<4x384xf32> -> vector<4x384xf32>
    %c14_475 = arith.constant 14 : index
    %c0_476 = arith.constant 0 : index
    %c0_477 = arith.constant 0 : index
    %457 = vector.load %arg4[%c14_475, %c0_476, %c0_477] : memref<15x4x1xf32, #tpu.memory_space<vmem>>, vector<1x4x1xf32>
    %458 = vector.shape_cast %457 : vector<1x4x1xf32> to vector<4x1xf32>
    %459 = vector.broadcast %458 : vector<4x1xf32> to vector<4x384xf32>
    %460 = arith.addf %456, %459 : vector<4x384xf32>
    %461 = vector.broadcast %0 : vector<1x384xf32> to vector<4x384xf32>
    %462 = arith.mulf %460, %461 : vector<4x384xf32>
    %463 = arith.addf %462, %310 : vector<4x384xf32>
    %cst_478 = arith.constant 2.000000e-01 : f32
    %464 = vector.broadcast %cst_478 : f32 to vector<4x384xf32>
    %465 = arith.mulf %463, %464 : vector<4x384xf32>
    %466 = arith.addf %465, %4 : vector<4x384xf32>
    %c0_479 = arith.constant 0 : index
    %c0_480 = arith.constant 0 : index
    %c0_481 = arith.constant 0 : index
    %467 = vector.load %arg5[%c0_479, %c0_480, %c0_481] : memref<1x4x384xf32, #tpu.memory_space<vmem>>, vector<1x4x384xf32>
    %468 = vector.shape_cast %467 : vector<1x4x384xf32> to vector<4x384xf32>
    %469 = vector.shape_cast %466 : vector<4x384xf32> to vector<1x4x384xf32>
    tpu.vector_store %arg5[%c0_479, %c0_480, %c0_481], %469 {strides = array<i32>} : memref<1x4x384xf32, #tpu.memory_space<vmem>>, vector<1x4x384xf32>,
    return
  }
  func.func @transform_0(%arg0: i32) -> (i32, i32, i32) {
    %c0_i32 = arith.constant 0 : i32
    %c0_i32_0 = arith.constant 0 : i32
    %c0_i32_1 = arith.constant 0 : i32
    return %arg0, %c0_i32, %c0_i32_0 : i32, i32, i32
  }
  func.func @transform_1(%arg0: i32) -> (i32, i32) {
    %c0_i32 = arith.constant 0 : i32
    %c0_i32_0 = arith.constant 0 : i32
    %c0_i32_1 = arith.constant 0 : i32
    return %c0_i32, %c0_i32_0 : i32, i32
  }
  func.func @transform_2(%arg0: i32) -> (i32, i32, i32) {
    %c0_i32 = arith.constant 0 : i32
    %c0_i32_0 = arith.constant 0 : i32
    %c0_i32_1 = arith.constant 0 : i32
    %c0_i32_2 = arith.constant 0 : i32
    return %c0_i32, %c0_i32_0, %c0_i32_1 : i32, i32, i32
  }
  func.func @transform_3(%arg0: i32) -> (i32, i32, i32) {
    %c0_i32 = arith.constant 0 : i32
    %c0_i32_0 = arith.constant 0 : i32
    %c0_i32_1 = arith.constant 0 : i32
    %c0_i32_2 = arith.constant 0 : i32
    return %c0_i32, %c0_i32_0, %c0_i32_1 : i32, i32, i32
  }
  func.func @transform_4(%arg0: i32) -> (i32, i32, i32) {
    %c0_i32 = arith.constant 0 : i32
    %c0_i32_0 = arith.constant 0 : i32
    %c0_i32_1 = arith.constant 0 : i32
    return %arg0, %c0_i32, %c0_i32_0 : i32, i32, i32
  }
}

</mosaic_0001>

<llo_original>
// kernel: tpu_custom_call.1
$region0: #{tpu_custom_call.1}
  #allocation0 [shape = 'u32[]', space=smem, size = 0x4, offset = 0x4, fixed_abs, tag = 'smem constant byte address 0x4 - core index']
  #allocation1 [shape = 'u32[144,128]{1,0:T(1,128)}', space=vmem, size = 0x12000, scoped, tag = 'internal scratch']
  #allocation2 [shape = 'f32[360,384]{1,0:T(8,128)}', space=vmem, size = 0x87000, scoped, tag = 'scratch operand']
  %s0 = inlined_call_operand.vmem [shape: f32[2,4,384], index: 0, kind: input, shape index: {}]
  %s1 = inlined_call_operand.vmem [shape: f32[1,384], index: 1, kind: input, shape index: {}]
  %s2 = inlined_call_operand.hbm [shape: bf16[15,4,360], index: 2, kind: input, shape index: {}]
  %s3 = inlined_call_operand.vmem [shape: f32[15,4,1], index: 3, kind: input, shape index: {}]
  %s4 = inlined_call_operand.hbm [shape: f32[2,4,384], index: 4, kind: output, shape index: {}]
  %s5 = sld [smem:[#allocation0]]
  $region53: #{tpu_custom_call.1} parent=0
    _
  %s7 = ssub.s32 1, %s5
  %s8 = scalar_select 0, %s7, %s5
  $region1: #{tpu_custom_call.1} parent=0
    #allocation3 [shape = 'u8[46080]{0}', space=vmem, size = 0xb400, scoped, tag = 'input window, operand 2, single buffered']
    #allocation4 [shape = 's32[2]{0}', space=sflag, size = 0x8, scoped, tag = 'scoped memory for tpu_custom_call.1']
    #allocation5 [shape = 's32[2]{0}', space=sflag, size = 0x8, scoped, tag = 'scoped memory for tpu_custom_call.1']
    #allocation6 [shape = 'u8[12288]{0}', space=vmem, size = 0x3000, scoped, tag = 'output window, operand 0']
    %9 = vsyncpa [#allocation4], 0
    %10 = vsyncpa [#allocation5], 0
    %s11 = scalar_lea.sflag [#allocation5], 1
    %12 = vsyncpa %s11, 0
    loop: start=0, step=1, limit=4
    $region2: #{tpu_custom_call.1} parent=1 // loop_pre_header
      _
    $region3: #{tpu_custom_call.1} parent=1 // loop_header
      %s14 = sphi 0, %s18
      %p15 = scmp.ge.s32.totalorder %s14, 4
      %s24 = sphi 0, %s26
      %s27 = sphi 0, %s24
      %s28 = sphi 0, %s27
      %s44 = sphi 0, %s28
      %s48 = sphi 0, %s48
      %s50 = sphi 0, %s48
      %s51 = sphi 0, %s50
      %s65 = sphi 0, %s51
      %s69 = sphi 0, %s69
      %s71 = sphi 0, %s69
      %s72 = sphi 0, %s71
      %s86 = sphi 0, %s72
      %s90 = sphi 0, %s90
      %s92 = sphi 0, %s90
      %s93 = sphi 0, %s92
      %s107 = sphi 0, %s93
      %s113 = sphi 0, %s115
      %s116 = sphi 0, %s113
      %s117 = sphi 0, %s116
      %s133 = sphi 0, %s117
    $region4: #{tpu_custom_call.1} parent=1 // loop_header_branch
      %17 = sbr.rel (%p15) target = $region8
    $region5: #{tpu_custom_call.1} parent=1 // loop_body
      %s19 = ssub.s32 %s14, 1
      %s20 = ssub.s32 %s14, 2
      %s21 = sadd.s32 %s14, 1
      %s22 = ssub.s32 %s14, %s21
      %p23 = scmp.eq.s32.totalorder %s22, 0
      %s25 = sadd.s32 %s24, 1
      %s26 = scalar_select %p23, %s24, %s25
      %p29 = pneg %p23
      %p30 = scmp.eq.s32.totalorder %s14, 1
      %p31 = por %p29, %p30
      %p32 = scmp.ne.s32.totalorder %s24, %s27
      %p33 = scmp.eq.s32.totalorder %s14, 0
      %p34 = por %p32, %p33
      %p35 = scmp.ne.s32.totalorder %s24, %s27
      %p36 = scmp.eq.s32.totalorder %s19, 1
      %p37 = por %p35, %p36
      %p38 = scmp.ne.s32.totalorder %s27, %s28
      %p39 = scmp.eq.s32.totalorder %s19, 0
      %p40 = por %p38, %p39
      %p41 = scmp.ne.s32.totalorder %s27, %s28
      %p42 = scmp.eq.s32.totalorder %s20, 1
      %p43 = por %p41, %p42
      %p45 = scmp.ne.s32.totalorder %s28, %s44
      %p46 = scmp.eq.s32.totalorder %s20, 0
      %p47 = por %p45, %p46
      %s49 = sadd.s32 %s48, 1
      %p52 = scmp.eq.s32.totalorder %s14, 1
      %p53 = scmp.ne.s32.totalorder %s48, %s50
      %p54 = scmp.eq.s32.totalorder %s14, 0
      %p55 = por %p53, %p54
      %p56 = scmp.ne.s32.totalorder %s48, %s50
      %p57 = scmp.eq.s32.totalorder %s19, 1
      %p58 = por %p56, %p57
      %p59 = scmp.ne.s32.totalorder %s50, %s51
      %p60 = scmp.eq.s32.totalorder %s19, 0
      %p61 = por %p59, %p60
      %p62 = scmp.ne.s32.totalorder %s50, %s51
      %p63 = scmp.eq.s32.totalorder %s20, 1
      %p64 = por %p62, %p63
      %p66 = scmp.ne.s32.totalorder %s51, %s65
      %p67 = scmp.eq.s32.totalorder %s20, 0
      %p68 = por %p66, %p67
      %s70 = sadd.s32 %s69, 1
      %p73 = scmp.eq.s32.totalorder %s14, 1
      %p74 = scmp.ne.s32.totalorder %s69, %s71
      %p75 = scmp.eq.s32.totalorder %s14, 0
      %p76 = por %p74, %p75
      %p77 = scmp.ne.s32.totalorder %s69, %s71
      %p78 = scmp.eq.s32.totalorder %s19, 1
      %p79 = por %p77, %p78
      %p80 = scmp.ne.s32.totalorder %s71, %s72
      %p81 = scmp.eq.s32.totalorder %s19, 0
      %p82 = por %p80, %p81
      %p83 = scmp.ne.s32.totalorder %s71, %s72
      %p84 = scmp.eq.s32.totalorder %s20, 1
      %p85 = por %p83, %p84
      %p87 = scmp.ne.s32.totalorder %s72, %s86
      %p88 = scmp.eq.s32.totalorder %s20, 0
      %p89 = por %p87, %p88
      %s91 = sadd.s32 %s90, 1
      %p94 = scmp.eq.s32.totalorder %s14, 1
      %p95 = scmp.ne.s32.totalorder %s90, %s92
      %p96 = scmp.eq.s32.totalorder %s14, 0
      %p97 = por %p95, %p96
      %p98 = scmp.ne.s32.totalorder %s90, %s92
      %p99 = scmp.eq.s32.totalorder %s19, 1
      %p100 = por %p98, %p99
      %p101 = scmp.ne.s32.totalorder %s92, %s93
      %p102 = scmp.eq.s32.totalorder %s19, 0
      %p103 = por %p101, %p102
      %p104 = scmp.ne.s32.totalorder %s92, %s93
      %p105 = scmp.eq.s32.totalorder %s20, 1
      %p106 = por %p104, %p105
      %p108 = scmp.ne.s32.totalorder %s93, %s107
      %p109 = scmp.eq.s32.totalorder %s20, 0
      %p110 = por %p108, %p109
      %s111 = ssub.s32 %s14, %s21
      %p112 = scmp.eq.s32.totalorder %s111, 0
      %s114 = sadd.s32 %s113, 1
      %s115 = scalar_select %p112, %s113, %s114
      %p118 = pneg %p112
      %p119 = scmp.eq.s32.totalorder %s14, 1
      %p120 = por %p118, %p119
      %p121 = scmp.ne.s32.totalorder %s113, %s116
      %p122 = scmp.eq.s32.totalorder %s14, 0
      %p123 = por %p121, %p122
      %p124 = scmp.ne.s32.totalorder %s113, %s116
      %p125 = scmp.eq.s32.totalorder %s19, 1
      %p126 = por %p124, %p125
      %p127 = scmp.ne.s32.totalorder %s116, %s117
      %p128 = scmp.eq.s32.totalorder %s19, 0
      %p129 = por %p127, %p128
      %p130 = scmp.ne.s32.totalorder %s116, %s117
      %p131 = scmp.eq.s32.totalorder %s20, 1
      %p132 = por %p130, %p131
      %p134 = scmp.ne.s32.totalorder %s117, %s133
      %p135 = scmp.eq.s32.totalorder %s20, 0
      %p136 = por %p134, %p135
      %p137 = scmp.le.s32.totalorder 1, %s14
      %p138 = scmp.lt.s32.totalorder %s14, 3
      %p139 = pnand %p137, %p138
      %p140 = pneg %p139
      // Predicated region
      $region9: #{tpu_custom_call.1} parent=5 // pred_check
        _
      $region10: #{tpu_custom_call.1} parent=5 // pred_check_branch
        %142 = sbr.rel (%p139) target = $region12
      $region11: #{tpu_custom_call.1} parent=5 // pred_region
        %s143 = ssub.s32 %s14, 1
        // Predicated region
        $region13: #{tpu_custom_call.1} parent=11 // pred_check
          %p144 = pneg %p61
        $region14: #{tpu_custom_call.1} parent=11 // pred_check_branch
          %146 = sbr.rel (%p144) target = $region16
        $region15: #{tpu_custom_call.1} parent=11 // pred_region
          _
        $region16: #{tpu_custom_call.1} parent=11 // pred_fallthru
          _
        // Predicated region
        $region17: #{tpu_custom_call.1} parent=11 // pred_check
          %p147 = pneg %p82
        $region18: #{tpu_custom_call.1} parent=11 // pred_check_branch
          %149 = sbr.rel (%p147) target = $region20
        $region19: #{tpu_custom_call.1} parent=11 // pred_region
          %s151 = ssub.s32 1440, 1440
          %152 = vsyncadd [#allocation4], %s151
          %s153 = sshll.u32 [#allocation3], 4
          %s154 = int_to_ptr.vmem [resolvable:$true] %s153
          %159 = dma.hbm_to_vmem [thread:$0]  %s2, 1440, %s154, [#allocation4], 96, 96, 6
        $region20: #{tpu_custom_call.1} parent=11 // pred_fallthru
          _
        // Predicated region
        $region21: #{tpu_custom_call.1} parent=11 // pred_check
          %p160 = pneg %p103
        $region22: #{tpu_custom_call.1} parent=11 // pred_check_branch
          %162 = sbr.rel (%p160) target = $region24
        $region23: #{tpu_custom_call.1} parent=11 // pred_region
          _
        $region24: #{tpu_custom_call.1} parent=11 // pred_fallthru
          _
      $region12: #{tpu_custom_call.1} parent=5 // pred_fallthru
        _
      %p163 = scmp.lt.s32.totalorder %s14, 2
      // Predicated region
      $region25: #{tpu_custom_call.1} parent=5 // pred_check
        %p164 = pneg %p163
      $region26: #{tpu_custom_call.1} parent=5 // pred_check_branch
        %166 = sbr.rel (%p164) target = $region28
      $region27: #{tpu_custom_call.1} parent=5 // pred_region
        // Predicated region
        $region29: #{tpu_custom_call.1} parent=27 // pred_check
          %p167 = pneg %p34
        $region30: #{tpu_custom_call.1} parent=27 // pred_check_branch
          %169 = sbr.rel (%p167) target = $region32
        $region31: #{tpu_custom_call.1} parent=27 // pred_region
          %p170 = scmp.lt.s32.totalorder %s14, 1
          %s171 = scalar_select %p170, %s14, 1
          %s172 = smul.addr %s171, 3
          %s173 = smul.addr %s172, 4
          %s174 = scalar_lea.vmem %s0, %s173
        $region32: #{tpu_custom_call.1} parent=27 // pred_fallthru
          _
      $region28: #{tpu_custom_call.1} parent=5 // pred_fallthru
        _
      %p175 = scmp.le.s32.totalorder 1, %s14
      %p176 = scmp.lt.s32.totalorder %s14, 3
      %p177 = pnand %p175, %p176
      %p178 = pneg %p177
      // Predicated region
      $region33: #{tpu_custom_call.1} parent=5 // pred_check
        _
      $region34: #{tpu_custom_call.1} parent=5 // pred_check_branch
        %180 = sbr.rel (%p177) target = $region36
      $region35: #{tpu_custom_call.1} parent=5 // pred_region
        %s181 = ssub.s32 %s14, 1
        // Predicated region
        $region37: #{tpu_custom_call.1} parent=35 // pred_check
          %p182 = pneg %p82
        $region38: #{tpu_custom_call.1} parent=35 // pred_check_branch
          %184 = sbr.rel (%p182) target = $region40
        $region39: #{tpu_custom_call.1} parent=35 // pred_region
          %185 = dma.done [#allocation4], 1440
        $region40: #{tpu_custom_call.1} parent=35 // pred_fallthru
          _
        %p186 = scmp.lt.s32.totalorder %s19, 1
        %s187 = scalar_select %p186, %s19, 1
        %s188 = smul.addr %s187, 3
        %s189 = smul.addr %s188, 4
        %s190 = scalar_lea.vmem %s0, %s189
        %p191 = pneg %p40
        %p192 = pneg %p37
        %p193 = pneg %p61
        %p194 = pneg %p58
        %p195 = pneg %p82
        %p196 = pneg %p79
        %p197 = pneg %p103
        %p198 = pneg %p100
        %p199 = pneg %p129
        %p200 = pneg %p126
        %s201 = sand.u32 %s116, 1
        %s202 = scalar_lea.sflag [#allocation5], %s201
        %s203 = sand.u32 %s116, 1
        %s204 = smul.addr %s203, 12
        %s205 = scalar_lea.vmem [#allocation6], %s204
        %p206 = scmp.lt.s32.totalorder %s19, 1
        %s207 = scalar_select %p206, %s19, 1
        %s208 = smul.addr %s207, 3
        %s209 = smul.addr %s208, 4
        %s210 = scalar_lea.vmem %s0, %s209
        %v212 = vld [vmem:[%s1] sm:$0x7]
        %213 = vst [vmem:[#allocation2] sm:$0xff] 0.0
        %214 = vst [vmem:[#allocation2 + $0x8] sm:$0xff] 0.0
        %215 = vst [vmem:[#allocation2 + $0x10] sm:$0xff] 0.0
        %216 = vst [vmem:[#allocation2 + $0x18] sm:$0xff] 0.0
        %217 = vst [vmem:[#allocation2 + $0x20] sm:$0xff] 0.0
        %218 = vst [vmem:[#allocation2 + $0x28] sm:$0xff] 0.0
        %219 = vst [vmem:[#allocation2 + $0x30] sm:$0xff] 0.0
        %220 = vst [vmem:[#allocation2 + $0x38] sm:$0xff] 0.0
        %221 = vst [vmem:[#allocation2 + $0x40] sm:$0xff] 0.0
        %222 = vst [vmem:[#allocation2 + $0x48] sm:$0xff] 0.0
        %223 = vst [vmem:[#allocation2 + $0x50] sm:$0xff] 0.0
        %224 = vst [vmem:[#allocation2 + $0x58] sm:$0xff] 0.0
        %225 = vst [vmem:[#allocation2 + $0x60] sm:$0xff] 0.0
        %226 = vst [vmem:[#allocation2 + $0x68] sm:$0xff] 0.0
        %227 = vst [vmem:[#allocation2 + $0x70] sm:$0xff] 0.0
        %228 = vst [vmem:[#allocation2 + $0x78] sm:$0xff] 0.0
        %229 = vst [vmem:[#allocation2 + $0x80] sm:$0xff] 0.0
        %230 = vst [vmem:[#allocation2 + $0x88] sm:$0xff] 0.0
        %231 = vst [vmem:[#allocation2 + $0x90] sm:$0xff] 0.0
        %232 = vst [vmem:[#allocation2 + $0x98] sm:$0xff] 0.0
        %233 = vst [vmem:[#allocation2 + $0xa0] sm:$0xff] 0.0
        %234 = vst [vmem:[#allocation2 + $0xa8] sm:$0xff] 0.0
        %235 = vst [vmem:[#allocation2 + $0xb0] sm:$0xff] 0.0
        %236 = vst [vmem:[#allocation2 + $0xb8] sm:$0xff] 0.0
        %237 = vst [vmem:[#allocation2 + $0xc0] sm:$0xff] 0.0
        %238 = vst [vmem:[#allocation2 + $0xc8] sm:$0xff] 0.0
        %239 = vst [vmem:[#allocation2 + $0xd0] sm:$0xff] 0.0
        %240 = vst [vmem:[#allocation2 + $0xd8] sm:$0xff] 0.0
        %241 = vst [vmem:[#allocation2 + $0xe0] sm:$0xff] 0.0
        %242 = vst [vmem:[#allocation2 + $0xe8] sm:$0xff] 0.0
        %243 = vst [vmem:[#allocation2 + $0xf0] sm:$0xff] 0.0
        %244 = vst [vmem:[#allocation2 + $0xf8] sm:$0xff] 0.0
        %245 = vst [vmem:[#allocation2 + $0x100] sm:$0xff] 0.0
        %246 = vst [vmem:[#allocation2 + $0x108] sm:$0xff] 0.0
        %247 = vst [vmem:[#allocation2 + $0x110] sm:$0xff] 0.0
        %248 = vst [vmem:[#allocation2 + $0x118] sm:$0xff] 0.0
        %249 = vst [vmem:[#allocation2 + $0x120] sm:$0xff] 0.0
        %250 = vst [vmem:[#allocation2 + $0x128] sm:$0xff] 0.0
        %251 = vst [vmem:[#allocation2 + $0x130] sm:$0xff] 0.0
        %252 = vst [vmem:[#allocation2 + $0x138] sm:$0xff] 0.0
        %253 = vst [vmem:[#allocation2 + $0x140] sm:$0xff] 0.0
        %254 = vst [vmem:[#allocation2 + $0x148] sm:$0xff] 0.0
        %255 = vst [vmem:[#allocation2 + $0x150] sm:$0xff] 0.0
        %256 = vst [vmem:[#allocation2 + $0x158] sm:$0xff] 0.0
        %257 = vst [vmem:[#allocation2 + $0x160] sm:$0xff] 0.0
        %258 = vst [vmem:[#allocation2 + $0x168] sm:$0xff] 0.0
        %259 = vst [vmem:[#allocation2 + $0x170] sm:$0xff] 0.0
        %260 = vst [vmem:[#allocation2 + $0x178] sm:$0xff] 0.0
        %261 = vst [vmem:[#allocation2 + $0x180] sm:$0xff] 0.0
        %262 = vst [vmem:[#allocation2 + $0x188] sm:$0xff] 0.0
        %263 = vst [vmem:[#allocation2 + $0x190] sm:$0xff] 0.0
        %264 = vst [vmem:[#allocation2 + $0x198] sm:$0xff] 0.0
        %265 = vst [vmem:[#allocation2 + $0x1a0] sm:$0xff] 0.0
        %266 = vst [vmem:[#allocation2 + $0x1a8] sm:$0xff] 0.0
        %267 = vst [vmem:[#allocation2 + $0x1b0] sm:$0xff] 0.0
        %268 = vst [vmem:[#allocation2 + $0x1b8] sm:$0xff] 0.0
        %269 = vst [vmem:[#allocation2 + $0x1c0] sm:$0xff] 0.0
        %270 = vst [vmem:[#allocation2 + $0x1c8] sm:$0xff] 0.0
        %271 = vst [vmem:[#allocation2 + $0x1d0] sm:$0xff] 0.0
        %272 = vst [vmem:[#allocation2 + $0x1d8] sm:$0xff] 0.0
        %273 = vst [vmem:[#allocation2 + $0x1e0] sm:$0xff] 0.0
        %274 = vst [vmem:[#allocation2 + $0x1e8] sm:$0xff] 0.0
        %275 = vst [vmem:[#allocation2 + $0x1f0] sm:$0xff] 0.0
        %276 = vst [vmem:[#allocation2 + $0x1f8] sm:$0xff] 0.0
        %277 = vst [vmem:[#allocation2 + $0x200] sm:$0xff] 0.0
        %278 = vst [vmem:[#allocation2 + $0x208] sm:$0xff] 0.0
        %279 = vst [vmem:[#allocation2 + $0x210] sm:$0xff] 0.0
        %280 = vst [vmem:[#allocation2 + $0x218] sm:$0xff] 0.0
        %281 = vst [vmem:[#allocation2 + $0x220] sm:$0xff] 0.0
        %282 = vst [vmem:[#allocation2 + $0x228] sm:$0xff] 0.0
        %283 = vst [vmem:[#allocation2 + $0x230] sm:$0xff] 0.0
        %284 = vst [vmem:[#allocation2 + $0x238] sm:$0xff] 0.0
        %285 = vst [vmem:[#allocation2 + $0x240] sm:$0xff] 0.0
        %286 = vst [vmem:[#allocation2 + $0x248] sm:$0xff] 0.0
        %287 = vst [vmem:[#allocation2 + $0x250] sm:$0xff] 0.0
        %288 = vst [vmem:[#allocation2 + $0x258] sm:$0xff] 0.0
        %289 = vst [vmem:[#allocation2 + $0x260] sm:$0xff] 0.0
        %290 = vst [vmem:[#allocation2 + $0x268] sm:$0xff] 0.0
        %291 = vst [vmem:[#allocation2 + $0x270] sm:$0xff] 0.0
        %292 = vst [vmem:[#allocation2 + $0x278] sm:$0xff] 0.0
        %293 = vst [vmem:[#allocation2 + $0x280] sm:$0xff] 0.0
        %294 = vst [vmem:[#allocation2 + $0x288] sm:$0xff] 0.0
        %295 = vst [vmem:[#allocation2 + $0x290] sm:$0xff] 0.0
        %296 = vst [vmem:[#allocation2 + $0x298] sm:$0xff] 0.0
        %297 = vst [vmem:[#allocation2 + $0x2a0] sm:$0xff] 0.0
        %298 = vst [vmem:[#allocation2 + $0x2a8] sm:$0xff] 0.0
        %299 = vst [vmem:[#allocation2 + $0x2b0] sm:$0xff] 0.0
        %300 = vst [vmem:[#allocation2 + $0x2b8] sm:$0xff] 0.0
        %301 = vst [vmem:[#allocation2 + $0x2c0] sm:$0xff] 0.0
        %302 = vst [vmem:[#allocation2 + $0x2c8] sm:$0xff] 0.0
        %303 = vst [vmem:[#allocation2 + $0x2d0] sm:$0xff] 0.0
        %304 = vst [vmem:[#allocation2 + $0x2d8] sm:$0xff] 0.0
        %305 = vst [vmem:[#allocation2 + $0x2e0] sm:$0xff] 0.0
        %306 = vst [vmem:[#allocation2 + $0x2e8] sm:$0xff] 0.0
        %307 = vst [vmem:[#allocation2 + $0x2f0] sm:$0xff] 0.0
        %308 = vst [vmem:[#allocation2 + $0x2f8] sm:$0xff] 0.0
        %309 = vst [vmem:[#allocation2 + $0x300] sm:$0xff] 0.0
        %310 = vst [vmem:[#allocation2 + $0x308] sm:$0xff] 0.0
        %311 = vst [vmem:[#allocation2 + $0x310] sm:$0xff] 0.0
        %312 = vst [vmem:[#allocation2 + $0x318] sm:$0xff] 0.0
        %313 = vst [vmem:[#allocation2 + $0x320] sm:$0xff] 0.0
        %314 = vst [vmem:[#allocation2 + $0x328] sm:$0xff] 0.0
        %315 = vst [vmem:[#allocation2 + $0x330] sm:$0xff] 0.0
        %316 = vst [vmem:[#allocation2 + $0x338] sm:$0xff] 0.0
        %317 = vst [vmem:[#allocation2 + $0x340] sm:$0xff] 0.0
        %318 = vst [vmem:[#allocation2 + $0x348] sm:$0xff] 0.0
        %319 = vst [vmem:[#allocation2 + $0x350] sm:$0xff] 0.0
        %320 = vst [vmem:[#allocation2 + $0x358] sm:$0xff] 0.0
        %321 = vst [vmem:[#allocation2 + $0x360] sm:$0xff] 0.0
        %322 = vst [vmem:[#allocation2 + $0x368] sm:$0xff] 0.0
        %323 = vst [vmem:[#allocation2 + $0x370] sm:$0xff] 0.0
        %324 = vst [vmem:[#allocation2 + $0x378] sm:$0xff] 0.0
        %325 = vst [vmem:[#allocation2 + $0x380] sm:$0xff] 0.0
        %326 = vst [vmem:[#allocation2 + $0x388] sm:$0xff] 0.0
        %327 = vst [vmem:[#allocation2 + $0x390] sm:$0xff] 0.0
        %328 = vst [vmem:[#allocation2 + $0x398] sm:$0xff] 0.0
        %329 = vst [vmem:[#allocation2 + $0x3a0] sm:$0xff] 0.0
        %330 = vst [vmem:[#allocation2 + $0x3a8] sm:$0xff] 0.0
        %331 = vst [vmem:[#allocation2 + $0x3b0] sm:$0xff] 0.0
        %332 = vst [vmem:[#allocation2 + $0x3b8] sm:$0xff] 0.0
        %333 = vst [vmem:[#allocation2 + $0x3c0] sm:$0xff] 0.0
        %334 = vst [vmem:[#allocation2 + $0x3c8] sm:$0xff] 0.0
        %335 = vst [vmem:[#allocation2 + $0x3d0] sm:$0xff] 0.0
        %336 = vst [vmem:[#allocation2 + $0x3d8] sm:$0xff] 0.0
        %337 = vst [vmem:[#allocation2 + $0x3e0] sm:$0xff] 0.0
        %338 = vst [vmem:[#allocation2 + $0x3e8] sm:$0xff] 0.0
        %339 = vst [vmem:[#allocation2 + $0x3f0] sm:$0xff] 0.0
        %340 = vst [vmem:[#allocation2 + $0x3f8] sm:$0xff] 0.0
        %341 = vst [vmem:[#allocation2 + $0x400] sm:$0xff] 0.0
        %342 = vst [vmem:[#allocation2 + $0x408] sm:$0xff] 0.0
        %343 = vst [vmem:[#allocation2 + $0x410] sm:$0xff] 0.0
        %344 = vst [vmem:[#allocation2 + $0x418] sm:$0xff] 0.0
        %345 = vst [vmem:[#allocation2 + $0x420] sm:$0xff] 0.0
        %346 = vst [vmem:[#allocation2 + $0x428] sm:$0xff] 0.0
        %347 = vst [vmem:[#allocation2 + $0x430] sm:$0xff] 0.0
        %v348 = vld [vmem:[%s210] sm:$0xff]
        %v349 = vld [vmem:[%s210 + $0x8] sm:$0xf]
        %v351 = vcombine.high %v348, %v348
        %353 = vrot.lane.b32.xlu0 %v348, 19
        %v354 = vpop.permute.xlu0 %353
        %355 = vrot.lane.b32.xlu0 %v351, 19
        %v356 = vpop.permute.xlu0 %355
        %357 = vrot.lane.b32.xlu0 %v349, 19
        %v358 = vpop.permute.xlu0 %357
        %v359 = vlaneseq
        %v360 = vand.u32 %v359, 127
        %vm361 = vcmp.lt.s32.totalorder %v360, 19
        %v362 = vsel %vm361, %v356, %v358
        %v363 = vsel %vm361, %v354, %v356
        %v364 = vsel %vm361, %v358, %v354
        %365 = vst [vmem:[#allocation2] sm:$0xf] %v364
        %366 = vst [vmem:[#allocation2 + $0x8] sm:$0xf] %v363
        %367 = vst [vmem:[#allocation2 + $0x10] sm:$0xf] %v362
        %368 = vrot.lane.b32.xlu0 %v348, 18
        %v369 = vpop.permute.xlu0 %368
        %370 = vrot.lane.b32.xlu0 %v351, 18
        %v371 = vpop.permute.xlu0 %370
        %372 = vrot.lane.b32.xlu0 %v349, 18
        %v373 = vpop.permute.xlu0 %372
        %vm374 = vcmp.lt.s32.totalorder %v360, 18
        %v375 = vsel %vm374, %v371, %v373
        %v376 = vsel %vm374, %v369, %v371
        %v377 = vsel %vm374, %v373, %v369
        %378 = vst [vmem:[#allocation2 + $0x18] sm:$0xf] %v377
        %379 = vst [vmem:[#allocation2 + $0x20] sm:$0xf] %v376
        %380 = vst [vmem:[#allocation2 + $0x28] sm:$0xf] %v375
        %381 = vrot.lane.b32.xlu0 %v348, 17
        %v382 = vpop.permute.xlu0 %381
        %383 = vrot.lane.b32.xlu0 %v351, 17
        %v384 = vpop.permute.xlu0 %383
        %385 = vrot.lane.b32.xlu0 %v349, 17
        %v386 = vpop.permute.xlu0 %385
        %vm387 = vcmp.lt.s32.totalorder %v360, 17
        %v388 = vsel %vm387, %v384, %v386
        %v389 = vsel %vm387, %v382, %v384
        %v390 = vsel %vm387, %v386, %v382
        %391 = vst [vmem:[#allocation2 + $0x30] sm:$0xf] %v390
        %392 = vst [vmem:[#allocation2 + $0x38] sm:$0xf] %v389
        %393 = vst [vmem:[#allocation2 + $0x40] sm:$0xf] %v388
        %394 = vrot.lane.b32.xlu0 %v348, 1
        %v395 = vpop.permute.xlu0 %394
        %396 = vrot.lane.b32.xlu0 %v351, 1
        %v397 = vpop.permute.xlu0 %396
        %398 = vrot.lane.b32.xlu0 %v349, 1
        %v399 = vpop.permute.xlu0 %398
        %vm400 = vcmp.lt.s32.totalorder %v360, 1
        %v401 = vsel %vm400, %v397, %v399
        %v402 = vsel %vm400, %v395, %v397
        %v403 = vsel %vm400, %v399, %v395
        %404 = vst [vmem:[#allocation2 + $0x48] sm:$0xf] %v403
        %405 = vst [vmem:[#allocation2 + $0x50] sm:$0xf] %v402
        %406 = vst [vmem:[#allocation2 + $0x58] sm:$0xf] %v401
        %407 = vst [vmem:[#allocation2 + $0x60] sm:$0xf] %v348
        %408 = vst [vmem:[#allocation2 + $0x68] sm:$0xf] %v351
        %409 = vst [vmem:[#allocation2 + $0x70] sm:$0xf] %v349
        %410 = vrot.lane.b32.xlu0 %v348, 127
        %v411 = vpop.permute.xlu0 %410
        %412 = vrot.lane.b32.xlu0 %v351, 127
        %v413 = vpop.permute.xlu0 %412
        %414 = vrot.lane.b32.xlu0 %v349, 127
        %v415 = vpop.permute.xlu0 %414
        %vm416 = vcmp.lt.s32.totalorder %v360, 127
        %v417 = vsel %vm416, %v413, %v415
        %v418 = vsel %vm416, %v411, %v413
        %v419 = vsel %vm416, %v415, %v411
        %420 = vst [vmem:[#allocation2 + $0x78] sm:$0xf] %v418
        %421 = vst [vmem:[#allocation2 + $0x80] sm:$0xf] %v417
        %422 = vst [vmem:[#allocation2 + $0x88] sm:$0xf] %v419
        %423 = vrot.lane.b32.xlu0 %v348, 111
        %v424 = vpop.permute.xlu0 %423
        %425 = vrot.lane.b32.xlu0 %v351, 111
        %v426 = vpop.permute.xlu0 %425
        %427 = vrot.lane.b32.xlu0 %v349, 111
        %v428 = vpop.permute.xlu0 %427
        %vm429 = vcmp.lt.s32.totalorder %v360, 111
        %v430 = vsel %vm429, %v426, %v428
        %v431 = vsel %vm429, %v424, %v426
        %v432 = vsel %vm429, %v428, %v424
        %433 = vst [vmem:[#allocation2 + $0x90] sm:$0xf] %v431
        %434 = vst [vmem:[#allocation2 + $0x98] sm:$0xf] %v430
        %435 = vst [vmem:[#allocation2 + $0xa0] sm:$0xf] %v432
        %436 = vrot.lane.b32.xlu0 %v348, 110
        %v437 = vpop.permute.xlu0 %436
        %438 = vrot.lane.b32.xlu0 %v351, 110
        %v439 = vpop.permute.xlu0 %438
        %440 = vrot.lane.b32.xlu0 %v349, 110
        %v441 = vpop.permute.xlu0 %440
        %vm442 = vcmp.lt.s32.totalorder %v360, 110
        %v443 = vsel %vm442, %v439, %v441
        %v444 = vsel %vm442, %v437, %v439
        %v445 = vsel %vm442, %v441, %v437
        %446 = vst [vmem:[#allocation2 + $0xa8] sm:$0xf] %v444
        %447 = vst [vmem:[#allocation2 + $0xb0] sm:$0xf] %v443
        %448 = vst [vmem:[#allocation2 + $0xb8] sm:$0xf] %v445
        %449 = vrot.lane.b32.xlu0 %v348, 109
        %v450 = vpop.permute.xlu0 %449
        %451 = vrot.lane.b32.xlu0 %v351, 109
        %v452 = vpop.permute.xlu0 %451
        %453 = vrot.lane.b32.xlu0 %v349, 109
        %v454 = vpop.permute.xlu0 %453
        %vm455 = vcmp.lt.s32.totalorder %v360, 109
        %v456 = vsel %vm455, %v452, %v454
        %v457 = vsel %vm455, %v450, %v452
        %v458 = vsel %vm455, %v454, %v450
        %459 = vst [vmem:[#allocation2 + $0xc0] sm:$0xf] %v457
        %460 = vst [vmem:[#allocation2 + $0xc8] sm:$0xf] %v456
        %461 = vst [vmem:[#allocation2 + $0xd0] sm:$0xf] %v458
        %v462 = vld [vmem:[#allocation2] sm:$0xff]
        %v463 = vld [vmem:[#allocation2 + $0x8] sm:$0xff]
        %v464 = vld [vmem:[#allocation2 + $0x10] sm:$0xff]
        %v465 = vld [vmem:[#allocation2 + $0x18] sm:$0xff]
        %v466 = vld [vmem:[#allocation2 + $0x20] sm:$0xff]
        %v467 = vld [vmem:[#allocation2 + $0x28] sm:$0xff]
        %v468 = vld [vmem:[#allocation2 + $0x30] sm:$0xff]
        %v469 = vld [vmem:[#allocation2 + $0x38] sm:$0xff]
        %v470 = vld [vmem:[#allocation2 + $0x40] sm:$0xff]
        %v471 = vld [vmem:[#allocation2 + $0x48] sm:$0xff]
        %v472 = vld [vmem:[#allocation2 + $0x50] sm:$0xff]
        %v473 = vld [vmem:[#allocation2 + $0x58] sm:$0xff]
        %v474 = vld [vmem:[#allocation2 + $0x60] sm:$0xff]
        %v475 = vld [vmem:[#allocation2 + $0x68] sm:$0xff]
        %v476 = vld [vmem:[#allocation2 + $0x70] sm:$0xff]
        %v477 = vld [vmem:[#allocation2 + $0x78] sm:$0xff]
        %v478 = vld [vmem:[#allocation2 + $0x80] sm:$0xff]
        %v479 = vld [vmem:[#allocation2 + $0x88] sm:$0xff]
        %v480 = vld [vmem:[#allocation2 + $0x90] sm:$0xff]
        %v481 = vld [vmem:[#allocation2 + $0x98] sm:$0xff]
        %v482 = vld [vmem:[#allocation2 + $0xa0] sm:$0xff]
        %v483 = vld [vmem:[#allocation2 + $0xa8] sm:$0xff]
        %v484 = vld [vmem:[#allocation2 + $0xb0] sm:$0xff]
        %v485 = vld [vmem:[#allocation2 + $0xb8] sm:$0xff]
        %v486 = vld [vmem:[#allocation2 + $0xc0] sm:$0xff]
        %v487 = vld [vmem:[#allocation2 + $0xc8] sm:$0xff]
        %v488 = vld [vmem:[#allocation2 + $0xd0] sm:$0xff]
        %v489 = vpack.c.bf16 %v465, %v462
        %v490 = vpack.c.bf16 %v466, %v463
        %v491 = vpack.c.bf16 %v467, %v464
        %v492 = vpack.c.bf16 %v471, %v468
        %v493 = vpack.c.bf16 %v472, %v469
        %v494 = vpack.c.bf16 %v473, %v470
        %v495 = vpack.c.bf16 %v477, %v474
        %v496 = vpack.c.bf16 %v478, %v475
        %v497 = vpack.c.bf16 %v479, %v476
        %v498 = vpack.c.bf16 %v483, %v480
        %v499 = vpack.c.bf16 %v484, %v481
        %v500 = vpack.c.bf16 %v485, %v482
        %v501 = vpack.c.bf16 %v486, %v486
        %v502 = vpack.c.bf16 %v487, %v487
        %v503 = vpack.c.bf16 %v488, %v488
        %v504 = vld [vmem:[#allocation3] sm:$0x3]
        %v505 = vld [vmem:[%s3] sm:$0xf]
        %507 = vset.pattern.permute.xlu0 0
        %508 = vperm.xlu0 %507, %v505
        %v509 = vpop.permute.xlu0 %508
        %vm511 = vcmask 588800
        %v513 = vsel %vm511, %v504, 0
        %vm515 = vcmask 1043456
        %v517 = vsel %vm515, %v501, 0
        %v520 = vsel %vm515, %v502, 0
        %v523 = vsel %vm515, %v503, 0
        %525 = vmatprep.subr.bf16.mxu0 %v490
        %526 = vmatpush1.bf16.msra.mxu0 %v489
        %527 = vmatprep.subr.bf16.mxu0 %v493
        %528 = vmatpush1.bf16.msra.mxu0 %v492
        %529 = vmatprep.subr.bf16.mxu0 %v496
        %530 = vmatpush1.bf16.msra.mxu0 %v495
        %531 = vmatprep.subr.bf16.mxu0 %v499
        %532 = vmatpush1.bf16.msra.mxu0 %v498
        %533 = vmatprep.subr.bf16.mxu0 %v520
        %534 = vmatpush1.bf16.msra.mxu0 %v517
        %535 = vmatprep.subr.bf16.mxu0 0
        %536 = vmatpush1.bf16.msra.mxu0 0
        %537 = vmatprep.subr.bf16.mxu0 0
        %538 = vmatpush1.bf16.msra.mxu0 0
        %539 = vmatprep.subr.bf16.mxu0 0
        %540 = vmatpush1.bf16.msra.mxu0 0
        %541 = vmatprep.subr.bf16.mxu0 0
        %542 = vmatpush1.bf16.msra.mxu0 0
        %543 = vmatprep.subr.bf16.mxu0 0
        %544 = vmatpush1.bf16.msra.mxu0 0
        %545 = vmatprep.subr.bf16.mxu0 0
        %546 = vmatpush1.bf16.msra.mxu0 0
        %547 = vmatprep.subr.bf16.mxu0 0
        %548 = vmatpush1.bf16.msra.mxu0 0
        %549 = vmatprep.subr.bf16.mxu0 0
        %550 = vmatpush1.bf16.msra.mxu0 0
        %551 = vmatprep.subr.bf16.mxu0 0
        %552 = vmatpush1.bf16.msra.mxu0 0
        %553 = vmatprep.subr.bf16.mxu0 0
        %554 = vmatpush1.bf16.msra.mxu0 0
        %555 = vmatprep.subr.bf16.mxu0 0
        %556 = vmatpush1.bf16.msra.mxu0 0
        %557 = vmatprep.mubr.bf16.mxu0 0
        %558 = vmatmul.mubr.bf16.gmra.mrb[0].mxu0 %v513
        %v559 = vpop.f32.mrb[0].mxu0
        %v560 = vadd.f32 %v509, %v559
        %v561 = vpop.f32.mrb[0].mxu0
        %v562 = vadd.f32 %v509, %v561
        %v563 = vpop.f32.mrb[0].mxu0
        %v564 = vpop.f32.mrb[0].mxu0
        %565 = vdwg.mxu0
        %566 = vmatprep.subr.bf16.mxu0 0
        %567 = vmatpush1.bf16.msra.mxu0 %v491
        %568 = vmatprep.subr.bf16.mxu0 0
        %569 = vmatpush1.bf16.msra.mxu0 %v494
        %570 = vmatprep.subr.bf16.mxu0 0
        %571 = vmatpush1.bf16.msra.mxu0 %v497
        %572 = vmatprep.subr.bf16.mxu0 0
        %573 = vmatpush1.bf16.msra.mxu0 %v500
        %574 = vmatprep.subr.bf16.mxu0 0
        %575 = vmatpush1.bf16.msra.mxu0 %v523
        %576 = vmatprep.subr.bf16.mxu0 0
        %577 = vmatpush1.bf16.msra.mxu0 0
        %578 = vmatprep.subr.bf16.mxu0 0
        %579 = vmatpush1.bf16.msra.mxu0 0
        %580 = vmatprep.subr.bf16.mxu0 0
        %581 = vmatpush1.bf16.msra.mxu0 0
        %582 = vmatprep.subr.bf16.mxu0 0
        %583 = vmatpush1.bf16.msra.mxu0 0
        %584 = vmatprep.subr.bf16.mxu0 0
        %585 = vmatpush1.bf16.msra.mxu0 0
        %586 = vmatprep.subr.bf16.mxu0 0
        %587 = vmatpush1.bf16.msra.mxu0 0
        %588 = vmatprep.subr.bf16.mxu0 0
        %589 = vmatpush1.bf16.msra.mxu0 0
        %590 = vmatprep.subr.bf16.mxu0 0
        %591 = vmatpush1.bf16.msra.mxu0 0
        %592 = vmatprep.subr.bf16.mxu0 0
        %593 = vmatpush1.bf16.msra.mxu0 0
        %594 = vmatprep.subr.bf16.mxu0 0
        %595 = vmatpush1.bf16.msra.mxu0 0
        %596 = vmatprep.subr.bf16.mxu0 0
        %597 = vmatpush1.bf16.msra.mxu0 0
        %598 = vmatprep.mubr.bf16.mxu0 0
        %599 = vmatmul.mubr.bf16.gmra.mrb[0].mxu0 %v513
        %v600 = vpop.f32.mrb[0].mxu0
        %v601 = vadd.f32 %v509, %v600
        %v602 = vpop.f32.mrb[0].mxu0
        %v603 = vpop.f32.mrb[0].mxu0
        %v604 = vpop.f32.mrb[0].mxu0
        %605 = vdwg.mxu0
        %v606 = vmul.f32 %v560, 0.01
        %v607 = vmul.f32 %v562, 0.01
        %v608 = vmul.f32 %v601, 0.01
        %v609 = vmax.f32 %v560, %v606
        %v610 = vmax.f32 %v562, %v607
        %v611 = vmax.f32 %v601, %v608
        %v613 = vlaneseq
        %v614 = vshrl.u32 %v613, 7
        %v615 = vsub.s32 0, %v614
        %v616 = vrot.slane %v212, %v615
        %v617 = vlaneseq
        %v618 = vshrl.u32 %v617, 7
        %v619 = vsub.s32 1, %v618
        %v620 = vrot.slane %v212, %v619
        %v621 = vlaneseq
        %v622 = vshrl.u32 %v621, 7
        %v623 = vsub.s32 2, %v622
        %v624 = vrot.slane %v212, %v623
        %v628 = vmul.f32 %v609, %v616
        %v629 = vmul.f32 %v610, %v620
        %v630 = vmul.f32 %v611, %v624
        %631 = vrot.lane.b32.xlu0 %v628, 19
        %v632 = vpop.permute.xlu0 %631
        %633 = vrot.lane.b32.xlu0 %v629, 19
        %v634 = vpop.permute.xlu0 %633
        %635 = vrot.lane.b32.xlu0 %v630, 19
        %v636 = vpop.permute.xlu0 %635
        %v637 = vsel %vm361, %v634, %v636
        %v638 = vsel %vm361, %v632, %v634
        %v639 = vsel %vm361, %v636, %v632
        %640 = vst [vmem:[#allocation2 + $0xd8] sm:$0xf] %v639
        %641 = vst [vmem:[#allocation2 + $0xe0] sm:$0xf] %v638
        %642 = vst [vmem:[#allocation2 + $0xe8] sm:$0xf] %v637
        %643 = vrot.lane.b32.xlu0 %v628, 18
        %v644 = vpop.permute.xlu0 %643
        %645 = vrot.lane.b32.xlu0 %v629, 18
        %v646 = vpop.permute.xlu0 %645
        %647 = vrot.lane.b32.xlu0 %v630, 18
        %v648 = vpop.permute.xlu0 %647
        %v649 = vsel %vm374, %v646, %v648
        %v650 = vsel %vm374, %v644, %v646
        %v651 = vsel %vm374, %v648, %v644
        %652 = vst [vmem:[#allocation2 + $0xf0] sm:$0xf] %v651
        %653 = vst [vmem:[#allocation2 + $0xf8] sm:$0xf] %v650
        %654 = vst [vmem:[#allocation2 + $0x100] sm:$0xf] %v649
        %655 = vrot.lane.b32.xlu0 %v628, 17
        %v656 = vpop.permute.xlu0 %655
        %657 = vrot.lane.b32.xlu0 %v629, 17
        %v658 = vpop.permute.xlu0 %657
        %659 = vrot.lane.b32.xlu0 %v630, 17
        %v660 = vpop.permute.xlu0 %659
        %v661 = vsel %vm387, %v658, %v660
        %v662 = vsel %vm387, %v656, %v658
        %v663 = vsel %vm387, %v660, %v656
        %664 = vst [vmem:[#allocation2 + $0x108] sm:$0xf] %v663
        %665 = vst [vmem:[#allocation2 + $0x110] sm:$0xf] %v662
        %666 = vst [vmem:[#allocation2 + $0x118] sm:$0xf] %v661
        %667 = vrot.lane.b32.xlu0 %v628, 1
        %v668 = vpop.permute.xlu0 %667
        %669 = vrot.lane.b32.xlu0 %v629, 1
        %v670 = vpop.permute.xlu0 %669
        %671 = vrot.lane.b32.xlu0 %v630, 1
        %v672 = vpop.permute.xlu0 %671
        %v673 = vsel %vm400, %v670, %v672
        %v674 = vsel %vm400, %v668, %v670
        %v675 = vsel %vm400, %v672, %v668
        %676 = vst [vmem:[#allocation2 + $0x120] sm:$0xf] %v675
        %677 = vst [vmem:[#allocation2 + $0x128] sm:$0xf] %v674
        %678 = vst [vmem:[#allocation2 + $0x130] sm:$0xf] %v673
        %679 = vst [vmem:[#allocation2 + $0x138] sm:$0xf] %v628
        %680 = vst [vmem:[#allocation2 + $0x140] sm:$0xf] %v629
        %681 = vst [vmem:[#allocation2 + $0x148] sm:$0xf] %v630
        %682 = vrot.lane.b32.xlu0 %v628, 127
        %v683 = vpop.permute.xlu0 %682
        %684 = vrot.lane.b32.xlu0 %v629, 127
        %v685 = vpop.permute.xlu0 %684
        %686 = vrot.lane.b32.xlu0 %v630, 127
        %v687 = vpop.permute.xlu0 %686
        %v688 = vsel %vm416, %v685, %v687
        %v689 = vsel %vm416, %v683, %v685
        %v690 = vsel %vm416, %v687, %v683
        %691 = vst [vmem:[#allocation2 + $0x150] sm:$0xf] %v689
        %692 = vst [vmem:[#allocation2 + $0x158] sm:$0xf] %v688
        %693 = vst [vmem:[#allocation2 + $0x160] sm:$0xf] %v690
        %694 = vrot.lane.b32.xlu0 %v628, 111
        %v695 = vpop.permute.xlu0 %694
        %696 = vrot.lane.b32.xlu0 %v629, 111
        %v697 = vpop.permute.xlu0 %696
        %698 = vrot.lane.b32.xlu0 %v630, 111
        %v699 = vpop.permute.xlu0 %698
        %v700 = vsel %vm429, %v697, %v699
        %v701 = vsel %vm429, %v695, %v697
        %v702 = vsel %vm429, %v699, %v695
        %703 = vst [vmem:[#allocation2 + $0x168] sm:$0xf] %v701
        %704 = vst [vmem:[#allocation2 + $0x170] sm:$0xf] %v700
        %705 = vst [vmem:[#allocation2 + $0x178] sm:$0xf] %v702
        %706 = vrot.lane.b32.xlu0 %v628, 110
        %v707 = vpop.permute.xlu0 %706
        %708 = vrot.lane.b32.xlu0 %v629, 110
        %v709 = vpop.permute.xlu0 %708
        %710 = vrot.lane.b32.xlu0 %v630, 110
        %v711 = vpop.permute.xlu0 %710
        %v712 = vsel %vm442, %v709, %v711
        %v713 = vsel %vm442, %v707, %v709
        %v714 = vsel %vm442, %v711, %v707
        %715 = vst [vmem:[#allocation2 + $0x180] sm:$0xf] %v713
        %716 = vst [vmem:[#allocation2 + $0x188] sm:$0xf] %v712
        %717 = vst [vmem:[#allocation2 + $0x190] sm:$0xf] %v714
        %718 = vrot.lane.b32.xlu0 %v628, 109
        %v719 = vpop.permute.xlu0 %718
        %720 = vrot.lane.b32.xlu0 %v629, 109
        %v721 = vpop.permute.xlu0 %720
        %722 = vrot.lane.b32.xlu0 %v630, 109
        %v723 = vpop.permute.xlu0 %722
        %v724 = vsel %vm455, %v721, %v723
        %v725 = vsel %vm455, %v719, %v721
        %v726 = vsel %vm455, %v723, %v719
        %727 = vst [vmem:[#allocation2 + $0x198] sm:$0xf] %v725
        %728 = vst [vmem:[#allocation2 + $0x1a0] sm:$0xf] %v724
        %729 = vst [vmem:[#allocation2 + $0x1a8] sm:$0xf] %v726
        %v730 = vld [vmem:[#allocation2] sm:$0xff]
        %v731 = vld [vmem:[#allocation2 + $0x8] sm:$0xff]
        %v732 = vld [vmem:[#allocation2 + $0x10] sm:$0xff]
        %v733 = vld [vmem:[#allocation2 + $0x18] sm:$0xff]
        %v734 = vld [vmem:[#allocation2 + $0x20] sm:$0xff]
        %v735 = vld [vmem:[#allocation2 + $0x28] sm:$0xff]
        %v736 = vld [vmem:[#allocation2 + $0x30] sm:$0xff]
        %v737 = vld [vmem:[#allocation2 + $0x38] sm:$0xff]
        %v738 = vld [vmem:[#allocation2 + $0x40] sm:$0xff]
        %v739 = vld [vmem:[#allocation2 + $0x48] sm:$0xff]
        %v740 = vld [vmem:[#allocation2 + $0x50] sm:$0xff]
        %v741 = vld [vmem:[#allocation2 + $0x58] sm:$0xff]
        %v742 = vld [vmem:[#allocation2 + $0x60] sm:$0xff]
        %v743 = vld [vmem:[#allocation2 + $0x68] sm:$0xff]
        %v744 = vld [vmem:[#allocation2 + $0x70] sm:$0xff]
        %v745 = vld [vmem:[#allocation2 + $0x78] sm:$0xff]
        %v746 = vld [vmem:[#allocation2 + $0x80] sm:$0xff]
        %v747 = vld [vmem:[#allocation2 + $0x88] sm:$0xff]
        %v748 = vld [vmem:[#allocation2 + $0x90] sm:$0xff]
        %v749 = vld [vmem:[#allocation2 + $0x98] sm:$0xff]
        %v750 = vld [vmem:[#allocation2 + $0xa0] sm:$0xff]
        %v751 = vld [vmem:[#allocation2 + $0xa8] sm:$0xff]
        %v752 = vld [vmem:[#allocation2 + $0xb0] sm:$0xff]
        %v753 = vld [vmem:[#allocation2 + $0xb8] sm:$0xff]
        %v754 = vld [vmem:[#allocation2 + $0xc0] sm:$0xff]
        %v755 = vld [vmem:[#allocation2 + $0xc8] sm:$0xff]
        %v756 = vld [vmem:[#allocation2 + $0xd0] sm:$0xff]
        %v757 = vld [vmem:[#allocation2 + $0xd8] sm:$0xff]
        %v758 = vld [vmem:[#allocation2 + $0xe0] sm:$0xff]
        %v759 = vld [vmem:[#allocation2 + $0xe8] sm:$0xff]
        %v760 = vld [vmem:[#allocation2 + $0xf0] sm:$0xff]
        %v761 = vld [vmem:[#allocation2 + $0xf8] sm:$0xff]
        %v762 = vld [vmem:[#allocation2 + $0x100] sm:$0xff]
        %v763 = vld [vmem:[#allocation2 + $0x108] sm:$0xff]
        %v764 = vld [vmem:[#allocation2 + $0x110] sm:$0xff]
        %v765 = vld [vmem:[#allocation2 + $0x118] sm:$0xff]
        %v766 = vld [vmem:[#allocation2 + $0x120] sm:$0xff]
        %v767 = vld [vmem:[#allocation2 + $0x128] sm:$0xff]
        %v768 = vld [vmem:[#allocation2 + $0x130] sm:$0xff]
        %v769 = vld [vmem:[#allocation2 + $0x138] sm:$0xff]
        %v770 = vld [vmem:[#allocation2 + $0x140] sm:$0xff]
        %v771 = vld [vmem:[#allocation2 + $0x148] sm:$0xff]
        %v772 = vld [vmem:[#allocation2 + $0x150] sm:$0xff]
        %v773 = vld [vmem:[#allocation2 + $0x158] sm:$0xff]
        %v774 = vld [vmem:[#allocation2 + $0x160] sm:$0xff]
        %v775 = vld [vmem:[#allocation2 + $0x168] sm:$0xff]
        %v776 = vld [vmem:[#allocation2 + $0x170] sm:$0xff]
        %v777 = vld [vmem:[#allocation2 + $0x178] sm:$0xff]
        %v778 = vld [vmem:[#allocation2 + $0x180] sm:$0xff]
        %v779 = vld [vmem:[#allocation2 + $0x188] sm:$0xff]
        %v780 = vld [vmem:[#allocation2 + $0x190] sm:$0xff]
        %v781 = vld [vmem:[#allocation2 + $0x198] sm:$0xff]
        %v782 = vld [vmem:[#allocation2 + $0x1a0] sm:$0xff]
        %v783 = vld [vmem:[#allocation2 + $0x1a8] sm:$0xff]
        %v784 = vpack.c.bf16 %v733, %v730
        %v785 = vpack.c.bf16 %v734, %v731
        %v786 = vpack.c.bf16 %v735, %v732
        %v787 = vpack.c.bf16 %v739, %v736
        %v788 = vpack.c.bf16 %v740, %v737
        %v789 = vpack.c.bf16 %v741, %v738
        %v790 = vpack.c.bf16 %v745, %v742
        %v791 = vpack.c.bf16 %v746, %v743
        %v792 = vpack.c.bf16 %v747, %v744
        %v793 = vpack.c.bf16 %v751, %v748
        %v794 = vpack.c.bf16 %v752, %v749
        %v795 = vpack.c.bf16 %v753, %v750
        %v796 = vpack.c.bf16 %v757, %v754
        %v797 = vpack.c.bf16 %v758, %v755
        %v798 = vpack.c.bf16 %v759, %v756
        %v799 = vpack.c.bf16 %v763, %v760
        %v800 = vpack.c.bf16 %v764, %v761
        %v801 = vpack.c.bf16 %v765, %v762
        %v802 = vpack.c.bf16 %v769, %v766
        %v803 = vpack.c.bf16 %v770, %v767
        %v804 = vpack.c.bf16 %v771, %v768
        %v805 = vpack.c.bf16 %v775, %v772
        %v806 = vpack.c.bf16 %v776, %v773
        %v807 = vpack.c.bf16 %v777, %v774
        %v808 = vpack.c.bf16 %v781, %v778
        %v809 = vpack.c.bf16 %v782, %v779
        %v810 = vpack.c.bf16 %v783, %v780
        %s811 = scalar_lea.vmem [#allocation3], 6
        %v812 = vld [vmem:[%s811] sm:$0xf]
        %s813 = scalar_lea.vmem %s3, 4
        %v814 = vld [vmem:[%s813] sm:$0xf]
        %816 = vset.pattern.permute.xlu0 0
        %817 = vperm.xlu0 %816, %v814
        %v818 = vpop.permute.xlu0 %817
        %v822 = vunpack.c.l.s4 1983009808
        %v823 = vunpack.c.0.s8 %v822
        %v824 = vlaneseq
        %v825 = vshrl.u32 %v824, 7
        %v826 = vsub.s32 %v823, %v825
        %v827 = vrot.slane %v812, %v826
        %v828 = vcombine.high %v827, %v827
        %vm830 = vcmask 130048
        %v832 = vsel %vm830, %v828, 0
        %834 = vmatprep.subr.bf16.mxu0 %v785
        %835 = vmatpush1.bf16.msra.mxu0 %v784
        %836 = vmatprep.subr.bf16.mxu0 %v788
        %837 = vmatpush1.bf16.msra.mxu0 %v787
        %838 = vmatprep.subr.bf16.mxu0 %v791
        %839 = vmatpush1.bf16.msra.mxu0 %v790
        %840 = vmatprep.subr.bf16.mxu0 %v794
        %841 = vmatpush1.bf16.msra.mxu0 %v793
        %842 = vmatprep.subr.bf16.mxu0 %v797
        %843 = vmatpush1.bf16.msra.mxu0 %v796
        %844 = vmatprep.subr.bf16.mxu0 %v800
        %845 = vmatpush1.bf16.msra.mxu0 %v799
        %846 = vmatprep.subr.bf16.mxu0 %v803
        %847 = vmatpush1.bf16.msra.mxu0 %v802
        %848 = vmatprep.subr.bf16.mxu0 %v806
        %849 = vmatpush1.bf16.msra.mxu0 %v805
        %850 = vmatprep.subr.bf16.mxu0 %v809
        %851 = vmatpush1.bf16.msra.mxu0 %v808
        %852 = vmatprep.subr.bf16.mxu0 0
        %853 = vmatpush1.bf16.msra.mxu0 0
        %854 = vmatprep.subr.bf16.mxu0 0
        %855 = vmatpush1.bf16.msra.mxu0 0
        %856 = vmatprep.subr.bf16.mxu0 0
        %857 = vmatpush1.bf16.msra.mxu0 0
        %858 = vmatprep.subr.bf16.mxu0 0
        %859 = vmatpush1.bf16.msra.mxu0 0
        %860 = vmatprep.subr.bf16.mxu0 0
        %861 = vmatpush1.bf16.msra.mxu0 0
        %862 = vmatprep.subr.bf16.mxu0 0
        %863 = vmatpush1.bf16.msra.mxu0 0
        %864 = vmatprep.subr.bf16.mxu0 0
        %865 = vmatpush1.bf16.msra.mxu0 0
        %866 = vmatprep.mubr.bf16.mxu0 %v832
        %867 = vmatmul.mubr.bf16.gmra.mrb[0].mxu0 %v827
        %v868 = vpop.f32.mrb[0].mxu0
        %v869 = vadd.f32 %v818, %v868
        %v870 = vpop.f32.mrb[0].mxu0
        %v871 = vadd.f32 %v818, %v870
        %v872 = vpop.f32.mrb[0].mxu0
        %v873 = vpop.f32.mrb[0].mxu0
        %874 = vdwg.mxu0
        %875 = vmatprep.subr.bf16.mxu0 0
        %876 = vmatpush1.bf16.msra.mxu0 %v786
        %877 = vmatprep.subr.bf16.mxu0 0
        %878 = vmatpush1.bf16.msra.mxu0 %v789
        %879 = vmatprep.subr.bf16.mxu0 0
        %880 = vmatpush1.bf16.msra.mxu0 %v792
        %881 = vmatprep.subr.bf16.mxu0 0
        %882 = vmatpush1.bf16.msra.mxu0 %v795
        %883 = vmatprep.subr.bf16.mxu0 0
        %884 = vmatpush1.bf16.msra.mxu0 %v798
        %885 = vmatprep.subr.bf16.mxu0 0
        %886 = vmatpush1.bf16.msra.mxu0 %v801
        %887 = vmatprep.subr.bf16.mxu0 0
        %888 = vmatpush1.bf16.msra.mxu0 %v804
        %889 = vmatprep.subr.bf16.mxu0 0
        %890 = vmatpush1.bf16.msra.mxu0 %v807
        %891 = vmatprep.subr.bf16.mxu0 0
        %892 = vmatpush1.bf16.msra.mxu0 %v810
        %893 = vmatprep.subr.bf16.mxu0 0
        %894 = vmatpush1.bf16.msra.mxu0 0
        %895 = vmatprep.subr.bf16.mxu0 0
        %896 = vmatpush1.bf16.msra.mxu0 0
        %897 = vmatprep.subr.bf16.mxu0 0
        %898 = vmatpush1.bf16.msra.mxu0 0
        %899 = vmatprep.subr.bf16.mxu0 0
        %900 = vmatpush1.bf16.msra.mxu0 0
        %901 = vmatprep.subr.bf16.mxu0 0
        %902 = vmatpush1.bf16.msra.mxu0 0
        %903 = vmatprep.subr.bf16.mxu0 0
        %904 = vmatpush1.bf16.msra.mxu0 0
        %905 = vmatprep.subr.bf16.mxu0 0
        %906 = vmatpush1.bf16.msra.mxu0 0
        %907 = vmatprep.mubr.bf16.mxu0 %v832
        %908 = vmatmul.mubr.bf16.gmra.mrb[0].mxu0 %v827
        %v909 = vpop.f32.mrb[0].mxu0
        %v910 = vadd.f32 %v818, %v909
        %v911 = vpop.f32.mrb[0].mxu0
        %v912 = vpop.f32.mrb[0].mxu0
        %v913 = vpop.f32.mrb[0].mxu0
        %914 = vdwg.mxu0
        %v915 = vmul.f32 %v869, 0.01
        %v916 = vmul.f32 %v871, 0.01
        %v917 = vmul.f32 %v910, 0.01
        %v918 = vmax.f32 %v869, %v915
        %v919 = vmax.f32 %v871, %v916
        %v920 = vmax.f32 %v910, %v917
        %v921 = vmul.f32 %v918, %v616
        %v922 = vmul.f32 %v919, %v620
        %v923 = vmul.f32 %v920, %v624
        %924 = vrot.lane.b32.xlu0 %v921, 19
        %v925 = vpop.permute.xlu0 %924
        %926 = vrot.lane.b32.xlu0 %v922, 19
        %v927 = vpop.permute.xlu0 %926
        %928 = vrot.lane.b32.xlu0 %v923, 19
        %v929 = vpop.permute.xlu0 %928
        %v930 = vsel %vm361, %v927, %v929
        %v931 = vsel %vm361, %v925, %v927
        %v932 = vsel %vm361, %v929, %v925
        %933 = vst [vmem:[#allocation2 + $0x1b0] sm:$0xf] %v932
        %934 = vst [vmem:[#allocation2 + $0x1b8] sm:$0xf] %v931
        %935 = vst [vmem:[#allocation2 + $0x1c0] sm:$0xf] %v930
        %936 = vrot.lane.b32.xlu0 %v921, 18
        %v937 = vpop.permute.xlu0 %936
        %938 = vrot.lane.b32.xlu0 %v922, 18
        %v939 = vpop.permute.xlu0 %938
        %940 = vrot.lane.b32.xlu0 %v923, 18
        %v941 = vpop.permute.xlu0 %940
        %v942 = vsel %vm374, %v939, %v941
        %v943 = vsel %vm374, %v937, %v939
        %v944 = vsel %vm374, %v941, %v937
        %945 = vst [vmem:[#allocation2 + $0x1c8] sm:$0xf] %v944
        %946 = vst [vmem:[#allocation2 + $0x1d0] sm:$0xf] %v943
        %947 = vst [vmem:[#allocation2 + $0x1d8] sm:$0xf] %v942
        %948 = vrot.lane.b32.xlu0 %v921, 17
        %v949 = vpop.permute.xlu0 %948
        %950 = vrot.lane.b32.xlu0 %v922, 17
        %v951 = vpop.permute.xlu0 %950
        %952 = vrot.lane.b32.xlu0 %v923, 17
        %v953 = vpop.permute.xlu0 %952
        %v954 = vsel %vm387, %v951, %v953
        %v955 = vsel %vm387, %v949, %v951
        %v956 = vsel %vm387, %v953, %v949
        %957 = vst [vmem:[#allocation2 + $0x1e0] sm:$0xf] %v956
        %958 = vst [vmem:[#allocation2 + $0x1e8] sm:$0xf] %v955
        %959 = vst [vmem:[#allocation2 + $0x1f0] sm:$0xf] %v954
        %960 = vrot.lane.b32.xlu0 %v921, 1
        %v961 = vpop.permute.xlu0 %960
        %962 = vrot.lane.b32.xlu0 %v922, 1
        %v963 = vpop.permute.xlu0 %962
        %964 = vrot.lane.b32.xlu0 %v923, 1
        %v965 = vpop.permute.xlu0 %964
        %v966 = vsel %vm400, %v963, %v965
        %v967 = vsel %vm400, %v961, %v963
        %v968 = vsel %vm400, %v965, %v961
        %969 = vst [vmem:[#allocation2 + $0x1f8] sm:$0xf] %v968
        %970 = vst [vmem:[#allocation2 + $0x200] sm:$0xf] %v967
        %971 = vst [vmem:[#allocation2 + $0x208] sm:$0xf] %v966
        %972 = vst [vmem:[#allocation2 + $0x210] sm:$0xf] %v921
        %973 = vst [vmem:[#allocation2 + $0x218] sm:$0xf] %v922
        %974 = vst [vmem:[#allocation2 + $0x220] sm:$0xf] %v923
        %975 = vrot.lane.b32.xlu0 %v921, 127
        %v976 = vpop.permute.xlu0 %975
        %977 = vrot.lane.b32.xlu0 %v922, 127
        %v978 = vpop.permute.xlu0 %977
        %979 = vrot.lane.b32.xlu0 %v923, 127
        %v980 = vpop.permute.xlu0 %979
        %v981 = vsel %vm416, %v978, %v980
        %v982 = vsel %vm416, %v976, %v978
        %v983 = vsel %vm416, %v980, %v976
        %984 = vst [vmem:[#allocation2 + $0x228] sm:$0xf] %v982
        %985 = vst [vmem:[#allocation2 + $0x230] sm:$0xf] %v981
        %986 = vst [vmem:[#allocation2 + $0x238] sm:$0xf] %v983
        %987 = vrot.lane.b32.xlu0 %v921, 111
        %v988 = vpop.permute.xlu0 %987
        %989 = vrot.lane.b32.xlu0 %v922, 111
        %v990 = vpop.permute.xlu0 %989
        %991 = vrot.lane.b32.xlu0 %v923, 111
        %v992 = vpop.permute.xlu0 %991
        %v993 = vsel %vm429, %v990, %v992
        %v994 = vsel %vm429, %v988, %v990
        %v995 = vsel %vm429, %v992, %v988
        %996 = vst [vmem:[#allocation2 + $0x240] sm:$0xf] %v994
        %997 = vst [vmem:[#allocation2 + $0x248] sm:$0xf] %v993
        %998 = vst [vmem:[#allocation2 + $0x250] sm:$0xf] %v995
        %999 = vrot.lane.b32.xlu0 %v921, 110
        %v1000 = vpop.permute.xlu0 %999
        %1001 = vrot.lane.b32.xlu0 %v922, 110
        %v1002 = vpop.permute.xlu0 %1001
        %1003 = vrot.lane.b32.xlu0 %v923, 110
        %v1004 = vpop.permute.xlu0 %1003
        %v1005 = vsel %vm442, %v1002, %v1004
        %v1006 = vsel %vm442, %v1000, %v1002
        %v1007 = vsel %vm442, %v1004, %v1000
        %1008 = vst [vmem:[#allocation2 + $0x258] sm:$0xf] %v1006
        %1009 = vst [vmem:[#allocation2 + $0x260] sm:$0xf] %v1005
        %1010 = vst [vmem:[#allocation2 + $0x268] sm:$0xf] %v1007
        %1011 = vrot.lane.b32.xlu0 %v921, 109
        %v1012 = vpop.permute.xlu0 %1011
        %1013 = vrot.lane.b32.xlu0 %v922, 109
        %v1014 = vpop.permute.xlu0 %1013
        %1015 = vrot.lane.b32.xlu0 %v923, 109
        %v1016 = vpop.permute.xlu0 %1015
        %v1017 = vsel %vm455, %v1014, %v1016
        %v1018 = vsel %vm455, %v1012, %v1014
        %v1019 = vsel %vm455, %v1016, %v1012
        %1020 = vst [vmem:[#allocation2 + $0x270] sm:$0xf] %v1018
        %1021 = vst [vmem:[#allocation2 + $0x278] sm:$0xf] %v1017
        %1022 = vst [vmem:[#allocation2 + $0x280] sm:$0xf] %v1019
        %v1023 = vld [vmem:[#allocation2] sm:$0xff]
        %v1024 = vld [vmem:[#allocation2 + $0x8] sm:$0xff]
        %v1025 = vld [vmem:[#allocation2 + $0x10] sm:$0xff]
        %v1026 = vld [vmem:[#allocation2 + $0x18] sm:$0xff]
        %v1027 = vld [vmem:[#allocation2 + $0x20] sm:$0xff]
        %v1028 = vld [vmem:[#allocation2 + $0x28] sm:$0xff]
        %v1029 = vld [vmem:[#allocation2 + $0x30] sm:$0xff]
        %v1030 = vld [vmem:[#allocation2 + $0x38] sm:$0xff]
        %v1031 = vld [vmem:[#allocation2 + $0x40] sm:$0xff]
        %v1032 = vld [vmem:[#allocation2 + $0x48] sm:$0xff]
        %v1033 = vld [vmem:[#allocation2 + $0x50] sm:$0xff]
        %v1034 = vld [vmem:[#allocation2 + $0x58] sm:$0xff]
        %v1035 = vld [vmem:[#allocation2 + $0x60] sm:$0xff]
        %v1036 = vld [vmem:[#allocation2 + $0x68] sm:$0xff]
        %v1037 = vld [vmem:[#allocation2 + $0x70] sm:$0xff]
        %v1038 = vld [vmem:[#allocation2 + $0x78] sm:$0xff]
        %v1039 = vld [vmem:[#allocation2 + $0x80] sm:$0xff]
        %v1040 = vld [vmem:[#allocation2 + $0x88] sm:$0xff]
        %v1041 = vld [vmem:[#allocation2 + $0x90] sm:$0xff]
        %v1042 = vld [vmem:[#allocation2 + $0x98] sm:$0xff]
        %v1043 = vld [vmem:[#allocation2 + $0xa0] sm:$0xff]
        %v1044 = vld [vmem:[#allocation2 + $0xa8] sm:$0xff]
        %v1045 = vld [vmem:[#allocation2 + $0xb0] sm:$0xff]
        %v1046 = vld [vmem:[#allocation2 + $0xb8] sm:$0xff]
        %v1047 = vld [vmem:[#allocation2 + $0xc0] sm:$0xff]
        %v1048 = vld [vmem:[#allocation2 + $0xc8] sm:$0xff]
        %v1049 = vld [vmem:[#allocation2 + $0xd0] sm:$0xff]
        %v1050 = vld [vmem:[#allocation2 + $0xd8] sm:$0xff]
        %v1051 = vld [vmem:[#allocation2 + $0xe0] sm:$0xff]
        %v1052 = vld [vmem:[#allocation2 + $0xe8] sm:$0xff]
        %v1053 = vld [vmem:[#allocation2 + $0xf0] sm:$0xff]
        %v1054 = vld [vmem:[#allocation2 + $0xf8] sm:$0xff]
        %v1055 = vld [vmem:[#allocation2 + $0x100] sm:$0xff]
        %v1056 = vld [vmem:[#allocation2 + $0x108] sm:$0xff]
        %v1057 = vld [vmem:[#allocation2 + $0x110] sm:$0xff]
        %v1058 = vld [vmem:[#allocation2 + $0x118] sm:$0xff]
        %v1059 = vld [vmem:[#allocation2 + $0x120] sm:$0xff]
        %v1060 = vld [vmem:[#allocation2 + $0x128] sm:$0xff]
        %v1061 = vld [vmem:[#allocation2 + $0x130] sm:$0xff]
        %v1062 = vld [vmem:[#allocation2 + $0x138] sm:$0xff]
        %v1063 = vld [vmem:[#allocation2 + $0x140] sm:$0xff]
        %v1064 = vld [vmem:[#allocation2 + $0x148] sm:$0xff]
        %v1065 = vld [vmem:[#allocation2 + $0x150] sm:$0xff]
        %v1066 = vld [vmem:[#allocation2 + $0x158] sm:$0xff]
        %v1067 = vld [vmem:[#allocation2 + $0x160] sm:$0xff]
        %v1068 = vld [vmem:[#allocation2 + $0x168] sm:$0xff]
        %v1069 = vld [vmem:[#allocation2 + $0x170] sm:$0xff]
        %v1070 = vld [vmem:[#allocation2 + $0x178] sm:$0xff]
        %v1071 = vld [vmem:[#allocation2 + $0x180] sm:$0xff]
        %v1072 = vld [vmem:[#allocation2 + $0x188] sm:$0xff]
        %v1073 = vld [vmem:[#allocation2 + $0x190] sm:$0xff]
        %v1074 = vld [vmem:[#allocation2 + $0x198] sm:$0xff]
        %v1075 = vld [vmem:[#allocation2 + $0x1a0] sm:$0xff]
        %v1076 = vld [vmem:[#allocation2 + $0x1a8] sm:$0xff]
        %v1077 = vld [vmem:[#allocation2 + $0x1b0] sm:$0xff]
        %v1078 = vld [vmem:[#allocation2 + $0x1b8] sm:$0xff]
        %v1079 = vld [vmem:[#allocation2 + $0x1c0] sm:$0xff]
        %v1080 = vld [vmem:[#allocation2 + $0x1c8] sm:$0xff]
        %v1081 = vld [vmem:[#allocation2 + $0x1d0] sm:$0xff]
        %v1082 = vld [vmem:[#allocation2 + $0x1d8] sm:$0xff]
        %v1083 = vld [vmem:[#allocation2 + $0x1e0] sm:$0xff]
        %v1084 = vld [vmem:[#allocation2 + $0x1e8] sm:$0xff]
        %v1085 = vld [vmem:[#allocation2 + $0x1f0] sm:$0xff]
        %v1086 = vld [vmem:[#allocation2 + $0x1f8] sm:$0xff]
        %v1087 = vld [vmem:[#allocation2 + $0x200] sm:$0xff]
        %v1088 = vld [vmem:[#allocation2 + $0x208] sm:$0xff]
        %v1089 = vld [vmem:[#allocation2 + $0x210] sm:$0xff]
        %v1090 = vld [vmem:[#allocation2 + $0x218] sm:$0xff]
        %v1091 = vld [vmem:[#allocation2 + $0x220] sm:$0xff]
        %v1092 = vld [vmem:[#allocation2 + $0x228] sm:$0xff]
        %v1093 = vld [vmem:[#allocation2 + $0x230] sm:$0xff]
        %v1094 = vld [vmem:[#allocation2 + $0x238] sm:$0xff]
        %v1095 = vld [vmem:[#allocation2 + $0x240] sm:$0xff]
        %v1096 = vld [vmem:[#allocation2 + $0x248] sm:$0xff]
        %v1097 = vld [vmem:[#allocation2 + $0x250] sm:$0xff]
        %v1098 = vld [vmem:[#allocation2 + $0x258] sm:$0xff]
        %v1099 = vld [vmem:[#allocation2 + $0x260] sm:$0xff]
        %v1100 = vld [vmem:[#allocation2 + $0x268] sm:$0xff]
        %v1101 = vld [vmem:[#allocation2 + $0x270] sm:$0xff]
        %v1102 = vld [vmem:[#allocation2 + $0x278] sm:$0xff]
        %v1103 = vld [vmem:[#allocation2 + $0x280] sm:$0xff]
        %v1104 = vpack.c.bf16 %v1026, %v1023
        %v1105 = vpack.c.bf16 %v1027, %v1024
        %v1106 = vpack.c.bf16 %v1028, %v1025
        %v1107 = vpack.c.bf16 %v1032, %v1029
        %v1108 = vpack.c.bf16 %v1033, %v1030
        %v1109 = vpack.c.bf16 %v1034, %v1031
        %v1110 = vpack.c.bf16 %v1038, %v1035
        %v1111 = vpack.c.bf16 %v1039, %v1036
        %v1112 = vpack.c.bf16 %v1040, %v1037
        %v1113 = vpack.c.bf16 %v1044, %v1041
        %v1114 = vpack.c.bf16 %v1045, %v1042
        %v1115 = vpack.c.bf16 %v1046, %v1043
        %v1116 = vpack.c.bf16 %v1050, %v1047
        %v1117 = vpack.c.bf16 %v1051, %v1048
        %v1118 = vpack.c.bf16 %v1052, %v1049
        %v1119 = vpack.c.bf16 %v1056, %v1053
        %v1120 = vpack.c.bf16 %v1057, %v1054
        %v1121 = vpack.c.bf16 %v1058, %v1055
        %v1122 = vpack.c.bf16 %v1062, %v1059
        %v1123 = vpack.c.bf16 %v1063, %v1060
        %v1124 = vpack.c.bf16 %v1064, %v1061
        %v1125 = vpack.c.bf16 %v1068, %v1065
        %v1126 = vpack.c.bf16 %v1069, %v1066
        %v1127 = vpack.c.bf16 %v1070, %v1067
        %v1128 = vpack.c.bf16 %v1074, %v1071
        %v1129 = vpack.c.bf16 %v1075, %v1072
        %v1130 = vpack.c.bf16 %v1076, %v1073
        %v1131 = vpack.c.bf16 %v1080, %v1077
        %v1132 = vpack.c.bf16 %v1081, %v1078
        %v1133 = vpack.c.bf16 %v1082, %v1079
        %v1134 = vpack.c.bf16 %v1086, %v1083
        %v1135 = vpack.c.bf16 %v1087, %v1084
        %v1136 = vpack.c.bf16 %v1088, %v1085
        %v1137 = vpack.c.bf16 %v1092, %v1089
        %v1138 = vpack.c.bf16 %v1093, %v1090
        %v1139 = vpack.c.bf16 %v1094, %v1091
        %v1140 = vpack.c.bf16 %v1098, %v1095
        %v1141 = vpack.c.bf16 %v1099, %v1096
        %v1142 = vpack.c.bf16 %v1100, %v1097
        %v1143 = vpack.c.bf16 %v1101, %v1101
        %v1144 = vpack.c.bf16 %v1102, %v1102
        %v1145 = vpack.c.bf16 %v1103, %v1103
        %s1146 = scalar_lea.vmem [#allocation3], 12
        %v1147 = vld [vmem:[%s1146] sm:$0xf]
        %s1148 = scalar_lea.vmem %s3, 8
        %v1149 = vld [vmem:[%s1148] sm:$0xf]
        %1151 = vset.pattern.permute.xlu0 0
        %1152 = vperm.xlu0 %1151, %v1149
        %v1153 = vpop.permute.xlu0 %1152
        %v1157 = vunpack.c.l.s4 1983009808
        %v1158 = vunpack.c.0.s8 %v1157
        %v1159 = vlaneseq
        %v1160 = vshrl.u32 %v1159, 7
        %v1161 = vsub.s32 %v1158, %v1160
        %v1162 = vrot.slane %v1147, %v1161
        %v1163 = vcombine.high %v1162, %v1162
        %vm1165 = vcmask 719872
        %v1167 = vsel %vm1165, %v1163, 0
        %v1170 = vsel %vm515, %v1143, 0
        %v1173 = vsel %vm515, %v1144, 0
        %v1176 = vsel %vm515, %v1145, 0
        %1178 = vmatprep.subr.bf16.mxu0 %v1105
        %1179 = vmatpush1.bf16.msra.mxu0 %v1104
        %1180 = vmatprep.subr.bf16.mxu0 %v1108
        %1181 = vmatpush1.bf16.msra.mxu0 %v1107
        %1182 = vmatprep.subr.bf16.mxu0 %v1111
        %1183 = vmatpush1.bf16.msra.mxu0 %v1110
        %1184 = vmatprep.subr.bf16.mxu0 %v1114
        %1185 = vmatpush1.bf16.msra.mxu0 %v1113
        %1186 = vmatprep.subr.bf16.mxu0 %v1117
        %1187 = vmatpush1.bf16.msra.mxu0 %v1116
        %1188 = vmatprep.subr.bf16.mxu0 %v1120
        %1189 = vmatpush1.bf16.msra.mxu0 %v1119
        %1190 = vmatprep.subr.bf16.mxu0 %v1123
        %1191 = vmatpush1.bf16.msra.mxu0 %v1122
        %1192 = vmatprep.subr.bf16.mxu0 %v1126
        %1193 = vmatpush1.bf16.msra.mxu0 %v1125
        %1194 = vmatprep.subr.bf16.mxu0 %v1129
        %1195 = vmatpush1.bf16.msra.mxu0 %v1128
        %1196 = vmatprep.subr.bf16.mxu0 %v1132
        %1197 = vmatpush1.bf16.msra.mxu0 %v1131
        %1198 = vmatprep.subr.bf16.mxu0 %v1135
        %1199 = vmatpush1.bf16.msra.mxu0 %v1134
        %1200 = vmatprep.subr.bf16.mxu0 %v1138
        %1201 = vmatpush1.bf16.msra.mxu0 %v1137
        %1202 = vmatprep.subr.bf16.mxu0 %v1141
        %1203 = vmatpush1.bf16.msra.mxu0 %v1140
        %1204 = vmatprep.subr.bf16.mxu0 %v1173
        %1205 = vmatpush1.bf16.msra.mxu0 %v1170
        %1206 = vmatprep.subr.bf16.mxu0 0
        %1207 = vmatpush1.bf16.msra.mxu0 0
        %1208 = vmatprep.subr.bf16.mxu0 0
        %1209 = vmatpush1.bf16.msra.mxu0 0
        %1210 = vmatprep.mubr.bf16.mxu0 %v1167
        %1211 = vmatmul.mubr.bf16.gmra.mrb[0].mxu0 %v1162
        %v1212 = vpop.f32.mrb[0].mxu0
        %v1213 = vadd.f32 %v1153, %v1212
        %v1214 = vpop.f32.mrb[0].mxu0
        %v1215 = vadd.f32 %v1153, %v1214
        %v1216 = vpop.f32.mrb[0].mxu0
        %v1217 = vpop.f32.mrb[0].mxu0
        %1218 = vdwg.mxu0
        %1219 = vmatprep.subr.bf16.mxu0 0
        %1220 = vmatpush1.bf16.msra.mxu0 %v1106
        %1221 = vmatprep.subr.bf16.mxu0 0
        %1222 = vmatpush1.bf16.msra.mxu0 %v1109
        %1223 = vmatprep.subr.bf16.mxu0 0
        %1224 = vmatpush1.bf16.msra.mxu0 %v1112
        %1225 = vmatprep.subr.bf16.mxu0 0
        %1226 = vmatpush1.bf16.msra.mxu0 %v1115
        %1227 = vmatprep.subr.bf16.mxu0 0
        %1228 = vmatpush1.bf16.msra.mxu0 %v1118
        %1229 = vmatprep.subr.bf16.mxu0 0
        %1230 = vmatpush1.bf16.msra.mxu0 %v1121
        %1231 = vmatprep.subr.bf16.mxu0 0
        %1232 = vmatpush1.bf16.msra.mxu0 %v1124
        %1233 = vmatprep.subr.bf16.mxu0 0
        %1234 = vmatpush1.bf16.msra.mxu0 %v1127
        %1235 = vmatprep.subr.bf16.mxu0 0
        %1236 = vmatpush1.bf16.msra.mxu0 %v1130
        %1237 = vmatprep.subr.bf16.mxu0 0
        %1238 = vmatpush1.bf16.msra.mxu0 %v1133
        %1239 = vmatprep.subr.bf16.mxu0 0
        %1240 = vmatpush1.bf16.msra.mxu0 %v1136
        %1241 = vmatprep.subr.bf16.mxu0 0
        %1242 = vmatpush1.bf16.msra.mxu0 %v1139
        %1243 = vmatprep.subr.bf16.mxu0 0
        %1244 = vmatpush1.bf16.msra.mxu0 %v1142
        %1245 = vmatprep.subr.bf16.mxu0 0
        %1246 = vmatpush1.bf16.msra.mxu0 %v1176
        %1247 = vmatprep.subr.bf16.mxu0 0
        %1248 = vmatpush1.bf16.msra.mxu0 0
        %1249 = vmatprep.subr.bf16.mxu0 0
        %1250 = vmatpush1.bf16.msra.mxu0 0
        %1251 = vmatprep.mubr.bf16.mxu0 %v1167
        %1252 = vmatmul.mubr.bf16.gmra.mrb[0].mxu0 %v1162
        %v1253 = vpop.f32.mrb[0].mxu0
        %v1254 = vadd.f32 %v1153, %v1253
        %v1255 = vpop.f32.mrb[0].mxu0
        %v1256 = vpop.f32.mrb[0].mxu0
        %v1257 = vpop.f32.mrb[0].mxu0
        %1258 = vdwg.mxu0
        %v1259 = vmul.f32 %v1213, 0.01
        %v1260 = vmul.f32 %v1215, 0.01
        %v1261 = vmul.f32 %v1254, 0.01
        %v1262 = vmax.f32 %v1213, %v1259
        %v1263 = vmax.f32 %v1215, %v1260
        %v1264 = vmax.f32 %v1254, %v1261
        %v1265 = vmul.f32 %v1262, %v616
        %v1266 = vmul.f32 %v1263, %v620
        %v1267 = vmul.f32 %v1264, %v624
        %1268 = vrot.lane.b32.xlu0 %v1265, 19
        %v1269 = vpop.permute.xlu0 %1268
        %1270 = vrot.lane.b32.xlu0 %v1266, 19
        %v1271 = vpop.permute.xlu0 %1270
        %1272 = vrot.lane.b32.xlu0 %v1267, 19
        %v1273 = vpop.permute.xlu0 %1272
        %v1274 = vsel %vm361, %v1271, %v1273
        %v1275 = vsel %vm361, %v1269, %v1271
        %v1276 = vsel %vm361, %v1273, %v1269
        %1277 = vst [vmem:[#allocation2 + $0x288] sm:$0xf] %v1276
        %1278 = vst [vmem:[#allocation2 + $0x290] sm:$0xf] %v1275
        %1279 = vst [vmem:[#allocation2 + $0x298] sm:$0xf] %v1274
        %1280 = vrot.lane.b32.xlu0 %v1265, 18
        %v1281 = vpop.permute.xlu0 %1280
        %1282 = vrot.lane.b32.xlu0 %v1266, 18
        %v1283 = vpop.permute.xlu0 %1282
        %1284 = vrot.lane.b32.xlu0 %v1267, 18
        %v1285 = vpop.permute.xlu0 %1284
        %v1286 = vsel %vm374, %v1283, %v1285
        %v1287 = vsel %vm374, %v1281, %v1283
        %v1288 = vsel %vm374, %v1285, %v1281
        %1289 = vst [vmem:[#allocation2 + $0x2a0] sm:$0xf] %v1288
        %1290 = vst [vmem:[#allocation2 + $0x2a8] sm:$0xf] %v1287
        %1291 = vst [vmem:[#allocation2 + $0x2b0] sm:$0xf] %v1286
        %1292 = vrot.lane.b32.xlu0 %v1265, 17
        %v1293 = vpop.permute.xlu0 %1292
        %1294 = vrot.lane.b32.xlu0 %v1266, 17
        %v1295 = vpop.permute.xlu0 %1294
        %1296 = vrot.lane.b32.xlu0 %v1267, 17
        %v1297 = vpop.permute.xlu0 %1296
        %v1298 = vsel %vm387, %v1295, %v1297
        %v1299 = vsel %vm387, %v1293, %v1295
        %v1300 = vsel %vm387, %v1297, %v1293
        %1301 = vst [vmem:[#allocation2 + $0x2b8] sm:$0xf] %v1300
        %1302 = vst [vmem:[#allocation2 + $0x2c0] sm:$0xf] %v1299
        %1303 = vst [vmem:[#allocation2 + $0x2c8] sm:$0xf] %v1298
        %1304 = vrot.lane.b32.xlu0 %v1265, 1
        %v1305 = vpop.permute.xlu0 %1304
        %1306 = vrot.lane.b32.xlu0 %v1266, 1
        %v1307 = vpop.permute.xlu0 %1306
        %1308 = vrot.lane.b32.xlu0 %v1267, 1
        %v1309 = vpop.permute.xlu0 %1308
        %v1310 = vsel %vm400, %v1307, %v1309
        %v1311 = vsel %vm400, %v1305, %v1307
        %v1312 = vsel %vm400, %v1309, %v1305
        %1313 = vst [vmem:[#allocation2 + $0x2d0] sm:$0xf] %v1312
        %1314 = vst [vmem:[#allocation2 + $0x2d8] sm:$0xf] %v1311
        %1315 = vst [vmem:[#allocation2 + $0x2e0] sm:$0xf] %v1310
        %1316 = vst [vmem:[#allocation2 + $0x2e8] sm:$0xf] %v1265
        %1317 = vst [vmem:[#allocation2 + $0x2f0] sm:$0xf] %v1266
        %1318 = vst [vmem:[#allocation2 + $0x2f8] sm:$0xf] %v1267
        %1319 = vrot.lane.b32.xlu0 %v1265, 127
        %v1320 = vpop.permute.xlu0 %1319
        %1321 = vrot.lane.b32.xlu0 %v1266, 127
        %v1322 = vpop.permute.xlu0 %1321
        %1323 = vrot.lane.b32.xlu0 %v1267, 127
        %v1324 = vpop.permute.xlu0 %1323
        %v1325 = vsel %vm416, %v1322, %v1324
        %v1326 = vsel %vm416, %v1320, %v1322
        %v1327 = vsel %vm416, %v1324, %v1320
        %1328 = vst [vmem:[#allocation2 + $0x300] sm:$0xf] %v1326
        %1329 = vst [vmem:[#allocation2 + $0x308] sm:$0xf] %v1325
        %1330 = vst [vmem:[#allocation2 + $0x310] sm:$0xf] %v1327
        %1331 = vrot.lane.b32.xlu0 %v1265, 111
        %v1332 = vpop.permute.xlu0 %1331
        %1333 = vrot.lane.b32.xlu0 %v1266, 111
        %v1334 = vpop.permute.xlu0 %1333
        %1335 = vrot.lane.b32.xlu0 %v1267, 111
        %v1336 = vpop.permute.xlu0 %1335
        %v1337 = vsel %vm429, %v1334, %v1336
        %v1338 = vsel %vm429, %v1332, %v1334
        %v1339 = vsel %vm429, %v1336, %v1332
        %1340 = vst [vmem:[#allocation2 + $0x318] sm:$0xf] %v1338
        %1341 = vst [vmem:[#allocation2 + $0x320] sm:$0xf] %v1337
        %1342 = vst [vmem:[#allocation2 + $0x328] sm:$0xf] %v1339
        %1343 = vrot.lane.b32.xlu0 %v1265, 110
        %v1344 = vpop.permute.xlu0 %1343
        %1345 = vrot.lane.b32.xlu0 %v1266, 110
        %v1346 = vpop.permute.xlu0 %1345
        %1347 = vrot.lane.b32.xlu0 %v1267, 110
        %v1348 = vpop.permute.xlu0 %1347
        %v1349 = vsel %vm442, %v1346, %v1348
        %v1350 = vsel %vm442, %v1344, %v1346
        %v1351 = vsel %vm442, %v1348, %v1344
        %1352 = vst [vmem:[#allocation2 + $0x330] sm:$0xf] %v1350
        %1353 = vst [vmem:[#allocation2 + $0x338] sm:$0xf] %v1349
        %1354 = vst [vmem:[#allocation2 + $0x340] sm:$0xf] %v1351
        %1355 = vrot.lane.b32.xlu0 %v1265, 109
        %v1356 = vpop.permute.xlu0 %1355
        %1357 = vrot.lane.b32.xlu0 %v1266, 109
        %v1358 = vpop.permute.xlu0 %1357
        %1359 = vrot.lane.b32.xlu0 %v1267, 109
        %v1360 = vpop.permute.xlu0 %1359
        %v1361 = vsel %vm455, %v1358, %v1360
        %v1362 = vsel %vm455, %v1356, %v1358
        %v1363 = vsel %vm455, %v1360, %v1356
        %1364 = vst [vmem:[#allocation2 + $0x348] sm:$0xf] %v1362
        %1365 = vst [vmem:[#allocation2 + $0x350] sm:$0xf] %v1361
        %1366 = vst [vmem:[#allocation2 + $0x358] sm:$0xf] %v1363
        %v1367 = vld [vmem:[#allocation2] sm:$0xff]
        %v1368 = vld [vmem:[#allocation2 + $0x8] sm:$0xff]
        %v1369 = vld [vmem:[#allocation2 + $0x10] sm:$0xff]
        %v1370 = vld [vmem:[#allocation2 + $0x18] sm:$0xff]
        %v1371 = vld [vmem:[#allocation2 + $0x20] sm:$0xff]
        %v1372 = vld [vmem:[#allocation2 + $0x28] sm:$0xff]
        %v1373 = vld [vmem:[#allocation2 + $0x30] sm:$0xff]
        %v1374 = vld [vmem:[#allocation2 + $0x38] sm:$0xff]
        %v1375 = vld [vmem:[#allocation2 + $0x40] sm:$0xff]
        %v1376 = vld [vmem:[#allocation2 + $0x48] sm:$0xff]
        %v1377 = vld [vmem:[#allocation2 + $0x50] sm:$0xff]
        %v1378 = vld [vmem:[#allocation2 + $0x58] sm:$0xff]
        %v1379 = vld [vmem:[#allocation2 + $0x60] sm:$0xff]
        %v1380 = vld [vmem:[#allocation2 + $0x68] sm:$0xff]
        %v1381 = vld [vmem:[#allocation2 + $0x70] sm:$0xff]
        %v1382 = vld [vmem:[#allocation2 + $0x78] sm:$0xff]
        %v1383 = vld [vmem:[#allocation2 + $0x80] sm:$0xff]
        %v1384 = vld [vmem:[#allocation2 + $0x88] sm:$0xff]
        %v1385 = vld [vmem:[#allocation2 + $0x90] sm:$0xff]
        %v1386 = vld [vmem:[#allocation2 + $0x98] sm:$0xff]
        %v1387 = vld [vmem:[#allocation2 + $0xa0] sm:$0xff]
        %v1388 = vld [vmem:[#allocation2 + $0xa8] sm:$0xff]
        %v1389 = vld [vmem:[#allocation2 + $0xb0] sm:$0xff]
        %v1390 = vld [vmem:[#allocation2 + $0xb8] sm:$0xff]
        %v1391 = vld [vmem:[#allocation2 + $0xc0] sm:$0xff]
        %v1392 = vld [vmem:[#allocation2 + $0xc8] sm:$0xff]
        %v1393 = vld [vmem:[#allocation2 + $0xd0] sm:$0xff]
        %v1394 = vld [vmem:[#allocation2 + $0xd8] sm:$0xff]
        %v1395 = vld [vmem:[#allocation2 + $0xe0] sm:$0xff]
        %v1396 = vld [vmem:[#allocation2 + $0xe8] sm:$0xff]
        %v1397 = vld [vmem:[#allocation2 + $0xf0] sm:$0xff]
        %v1398 = vld [vmem:[#allocation2 + $0xf8] sm:$0xff]
        %v1399 = vld [vmem:[#allocation2 + $0x100] sm:$0xff]
        %v1400 = vld [vmem:[#allocation2 + $0x108] sm:$0xff]
        %v1401 = vld [vmem:[#allocation2 + $0x110] sm:$0xff]
        %v1402 = vld [vmem:[#allocation2 + $0x118] sm:$0xff]
        %v1403 = vld [vmem:[#allocation2 + $0x120] sm:$0xff]
        %v1404 = vld [vmem:[#allocation2 + $0x128] sm:$0xff]
        %v1405 = vld [vmem:[#allocation2 + $0x130] sm:$0xff]
        %v1406 = vld [vmem:[#allocation2 + $0x138] sm:$0xff]
        %v1407 = vld [vmem:[#allocation2 + $0x140] sm:$0xff]
        %v1408 = vld [vmem:[#allocation2 + $0x148] sm:$0xff]
        %v1409 = vld [vmem:[#allocation2 + $0x150] sm:$0xff]
        %v1410 = vld [vmem:[#allocation2 + $0x158] sm:$0xff]
        %v1411 = vld [vmem:[#allocation2 + $0x160] sm:$0xff]
        %v1412 = vld [vmem:[#allocation2 + $0x168] sm:$0xff]
        %v1413 = vld [vmem:[#allocation2 + $0x170] sm:$0xff]
        %v1414 = vld [vmem:[#allocation2 + $0x178] sm:$0xff]
        %v1415 = vld [vmem:[#allocation2 + $0x180] sm:$0xff]
        %v1416 = vld [vmem:[#allocation2 + $0x188] sm:$0xff]
        %v1417 = vld [vmem:[#allocation2 + $0x190] sm:$0xff]
        %v1418 = vld [vmem:[#allocation2 + $0x198] sm:$0xff]
        %v1419 = vld [vmem:[#allocation2 + $0x1a0] sm:$0xff]
        %v1420 = vld [vmem:[#allocation2 + $0x1a8] sm:$0xff]
        %v1421 = vld [vmem:[#allocation2 + $0x1b0] sm:$0xff]
        %v1422 = vld [vmem:[#allocation2 + $0x1b8] sm:$0xff]
        %v1423 = vld [vmem:[#allocation2 + $0x1c0] sm:$0xff]
        %v1424 = vld [vmem:[#allocation2 + $0x1c8] sm:$0xff]
        %v1425 = vld [vmem:[#allocation2 + $0x1d0] sm:$0xff]
        %v1426 = vld [vmem:[#allocation2 + $0x1d8] sm:$0xff]
        %v1427 = vld [vmem:[#allocation2 + $0x1e0] sm:$0xff]
        %v1428 = vld [vmem:[#allocation2 + $0x1e8] sm:$0xff]
        %v1429 = vld [vmem:[#allocation2 + $0x1f0] sm:$0xff]
        %v1430 = vld [vmem:[#allocation2 + $0x1f8] sm:$0xff]
        %v1431 = vld [vmem:[#allocation2 + $0x200] sm:$0xff]
        %v1432 = vld [vmem:[#allocation2 + $0x208] sm:$0xff]
        %v1433 = vld [vmem:[#allocation2 + $0x210] sm:$0xff]
        %v1434 = vld [vmem:[#allocation2 + $0x218] sm:$0xff]
        %v1435 = vld [vmem:[#allocation2 + $0x220] sm:$0xff]
        %v1436 = vld [vmem:[#allocation2 + $0x228] sm:$0xff]
        %v1437 = vld [vmem:[#allocation2 + $0x230] sm:$0xff]
        %v1438 = vld [vmem:[#allocation2 + $0x238] sm:$0xff]
        %v1439 = vld [vmem:[#allocation2 + $0x240] sm:$0xff]
        %v1440 = vld [vmem:[#allocation2 + $0x248] sm:$0xff]
        %v1441 = vld [vmem:[#allocation2 + $0x250] sm:$0xff]
        %v1442 = vld [vmem:[#allocation2 + $0x258] sm:$0xff]
        %v1443 = vld [vmem:[#allocation2 + $0x260] sm:$0xff]
        %v1444 = vld [vmem:[#allocation2 + $0x268] sm:$0xff]
        %v1445 = vld [vmem:[#allocation2 + $0x270] sm:$0xff]
        %v1446 = vld [vmem:[#allocation2 + $0x278] sm:$0xff]
        %v1447 = vld [vmem:[#allocation2 + $0x280] sm:$0xff]
        %v1448 = vld [vmem:[#allocation2 + $0x288] sm:$0xff]
        %v1449 = vld [vmem:[#allocation2 + $0x290] sm:$0xff]
        %v1450 = vld [vmem:[#allocation2 + $0x298] sm:$0xff]
        %v1451 = vld [vmem:[#allocation2 + $0x2a0] sm:$0xff]
        %v1452 = vld [vmem:[#allocation2 + $0x2a8] sm:$0xff]
        %v1453 = vld [vmem:[#allocation2 + $0x2b0] sm:$0xff]
        %v1454 = vld [vmem:[#allocation2 + $0x2b8] sm:$0xff]
        %v1455 = vld [vmem:[#allocation2 + $0x2c0] sm:$0xff]
        %v1456 = vld [vmem:[#allocation2 + $0x2c8] sm:$0xff]
        %v1457 = vld [vmem:[#allocation2 + $0x2d0] sm:$0xff]
        %v1458 = vld [vmem:[#allocation2 + $0x2d8] sm:$0xff]
        %v1459 = vld [vmem:[#allocation2 + $0x2e0] sm:$0xff]
        %v1460 = vld [vmem:[#allocation2 + $0x2e8] sm:$0xff]
        %v1461 = vld [vmem:[#allocation2 + $0x2f0] sm:$0xff]
        %v1462 = vld [vmem:[#allocation2 + $0x2f8] sm:$0xff]
        %v1463 = vld [vmem:[#allocation2 + $0x300] sm:$0xff]
        %v1464 = vld [vmem:[#allocation2 + $0x308] sm:$0xff]
        %v1465 = vld [vmem:[#allocation2 + $0x310] sm:$0xff]
        %v1466 = vld [vmem:[#allocation2 + $0x318] sm:$0xff]
        %v1467 = vld [vmem:[#allocation2 + $0x320] sm:$0xff]
        %v1468 = vld [vmem:[#allocation2 + $0x328] sm:$0xff]
        %v1469 = vld [vmem:[#allocation2 + $0x330] sm:$0xff]
        %v1470 = vld [vmem:[#allocation2 + $0x338] sm:$0xff]
        %v1471 = vld [vmem:[#allocation2 + $0x340] sm:$0xff]
        %v1472 = vld [vmem:[#allocation2 + $0x348] sm:$0xff]
        %v1473 = vld [vmem:[#allocation2 + $0x350] sm:$0xff]
        %v1474 = vld [vmem:[#allocation2 + $0x358] sm:$0xff]
        %v1475 = vpack.c.bf16 %v1370, %v1367
        %v1476 = vpack.c.bf16 %v1371, %v1368
        %v1477 = vpack.c.bf16 %v1372, %v1369
        %v1478 = vpack.c.bf16 %v1376, %v1373
        %v1479 = vpack.c.bf16 %v1377, %v1374
        %v1480 = vpack.c.bf16 %v1378, %v1375
        %v1481 = vpack.c.bf16 %v1382, %v1379
        %v1482 = vpack.c.bf16 %v1383, %v1380
        %v1483 = vpack.c.bf16 %v1384, %v1381
        %v1484 = vpack.c.bf16 %v1388, %v1385
        %v1485 = vpack.c.bf16 %v1389, %v1386
        %v1486 = vpack.c.bf16 %v1390, %v1387
        %v1487 = vpack.c.bf16 %v1394, %v1391
        %v1488 = vpack.c.bf16 %v1395, %v1392
        %v1489 = vpack.c.bf16 %v1396, %v1393
        %v1490 = vpack.c.bf16 %v1400, %v1397
        %v1491 = vpack.c.bf16 %v1401, %v1398
        %v1492 = vpack.c.bf16 %v1402, %v1399
        %v1493 = vpack.c.bf16 %v1406, %v1403
        %v1494 = vpack.c.bf16 %v1407, %v1404
        %v1495 = vpack.c.bf16 %v1408, %v1405
        %v1496 = vpack.c.bf16 %v1412, %v1409
        %v1497 = vpack.c.bf16 %v1413, %v1410
        %v1498 = vpack.c.bf16 %v1414, %v1411
        %v1499 = vpack.c.bf16 %v1418, %v1415
        %v1500 = vpack.c.bf16 %v1419, %v1416
        %v1501 = vpack.c.bf16 %v1420, %v1417
        %v1502 = vpack.c.bf16 %v1424, %v1421
        %v1503 = vpack.c.bf16 %v1425, %v1422
        %v1504 = vpack.c.bf16 %v1426, %v1423
        %v1505 = vpack.c.bf16 %v1430, %v1427
        %v1506 = vpack.c.bf16 %v1431, %v1428
        %v1507 = vpack.c.bf16 %v1432, %v1429
        %v1508 = vpack.c.bf16 %v1436, %v1433
        %v1509 = vpack.c.bf16 %v1437, %v1434
        %v1510 = vpack.c.bf16 %v1438, %v1435
        %v1511 = vpack.c.bf16 %v1442, %v1439
        %v1512 = vpack.c.bf16 %v1443, %v1440
        %v1513 = vpack.c.bf16 %v1444, %v1441
        %v1514 = vpack.c.bf16 %v1448, %v1445
        %v1515 = vpack.c.bf16 %v1449, %v1446
        %v1516 = vpack.c.bf16 %v1450, %v1447
        %v1517 = vpack.c.bf16 %v1454, %v1451
        %v1518 = vpack.c.bf16 %v1455, %v1452
        %v1519 = vpack.c.bf16 %v1456, %v1453
        %v1520 = vpack.c.bf16 %v1460, %v1457
        %v1521 = vpack.c.bf16 %v1461, %v1458
        %v1522 = vpack.c.bf16 %v1462, %v1459
        %v1523 = vpack.c.bf16 %v1466, %v1463
        %v1524 = vpack.c.bf16 %v1467, %v1464
        %v1525 = vpack.c.bf16 %v1468, %v1465
        %v1526 = vpack.c.bf16 %v1472, %v1469
        %v1527 = vpack.c.bf16 %v1473, %v1470
        %v1528 = vpack.c.bf16 %v1474, %v1471
        %s1529 = scalar_lea.vmem [#allocation3], 18
        %v1530 = vld [vmem:[%s1529] sm:$0x3f]
        %s1531 = scalar_lea.vmem %s3, 12
        %v1532 = vld [vmem:[%s1531] sm:$0xf]
        %1534 = vset.pattern.permute.xlu0 0
        %1535 = vperm.xlu0 %1534, %v1532
        %v1536 = vpop.permute.xlu0 %1535
        %v1539 = vcombine.high %v1530, %v1530
        %v1541 = vunpack.c.l.s4 1983009808
        %v1542 = vunpack.c.0.s8 %v1541
        %v1543 = vlaneseq
        %v1544 = vshrl.u32 %v1543, 7
        %v1545 = vsub.s32 %v1542, %v1544
        %v1546 = vrot.slane %v1530, %v1545
        %v1548 = vunpack.c.l.s4 1983009808
        %v1549 = vunpack.c.0.s8 %v1548
        %v1550 = vlaneseq
        %v1551 = vshrl.u32 %v1550, 7
        %v1552 = vsub.s32 %v1549, %v1551
        %v1553 = vrot.slane %v1539, %v1552
        %v1554 = vcombine.high %v1546, %v1546
        %vm1557 = vcmask 261120
        %v1559 = vsel %vm1557, %v1553, 0
        %1561 = vmatprep.subr.bf16.mxu0 %v1476
        %1562 = vmatpush1.bf16.msra.mxu0 %v1475
        %1563 = vmatprep.subr.bf16.mxu0 %v1479
        %1564 = vmatpush1.bf16.msra.mxu0 %v1478
        %1565 = vmatprep.subr.bf16.mxu0 %v1482
        %1566 = vmatpush1.bf16.msra.mxu0 %v1481
        %1567 = vmatprep.subr.bf16.mxu0 %v1485
        %1568 = vmatpush1.bf16.msra.mxu0 %v1484
        %1569 = vmatprep.subr.bf16.mxu0 %v1488
        %1570 = vmatpush1.bf16.msra.mxu0 %v1487
        %1571 = vmatprep.subr.bf16.mxu0 %v1491
        %1572 = vmatpush1.bf16.msra.mxu0 %v1490
        %1573 = vmatprep.subr.bf16.mxu0 %v1494
        %1574 = vmatpush1.bf16.msra.mxu0 %v1493
        %1575 = vmatprep.subr.bf16.mxu0 %v1497
        %1576 = vmatpush1.bf16.msra.mxu0 %v1496
        %1577 = vmatprep.subr.bf16.mxu0 %v1500
        %1578 = vmatpush1.bf16.msra.mxu0 %v1499
        %1579 = vmatprep.subr.bf16.mxu0 %v1503
        %1580 = vmatpush1.bf16.msra.mxu0 %v1502
        %1581 = vmatprep.subr.bf16.mxu0 %v1506
        %1582 = vmatpush1.bf16.msra.mxu0 %v1505
        %1583 = vmatprep.subr.bf16.mxu0 %v1509
        %1584 = vmatpush1.bf16.msra.mxu0 %v1508
        %1585 = vmatprep.subr.bf16.mxu0 %v1512
        %1586 = vmatpush1.bf16.msra.mxu0 %v1511
        %1587 = vmatprep.subr.bf16.mxu0 %v1515
        %1588 = vmatpush1.bf16.msra.mxu0 %v1514
        %1589 = vmatprep.subr.bf16.mxu0 %v1518
        %1590 = vmatpush1.bf16.msra.mxu0 %v1517
        %1591 = vmatprep.subr.bf16.mxu0 %v1521
        %1592 = vmatpush1.bf16.msra.mxu0 %v1520
        %1593 = vmatprep.mubr.bf16.mxu0 %v1554
        %1594 = vmatmul.mubr.bf16.gmra.mrb[0].mxu0 %v1546
        %v1595 = vpop.f32.mrb[0].mxu0
        %v1596 = vadd.f32 %v1536, %v1595
        %v1597 = vpop.f32.mrb[0].mxu0
        %v1598 = vadd.f32 %v1536, %v1597
        %v1599 = vpop.f32.mrb[0].mxu0
        %v1600 = vpop.f32.mrb[0].mxu0
        %1601 = vdwg.mxu0
        %1602 = vmatprep.subr.bf16.mxu0 %v1524
        %1603 = vmatpush1.bf16.msra.mxu0 %v1523
        %1604 = vmatprep.subr.bf16.mxu0 %v1527
        %1605 = vmatpush1.bf16.msra.mxu0 %v1526
        %1606 = vmatprep.subr.bf16.mxu0 0
        %1607 = vmatpush1.bf16.msra.mxu0 0
        %1608 = vmatprep.subr.bf16.mxu0 0
        %1609 = vmatpush1.bf16.msra.mxu0 0
        %1610 = vmatprep.subr.bf16.mxu0 0
        %1611 = vmatpush1.bf16.msra.mxu0 0
        %1612 = vmatprep.subr.bf16.mxu0 0
        %1613 = vmatpush1.bf16.msra.mxu0 0
        %1614 = vmatprep.subr.bf16.mxu0 0
        %1615 = vmatpush1.bf16.msra.mxu0 0
        %1616 = vmatprep.subr.bf16.mxu0 0
        %1617 = vmatpush1.bf16.msra.mxu0 0
        %1618 = vmatprep.subr.bf16.mxu0 0
        %1619 = vmatpush1.bf16.msra.mxu0 0
        %1620 = vmatprep.subr.bf16.mxu0 0
        %1621 = vmatpush1.bf16.msra.mxu0 0
        %1622 = vmatprep.subr.bf16.mxu0 0
        %1623 = vmatpush1.bf16.msra.mxu0 0
        %1624 = vmatprep.subr.bf16.mxu0 0
        %1625 = vmatpush1.bf16.msra.mxu0 0
        %1626 = vmatprep.subr.bf16.mxu0 0
        %1627 = vmatpush1.bf16.msra.mxu0 0
        %1628 = vmatprep.subr.bf16.mxu0 0
        %1629 = vmatpush1.bf16.msra.mxu0 0
        %1630 = vmatprep.subr.bf16.mxu0 0
        %1631 = vmatpush1.bf16.msra.mxu0 0
        %1632 = vmatprep.subr.bf16.mxu0 0
        %1633 = vmatpush1.bf16.msra.mxu0 0
        %1634 = vmatprep.mubr.bf16.mxu0 0
        %1635 = vmatmul.mubr.bf16.gmra.mrb[0].mxu0 %v1559
        %v1636 = vpop.f32.mrb[0].mxu0
        %v1637 = vadd.f32 %v1596, %v1636
        %v1638 = vpop.f32.mrb[0].mxu0
        %v1639 = vadd.f32 %v1598, %v1638
        %v1640 = vpop.f32.mrb[0].mxu0
        %v1641 = vpop.f32.mrb[0].mxu0
        %1642 = vdwg.mxu0
        %1643 = vmatprep.subr.bf16.mxu0 0
        %1644 = vmatpush1.bf16.msra.mxu0 %v1477
        %1645 = vmatprep.subr.bf16.mxu0 0
        %1646 = vmatpush1.bf16.msra.mxu0 %v1480
        %1647 = vmatprep.subr.bf16.mxu0 0
        %1648 = vmatpush1.bf16.msra.mxu0 %v1483
        %1649 = vmatprep.subr.bf16.mxu0 0
        %1650 = vmatpush1.bf16.msra.mxu0 %v1486
        %1651 = vmatprep.subr.bf16.mxu0 0
        %1652 = vmatpush1.bf16.msra.mxu0 %v1489
        %1653 = vmatprep.subr.bf16.mxu0 0
        %1654 = vmatpush1.bf16.msra.mxu0 %v1492
        %1655 = vmatprep.subr.bf16.mxu0 0
        %1656 = vmatpush1.bf16.msra.mxu0 %v1495
        %1657 = vmatprep.subr.bf16.mxu0 0
        %1658 = vmatpush1.bf16.msra.mxu0 %v1498
        %1659 = vmatprep.subr.bf16.mxu0 0
        %1660 = vmatpush1.bf16.msra.mxu0 %v1501
        %1661 = vmatprep.subr.bf16.mxu0 0
        %1662 = vmatpush1.bf16.msra.mxu0 %v1504
        %1663 = vmatprep.subr.bf16.mxu0 0
        %1664 = vmatpush1.bf16.msra.mxu0 %v1507
        %1665 = vmatprep.subr.bf16.mxu0 0
        %1666 = vmatpush1.bf16.msra.mxu0 %v1510
        %1667 = vmatprep.subr.bf16.mxu0 0
        %1668 = vmatpush1.bf16.msra.mxu0 %v1513
        %1669 = vmatprep.subr.bf16.mxu0 0
        %1670 = vmatpush1.bf16.msra.mxu0 %v1516
        %1671 = vmatprep.subr.bf16.mxu0 0
        %1672 = vmatpush1.bf16.msra.mxu0 %v1519
        %1673 = vmatprep.subr.bf16.mxu0 0
        %1674 = vmatpush1.bf16.msra.mxu0 %v1522
        %1675 = vmatprep.mubr.bf16.mxu0 %v1554
        %1676 = vmatmul.mubr.bf16.gmra.mrb[0].mxu0 %v1546
        %v1677 = vpop.f32.mrb[0].mxu0
        %v1678 = vadd.f32 %v1536, %v1677
        %v1679 = vpop.f32.mrb[0].mxu0
        %v1680 = vpop.f32.mrb[0].mxu0
        %v1681 = vpop.f32.mrb[0].mxu0
        %1682 = vdwg.mxu0
        %1683 = vmatprep.subr.bf16.mxu0 0
        %1684 = vmatpush1.bf16.msra.mxu0 %v1525
        %1685 = vmatprep.subr.bf16.mxu0 0
        %1686 = vmatpush1.bf16.msra.mxu0 %v1528
        %1687 = vmatprep.subr.bf16.mxu0 0
        %1688 = vmatpush1.bf16.msra.mxu0 0
        %1689 = vmatprep.subr.bf16.mxu0 0
        %1690 = vmatpush1.bf16.msra.mxu0 0
        %1691 = vmatprep.subr.bf16.mxu0 0
        %1692 = vmatpush1.bf16.msra.mxu0 0
        %1693 = vmatprep.subr.bf16.mxu0 0
        %1694 = vmatpush1.bf16.msra.mxu0 0
        %1695 = vmatprep.subr.bf16.mxu0 0
        %1696 = vmatpush1.bf16.msra.mxu0 0
        %1697 = vmatprep.subr.bf16.mxu0 0
        %1698 = vmatpush1.bf16.msra.mxu0 0
        %1699 = vmatprep.subr.bf16.mxu0 0
        %1700 = vmatpush1.bf16.msra.mxu0 0
        %1701 = vmatprep.subr.bf16.mxu0 0
        %1702 = vmatpush1.bf16.msra.mxu0 0
        %1703 = vmatprep.subr.bf16.mxu0 0
        %1704 = vmatpush1.bf16.msra.mxu0 0
        %1705 = vmatprep.subr.bf16.mxu0 0
        %1706 = vmatpush1.bf16.msra.mxu0 0
        %1707 = vmatprep.subr.bf16.mxu0 0
        %1708 = vmatpush1.bf16.msra.mxu0 0
        %1709 = vmatprep.subr.bf16.mxu0 0
        %1710 = vmatpush1.bf16.msra.mxu0 0
        %1711 = vmatprep.subr.bf16.mxu0 0
        %1712 = vmatpush1.bf16.msra.mxu0 0
        %1713 = vmatprep.subr.bf16.mxu0 0
        %1714 = vmatpush1.bf16.msra.mxu0 0
        %1715 = vmatprep.mubr.bf16.mxu0 0
        %1716 = vmatmul.mubr.bf16.gmra.mrb[0].mxu0 %v1559
        %v1717 = vpop.f32.mrb[0].mxu0
        %v1718 = vadd.f32 %v1678, %v1717
        %v1719 = vpop.f32.mrb[0].mxu0
        %v1720 = vpop.f32.mrb[0].mxu0
        %v1721 = vpop.f32.mrb[0].mxu0
        %1722 = vdwg.mxu0
        %v1723 = vmul.f32 %v1637, 0.01
        %v1724 = vmul.f32 %v1639, 0.01
        %v1725 = vmul.f32 %v1718, 0.01
        %v1726 = vmax.f32 %v1637, %v1723
        %v1727 = vmax.f32 %v1639, %v1724
        %v1728 = vmax.f32 %v1718, %v1725
        %v1729 = vmul.f32 %v1726, %v616
        %v1730 = vmul.f32 %v1727, %v620
        %v1731 = vmul.f32 %v1728, %v624
        %1732 = vrot.lane.b32.xlu0 %v1729, 19
        %v1733 = vpop.permute.xlu0 %1732
        %1734 = vrot.lane.b32.xlu0 %v1730, 19
        %v1735 = vpop.permute.xlu0 %1734
        %1736 = vrot.lane.b32.xlu0 %v1731, 19
        %v1737 = vpop.permute.xlu0 %1736
        %v1738 = vsel %vm361, %v1735, %v1737
        %v1739 = vsel %vm361, %v1733, %v1735
        %v1740 = vsel %vm361, %v1737, %v1733
        %1741 = vst [vmem:[#allocation2 + $0x360] sm:$0xf] %v1740
        %1742 = vst [vmem:[#allocation2 + $0x368] sm:$0xf] %v1739
        %1743 = vst [vmem:[#allocation2 + $0x370] sm:$0xf] %v1738
        %1744 = vrot.lane.b32.xlu0 %v1729, 18
        %v1745 = vpop.permute.xlu0 %1744
        %1746 = vrot.lane.b32.xlu0 %v1730, 18
        %v1747 = vpop.permute.xlu0 %1746
        %1748 = vrot.lane.b32.xlu0 %v1731, 18
        %v1749 = vpop.permute.xlu0 %1748
        %v1750 = vsel %vm374, %v1747, %v1749
        %v1751 = vsel %vm374, %v1745, %v1747
        %v1752 = vsel %vm374, %v1749, %v1745
        %1753 = vst [vmem:[#allocation2 + $0x378] sm:$0xf] %v1752
        %1754 = vst [vmem:[#allocation2 + $0x380] sm:$0xf] %v1751
        %1755 = vst [vmem:[#allocation2 + $0x388] sm:$0xf] %v1750
        %1756 = vrot.lane.b32.xlu0 %v1729, 17
        %v1757 = vpop.permute.xlu0 %1756
        %1758 = vrot.lane.b32.xlu0 %v1730, 17
        %v1759 = vpop.permute.xlu0 %1758
        %1760 = vrot.lane.b32.xlu0 %v1731, 17
        %v1761 = vpop.permute.xlu0 %1760
        %v1762 = vsel %vm387, %v1759, %v1761
        %v1763 = vsel %vm387, %v1757, %v1759
        %v1764 = vsel %vm387, %v1761, %v1757
        %1765 = vst [vmem:[#allocation2 + $0x390] sm:$0xf] %v1764
        %1766 = vst [vmem:[#allocation2 + $0x398] sm:$0xf] %v1763
        %1767 = vst [vmem:[#allocation2 + $0x3a0] sm:$0xf] %v1762
        %1768 = vrot.lane.b32.xlu0 %v1729, 1
        %v1769 = vpop.permute.xlu0 %1768
        %1770 = vrot.lane.b32.xlu0 %v1730, 1
        %v1771 = vpop.permute.xlu0 %1770
        %1772 = vrot.lane.b32.xlu0 %v1731, 1
        %v1773 = vpop.permute.xlu0 %1772
        %v1774 = vsel %vm400, %v1771, %v1773
        %v1775 = vsel %vm400, %v1769, %v1771
        %v1776 = vsel %vm400, %v1773, %v1769
        %1777 = vst [vmem:[#allocation2 + $0x3a8] sm:$0xf] %v1776
        %1778 = vst [vmem:[#allocation2 + $0x3b0] sm:$0xf] %v1775
        %1779 = vst [vmem:[#allocation2 + $0x3b8] sm:$0xf] %v1774
        %1780 = vst [vmem:[#allocation2 + $0x3c0] sm:$0xf] %v1729
        %1781 = vst [vmem:[#allocation2 + $0x3c8] sm:$0xf] %v1730
        %1782 = vst [vmem:[#allocation2 + $0x3d0] sm:$0xf] %v1731
        %1783 = vrot.lane.b32.xlu0 %v1729, 127
        %v1784 = vpop.permute.xlu0 %1783
        %1785 = vrot.lane.b32.xlu0 %v1730, 127
        %v1786 = vpop.permute.xlu0 %1785
        %1787 = vrot.lane.b32.xlu0 %v1731, 127
        %v1788 = vpop.permute.xlu0 %1787
        %v1789 = vsel %vm416, %v1786, %v1788
        %v1790 = vsel %vm416, %v1784, %v1786
        %v1791 = vsel %vm416, %v1788, %v1784
        %1792 = vst [vmem:[#allocation2 + $0x3d8] sm:$0xf] %v1790
        %1793 = vst [vmem:[#allocation2 + $0x3e0] sm:$0xf] %v1789
        %1794 = vst [vmem:[#allocation2 + $0x3e8] sm:$0xf] %v1791
        %1795 = vrot.lane.b32.xlu0 %v1729, 111
        %v1796 = vpop.permute.xlu0 %1795
        %1797 = vrot.lane.b32.xlu0 %v1730, 111
        %v1798 = vpop.permute.xlu0 %1797
        %1799 = vrot.lane.b32.xlu0 %v1731, 111
        %v1800 = vpop.permute.xlu0 %1799
        %v1801 = vsel %vm429, %v1798, %v1800
        %v1802 = vsel %vm429, %v1796, %v1798
        %v1803 = vsel %vm429, %v1800, %v1796
        %1804 = vst [vmem:[#allocation2 + $0x3f0] sm:$0xf] %v1802
        %1805 = vst [vmem:[#allocation2 + $0x3f8] sm:$0xf] %v1801
        %1806 = vst [vmem:[#allocation2 + $0x400] sm:$0xf] %v1803
        %1807 = vrot.lane.b32.xlu0 %v1729, 110
        %v1808 = vpop.permute.xlu0 %1807
        %1809 = vrot.lane.b32.xlu0 %v1730, 110
        %v1810 = vpop.permute.xlu0 %1809
        %1811 = vrot.lane.b32.xlu0 %v1731, 110
        %v1812 = vpop.permute.xlu0 %1811
        %v1813 = vsel %vm442, %v1810, %v1812
        %v1814 = vsel %vm442, %v1808, %v1810
        %v1815 = vsel %vm442, %v1812, %v1808
        %1816 = vst [vmem:[#allocation2 + $0x408] sm:$0xf] %v1814
        %1817 = vst [vmem:[#allocation2 + $0x410] sm:$0xf] %v1813
        %1818 = vst [vmem:[#allocation2 + $0x418] sm:$0xf] %v1815
        %1819 = vrot.lane.b32.xlu0 %v1729, 109
        %v1820 = vpop.permute.xlu0 %1819
        %1821 = vrot.lane.b32.xlu0 %v1730, 109
        %v1822 = vpop.permute.xlu0 %1821
        %1823 = vrot.lane.b32.xlu0 %v1731, 109
        %v1824 = vpop.permute.xlu0 %1823
        %v1825 = vsel %vm455, %v1822, %v1824
        %v1826 = vsel %vm455, %v1820, %v1822
        %v1827 = vsel %vm455, %v1824, %v1820
        %1828 = vst [vmem:[#allocation2 + $0x420] sm:$0xf] %v1826
        %1829 = vst [vmem:[#allocation2 + $0x428] sm:$0xf] %v1825
        %1830 = vst [vmem:[#allocation2 + $0x430] sm:$0xf] %v1827
        %v1831 = vld [vmem:[#allocation2] sm:$0xff]
        %v1832 = vld [vmem:[#allocation2 + $0x8] sm:$0xff]
        %v1833 = vld [vmem:[#allocation2 + $0x10] sm:$0xff]
        %v1834 = vld [vmem:[#allocation2 + $0x18] sm:$0xff]
        %v1835 = vld [vmem:[#allocation2 + $0x20] sm:$0xff]
        %v1836 = vld [vmem:[#allocation2 + $0x28] sm:$0xff]
        %v1837 = vld [vmem:[#allocation2 + $0x30] sm:$0xff]
        %v1838 = vld [vmem:[#allocation2 + $0x38] sm:$0xff]
        %v1839 = vld [vmem:[#allocation2 + $0x40] sm:$0xff]
        %v1840 = vld [vmem:[#allocation2 + $0x48] sm:$0xff]
        %v1841 = vld [vmem:[#allocation2 + $0x50] sm:$0xff]
        %v1842 = vld [vmem:[#allocation2 + $0x58] sm:$0xff]
        %v1843 = vld [vmem:[#allocation2 + $0x60] sm:$0xff]
        %v1844 = vld [vmem:[#allocation2 + $0x68] sm:$0xff]
        %v1845 = vld [vmem:[#allocation2 + $0x70] sm:$0xff]
        %v1846 = vld [vmem:[#allocation2 + $0x78] sm:$0xff]
        %v1847 = vld [vmem:[#allocation2 + $0x80] sm:$0xff]
        %v1848 = vld [vmem:[#allocation2 + $0x88] sm:$0xff]
        %v1849 = vld [vmem:[#allocation2 + $0x90] sm:$0xff]
        %v1850 = vld [vmem:[#allocation2 + $0x98] sm:$0xff]
        %v1851 = vld [vmem:[#allocation2 + $0xa0] sm:$0xff]
        %v1852 = vld [vmem:[#allocation2 + $0xa8] sm:$0xff]
        %v1853 = vld [vmem:[#allocation2 + $0xb0] sm:$0xff]
        %v1854 = vld [vmem:[#allocation2 + $0xb8] sm:$0xff]
        %v1855 = vld [vmem:[#allocation2 + $0xc0] sm:$0xff]
        %v1856 = vld [vmem:[#allocation2 + $0xc8] sm:$0xff]
        %v1857 = vld [vmem:[#allocation2 + $0xd0] sm:$0xff]
        %v1858 = vld [vmem:[#allocation2 + $0xd8] sm:$0xff]
        %v1859 = vld [vmem:[#allocation2 + $0xe0] sm:$0xff]
        %v1860 = vld [vmem:[#allocation2 + $0xe8] sm:$0xff]
        %v1861 = vld [vmem:[#allocation2 + $0xf0] sm:$0xff]
        %v1862 = vld [vmem:[#allocation2 + $0xf8] sm:$0xff]
        %v1863 = vld [vmem:[#allocation2 + $0x100] sm:$0xff]
        %v1864 = vld [vmem:[#allocation2 + $0x108] sm:$0xff]
        %v1865 = vld [vmem:[#allocation2 + $0x110] sm:$0xff]
        %v1866 = vld [vmem:[#allocation2 + $0x118] sm:$0xff]
        %v1867 = vld [vmem:[#allocation2 + $0x120] sm:$0xff]
        %v1868 = vld [vmem:[#allocation2 + $0x128] sm:$0xff]
        %v1869 = vld [vmem:[#allocation2 + $0x130] sm:$0xff]
        %v1870 = vld [vmem:[#allocation2 + $0x138] sm:$0xff]
        %v1871 = vld [vmem:[#allocation2 + $0x140] sm:$0xff]
        %v1872 = vld [vmem:[#allocation2 + $0x148] sm:$0xff]
        %v1873 = vld [vmem:[#allocation2 + $0x150] sm:$0xff]
        %v1874 = vld [vmem:[#allocation2 + $0x158] sm:$0xff]
        %v1875 = vld [vmem:[#allocation2 + $0x160] sm:$0xff]
        %v1876 = vld [vmem:[#allocation2 + $0x168] sm:$0xff]
        %v1877 = vld [vmem:[#allocation2 + $0x170] sm:$0xff]
        %v1878 = vld [vmem:[#allocation2 + $0x178] sm:$0xff]
        %v1879 = vld [vmem:[#allocation2 + $0x180] sm:$0xff]
        %v1880 = vld [vmem:[#allocation2 + $0x188] sm:$0xff]
        %v1881 = vld [vmem:[#allocation2 + $0x190] sm:$0xff]
        %v1882 = vld [vmem:[#allocation2 + $0x198] sm:$0xff]
        %v1883 = vld [vmem:[#allocation2 + $0x1a0] sm:$0xff]
        %v1884 = vld [vmem:[#allocation2 + $0x1a8] sm:$0xff]
        %v1885 = vld [vmem:[#allocation2 + $0x1b0] sm:$0xff]
        %v1886 = vld [vmem:[#allocation2 + $0x1b8] sm:$0xff]
        %v1887 = vld [vmem:[#allocation2 + $0x1c0] sm:$0xff]
        %v1888 = vld [vmem:[#allocation2 + $0x1c8] sm:$0xff]
        %v1889 = vld [vmem:[#allocation2 + $0x1d0] sm:$0xff]
        %v1890 = vld [vmem:[#allocation2 + $0x1d8] sm:$0xff]
        %v1891 = vld [vmem:[#allocation2 + $0x1e0] sm:$0xff]
        %v1892 = vld [vmem:[#allocation2 + $0x1e8] sm:$0xff]
        %v1893 = vld [vmem:[#allocation2 + $0x1f0] sm:$0xff]
        %v1894 = vld [vmem:[#allocation2 + $0x1f8] sm:$0xff]
        %v1895 = vld [vmem:[#allocation2 + $0x200] sm:$0xff]
        %v1896 = vld [vmem:[#allocation2 + $0x208] sm:$0xff]
        %v1897 = vld [vmem:[#allocation2 + $0x210] sm:$0xff]
        %v1898 = vld [vmem:[#allocation2 + $0x218] sm:$0xff]
        %v1899 = vld [vmem:[#allocation2 + $0x220] sm:$0xff]
        %v1900 = vld [vmem:[#allocation2 + $0x228] sm:$0xff]
        %v1901 = vld [vmem:[#allocation2 + $0x230] sm:$0xff]
        %v1902 = vld [vmem:[#allocation2 + $0x238] sm:$0xff]
        %v1903 = vld [vmem:[#allocation2 + $0x240] sm:$0xff]
        %v1904 = vld [vmem:[#allocation2 + $0x248] sm:$0xff]
        %v1905 = vld [vmem:[#allocation2 + $0x250] sm:$0xff]
        %v1906 = vld [vmem:[#allocation2 + $0x258] sm:$0xff]
        %v1907 = vld [vmem:[#allocation2 + $0x260] sm:$0xff]
        %v1908 = vld [vmem:[#allocation2 + $0x268] sm:$0xff]
        %v1909 = vld [vmem:[#allocation2 + $0x270] sm:$0xff]
        %v1910 = vld [vmem:[#allocation2 + $0x278] sm:$0xff]
        %v1911 = vld [vmem:[#allocation2 + $0x280] sm:$0xff]
        %v1912 = vld [vmem:[#allocation2 + $0x288] sm:$0xff]
        %v1913 = vld [vmem:[#allocation2 + $0x290] sm:$0xff]
        %v1914 = vld [vmem:[#allocation2 + $0x298] sm:$0xff]
        %v1915 = vld [vmem:[#allocation2 + $0x2a0] sm:$0xff]
        %v1916 = vld [vmem:[#allocation2 + $0x2a8] sm:$0xff]
        %v1917 = vld [vmem:[#allocation2 + $0x2b0] sm:$0xff]
        %v1918 = vld [vmem:[#allocation2 + $0x2b8] sm:$0xff]
        %v1919 = vld [vmem:[#allocation2 + $0x2c0] sm:$0xff]
        %v1920 = vld [vmem:[#allocation2 + $0x2c8] sm:$0xff]
        %v1921 = vld [vmem:[#allocation2 + $0x2d0] sm:$0xff]
        %v1922 = vld [vmem:[#allocation2 + $0x2d8] sm:$0xff]
        %v1923 = vld [vmem:[#allocation2 + $0x2e0] sm:$0xff]
        %v1924 = vld [vmem:[#allocation2 + $0x2e8] sm:$0xff]
        %v1925 = vld [vmem:[#allocation2 + $0x2f0] sm:$0xff]
        %v1926 = vld [vmem:[#allocation2 + $0x2f8] sm:$0xff]
        %v1927 = vld [vmem:[#allocation2 + $0x300] sm:$0xff]
        %v1928 = vld [vmem:[#allocation2 + $0x308] sm:$0xff]
        %v1929 = vld [vmem:[#allocation2 + $0x310] sm:$0xff]
        %v1930 = vld [vmem:[#allocation2 + $0x318] sm:$0xff]
        %v1931 = vld [vmem:[#allocation2 + $0x320] sm:$0xff]
        %v1932 = vld [vmem:[#allocation2 + $0x328] sm:$0xff]
        %v1933 = vld [vmem:[#allocation2 + $0x330] sm:$0xff]
        %v1934 = vld [vmem:[#allocation2 + $0x338] sm:$0xff]
        %v1935 = vld [vmem:[#allocation2 + $0x340] sm:$0xff]
        %v1936 = vld [vmem:[#allocation2 + $0x348] sm:$0xff]
        %v1937 = vld [vmem:[#allocation2 + $0x350] sm:$0xff]
        %v1938 = vld [vmem:[#allocation2 + $0x358] sm:$0xff]
        %v1939 = vld [vmem:[#allocation2 + $0x360] sm:$0xff]
        %v1940 = vld [vmem:[#allocation2 + $0x368] sm:$0xff]
        %v1941 = vld [vmem:[#allocation2 + $0x370] sm:$0xff]
        %v1942 = vld [vmem:[#allocation2 + $0x378] sm:$0xff]
        %v1943 = vld [vmem:[#allocation2 + $0x380] sm:$0xff]
        %v1944 = vld [vmem:[#allocation2 + $0x388] sm:$0xff]
        %v1945 = vld [vmem:[#allocation2 + $0x390] sm:$0xff]
        %v1946 = vld [vmem:[#allocation2 + $0x398] sm:$0xff]
        %v1947 = vld [vmem:[#allocation2 + $0x3a0] sm:$0xff]
        %v1948 = vld [vmem:[#allocation2 + $0x3a8] sm:$0xff]
        %v1949 = vld [vmem:[#allocation2 + $0x3b0] sm:$0xff]
        %v1950 = vld [vmem:[#allocation2 + $0x3b8] sm:$0xff]
        %v1951 = vld [vmem:[#allocation2 + $0x3c0] sm:$0xff]
        %v1952 = vld [vmem:[#allocation2 + $0x3c8] sm:$0xff]
        %v1953 = vld [vmem:[#allocation2 + $0x3d0] sm:$0xff]
        %v1954 = vld [vmem:[#allocation2 + $0x3d8] sm:$0xff]
        %v1955 = vld [vmem:[#allocation2 + $0x3e0] sm:$0xff]
        %v1956 = vld [vmem:[#allocation2 + $0x3e8] sm:$0xff]
        %v1957 = vld [vmem:[#allocation2 + $0x3f0] sm:$0xff]
        %v1958 = vld [vmem:[#allocation2 + $0x3f8] sm:$0xff]
        %v1959 = vld [vmem:[#allocation2 + $0x400] sm:$0xff]
        %v1960 = vld [vmem:[#allocation2 + $0x408] sm:$0xff]
        %v1961 = vld [vmem:[#allocation2 + $0x410] sm:$0xff]
        %v1962 = vld [vmem:[#allocation2 + $0x418] sm:$0xff]
        %v1963 = vld [vmem:[#allocation2 + $0x420] sm:$0xff]
        %v1964 = vld [vmem:[#allocation2 + $0x428] sm:$0xff]
        %v1965 = vld [vmem:[#allocation2 + $0x430] sm:$0xff]
        %v1966 = vpack.c.bf16 %v1834, %v1831
        %v1967 = vpack.c.bf16 %v1835, %v1832
        %v1968 = vpack.c.bf16 %v1836, %v1833
        %v1969 = vpack.c.bf16 %v1840, %v1837
        %v1970 = vpack.c.bf16 %v1841, %v1838
        %v1971 = vpack.c.bf16 %v1842, %v1839
        %v1972 = vpack.c.bf16 %v1846, %v1843
        %v1973 = vpack.c.bf16 %v1847, %v1844
        %v1974 = vpack.c.bf16 %v1848, %v1845
        %v1975 = vpack.c.bf16 %v1852, %v1849
        %v1976 = vpack.c.bf16 %v1853, %v1850
        %v1977 = vpack.c.bf16 %v1854, %v1851
        %v1978 = vpack.c.bf16 %v1858, %v1855
        %v1979 = vpack.c.bf16 %v1859, %v1856
        %v1980 = vpack.c.bf16 %v1860, %v1857
        %v1981 = vpack.c.bf16 %v1864, %v1861
        %v1982 = vpack.c.bf16 %v1865, %v1862
        %v1983 = vpack.c.bf16 %v1866, %v1863
        %v1984 = vpack.c.bf16 %v1870, %v1867
        %v1985 = vpack.c.bf16 %v1871, %v1868
        %v1986 = vpack.c.bf16 %v1872, %v1869
        %v1987 = vpack.c.bf16 %v1876, %v1873
        %v1988 = vpack.c.bf16 %v1877, %v1874
        %v1989 = vpack.c.bf16 %v1878, %v1875
        %v1990 = vpack.c.bf16 %v1882, %v1879
        %v1991 = vpack.c.bf16 %v1883, %v1880
        %v1992 = vpack.c.bf16 %v1884, %v1881
        %v1993 = vpack.c.bf16 %v1888, %v1885
        %v1994 = vpack.c.bf16 %v1889, %v1886
        %v1995 = vpack.c.bf16 %v1890, %v1887
        %v1996 = vpack.c.bf16 %v1894, %v1891
        %v1997 = vpack.c.bf16 %v1895, %v1892
        %v1998 = vpack.c.bf16 %v1896, %v1893
        %v1999 = vpack.c.bf16 %v1900, %v1897
        %v2000 = vpack.c.bf16 %v1901, %v1898
        %v2001 = vpack.c.bf16 %v1902, %v1899
        %v2002 = vpack.c.bf16 %v1906, %v1903
        %v2003 = vpack.c.bf16 %v1907, %v1904
        %v2004 = vpack.c.bf16 %v1908, %v1905
        %v2005 = vpack.c.bf16 %v1912, %v1909
        %v2006 = vpack.c.bf16 %v1913, %v1910
        %v2007 = vpack.c.bf16 %v1914, %v1911
        %v2008 = vpack.c.bf16 %v1918, %v1915
        %v2009 = vpack.c.bf16 %v1919, %v1916
        %v2010 = vpack.c.bf16 %v1920, %v1917
        %v2011 = vpack.c.bf16 %v1924, %v1921
        %v2012 = vpack.c.bf16 %v1925, %v1922
        %v2013 = vpack.c.bf16 %v1926, %v1923
        %v2014 = vpack.c.bf16 %v1930, %v1927
        %v2015 = vpack.c.bf16 %v1931, %v1928
        %v2016 = vpack.c.bf16 %v1932, %v1929
        %v2017 = vpack.c.bf16 %v1936, %v1933
        %v2018 = vpack.c.bf16 %v1937, %v1934
        %v2019 = vpack.c.bf16 %v1938, %v1935
        %v2020 = vpack.c.bf16 %v1942, %v1939
        %v2021 = vpack.c.bf16 %v1943, %v1940
        %v2022 = vpack.c.bf16 %v1944, %v1941
        %v2023 = vpack.c.bf16 %v1948, %v1945
        %v2024 = vpack.c.bf16 %v1949, %v1946
        %v2025 = vpack.c.bf16 %v1950, %v1947
        %v2026 = vpack.c.bf16 %v1954, %v1951
        %v2027 = vpack.c.bf16 %v1955, %v1952
        %v2028 = vpack.c.bf16 %v1956, %v1953
        %v2029 = vpack.c.bf16 %v1960, %v1957
        %v2030 = vpack.c.bf16 %v1961, %v1958
        %v2031 = vpack.c.bf16 %v1962, %v1959
        %v2032 = vpack.c.bf16 %v1963, %v1963
        %v2033 = vpack.c.bf16 %v1964, %v1964
        %v2034 = vpack.c.bf16 %v1965, %v1965
        %s2035 = scalar_lea.vmem [#allocation3], 24
        %v2036 = vld [vmem:[%s2035] sm:$0x3f]
        %s2037 = scalar_lea.vmem %s3, 16
        %v2038 = vld [vmem:[%s2037] sm:$0xf]
        %2040 = vset.pattern.permute.xlu0 0
        %2041 = vperm.xlu0 %2040, %v2038
        %v2042 = vpop.permute.xlu0 %2041
        %v2045 = vcombine.high %v2036, %v2036
        %v2047 = vunpack.c.l.s4 1983009808
        %v2048 = vunpack.c.0.s8 %v2047
        %v2049 = vlaneseq
        %v2050 = vshrl.u32 %v2049, 7
        %v2051 = vsub.s32 %v2048, %v2050
        %v2052 = vrot.slane %v2036, %v2051
        %v2054 = vunpack.c.l.s4 1983009808
        %v2055 = vunpack.c.0.s8 %v2054
        %v2056 = vlaneseq
        %v2057 = vshrl.u32 %v2056, 7
        %v2058 = vsub.s32 %v2055, %v2057
        %v2059 = vrot.slane %v2045, %v2058
        %v2060 = vcombine.high %v2052, %v2052
        %vm2063 = vcmask 850944
        %v2065 = vsel %vm2063, %v2059, 0
        %v2068 = vsel %vm515, %v2032, 0
        %v2071 = vsel %vm515, %v2033, 0
        %v2074 = vsel %vm515, %v2034, 0
        %2076 = vmatprep.subr.bf16.mxu0 %v1967
        %2077 = vmatpush1.bf16.msra.mxu0 %v1966
        %2078 = vmatprep.subr.bf16.mxu0 %v1970
        %2079 = vmatpush1.bf16.msra.mxu0 %v1969
        %2080 = vmatprep.subr.bf16.mxu0 %v1973
        %2081 = vmatpush1.bf16.msra.mxu0 %v1972
        %2082 = vmatprep.subr.bf16.mxu0 %v1976
        %2083 = vmatpush1.bf16.msra.mxu0 %v1975
        %2084 = vmatprep.subr.bf16.mxu0 %v1979
        %2085 = vmatpush1.bf16.msra.mxu0 %v1978
        %2086 = vmatprep.subr.bf16.mxu0 %v1982
        %2087 = vmatpush1.bf16.msra.mxu0 %v1981
        %2088 = vmatprep.subr.bf16.mxu0 %v1985
        %2089 = vmatpush1.bf16.msra.mxu0 %v1984
        %2090 = vmatprep.subr.bf16.mxu0 %v1988
        %2091 = vmatpush1.bf16.msra.mxu0 %v1987
        %2092 = vmatprep.subr.bf16.mxu0 %v1991
        %2093 = vmatpush1.bf16.msra.mxu0 %v1990
        %2094 = vmatprep.subr.bf16.mxu0 %v1994
        %2095 = vmatpush1.bf16.msra.mxu0 %v1993
        %2096 = vmatprep.subr.bf16.mxu0 %v1997
        %2097 = vmatpush1.bf16.msra.mxu0 %v1996
        %2098 = vmatprep.subr.bf16.mxu0 %v2000
        %2099 = vmatpush1.bf16.msra.mxu0 %v1999
        %2100 = vmatprep.subr.bf16.mxu0 %v2003
        %2101 = vmatpush1.bf16.msra.mxu0 %v2002
        %2102 = vmatprep.subr.bf16.mxu0 %v2006
        %2103 = vmatpush1.bf16.msra.mxu0 %v2005
        %2104 = vmatprep.subr.bf16.mxu0 %v2009
        %2105 = vmatpush1.bf16.msra.mxu0 %v2008
        %2106 = vmatprep.subr.bf16.mxu0 %v2012
        %2107 = vmatpush1.bf16.msra.mxu0 %v2011
        %2108 = vmatprep.mubr.bf16.mxu0 %v2060
        %2109 = vmatmul.mubr.bf16.gmra.mrb[0].mxu0 %v2052
        %v2110 = vpop.f32.mrb[0].mxu0
        %v2111 = vadd.f32 %v2042, %v2110
        %v2112 = vpop.f32.mrb[0].mxu0
        %v2113 = vadd.f32 %v2042, %v2112
        %v2114 = vpop.f32.mrb[0].mxu0
        %v2115 = vpop.f32.mrb[0].mxu0
        %2116 = vdwg.mxu0
        %2117 = vmatprep.subr.bf16.mxu0 %v2015
        %2118 = vmatpush1.bf16.msra.mxu0 %v2014
        %2119 = vmatprep.subr.bf16.mxu0 %v2018
        %2120 = vmatpush1.bf16.msra.mxu0 %v2017
        %2121 = vmatprep.subr.bf16.mxu0 %v2021
        %2122 = vmatpush1.bf16.msra.mxu0 %v2020
        %2123 = vmatprep.subr.bf16.mxu0 %v2024
        %2124 = vmatpush1.bf16.msra.mxu0 %v2023
        %2125 = vmatprep.subr.bf16.mxu0 %v2027
        %2126 = vmatpush1.bf16.msra.mxu0 %v2026
        %2127 = vmatprep.subr.bf16.mxu0 %v2030
        %2128 = vmatpush1.bf16.msra.mxu0 %v2029
        %2129 = vmatprep.subr.bf16.mxu0 %v2071
        %2130 = vmatpush1.bf16.msra.mxu0 %v2068
        %2131 = vmatprep.subr.bf16.mxu0 0
        %2132 = vmatpush1.bf16.msra.mxu0 0
        %2133 = vmatprep.subr.bf16.mxu0 0
        %2134 = vmatpush1.bf16.msra.mxu0 0
        %2135 = vmatprep.subr.bf16.mxu0 0
        %2136 = vmatpush1.bf16.msra.mxu0 0
        %2137 = vmatprep.subr.bf16.mxu0 0
        %2138 = vmatpush1.bf16.msra.mxu0 0
        %2139 = vmatprep.subr.bf16.mxu0 0
        %2140 = vmatpush1.bf16.msra.mxu0 0
        %2141 = vmatprep.subr.bf16.mxu0 0
        %2142 = vmatpush1.bf16.msra.mxu0 0
        %2143 = vmatprep.subr.bf16.mxu0 0
        %2144 = vmatpush1.bf16.msra.mxu0 0
        %2145 = vmatprep.subr.bf16.mxu0 0
        %2146 = vmatpush1.bf16.msra.mxu0 0
        %2147 = vmatprep.subr.bf16.mxu0 0
        %2148 = vmatpush1.bf16.msra.mxu0 0
        %2149 = vmatprep.mubr.bf16.mxu0 0
        %2150 = vmatmul.mubr.bf16.gmra.mrb[0].mxu0 %v2065
        %v2151 = vpop.f32.mrb[0].mxu0
        %v2152 = vadd.f32 %v2111, %v2151
        %v2153 = vpop.f32.mrb[0].mxu0
        %v2154 = vadd.f32 %v2113, %v2153
        %v2155 = vpop.f32.mrb[0].mxu0
        %v2156 = vpop.f32.mrb[0].mxu0
        %2157 = vdwg.mxu0
        %2158 = vmatprep.subr.bf16.mxu0 0
        %2159 = vmatpush1.bf16.msra.mxu0 %v1968
        %2160 = vmatprep.subr.bf16.mxu0 0
        %2161 = vmatpush1.bf16.msra.mxu0 %v1971
        %2162 = vmatprep.subr.bf16.mxu0 0
        %2163 = vmatpush1.bf16.msra.mxu0 %v1974
        %2164 = vmatprep.subr.bf16.mxu0 0
        %2165 = vmatpush1.bf16.msra.mxu0 %v1977
        %2166 = vmatprep.subr.bf16.mxu0 0
        %2167 = vmatpush1.bf16.msra.mxu0 %v1980
        %2168 = vmatprep.subr.bf16.mxu0 0
        %2169 = vmatpush1.bf16.msra.mxu0 %v1983
        %2170 = vmatprep.subr.bf16.mxu0 0
        %2171 = vmatpush1.bf16.msra.mxu0 %v1986
        %2172 = vmatprep.subr.bf16.mxu0 0
        %2173 = vmatpush1.bf16.msra.mxu0 %v1989
        %2174 = vmatprep.subr.bf16.mxu0 0
        %2175 = vmatpush1.bf16.msra.mxu0 %v1992
        %2176 = vmatprep.subr.bf16.mxu0 0
        %2177 = vmatpush1.bf16.msra.mxu0 %v1995
        %2178 = vmatprep.subr.bf16.mxu0 0
        %2179 = vmatpush1.bf16.msra.mxu0 %v1998
        %2180 = vmatprep.subr.bf16.mxu0 0
        %2181 = vmatpush1.bf16.msra.mxu0 %v2001
        %2182 = vmatprep.subr.bf16.mxu0 0
        %2183 = vmatpush1.bf16.msra.mxu0 %v2004
        %2184 = vmatprep.subr.bf16.mxu0 0
        %2185 = vmatpush1.bf16.msra.mxu0 %v2007
        %2186 = vmatprep.subr.bf16.mxu0 0
        %2187 = vmatpush1.bf16.msra.mxu0 %v2010
        %2188 = vmatprep.subr.bf16.mxu0 0
        %2189 = vmatpush1.bf16.msra.mxu0 %v2013
        %2190 = vmatprep.mubr.bf16.mxu0 %v2060
        %2191 = vmatmul.mubr.bf16.gmra.mrb[0].mxu0 %v2052
        %v2192 = vpop.f32.mrb[0].mxu0
        %v2193 = vadd.f32 %v2042, %v2192
        %v2194 = vpop.f32.mrb[0].mxu0
        %v2195 = vpop.f32.mrb[0].mxu0
        %v2196 = vpop.f32.mrb[0].mxu0
        %2197 = vdwg.mxu0
        %2198 = vmatprep.subr.bf16.mxu0 0
        %2199 = vmatpush1.bf16.msra.mxu0 %v2016
        %2200 = vmatprep.subr.bf16.mxu0 0
        %2201 = vmatpush1.bf16.msra.mxu0 %v2019
        %2202 = vmatprep.subr.bf16.mxu0 0
        %2203 = vmatpush1.bf16.msra.mxu0 %v2022
        %2204 = vmatprep.subr.bf16.mxu0 0
        %2205 = vmatpush1.bf16.msra.mxu0 %v2025
        %2206 = vmatprep.subr.bf16.mxu0 0
        %2207 = vmatpush1.bf16.msra.mxu0 %v2028
        %2208 = vmatprep.subr.bf16.mxu0 0
        %2209 = vmatpush1.bf16.msra.mxu0 %v2031
        %2210 = vmatprep.subr.bf16.mxu0 0
        %2211 = vmatpush1.bf16.msra.mxu0 %v2074
        %2212 = vmatprep.subr.bf16.mxu0 0
        %2213 = vmatpush1.bf16.msra.mxu0 0
        %2214 = vmatprep.subr.bf16.mxu0 0
        %2215 = vmatpush1.bf16.msra.mxu0 0
        %2216 = vmatprep.subr.bf16.mxu0 0
        %2217 = vmatpush1.bf16.msra.mxu0 0
        %2218 = vmatprep.subr.bf16.mxu0 0
        %2219 = vmatpush1.bf16.msra.mxu0 0
        %2220 = vmatprep.subr.bf16.mxu0 0
        %2221 = vmatpush1.bf16.msra.mxu0 0
        %2222 = vmatprep.subr.bf16.mxu0 0
        %2223 = vmatpush1.bf16.msra.mxu0 0
        %2224 = vmatprep.subr.bf16.mxu0 0
        %2225 = vmatpush1.bf16.msra.mxu0 0
        %2226 = vmatprep.subr.bf16.mxu0 0
        %2227 = vmatpush1.bf16.msra.mxu0 0
        %2228 = vmatprep.subr.bf16.mxu0 0
        %2229 = vmatpush1.bf16.msra.mxu0 0
        %2230 = vmatprep.mubr.bf16.mxu0 0
        %2231 = vmatmul.mubr.bf16.gmra.mrb[0].mxu0 %v2065
        %v2232 = vpop.f32.mrb[0].mxu0
        %v2233 = vadd.f32 %v2193, %v2232
        %v2234 = vpop.f32.mrb[0].mxu0
        %v2235 = vpop.f32.mrb[0].mxu0
        %v2236 = vpop.f32.mrb[0].mxu0
        %2237 = vdwg.mxu0
        %v2238 = vmul.f32 %v2152, %v616
        %v2239 = vmul.f32 %v2154, %v620
        %v2240 = vmul.f32 %v2233, %v624
        %v2241 = vadd.f32 %v2238, %v348
        %v2242 = vadd.f32 %v2239, %v351
        %v2243 = vadd.f32 %v2240, %v349
        %2244 = vrot.lane.b32.xlu0 %v2241, 19
        %v2245 = vpop.permute.xlu0 %2244
        %2246 = vrot.lane.b32.xlu0 %v2242, 19
        %v2247 = vpop.permute.xlu0 %2246
        %2248 = vrot.lane.b32.xlu0 %v2243, 19
        %v2249 = vpop.permute.xlu0 %2248
        %v2250 = vsel %vm361, %v2247, %v2249
        %v2251 = vsel %vm361, %v2245, %v2247
        %v2252 = vsel %vm361, %v2249, %v2245
        %2253 = vst [vmem:[#allocation2] sm:$0xf] %v2252
        %2254 = vst [vmem:[#allocation2 + $0x8] sm:$0xf] %v2251
        %2255 = vst [vmem:[#allocation2 + $0x10] sm:$0xf] %v2250
        %2256 = vrot.lane.b32.xlu0 %v2241, 18
        %v2257 = vpop.permute.xlu0 %2256
        %2258 = vrot.lane.b32.xlu0 %v2242, 18
        %v2259 = vpop.permute.xlu0 %2258
        %2260 = vrot.lane.b32.xlu0 %v2243, 18
        %v2261 = vpop.permute.xlu0 %2260
        %v2262 = vsel %vm374, %v2259, %v2261
        %v2263 = vsel %vm374, %v2257, %v2259
        %v2264 = vsel %vm374, %v2261, %v2257
        %2265 = vst [vmem:[#allocation2 + $0x18] sm:$0xf] %v2264
        %2266 = vst [vmem:[#allocation2 + $0x20] sm:$0xf] %v2263
        %2267 = vst [vmem:[#allocation2 + $0x28] sm:$0xf] %v2262
        %2268 = vrot.lane.b32.xlu0 %v2241, 17
        %v2269 = vpop.permute.xlu0 %2268
        %2270 = vrot.lane.b32.xlu0 %v2242, 17
        %v2271 = vpop.permute.xlu0 %2270
        %2272 = vrot.lane.b32.xlu0 %v2243, 17
        %v2273 = vpop.permute.xlu0 %2272
        %v2274 = vsel %vm387, %v2271, %v2273
        %v2275 = vsel %vm387, %v2269, %v2271
        %v2276 = vsel %vm387, %v2273, %v2269
        %2277 = vst [vmem:[#allocation2 + $0x30] sm:$0xf] %v2276
        %2278 = vst [vmem:[#allocation2 + $0x38] sm:$0xf] %v2275
        %2279 = vst [vmem:[#allocation2 + $0x40] sm:$0xf] %v2274
        %2280 = vrot.lane.b32.xlu0 %v2241, 1
        %v2281 = vpop.permute.xlu0 %2280
        %2282 = vrot.lane.b32.xlu0 %v2242, 1
        %v2283 = vpop.permute.xlu0 %2282
        %2284 = vrot.lane.b32.xlu0 %v2243, 1
        %v2285 = vpop.permute.xlu0 %2284
        %v2286 = vsel %vm400, %v2283, %v2285
        %v2287 = vsel %vm400, %v2281, %v2283
        %v2288 = vsel %vm400, %v2285, %v2281
        %2289 = vst [vmem:[#allocation2 + $0x48] sm:$0xf] %v2288
        %2290 = vst [vmem:[#allocation2 + $0x50] sm:$0xf] %v2287
        %2291 = vst [vmem:[#allocation2 + $0x58] sm:$0xf] %v2286
        %2292 = vst [vmem:[#allocation2 + $0x60] sm:$0xf] %v2241
        %2293 = vst [vmem:[#allocation2 + $0x68] sm:$0xf] %v2242
        %2294 = vst [vmem:[#allocation2 + $0x70] sm:$0xf] %v2243
        %2295 = vrot.lane.b32.xlu0 %v2241, 127
        %v2296 = vpop.permute.xlu0 %2295
        %2297 = vrot.lane.b32.xlu0 %v2242, 127
        %v2298 = vpop.permute.xlu0 %2297
        %2299 = vrot.lane.b32.xlu0 %v2243, 127
        %v2300 = vpop.permute.xlu0 %2299
        %v2301 = vsel %vm416, %v2298, %v2300
        %v2302 = vsel %vm416, %v2296, %v2298
        %v2303 = vsel %vm416, %v2300, %v2296
        %2304 = vst [vmem:[#allocation2 + $0x78] sm:$0xf] %v2302
        %2305 = vst [vmem:[#allocation2 + $0x80] sm:$0xf] %v2301
        %2306 = vst [vmem:[#allocation2 + $0x88] sm:$0xf] %v2303
        %2307 = vrot.lane.b32.xlu0 %v2241, 111
        %v2308 = vpop.permute.xlu0 %2307
        %2309 = vrot.lane.b32.xlu0 %v2242, 111
        %v2310 = vpop.permute.xlu0 %2309
        %2311 = vrot.lane.b32.xlu0 %v2243, 111
        %v2312 = vpop.permute.xlu0 %2311
        %v2313 = vsel %vm429, %v2310, %v2312
        %v2314 = vsel %vm429, %v2308, %v2310
        %v2315 = vsel %vm429, %v2312, %v2308
        %2316 = vst [vmem:[#allocation2 + $0x90] sm:$0xf] %v2314
        %2317 = vst [vmem:[#allocation2 + $0x98] sm:$0xf] %v2313
        %2318 = vst [vmem:[#allocation2 + $0xa0] sm:$0xf] %v2315
        %2319 = vrot.lane.b32.xlu0 %v2241, 110
        %v2320 = vpop.permute.xlu0 %2319
        %2321 = vrot.lane.b32.xlu0 %v2242, 110
        %v2322 = vpop.permute.xlu0 %2321
        %2323 = vrot.lane.b32.xlu0 %v2243, 110
        %v2324 = vpop.permute.xlu0 %2323
        %v2325 = vsel %vm442, %v2322, %v2324
        %v2326 = vsel %vm442, %v2320, %v2322
        %v2327 = vsel %vm442, %v2324, %v2320
        %2328 = vst [vmem:[#allocation2 + $0xa8] sm:$0xf] %v2326
        %2329 = vst [vmem:[#allocation2 + $0xb0] sm:$0xf] %v2325
        %2330 = vst [vmem:[#allocation2 + $0xb8] sm:$0xf] %v2327
        %2331 = vrot.lane.b32.xlu0 %v2241, 109
        %v2332 = vpop.permute.xlu0 %2331
        %2333 = vrot.lane.b32.xlu0 %v2242, 109
        %v2334 = vpop.permute.xlu0 %2333
        %2335 = vrot.lane.b32.xlu0 %v2243, 109
        %v2336 = vpop.permute.xlu0 %2335
        %v2337 = vsel %vm455, %v2334, %v2336
        %v2338 = vsel %vm455, %v2332, %v2334
        %v2339 = vsel %vm455, %v2336, %v2332
        %2340 = vst [vmem:[#allocation2 + $0xc0] sm:$0xf] %v2338
        %2341 = vst [vmem:[#allocation2 + $0xc8] sm:$0xf] %v2337
        %2342 = vst [vmem:[#allocation2 + $0xd0] sm:$0xf] %v2339
        %v2343 = vld [vmem:[#allocation2] sm:$0xff]
        %v2344 = vld [vmem:[#allocation2 + $0x8] sm:$0xff]
        %v2345 = vld [vmem:[#allocation2 + $0x10] sm:$0xff]
        %v2346 = vld [vmem:[#allocation2 + $0x18] sm:$0xff]
        %v2347 = vld [vmem:[#allocation2 + $0x20] sm:$0xff]
        %v2348 = vld [vmem:[#allocation2 + $0x28] sm:$0xff]
        %v2349 = vld [vmem:[#allocation2 + $0x30] sm:$0xff]
        %v2350 = vld [vmem:[#allocation2 + $0x38] sm:$0xff]
        %v2351 = vld [vmem:[#allocation2 + $0x40] sm:$0xff]
        %v2352 = vld [vmem:[#allocation2 + $0x48] sm:$0xff]
        %v2353 = vld [vmem:[#allocation2 + $0x50] sm:$0xff]
        %v2354 = vld [vmem:[#allocation2 + $0x58] sm:$0xff]
        %v2355 = vld [vmem:[#allocation2 + $0x60] sm:$0xff]
        %v2356 = vld [vmem:[#allocation2 + $0x68] sm:$0xff]
        %v2357 = vld [vmem:[#allocation2 + $0x70] sm:$0xff]
        %v2358 = vld [vmem:[#allocation2 + $0x78] sm:$0xff]
        %v2359 = vld [vmem:[#allocation2 + $0x80] sm:$0xff]
        %v2360 = vld [vmem:[#allocation2 + $0x88] sm:$0xff]
        %v2361 = vld [vmem:[#allocation2 + $0x90] sm:$0xff]
        %v2362 = vld [vmem:[#allocation2 + $0x98] sm:$0xff]
        %v2363 = vld [vmem:[#allocation2 + $0xa0] sm:$0xff]
        %v2364 = vld [vmem:[#allocation2 + $0xa8] sm:$0xff]
        %v2365 = vld [vmem:[#allocation2 + $0xb0] sm:$0xff]
        %v2366 = vld [vmem:[#allocation2 + $0xb8] sm:$0xff]
        %v2367 = vld [vmem:[#allocation2 + $0xc0] sm:$0xff]
        %v2368 = vld [vmem:[#allocation2 + $0xc8] sm:$0xff]
        %v2369 = vld [vmem:[#allocation2 + $0xd0] sm:$0xff]
        %v2370 = vpack.c.bf16 %v2346, %v2343
        %v2371 = vpack.c.bf16 %v2347, %v2344
        %v2372 = vpack.c.bf16 %v2348, %v2345
        %v2373 = vpack.c.bf16 %v2352, %v2349
        %v2374 = vpack.c.bf16 %v2353, %v2350
        %v2375 = vpack.c.bf16 %v2354, %v2351
        %v2376 = vpack.c.bf16 %v2358, %v2355
        %v2377 = vpack.c.bf16 %v2359, %v2356
        %v2378 = vpack.c.bf16 %v2360, %v2357
        %v2379 = vpack.c.bf16 %v2364, %v2361
        %v2380 = vpack.c.bf16 %v2365, %v2362
        %v2381 = vpack.c.bf16 %v2366, %v2363
        %v2382 = vpack.c.bf16 %v2367, %v2367
        %v2383 = vpack.c.bf16 %v2368, %v2368
        %v2384 = vpack.c.bf16 %v2369, %v2369
        %s2385 = scalar_lea.vmem [#allocation3], 30
        %v2386 = vld [vmem:[%s2385] sm:$0x3]
        %s2387 = scalar_lea.vmem %s3, 20
        %v2388 = vld [vmem:[%s2387] sm:$0xf]
        %2390 = vset.pattern.permute.xlu0 0
        %2391 = vperm.xlu0 %2390, %v2388
        %v2392 = vpop.permute.xlu0 %2391
        %v2395 = vsel %vm511, %v2386, 0
        %v2398 = vsel %vm515, %v2382, 0
        %v2401 = vsel %vm515, %v2383, 0
        %v2404 = vsel %vm515, %v2384, 0
        %2406 = vmatprep.subr.bf16.mxu0 %v2371
        %2407 = vmatpush1.bf16.msra.mxu0 %v2370
        %2408 = vmatprep.subr.bf16.mxu0 %v2374
        %2409 = vmatpush1.bf16.msra.mxu0 %v2373
        %2410 = vmatprep.subr.bf16.mxu0 %v2377
        %2411 = vmatpush1.bf16.msra.mxu0 %v2376
        %2412 = vmatprep.subr.bf16.mxu0 %v2380
        %2413 = vmatpush1.bf16.msra.mxu0 %v2379
        %2414 = vmatprep.subr.bf16.mxu0 %v2401
        %2415 = vmatpush1.bf16.msra.mxu0 %v2398
        %2416 = vmatprep.subr.bf16.mxu0 0
        %2417 = vmatpush1.bf16.msra.mxu0 0
        %2418 = vmatprep.subr.bf16.mxu0 0
        %2419 = vmatpush1.bf16.msra.mxu0 0
        %2420 = vmatprep.subr.bf16.mxu0 0
        %2421 = vmatpush1.bf16.msra.mxu0 0
        %2422 = vmatprep.subr.bf16.mxu0 0
        %2423 = vmatpush1.bf16.msra.mxu0 0
        %2424 = vmatprep.subr.bf16.mxu0 0
        %2425 = vmatpush1.bf16.msra.mxu0 0
        %2426 = vmatprep.subr.bf16.mxu0 0
        %2427 = vmatpush1.bf16.msra.mxu0 0
        %2428 = vmatprep.subr.bf16.mxu0 0
        %2429 = vmatpush1.bf16.msra.mxu0 0
        %2430 = vmatprep.subr.bf16.mxu0 0
        %2431 = vmatpush1.bf16.msra.mxu0 0
        %2432 = vmatprep.subr.bf16.mxu0 0
        %2433 = vmatpush1.bf16.msra.mxu0 0
        %2434 = vmatprep.subr.bf16.mxu0 0
        %2435 = vmatpush1.bf16.msra.mxu0 0
        %2436 = vmatprep.subr.bf16.mxu0 0
        %2437 = vmatpush1.bf16.msra.mxu0 0
        %2438 = vmatprep.mubr.bf16.mxu0 0
        %2439 = vmatmul.mubr.bf16.gmra.mrb[0].mxu0 %v2395
        %v2440 = vpop.f32.mrb[0].mxu0
        %v2441 = vadd.f32 %v2392, %v2440
        %v2442 = vpop.f32.mrb[0].mxu0
        %v2443 = vadd.f32 %v2392, %v2442
        %v2444 = vpop.f32.mrb[0].mxu0
        %v2445 = vpop.f32.mrb[0].mxu0
        %2446 = vdwg.mxu0
        %2447 = vmatprep.subr.bf16.mxu0 0
        %2448 = vmatpush1.bf16.msra.mxu0 %v2372
        %2449 = vmatprep.subr.bf16.mxu0 0
        %2450 = vmatpush1.bf16.msra.mxu0 %v2375
        %2451 = vmatprep.subr.bf16.mxu0 0
        %2452 = vmatpush1.bf16.msra.mxu0 %v2378
        %2453 = vmatprep.subr.bf16.mxu0 0
        %2454 = vmatpush1.bf16.msra.mxu0 %v2381
        %2455 = vmatprep.subr.bf16.mxu0 0
        %2456 = vmatpush1.bf16.msra.mxu0 %v2404
        %2457 = vmatprep.subr.bf16.mxu0 0
        %2458 = vmatpush1.bf16.msra.mxu0 0
        %2459 = vmatprep.subr.bf16.mxu0 0
        %2460 = vmatpush1.bf16.msra.mxu0 0
        %2461 = vmatprep.subr.bf16.mxu0 0
        %2462 = vmatpush1.bf16.msra.mxu0 0
        %2463 = vmatprep.subr.bf16.mxu0 0
        %2464 = vmatpush1.bf16.msra.mxu0 0
        %2465 = vmatprep.subr.bf16.mxu0 0
        %2466 = vmatpush1.bf16.msra.mxu0 0
        %2467 = vmatprep.subr.bf16.mxu0 0
        %2468 = vmatpush1.bf16.msra.mxu0 0
        %2469 = vmatprep.subr.bf16.mxu0 0
        %2470 = vmatpush1.bf16.msra.mxu0 0
        %2471 = vmatprep.subr.bf16.mxu0 0
        %2472 = vmatpush1.bf16.msra.mxu0 0
        %2473 = vmatprep.subr.bf16.mxu0 0
        %2474 = vmatpush1.bf16.msra.mxu0 0
        %2475 = vmatprep.subr.bf16.mxu0 0
        %2476 = vmatpush1.bf16.msra.mxu0 0
        %2477 = vmatprep.subr.bf16.mxu0 0
        %2478 = vmatpush1.bf16.msra.mxu0 0
        %2479 = vmatprep.mubr.bf16.mxu0 0
        %2480 = vmatmul.mubr.bf16.gmra.mrb[0].mxu0 %v2395
        %v2481 = vpop.f32.mrb[0].mxu0
        %v2482 = vadd.f32 %v2392, %v2481
        %v2483 = vpop.f32.mrb[0].mxu0
        %v2484 = vpop.f32.mrb[0].mxu0
        %v2485 = vpop.f32.mrb[0].mxu0
        %2486 = vdwg.mxu0
        %v2487 = vmul.f32 %v2441, 0.01
        %v2488 = vmul.f32 %v2443, 0.01
        %v2489 = vmul.f32 %v2482, 0.01
        %v2490 = vmax.f32 %v2441, %v2487
        %v2491 = vmax.f32 %v2443, %v2488
        %v2492 = vmax.f32 %v2482, %v2489
        %v2493 = vmul.f32 %v2490, %v616
        %v2494 = vmul.f32 %v2491, %v620
        %v2495 = vmul.f32 %v2492, %v624
        %2496 = vrot.lane.b32.xlu0 %v2493, 19
        %v2497 = vpop.permute.xlu0 %2496
        %2498 = vrot.lane.b32.xlu0 %v2494, 19
        %v2499 = vpop.permute.xlu0 %2498
        %2500 = vrot.lane.b32.xlu0 %v2495, 19
        %v2501 = vpop.permute.xlu0 %2500
        %v2502 = vsel %vm361, %v2499, %v2501
        %v2503 = vsel %vm361, %v2497, %v2499
        %v2504 = vsel %vm361, %v2501, %v2497
        %2505 = vst [vmem:[#allocation2 + $0xd8] sm:$0xf] %v2504
        %2506 = vst [vmem:[#allocation2 + $0xe0] sm:$0xf] %v2503
        %2507 = vst [vmem:[#allocation2 + $0xe8] sm:$0xf] %v2502
        %2508 = vrot.lane.b32.xlu0 %v2493, 18
        %v2509 = vpop.permute.xlu0 %2508
        %2510 = vrot.lane.b32.xlu0 %v2494, 18
        %v2511 = vpop.permute.xlu0 %2510
        %2512 = vrot.lane.b32.xlu0 %v2495, 18
        %v2513 = vpop.permute.xlu0 %2512
        %v2514 = vsel %vm374, %v2511, %v2513
        %v2515 = vsel %vm374, %v2509, %v2511
        %v2516 = vsel %vm374, %v2513, %v2509
        %2517 = vst [vmem:[#allocation2 + $0xf0] sm:$0xf] %v2516
        %2518 = vst [vmem:[#allocation2 + $0xf8] sm:$0xf] %v2515
        %2519 = vst [vmem:[#allocation2 + $0x100] sm:$0xf] %v2514
        %2520 = vrot.lane.b32.xlu0 %v2493, 17
        %v2521 = vpop.permute.xlu0 %2520
        %2522 = vrot.lane.b32.xlu0 %v2494, 17
        %v2523 = vpop.permute.xlu0 %2522
        %2524 = vrot.lane.b32.xlu0 %v2495, 17
        %v2525 = vpop.permute.xlu0 %2524
        %v2526 = vsel %vm387, %v2523, %v2525
        %v2527 = vsel %vm387, %v2521, %v2523
        %v2528 = vsel %vm387, %v2525, %v2521
        %2529 = vst [vmem:[#allocation2 + $0x108] sm:$0xf] %v2528
        %2530 = vst [vmem:[#allocation2 + $0x110] sm:$0xf] %v2527
        %2531 = vst [vmem:[#allocation2 + $0x118] sm:$0xf] %v2526
        %2532 = vrot.lane.b32.xlu0 %v2493, 1
        %v2533 = vpop.permute.xlu0 %2532
        %2534 = vrot.lane.b32.xlu0 %v2494, 1
        %v2535 = vpop.permute.xlu0 %2534
        %2536 = vrot.lane.b32.xlu0 %v2495, 1
        %v2537 = vpop.permute.xlu0 %2536
        %v2538 = vsel %vm400, %v2535, %v2537
        %v2539 = vsel %vm400, %v2533, %v2535
        %v2540 = vsel %vm400, %v2537, %v2533
        %2541 = vst [vmem:[#allocation2 + $0x120] sm:$0xf] %v2540
        %2542 = vst [vmem:[#allocation2 + $0x128] sm:$0xf] %v2539
        %2543 = vst [vmem:[#allocation2 + $0x130] sm:$0xf] %v2538
        %2544 = vst [vmem:[#allocation2 + $0x138] sm:$0xf] %v2493
        %2545 = vst [vmem:[#allocation2 + $0x140] sm:$0xf] %v2494
        %2546 = vst [vmem:[#allocation2 + $0x148] sm:$0xf] %v2495
        %2547 = vrot.lane.b32.xlu0 %v2493, 127
        %v2548 = vpop.permute.xlu0 %2547
        %2549 = vrot.lane.b32.xlu0 %v2494, 127
        %v2550 = vpop.permute.xlu0 %2549
        %2551 = vrot.lane.b32.xlu0 %v2495, 127
        %v2552 = vpop.permute.xlu0 %2551
        %v2553 = vsel %vm416, %v2550, %v2552
        %v2554 = vsel %vm416, %v2548, %v2550
        %v2555 = vsel %vm416, %v2552, %v2548
        %2556 = vst [vmem:[#allocation2 + $0x150] sm:$0xf] %v2554
        %2557 = vst [vmem:[#allocation2 + $0x158] sm:$0xf] %v2553
        %2558 = vst [vmem:[#allocation2 + $0x160] sm:$0xf] %v2555
        %2559 = vrot.lane.b32.xlu0 %v2493, 111
        %v2560 = vpop.permute.xlu0 %2559
        %2561 = vrot.lane.b32.xlu0 %v2494, 111
        %v2562 = vpop.permute.xlu0 %2561
        %2563 = vrot.lane.b32.xlu0 %v2495, 111
        %v2564 = vpop.permute.xlu0 %2563
        %v2565 = vsel %vm429, %v2562, %v2564
        %v2566 = vsel %vm429, %v2560, %v2562
        %v2567 = vsel %vm429, %v2564, %v2560
        %2568 = vst [vmem:[#allocation2 + $0x168] sm:$0xf] %v2566
        %2569 = vst [vmem:[#allocation2 + $0x170] sm:$0xf] %v2565
        %2570 = vst [vmem:[#allocation2 + $0x178] sm:$0xf] %v2567
        %2571 = vrot.lane.b32.xlu0 %v2493, 110
        %v2572 = vpop.permute.xlu0 %2571
        %2573 = vrot.lane.b32.xlu0 %v2494, 110
        %v2574 = vpop.permute.xlu0 %2573
        %2575 = vrot.lane.b32.xlu0 %v2495, 110
        %v2576 = vpop.permute.xlu0 %2575
        %v2577 = vsel %vm442, %v2574, %v2576
        %v2578 = vsel %vm442, %v2572, %v2574
        %v2579 = vsel %vm442, %v2576, %v2572
        %2580 = vst [vmem:[#allocation2 + $0x180] sm:$0xf] %v2578
        %2581 = vst [vmem:[#allocation2 + $0x188] sm:$0xf] %v2577
        %2582 = vst [vmem:[#allocation2 + $0x190] sm:$0xf] %v2579
        %2583 = vrot.lane.b32.xlu0 %v2493, 109
        %v2584 = vpop.permute.xlu0 %2583
        %2585 = vrot.lane.b32.xlu0 %v2494, 109
        %v2586 = vpop.permute.xlu0 %2585
        %2587 = vrot.lane.b32.xlu0 %v2495, 109
        %v2588 = vpop.permute.xlu0 %2587
        %v2589 = vsel %vm455, %v2586, %v2588
        %v2590 = vsel %vm455, %v2584, %v2586
        %v2591 = vsel %vm455, %v2588, %v2584
        %2592 = vst [vmem:[#allocation2 + $0x198] sm:$0xf] %v2590
        %2593 = vst [vmem:[#allocation2 + $0x1a0] sm:$0xf] %v2589
        %2594 = vst [vmem:[#allocation2 + $0x1a8] sm:$0xf] %v2591
        %v2595 = vld [vmem:[#allocation2] sm:$0xff]
        %v2596 = vld [vmem:[#allocation2 + $0x8] sm:$0xff]
        %v2597 = vld [vmem:[#allocation2 + $0x10] sm:$0xff]
        %v2598 = vld [vmem:[#allocation2 + $0x18] sm:$0xff]
        %v2599 = vld [vmem:[#allocation2 + $0x20] sm:$0xff]
        %v2600 = vld [vmem:[#allocation2 + $0x28] sm:$0xff]
        %v2601 = vld [vmem:[#allocation2 + $0x30] sm:$0xff]
        %v2602 = vld [vmem:[#allocation2 + $0x38] sm:$0xff]
        %v2603 = vld [vmem:[#allocation2 + $0x40] sm:$0xff]
        %v2604 = vld [vmem:[#allocation2 + $0x48] sm:$0xff]
        %v2605 = vld [vmem:[#allocation2 + $0x50] sm:$0xff]
        %v2606 = vld [vmem:[#allocation2 + $0x58] sm:$0xff]
        %v2607 = vld [vmem:[#allocation2 + $0x60] sm:$0xff]
        %v2608 = vld [vmem:[#allocation2 + $0x68] sm:$0xff]
        %v2609 = vld [vmem:[#allocation2 + $0x70] sm:$0xff]
        %v2610 = vld [vmem:[#allocation2 + $0x78] sm:$0xff]
        %v2611 = vld [vmem:[#allocation2 + $0x80] sm:$0xff]
        %v2612 = vld [vmem:[#allocation2 + $0x88] sm:$0xff]
        %v2613 = vld [vmem:[#allocation2 + $0x90] sm:$0xff]
        %v2614 = vld [vmem:[#allocation2 + $0x98] sm:$0xff]
        %v2615 = vld [vmem:[#allocation2 + $0xa0] sm:$0xff]
        %v2616 = vld [vmem:[#allocation2 + $0xa8] sm:$0xff]
        %v2617 = vld [vmem:[#allocation2 + $0xb0] sm:$0xff]
        %v2618 = vld [vmem:[#allocation2 + $0xb8] sm:$0xff]
        %v2619 = vld [vmem:[#allocation2 + $0xc0] sm:$0xff]
        %v2620 = vld [vmem:[#allocation2 + $0xc8] sm:$0xff]
        %v2621 = vld [vmem:[#allocation2 + $0xd0] sm:$0xff]
        %v2622 = vld [vmem:[#allocation2 + $0xd8] sm:$0xff]
        %v2623 = vld [vmem:[#allocation2 + $0xe0] sm:$0xff]
        %v2624 = vld [vmem:[#allocation2 + $0xe8] sm:$0xff]
        %v2625 = vld [vmem:[#allocation2 + $0xf0] sm:$0xff]
        %v2626 = vld [vmem:[#allocation2 + $0xf8] sm:$0xff]
        %v2627 = vld [vmem:[#allocation2 + $0x100] sm:$0xff]
        %v2628 = vld [vmem:[#allocation2 + $0x108] sm:$0xff]
        %v2629 = vld [vmem:[#allocation2 + $0x110] sm:$0xff]
        %v2630 = vld [vmem:[#allocation2 + $0x118] sm:$0xff]
        %v2631 = vld [vmem:[#allocation2 + $0x120] sm:$0xff]
        %v2632 = vld [vmem:[#allocation2 + $0x128] sm:$0xff]
        %v2633 = vld [vmem:[#allocation2 + $0x130] sm:$0xff]
        %v2634 = vld [vmem:[#allocation2 + $0x138] sm:$0xff]
        %v2635 = vld [vmem:[#allocation2 + $0x140] sm:$0xff]
        %v2636 = vld [vmem:[#allocation2 + $0x148] sm:$0xff]
        %v2637 = vld [vmem:[#allocation2 + $0x150] sm:$0xff]
        %v2638 = vld [vmem:[#allocation2 + $0x158] sm:$0xff]
        %v2639 = vld [vmem:[#allocation2 + $0x160] sm:$0xff]
        %v2640 = vld [vmem:[#allocation2 + $0x168] sm:$0xff]
        %v2641 = vld [vmem:[#allocation2 + $0x170] sm:$0xff]
        %v2642 = vld [vmem:[#allocation2 + $0x178] sm:$0xff]
        %v2643 = vld [vmem:[#allocation2 + $0x180] sm:$0xff]
        %v2644 = vld [vmem:[#allocation2 + $0x188] sm:$0xff]
        %v2645 = vld [vmem:[#allocation2 + $0x190] sm:$0xff]
        %v2646 = vld [vmem:[#allocation2 + $0x198] sm:$0xff]
        %v2647 = vld [vmem:[#allocation2 + $0x1a0] sm:$0xff]
        %v2648 = vld [vmem:[#allocation2 + $0x1a8] sm:$0xff]
        %v2649 = vpack.c.bf16 %v2598, %v2595
        %v2650 = vpack.c.bf16 %v2599, %v2596
        %v2651 = vpack.c.bf16 %v2600, %v2597
        %v2652 = vpack.c.bf16 %v2604, %v2601
        %v2653 = vpack.c.bf16 %v2605, %v2602
        %v2654 = vpack.c.bf16 %v2606, %v2603
        %v2655 = vpack.c.bf16 %v2610, %v2607
        %v2656 = vpack.c.bf16 %v2611, %v2608
        %v2657 = vpack.c.bf16 %v2612, %v2609
        %v2658 = vpack.c.bf16 %v2616, %v2613
        %v2659 = vpack.c.bf16 %v2617, %v2614
        %v2660 = vpack.c.bf16 %v2618, %v2615
        %v2661 = vpack.c.bf16 %v2622, %v2619
        %v2662 = vpack.c.bf16 %v2623, %v2620
        %v2663 = vpack.c.bf16 %v2624, %v2621
        %v2664 = vpack.c.bf16 %v2628, %v2625
        %v2665 = vpack.c.bf16 %v2629, %v2626
        %v2666 = vpack.c.bf16 %v2630, %v2627
        %v2667 = vpack.c.bf16 %v2634, %v2631
        %v2668 = vpack.c.bf16 %v2635, %v2632
        %v2669 = vpack.c.bf16 %v2636, %v2633
        %v2670 = vpack.c.bf16 %v2640, %v2637
        %v2671 = vpack.c.bf16 %v2641, %v2638
        %v2672 = vpack.c.bf16 %v2642, %v2639
        %v2673 = vpack.c.bf16 %v2646, %v2643
        %v2674 = vpack.c.bf16 %v2647, %v2644
        %v2675 = vpack.c.bf16 %v2648, %v2645
        %s2676 = scalar_lea.vmem [#allocation3], 36
        %v2677 = vld [vmem:[%s2676] sm:$0xf]
        %s2678 = scalar_lea.vmem %s3, 24
        %v2679 = vld [vmem:[%s2678] sm:$0xf]
        %2681 = vset.pattern.permute.xlu0 0
        %2682 = vperm.xlu0 %2681, %v2679
        %v2683 = vpop.permute.xlu0 %2682
        %v2687 = vunpack.c.l.s4 1983009808
        %v2688 = vunpack.c.0.s8 %v2687
        %v2689 = vlaneseq
        %v2690 = vshrl.u32 %v2689, 7
        %v2691 = vsub.s32 %v2688, %v2690
        %v2692 = vrot.slane %v2677, %v2691
        %v2693 = vcombine.high %v2692, %v2692
        %v2696 = vsel %vm830, %v2693, 0
        %2698 = vmatprep.subr.bf16.mxu0 %v2650
        %2699 = vmatpush1.bf16.msra.mxu0 %v2649
        %2700 = vmatprep.subr.bf16.mxu0 %v2653
        %2701 = vmatpush1.bf16.msra.mxu0 %v2652
        %2702 = vmatprep.subr.bf16.mxu0 %v2656
        %2703 = vmatpush1.bf16.msra.mxu0 %v2655
        %2704 = vmatprep.subr.bf16.mxu0 %v2659
        %2705 = vmatpush1.bf16.msra.mxu0 %v2658
        %2706 = vmatprep.subr.bf16.mxu0 %v2662
        %2707 = vmatpush1.bf16.msra.mxu0 %v2661
        %2708 = vmatprep.subr.bf16.mxu0 %v2665
        %2709 = vmatpush1.bf16.msra.mxu0 %v2664
        %2710 = vmatprep.subr.bf16.mxu0 %v2668
        %2711 = vmatpush1.bf16.msra.mxu0 %v2667
        %2712 = vmatprep.subr.bf16.mxu0 %v2671
        %2713 = vmatpush1.bf16.msra.mxu0 %v2670
        %2714 = vmatprep.subr.bf16.mxu0 %v2674
        %2715 = vmatpush1.bf16.msra.mxu0 %v2673
        %2716 = vmatprep.subr.bf16.mxu0 0
        %2717 = vmatpush1.bf16.msra.mxu0 0
        %2718 = vmatprep.subr.bf16.mxu0 0
        %2719 = vmatpush1.bf16.msra.mxu0 0
        %2720 = vmatprep.subr.bf16.mxu0 0
        %2721 = vmatpush1.bf16.msra.mxu0 0
        %2722 = vmatprep.subr.bf16.mxu0 0
        %2723 = vmatpush1.bf16.msra.mxu0 0
        %2724 = vmatprep.subr.bf16.mxu0 0
        %2725 = vmatpush1.bf16.msra.mxu0 0
        %2726 = vmatprep.subr.bf16.mxu0 0
        %2727 = vmatpush1.bf16.msra.mxu0 0
        %2728 = vmatprep.subr.bf16.mxu0 0
        %2729 = vmatpush1.bf16.msra.mxu0 0
        %2730 = vmatprep.mubr.bf16.mxu0 %v2696
        %2731 = vmatmul.mubr.bf16.gmra.mrb[0].mxu0 %v2692
        %v2732 = vpop.f32.mrb[0].mxu0
        %v2733 = vadd.f32 %v2683, %v2732
        %v2734 = vpop.f32.mrb[0].mxu0
        %v2735 = vadd.f32 %v2683, %v2734
        %v2736 = vpop.f32.mrb[0].mxu0
        %v2737 = vpop.f32.mrb[0].mxu0
        %2738 = vdwg.mxu0
        %2739 = vmatprep.subr.bf16.mxu0 0
        %2740 = vmatpush1.bf16.msra.mxu0 %v2651
        %2741 = vmatprep.subr.bf16.mxu0 0
        %2742 = vmatpush1.bf16.msra.mxu0 %v2654
        %2743 = vmatprep.subr.bf16.mxu0 0
        %2744 = vmatpush1.bf16.msra.mxu0 %v2657
        %2745 = vmatprep.subr.bf16.mxu0 0
        %2746 = vmatpush1.bf16.msra.mxu0 %v2660
        %2747 = vmatprep.subr.bf16.mxu0 0
        %2748 = vmatpush1.bf16.msra.mxu0 %v2663
        %2749 = vmatprep.subr.bf16.mxu0 0
        %2750 = vmatpush1.bf16.msra.mxu0 %v2666
        %2751 = vmatprep.subr.bf16.mxu0 0
        %2752 = vmatpush1.bf16.msra.mxu0 %v2669
        %2753 = vmatprep.subr.bf16.mxu0 0
        %2754 = vmatpush1.bf16.msra.mxu0 %v2672
        %2755 = vmatprep.subr.bf16.mxu0 0
        %2756 = vmatpush1.bf16.msra.mxu0 %v2675
        %2757 = vmatprep.subr.bf16.mxu0 0
        %2758 = vmatpush1.bf16.msra.mxu0 0
        %2759 = vmatprep.subr.bf16.mxu0 0
        %2760 = vmatpush1.bf16.msra.mxu0 0
        %2761 = vmatprep.subr.bf16.mxu0 0
        %2762 = vmatpush1.bf16.msra.mxu0 0
        %2763 = vmatprep.subr.bf16.mxu0 0
        %2764 = vmatpush1.bf16.msra.mxu0 0
        %2765 = vmatprep.subr.bf16.mxu0 0
        %2766 = vmatpush1.bf16.msra.mxu0 0
        %2767 = vmatprep.subr.bf16.mxu0 0
        %2768 = vmatpush1.bf16.msra.mxu0 0
        %2769 = vmatprep.subr.bf16.mxu0 0
        %2770 = vmatpush1.bf16.msra.mxu0 0
        %2771 = vmatprep.mubr.bf16.mxu0 %v2696
        %2772 = vmatmul.mubr.bf16.gmra.mrb[0].mxu0 %v2692
        %v2773 = vpop.f32.mrb[0].mxu0
        %v2774 = vadd.f32 %v2683, %v2773
        %v2775 = vpop.f32.mrb[0].mxu0
        %v2776 = vpop.f32.mrb[0].mxu0
        %v2777 = vpop.f32.mrb[0].mxu0
        %2778 = vdwg.mxu0
        %v2779 = vmul.f32 %v2733, 0.01
        %v2780 = vmul.f32 %v2735, 0.01
        %v2781 = vmul.f32 %v2774, 0.01
        %v2782 = vmax.f32 %v2733, %v2779
        %v2783 = vmax.f32 %v2735, %v2780
        %v2784 = vmax.f32 %v2774, %v2781
        %v2785 = vmul.f32 %v2782, %v616
        %v2786 = vmul.f32 %v2783, %v620
        %v2787 = vmul.f32 %v2784, %v624
        %2788 = vrot.lane.b32.xlu0 %v2785, 19
        %v2789 = vpop.permute.xlu0 %2788
        %2790 = vrot.lane.b32.xlu0 %v2786, 19
        %v2791 = vpop.permute.xlu0 %2790
        %2792 = vrot.lane.b32.xlu0 %v2787, 19
        %v2793 = vpop.permute.xlu0 %2792
        %v2794 = vsel %vm361, %v2791, %v2793
        %v2795 = vsel %vm361, %v2789, %v2791
        %v2796 = vsel %vm361, %v2793, %v2789
        %2797 = vst [vmem:[#allocation2 + $0x1b0] sm:$0xf] %v2796
        %2798 = vst [vmem:[#allocation2 + $0x1b8] sm:$0xf] %v2795
        %2799 = vst [vmem:[#allocation2 + $0x1c0] sm:$0xf] %v2794
        %2800 = vrot.lane.b32.xlu0 %v2785, 18
        %v2801 = vpop.permute.xlu0 %2800
        %2802 = vrot.lane.b32.xlu0 %v2786, 18
        %v2803 = vpop.permute.xlu0 %2802
        %2804 = vrot.lane.b32.xlu0 %v2787, 18
        %v2805 = vpop.permute.xlu0 %2804
        %v2806 = vsel %vm374, %v2803, %v2805
        %v2807 = vsel %vm374, %v2801, %v2803
        %v2808 = vsel %vm374, %v2805, %v2801
        %2809 = vst [vmem:[#allocation2 + $0x1c8] sm:$0xf] %v2808
        %2810 = vst [vmem:[#allocation2 + $0x1d0] sm:$0xf] %v2807
        %2811 = vst [vmem:[#allocation2 + $0x1d8] sm:$0xf] %v2806
        %2812 = vrot.lane.b32.xlu0 %v2785, 17
        %v2813 = vpop.permute.xlu0 %2812
        %2814 = vrot.lane.b32.xlu0 %v2786, 17
        %v2815 = vpop.permute.xlu0 %2814
        %2816 = vrot.lane.b32.xlu0 %v2787, 17
        %v2817 = vpop.permute.xlu0 %2816
        %v2818 = vsel %vm387, %v2815, %v2817
        %v2819 = vsel %vm387, %v2813, %v2815
        %v2820 = vsel %vm387, %v2817, %v2813
        %2821 = vst [vmem:[#allocation2 + $0x1e0] sm:$0xf] %v2820
        %2822 = vst [vmem:[#allocation2 + $0x1e8] sm:$0xf] %v2819
        %2823 = vst [vmem:[#allocation2 + $0x1f0] sm:$0xf] %v2818
        %2824 = vrot.lane.b32.xlu0 %v2785, 1
        %v2825 = vpop.permute.xlu0 %2824
        %2826 = vrot.lane.b32.xlu0 %v2786, 1
        %v2827 = vpop.permute.xlu0 %2826
        %2828 = vrot.lane.b32.xlu0 %v2787, 1
        %v2829 = vpop.permute.xlu0 %2828
        %v2830 = vsel %vm400, %v2827, %v2829
        %v2831 = vsel %vm400, %v2825, %v2827
        %v2832 = vsel %vm400, %v2829, %v2825
        %2833 = vst [vmem:[#allocation2 + $0x1f8] sm:$0xf] %v2832
        %2834 = vst [vmem:[#allocation2 + $0x200] sm:$0xf] %v2831
        %2835 = vst [vmem:[#allocation2 + $0x208] sm:$0xf] %v2830
        %2836 = vst [vmem:[#allocation2 + $0x210] sm:$0xf] %v2785
        %2837 = vst [vmem:[#allocation2 + $0x218] sm:$0xf] %v2786
        %2838 = vst [vmem:[#allocation2 + $0x220] sm:$0xf] %v2787
        %2839 = vrot.lane.b32.xlu0 %v2785, 127
        %v2840 = vpop.permute.xlu0 %2839
        %2841 = vrot.lane.b32.xlu0 %v2786, 127
        %v2842 = vpop.permute.xlu0 %2841
        %2843 = vrot.lane.b32.xlu0 %v2787, 127
        %v2844 = vpop.permute.xlu0 %2843
        %v2845 = vsel %vm416, %v2842, %v2844
        %v2846 = vsel %vm416, %v2840, %v2842
        %v2847 = vsel %vm416, %v2844, %v2840
        %2848 = vst [vmem:[#allocation2 + $0x228] sm:$0xf] %v2846
        %2849 = vst [vmem:[#allocation2 + $0x230] sm:$0xf] %v2845
        %2850 = vst [vmem:[#allocation2 + $0x238] sm:$0xf] %v2847
        %2851 = vrot.lane.b32.xlu0 %v2785, 111
        %v2852 = vpop.permute.xlu0 %2851
        %2853 = vrot.lane.b32.xlu0 %v2786, 111
        %v2854 = vpop.permute.xlu0 %2853
        %2855 = vrot.lane.b32.xlu0 %v2787, 111
        %v2856 = vpop.permute.xlu0 %2855
        %v2857 = vsel %vm429, %v2854, %v2856
        %v2858 = vsel %vm429, %v2852, %v2854
        %v2859 = vsel %vm429, %v2856, %v2852
        %2860 = vst [vmem:[#allocation2 + $0x240] sm:$0xf] %v2858
        %2861 = vst [vmem:[#allocation2 + $0x248] sm:$0xf] %v2857
        %2862 = vst [vmem:[#allocation2 + $0x250] sm:$0xf] %v2859
        %2863 = vrot.lane.b32.xlu0 %v2785, 110
        %v2864 = vpop.permute.xlu0 %2863
        %2865 = vrot.lane.b32.xlu0 %v2786, 110
        %v2866 = vpop.permute.xlu0 %2865
        %2867 = vrot.lane.b32.xlu0 %v2787, 110
        %v2868 = vpop.permute.xlu0 %2867
        %v2869 = vsel %vm442, %v2866, %v2868
        %v2870 = vsel %vm442, %v2864, %v2866
        %v2871 = vsel %vm442, %v2868, %v2864
        %2872 = vst [vmem:[#allocation2 + $0x258] sm:$0xf] %v2870
        %2873 = vst [vmem:[#allocation2 + $0x260] sm:$0xf] %v2869
        %2874 = vst [vmem:[#allocation2 + $0x268] sm:$0xf] %v2871
        %2875 = vrot.lane.b32.xlu0 %v2785, 109
        %v2876 = vpop.permute.xlu0 %2875
        %2877 = vrot.lane.b32.xlu0 %v2786, 109
        %v2878 = vpop.permute.xlu0 %2877
        %2879 = vrot.lane.b32.xlu0 %v2787, 109
        %v2880 = vpop.permute.xlu0 %2879
        %v2881 = vsel %vm455, %v2878, %v2880
        %v2882 = vsel %vm455, %v2876, %v2878
        %v2883 = vsel %vm455, %v2880, %v2876
        %2884 = vst [vmem:[#allocation2 + $0x270] sm:$0xf] %v2882
        %2885 = vst [vmem:[#allocation2 + $0x278] sm:$0xf] %v2881
        %2886 = vst [vmem:[#allocation2 + $0x280] sm:$0xf] %v2883
        %v2887 = vld [vmem:[#allocation2] sm:$0xff]
        %v2888 = vld [vmem:[#allocation2 + $0x8] sm:$0xff]
        %v2889 = vld [vmem:[#allocation2 + $0x10] sm:$0xff]
        %v2890 = vld [vmem:[#allocation2 + $0x18] sm:$0xff]
        %v2891 = vld [vmem:[#allocation2 + $0x20] sm:$0xff]
        %v2892 = vld [vmem:[#allocation2 + $0x28] sm:$0xff]
        %v2893 = vld [vmem:[#allocation2 + $0x30] sm:$0xff]
        %v2894 = vld [vmem:[#allocation2 + $0x38] sm:$0xff]
        %v2895 = vld [vmem:[#allocation2 + $0x40] sm:$0xff]
        %v2896 = vld [vmem:[#allocation2 + $0x48] sm:$0xff]
        %v2897 = vld [vmem:[#allocation2 + $0x50] sm:$0xff]
        %v2898 = vld [vmem:[#allocation2 + $0x58] sm:$0xff]
        %v2899 = vld [vmem:[#allocation2 + $0x60] sm:$0xff]
        %v2900 = vld [vmem:[#allocation2 + $0x68] sm:$0xff]
        %v2901 = vld [vmem:[#allocation2 + $0x70] sm:$0xff]
        %v2902 = vld [vmem:[#allocation2 + $0x78] sm:$0xff]
        %v2903 = vld [vmem:[#allocation2 + $0x80] sm:$0xff]
        %v2904 = vld [vmem:[#allocation2 + $0x88] sm:$0xff]
        %v2905 = vld [vmem:[#allocation2 + $0x90] sm:$0xff]
        %v2906 = vld [vmem:[#allocation2 + $0x98] sm:$0xff]
        %v2907 = vld [vmem:[#allocation2 + $0xa0] sm:$0xff]
        %v2908 = vld [vmem:[#allocation2 + $0xa8] sm:$0xff]
        %v2909 = vld [vmem:[#allocation2 + $0xb0] sm:$0xff]
        %v2910 = vld [vmem:[#allocation2 + $0xb8] sm:$0xff]
        %v2911 = vld [vmem:[#allocation2 + $0xc0] sm:$0xff]
        %v2912 = vld [vmem:[#allocation2 + $0xc8] sm:$0xff]
        %v2913 = vld [vmem:[#allocation2 + $0xd0] sm:$0xff]
        %v2914 = vld [vmem:[#allocation2 + $0xd8] sm:$0xff]
        %v2915 = vld [vmem:[#allocation2 + $0xe0] sm:$0xff]
        %v2916 = vld [vmem:[#allocation2 + $0xe8] sm:$0xff]
        %v2917 = vld [vmem:[#allocation2 + $0xf0] sm:$0xff]
        %v2918 = vld [vmem:[#allocation2 + $0xf8] sm:$0xff]
        %v2919 = vld [vmem:[#allocation2 + $0x100] sm:$0xff]
        %v2920 = vld [vmem:[#allocation2 + $0x108] sm:$0xff]
        %v2921 = vld [vmem:[#allocation2 + $0x110] sm:$0xff]
        %v2922 = vld [vmem:[#allocation2 + $0x118] sm:$0xff]
        %v2923 = vld [vmem:[#allocation2 + $0x120] sm:$0xff]
        %v2924 = vld [vmem:[#allocation2 + $0x128] sm:$0xff]
        %v2925 = vld [vmem:[#allocation2 + $0x130] sm:$0xff]
        %v2926 = vld [vmem:[#allocation2 + $0x138] sm:$0xff]
        %v2927 = vld [vmem:[#allocation2 + $0x140] sm:$0xff]
        %v2928 = vld [vmem:[#allocation2 + $0x148] sm:$0xff]
        %v2929 = vld [vmem:[#allocation2 + $0x150] sm:$0xff]
        %v2930 = vld [vmem:[#allocation2 + $0x158] sm:$0xff]
        %v2931 = vld [vmem:[#allocation2 + $0x160] sm:$0xff]
        %v2932 = vld [vmem:[#allocation2 + $0x168] sm:$0xff]
        %v2933 = vld [vmem:[#allocation2 + $0x170] sm:$0xff]
        %v2934 = vld [vmem:[#allocation2 + $0x178] sm:$0xff]
        %v2935 = vld [vmem:[#allocation2 + $0x180] sm:$0xff]
        %v2936 = vld [vmem:[#allocation2 + $0x188] sm:$0xff]
        %v2937 = vld [vmem:[#allocation2 + $0x190] sm:$0xff]
        %v2938 = vld [vmem:[#allocation2 + $0x198] sm:$0xff]
        %v2939 = vld [vmem:[#allocation2 + $0x1a0] sm:$0xff]
        %v2940 = vld [vmem:[#allocation2 + $0x1a8] sm:$0xff]
        %v2941 = vld [vmem:[#allocation2 + $0x1b0] sm:$0xff]
        %v2942 = vld [vmem:[#allocation2 + $0x1b8] sm:$0xff]
        %v2943 = vld [vmem:[#allocation2 + $0x1c0] sm:$0xff]
        %v2944 = vld [vmem:[#allocation2 + $0x1c8] sm:$0xff]
        %v2945 = vld [vmem:[#allocation2 + $0x1d0] sm:$0xff]
        %v2946 = vld [vmem:[#allocation2 + $0x1d8] sm:$0xff]
        %v2947 = vld [vmem:[#allocation2 + $0x1e0] sm:$0xff]
        %v2948 = vld [vmem:[#allocation2 + $0x1e8] sm:$0xff]
        %v2949 = vld [vmem:[#allocation2 + $0x1f0] sm:$0xff]
        %v2950 = vld [vmem:[#allocation2 + $0x1f8] sm:$0xff]
        %v2951 = vld [vmem:[#allocation2 + $0x200] sm:$0xff]
        %v2952 = vld [vmem:[#allocation2 + $0x208] sm:$0xff]
        %v2953 = vld [vmem:[#allocation2 + $0x210] sm:$0xff]
        %v2954 = vld [vmem:[#allocation2 + $0x218] sm:$0xff]
        %v2955 = vld [vmem:[#allocation2 + $0x220] sm:$0xff]
        %v2956 = vld [vmem:[#allocation2 + $0x228] sm:$0xff]
        %v2957 = vld [vmem:[#allocation2 + $0x230] sm:$0xff]
        %v2958 = vld [vmem:[#allocation2 + $0x238] sm:$0xff]
        %v2959 = vld [vmem:[#allocation2 + $0x240] sm:$0xff]
        %v2960 = vld [vmem:[#allocation2 + $0x248] sm:$0xff]
        %v2961 = vld [vmem:[#allocation2 + $0x250] sm:$0xff]
        %v2962 = vld [vmem:[#allocation2 + $0x258] sm:$0xff]
        %v2963 = vld [vmem:[#allocation2 + $0x260] sm:$0xff]
        %v2964 = vld [vmem:[#allocation2 + $0x268] sm:$0xff]
        %v2965 = vld [vmem:[#allocation2 + $0x270] sm:$0xff]
        %v2966 = vld [vmem:[#allocation2 + $0x278] sm:$0xff]
        %v2967 = vld [vmem:[#allocation2 + $0x280] sm:$0xff]
        %v2968 = vpack.c.bf16 %v2890, %v2887
        %v2969 = vpack.c.bf16 %v2891, %v2888
        %v2970 = vpack.c.bf16 %v2892, %v2889
        %v2971 = vpack.c.bf16 %v2896, %v2893
        %v2972 = vpack.c.bf16 %v2897, %v2894
        %v2973 = vpack.c.bf16 %v2898, %v2895
        %v2974 = vpack.c.bf16 %v2902, %v2899
        %v2975 = vpack.c.bf16 %v2903, %v2900
        %v2976 = vpack.c.bf16 %v2904, %v2901
        %v2977 = vpack.c.bf16 %v2908, %v2905
        %v2978 = vpack.c.bf16 %v2909, %v2906
        %v2979 = vpack.c.bf16 %v2910, %v2907
        %v2980 = vpack.c.bf16 %v2914, %v2911
        %v2981 = vpack.c.bf16 %v2915, %v2912
        %v2982 = vpack.c.bf16 %v2916, %v2913
        %v2983 = vpack.c.bf16 %v2920, %v2917
        %v2984 = vpack.c.bf16 %v2921, %v2918
        %v2985 = vpack.c.bf16 %v2922, %v2919
        %v2986 = vpack.c.bf16 %v2926, %v2923
        %v2987 = vpack.c.bf16 %v2927, %v2924
        %v2988 = vpack.c.bf16 %v2928, %v2925
        %v2989 = vpack.c.bf16 %v2932, %v2929
        %v2990 = vpack.c.bf16 %v2933, %v2930
        %v2991 = vpack.c.bf16 %v2934, %v2931
        %v2992 = vpack.c.bf16 %v2938, %v2935
        %v2993 = vpack.c.bf16 %v2939, %v2936
        %v2994 = vpack.c.bf16 %v2940, %v2937
        %v2995 = vpack.c.bf16 %v2944, %v2941
        %v2996 = vpack.c.bf16 %v2945, %v2942
        %v2997 = vpack.c.bf16 %v2946, %v2943
        %v2998 = vpack.c.bf16 %v2950, %v2947
        %v2999 = vpack.c.bf16 %v2951, %v2948
        %v3000 = vpack.c.bf16 %v2952, %v2949
        %v3001 = vpack.c.bf16 %v2956, %v2953
        %v3002 = vpack.c.bf16 %v2957, %v2954
        %v3003 = vpack.c.bf16 %v2958, %v2955
        %v3004 = vpack.c.bf16 %v2962, %v2959
        %v3005 = vpack.c.bf16 %v2963, %v2960
        %v3006 = vpack.c.bf16 %v2964, %v2961
        %v3007 = vpack.c.bf16 %v2965, %v2965
        %v3008 = vpack.c.bf16 %v2966, %v2966
        %v3009 = vpack.c.bf16 %v2967, %v2967
        %s3010 = scalar_lea.vmem [#allocation3], 42
        %v3011 = vld [vmem:[%s3010] sm:$0xf]
        %s3012 = scalar_lea.vmem %s3, 28
        %v3013 = vld [vmem:[%s3012] sm:$0xf]
        %3015 = vset.pattern.permute.xlu0 0
        %3016 = vperm.xlu0 %3015, %v3013
        %v3017 = vpop.permute.xlu0 %3016
        %v3021 = vunpack.c.l.s4 1983009808
        %v3022 = vunpack.c.0.s8 %v3021
        %v3023 = vlaneseq
        %v3024 = vshrl.u32 %v3023, 7
        %v3025 = vsub.s32 %v3022, %v3024
        %v3026 = vrot.slane %v3011, %v3025
        %v3027 = vcombine.high %v3026, %v3026
        %v3030 = vsel %vm1165, %v3027, 0
        %v3033 = vsel %vm515, %v3007, 0
        %v3036 = vsel %vm515, %v3008, 0
        %v3039 = vsel %vm515, %v3009, 0
        %3041 = vmatprep.subr.bf16.mxu0 %v2969
        %3042 = vmatpush1.bf16.msra.mxu0 %v2968
        %3043 = vmatprep.subr.bf16.mxu0 %v2972
        %3044 = vmatpush1.bf16.msra.mxu0 %v2971
        %3045 = vmatprep.subr.bf16.mxu0 %v2975
        %3046 = vmatpush1.bf16.msra.mxu0 %v2974
        %3047 = vmatprep.subr.bf16.mxu0 %v2978
        %3048 = vmatpush1.bf16.msra.mxu0 %v2977
        %3049 = vmatprep.subr.bf16.mxu0 %v2981
        %3050 = vmatpush1.bf16.msra.mxu0 %v2980
        %3051 = vmatprep.subr.bf16.mxu0 %v2984
        %3052 = vmatpush1.bf16.msra.mxu0 %v2983
        %3053 = vmatprep.subr.bf16.mxu0 %v2987
        %3054 = vmatpush1.bf16.msra.mxu0 %v2986
        %3055 = vmatprep.subr.bf16.mxu0 %v2990
        %3056 = vmatpush1.bf16.msra.mxu0 %v2989
        %3057 = vmatprep.subr.bf16.mxu0 %v2993
        %3058 = vmatpush1.bf16.msra.mxu0 %v2992
        %3059 = vmatprep.subr.bf16.mxu0 %v2996
        %3060 = vmatpush1.bf16.msra.mxu0 %v2995
        %3061 = vmatprep.subr.bf16.mxu0 %v2999
        %3062 = vmatpush1.bf16.msra.mxu0 %v2998
        %3063 = vmatprep.subr.bf16.mxu0 %v3002
        %3064 = vmatpush1.bf16.msra.mxu0 %v3001
        %3065 = vmatprep.subr.bf16.mxu0 %v3005
        %3066 = vmatpush1.bf16.msra.mxu0 %v3004
        %3067 = vmatprep.subr.bf16.mxu0 %v3036
        %3068 = vmatpush1.bf16.msra.mxu0 %v3033
        %3069 = vmatprep.subr.bf16.mxu0 0
        %3070 = vmatpush1.bf16.msra.mxu0 0
        %3071 = vmatprep.subr.bf16.mxu0 0
        %3072 = vmatpush1.bf16.msra.mxu0 0
        %3073 = vmatprep.mubr.bf16.mxu0 %v3030
        %3074 = vmatmul.mubr.bf16.gmra.mrb[0].mxu0 %v3026
        %v3075 = vpop.f32.mrb[0].mxu0
        %v3076 = vadd.f32 %v3017, %v3075
        %v3077 = vpop.f32.mrb[0].mxu0
        %v3078 = vadd.f32 %v3017, %v3077
        %v3079 = vpop.f32.mrb[0].mxu0
        %v3080 = vpop.f32.mrb[0].mxu0
        %3081 = vdwg.mxu0
        %3082 = vmatprep.subr.bf16.mxu0 0
        %3083 = vmatpush1.bf16.msra.mxu0 %v2970
        %3084 = vmatprep.subr.bf16.mxu0 0
        %3085 = vmatpush1.bf16.msra.mxu0 %v2973
        %3086 = vmatprep.subr.bf16.mxu0 0
        %3087 = vmatpush1.bf16.msra.mxu0 %v2976
        %3088 = vmatprep.subr.bf16.mxu0 0
        %3089 = vmatpush1.bf16.msra.mxu0 %v2979
        %3090 = vmatprep.subr.bf16.mxu0 0
        %3091 = vmatpush1.bf16.msra.mxu0 %v2982
        %3092 = vmatprep.subr.bf16.mxu0 0
        %3093 = vmatpush1.bf16.msra.mxu0 %v2985
        %3094 = vmatprep.subr.bf16.mxu0 0
        %3095 = vmatpush1.bf16.msra.mxu0 %v2988
        %3096 = vmatprep.subr.bf16.mxu0 0
        %3097 = vmatpush1.bf16.msra.mxu0 %v2991
        %3098 = vmatprep.subr.bf16.mxu0 0
        %3099 = vmatpush1.bf16.msra.mxu0 %v2994
        %3100 = vmatprep.subr.bf16.mxu0 0
        %3101 = vmatpush1.bf16.msra.mxu0 %v2997
        %3102 = vmatprep.subr.bf16.mxu0 0
        %3103 = vmatpush1.bf16.msra.mxu0 %v3000
        %3104 = vmatprep.subr.bf16.mxu0 0
        %3105 = vmatpush1.bf16.msra.mxu0 %v3003
        %3106 = vmatprep.subr.bf16.mxu0 0
        %3107 = vmatpush1.bf16.msra.mxu0 %v3006
        %3108 = vmatprep.subr.bf16.mxu0 0
        %3109 = vmatpush1.bf16.msra.mxu0 %v3039
        %3110 = vmatprep.subr.bf16.mxu0 0
        %3111 = vmatpush1.bf16.msra.mxu0 0
        %3112 = vmatprep.subr.bf16.mxu0 0
        %3113 = vmatpush1.bf16.msra.mxu0 0
        %3114 = vmatprep.mubr.bf16.mxu0 %v3030
        %3115 = vmatmul.mubr.bf16.gmra.mrb[0].mxu0 %v3026
        %v3116 = vpop.f32.mrb[0].mxu0
        %v3117 = vadd.f32 %v3017, %v3116
        %v3118 = vpop.f32.mrb[0].mxu0
        %v3119 = vpop.f32.mrb[0].mxu0
        %v3120 = vpop.f32.mrb[0].mxu0
        %3121 = vdwg.mxu0
        %v3122 = vmul.f32 %v3076, 0.01
        %v3123 = vmul.f32 %v3078, 0.01
        %v3124 = vmul.f32 %v3117, 0.01
        %v3125 = vmax.f32 %v3076, %v3122
        %v3126 = vmax.f32 %v3078, %v3123
        %v3127 = vmax.f32 %v3117, %v3124
        %v3128 = vmul.f32 %v3125, %v616
        %v3129 = vmul.f32 %v3126, %v620
        %v3130 = vmul.f32 %v3127, %v624
        %3131 = vrot.lane.b32.xlu0 %v3128, 19
        %v3132 = vpop.permute.xlu0 %3131
        %3133 = vrot.lane.b32.xlu0 %v3129, 19
        %v3134 = vpop.permute.xlu0 %3133
        %3135 = vrot.lane.b32.xlu0 %v3130, 19
        %v3136 = vpop.permute.xlu0 %3135
        %v3137 = vsel %vm361, %v3134, %v3136
        %v3138 = vsel %vm361, %v3132, %v3134
        %v3139 = vsel %vm361, %v3136, %v3132
        %3140 = vst [vmem:[#allocation2 + $0x288] sm:$0xf] %v3139
        %3141 = vst [vmem:[#allocation2 + $0x290] sm:$0xf] %v3138
        %3142 = vst [vmem:[#allocation2 + $0x298] sm:$0xf] %v3137
        %3143 = vrot.lane.b32.xlu0 %v3128, 18
        %v3144 = vpop.permute.xlu0 %3143
        %3145 = vrot.lane.b32.xlu0 %v3129, 18
        %v3146 = vpop.permute.xlu0 %3145
        %3147 = vrot.lane.b32.xlu0 %v3130, 18
        %v3148 = vpop.permute.xlu0 %3147
        %v3149 = vsel %vm374, %v3146, %v3148
        %v3150 = vsel %vm374, %v3144, %v3146
        %v3151 = vsel %vm374, %v3148, %v3144
        %3152 = vst [vmem:[#allocation2 + $0x2a0] sm:$0xf] %v3151
        %3153 = vst [vmem:[#allocation2 + $0x2a8] sm:$0xf] %v3150
        %3154 = vst [vmem:[#allocation2 + $0x2b0] sm:$0xf] %v3149
        %3155 = vrot.lane.b32.xlu0 %v3128, 17
        %v3156 = vpop.permute.xlu0 %3155
        %3157 = vrot.lane.b32.xlu0 %v3129, 17
        %v3158 = vpop.permute.xlu0 %3157
        %3159 = vrot.lane.b32.xlu0 %v3130, 17
        %v3160 = vpop.permute.xlu0 %3159
        %v3161 = vsel %vm387, %v3158, %v3160
        %v3162 = vsel %vm387, %v3156, %v3158
        %v3163 = vsel %vm387, %v3160, %v3156
        %3164 = vst [vmem:[#allocation2 + $0x2b8] sm:$0xf] %v3163
        %3165 = vst [vmem:[#allocation2 + $0x2c0] sm:$0xf] %v3162
        %3166 = vst [vmem:[#allocation2 + $0x2c8] sm:$0xf] %v3161
        %3167 = vrot.lane.b32.xlu0 %v3128, 1
        %v3168 = vpop.permute.xlu0 %3167
        %3169 = vrot.lane.b32.xlu0 %v3129, 1
        %v3170 = vpop.permute.xlu0 %3169
        %3171 = vrot.lane.b32.xlu0 %v3130, 1
        %v3172 = vpop.permute.xlu0 %3171
        %v3173 = vsel %vm400, %v3170, %v3172
        %v3174 = vsel %vm400, %v3168, %v3170
        %v3175 = vsel %vm400, %v3172, %v3168
        %3176 = vst [vmem:[#allocation2 + $0x2d0] sm:$0xf] %v3175
        %3177 = vst [vmem:[#allocation2 + $0x2d8] sm:$0xf] %v3174
        %3178 = vst [vmem:[#allocation2 + $0x2e0] sm:$0xf] %v3173
        %3179 = vst [vmem:[#allocation2 + $0x2e8] sm:$0xf] %v3128
        %3180 = vst [vmem:[#allocation2 + $0x2f0] sm:$0xf] %v3129
        %3181 = vst [vmem:[#allocation2 + $0x2f8] sm:$0xf] %v3130
        %3182 = vrot.lane.b32.xlu0 %v3128, 127
        %v3183 = vpop.permute.xlu0 %3182
        %3184 = vrot.lane.b32.xlu0 %v3129, 127
        %v3185 = vpop.permute.xlu0 %3184
        %3186 = vrot.lane.b32.xlu0 %v3130, 127
        %v3187 = vpop.permute.xlu0 %3186
        %v3188 = vsel %vm416, %v3185, %v3187
        %v3189 = vsel %vm416, %v3183, %v3185
        %v3190 = vsel %vm416, %v3187, %v3183
        %3191 = vst [vmem:[#allocation2 + $0x300] sm:$0xf] %v3189
        %3192 = vst [vmem:[#allocation2 + $0x308] sm:$0xf] %v3188
        %3193 = vst [vmem:[#allocation2 + $0x310] sm:$0xf] %v3190
        %3194 = vrot.lane.b32.xlu0 %v3128, 111
        %v3195 = vpop.permute.xlu0 %3194
        %3196 = vrot.lane.b32.xlu0 %v3129, 111
        %v3197 = vpop.permute.xlu0 %3196
        %3198 = vrot.lane.b32.xlu0 %v3130, 111
        %v3199 = vpop.permute.xlu0 %3198
        %v3200 = vsel %vm429, %v3197, %v3199
        %v3201 = vsel %vm429, %v3195, %v3197
        %v3202 = vsel %vm429, %v3199, %v3195
        %3203 = vst [vmem:[#allocation2 + $0x318] sm:$0xf] %v3201
        %3204 = vst [vmem:[#allocation2 + $0x320] sm:$0xf] %v3200
        %3205 = vst [vmem:[#allocation2 + $0x328] sm:$0xf] %v3202
        %3206 = vrot.lane.b32.xlu0 %v3128, 110
        %v3207 = vpop.permute.xlu0 %3206
        %3208 = vrot.lane.b32.xlu0 %v3129, 110
        %v3209 = vpop.permute.xlu0 %3208
        %3210 = vrot.lane.b32.xlu0 %v3130, 110
        %v3211 = vpop.permute.xlu0 %3210
        %v3212 = vsel %vm442, %v3209, %v3211
        %v3213 = vsel %vm442, %v3207, %v3209
        %v3214 = vsel %vm442, %v3211, %v3207
        %3215 = vst [vmem:[#allocation2 + $0x330] sm:$0xf] %v3213
        %3216 = vst [vmem:[#allocation2 + $0x338] sm:$0xf] %v3212
        %3217 = vst [vmem:[#allocation2 + $0x340] sm:$0xf] %v3214
        %3218 = vrot.lane.b32.xlu0 %v3128, 109
        %v3219 = vpop.permute.xlu0 %3218
        %3220 = vrot.lane.b32.xlu0 %v3129, 109
        %v3221 = vpop.permute.xlu0 %3220
        %3222 = vrot.lane.b32.xlu0 %v3130, 109
        %v3223 = vpop.permute.xlu0 %3222
        %v3224 = vsel %vm455, %v3221, %v3223
        %v3225 = vsel %vm455, %v3219, %v3221
        %v3226 = vsel %vm455, %v3223, %v3219
        %3227 = vst [vmem:[#allocation2 + $0x348] sm:$0xf] %v3225
        %3228 = vst [vmem:[#allocation2 + $0x350] sm:$0xf] %v3224
        %3229 = vst [vmem:[#allocation2 + $0x358] sm:$0xf] %v3226
        %v3230 = vld [vmem:[#allocation2] sm:$0xff]
        %v3231 = vld [vmem:[#allocation2 + $0x8] sm:$0xff]
        %v3232 = vld [vmem:[#allocation2 + $0x10] sm:$0xff]
        %v3233 = vld [vmem:[#allocation2 + $0x18] sm:$0xff]
        %v3234 = vld [vmem:[#allocation2 + $0x20] sm:$0xff]
        %v3235 = vld [vmem:[#allocation2 + $0x28] sm:$0xff]
        %v3236 = vld [vmem:[#allocation2 + $0x30] sm:$0xff]
        %v3237 = vld [vmem:[#allocation2 + $0x38] sm:$0xff]
        %v3238 = vld [vmem:[#allocation2 + $0x40] sm:$0xff]
        %v3239 = vld [vmem:[#allocation2 + $0x48] sm:$0xff]
        %v3240 = vld [vmem:[#allocation2 + $0x50] sm:$0xff]
        %v3241 = vld [vmem:[#allocation2 + $0x58] sm:$0xff]
        %v3242 = vld [vmem:[#allocation2 + $0x60] sm:$0xff]
        %v3243 = vld [vmem:[#allocation2 + $0x68] sm:$0xff]
        %v3244 = vld [vmem:[#allocation2 + $0x70] sm:$0xff]
        %v3245 = vld [vmem:[#allocation2 + $0x78] sm:$0xff]
        %v3246 = vld [vmem:[#allocation2 + $0x80] sm:$0xff]
        %v3247 = vld [vmem:[#allocation2 + $0x88] sm:$0xff]
        %v3248 = vld [vmem:[#allocation2 + $0x90] sm:$0xff]
        %v3249 = vld [vmem:[#allocation2 + $0x98] sm:$0xff]
        %v3250 = vld [vmem:[#allocation2 + $0xa0] sm:$0xff]
        %v3251 = vld [vmem:[#allocation2 + $0xa8] sm:$0xff]
        %v3252 = vld [vmem:[#allocation2 + $0xb0] sm:$0xff]
        %v3253 = vld [vmem:[#allocation2 + $0xb8] sm:$0xff]
        %v3254 = vld [vmem:[#allocation2 + $0xc0] sm:$0xff]
        %v3255 = vld [vmem:[#allocation2 + $0xc8] sm:$0xff]
        %v3256 = vld [vmem:[#allocation2 + $0xd0] sm:$0xff]
        %v3257 = vld [vmem:[#allocation2 + $0xd8] sm:$0xff]
        %v3258 = vld [vmem:[#allocation2 + $0xe0] sm:$0xff]
        %v3259 = vld [vmem:[#allocation2 + $0xe8] sm:$0xff]
        %v3260 = vld [vmem:[#allocation2 + $0xf0] sm:$0xff]
        %v3261 = vld [vmem:[#allocation2 + $0xf8] sm:$0xff]
        %v3262 = vld [vmem:[#allocation2 + $0x100] sm:$0xff]
        %v3263 = vld [vmem:[#allocation2 + $0x108] sm:$0xff]
        %v3264 = vld [vmem:[#allocation2 + $0x110] sm:$0xff]
        %v3265 = vld [vmem:[#allocation2 + $0x118] sm:$0xff]
        %v3266 = vld [vmem:[#allocation2 + $0x120] sm:$0xff]
        %v3267 = vld [vmem:[#allocation2 + $0x128] sm:$0xff]
        %v3268 = vld [vmem:[#allocation2 + $0x130] sm:$0xff]
        %v3269 = vld [vmem:[#allocation2 + $0x138] sm:$0xff]
        %v3270 = vld [vmem:[#allocation2 + $0x140] sm:$0xff]
        %v3271 = vld [vmem:[#allocation2 + $0x148] sm:$0xff]
        %v3272 = vld [vmem:[#allocation2 + $0x150] sm:$0xff]
        %v3273 = vld [vmem:[#allocation2 + $0x158] sm:$0xff]
        %v3274 = vld [vmem:[#allocation2 + $0x160] sm:$0xff]
        %v3275 = vld [vmem:[#allocation2 + $0x168] sm:$0xff]
        %v3276 = vld [vmem:[#allocation2 + $0x170] sm:$0xff]
        %v3277 = vld [vmem:[#allocation2 + $0x178] sm:$0xff]
        %v3278 = vld [vmem:[#allocation2 + $0x180] sm:$0xff]
        %v3279 = vld [vmem:[#allocation2 + $0x188] sm:$0xff]
        %v3280 = vld [vmem:[#allocation2 + $0x190] sm:$0xff]
        %v3281 = vld [vmem:[#allocation2 + $0x198] sm:$0xff]
        %v3282 = vld [vmem:[#allocation2 + $0x1a0] sm:$0xff]
        %v3283 = vld [vmem:[#allocation2 + $0x1a8] sm:$0xff]
        %v3284 = vld [vmem:[#allocation2 + $0x1b0] sm:$0xff]
        %v3285 = vld [vmem:[#allocation2 + $0x1b8] sm:$0xff]
        %v3286 = vld [vmem:[#allocation2 + $0x1c0] sm:$0xff]
        %v3287 = vld [vmem:[#allocation2 + $0x1c8] sm:$0xff]
        %v3288 = vld [vmem:[#allocation2 + $0x1d0] sm:$0xff]
        %v3289 = vld [vmem:[#allocation2 + $0x1d8] sm:$0xff]
        %v3290 = vld [vmem:[#allocation2 + $0x1e0] sm:$0xff]
        %v3291 = vld [vmem:[#allocation2 + $0x1e8] sm:$0xff]
        %v3292 = vld [vmem:[#allocation2 + $0x1f0] sm:$0xff]
        %v3293 = vld [vmem:[#allocation2 + $0x1f8] sm:$0xff]
        %v3294 = vld [vmem:[#allocation2 + $0x200] sm:$0xff]
        %v3295 = vld [vmem:[#allocation2 + $0x208] sm:$0xff]
        %v3296 = vld [vmem:[#allocation2 + $0x210] sm:$0xff]
        %v3297 = vld [vmem:[#allocation2 + $0x218] sm:$0xff]
        %v3298 = vld [vmem:[#allocation2 + $0x220] sm:$0xff]
        %v3299 = vld [vmem:[#allocation2 + $0x228] sm:$0xff]
        %v3300 = vld [vmem:[#allocation2 + $0x230] sm:$0xff]
        %v3301 = vld [vmem:[#allocation2 + $0x238] sm:$0xff]
        %v3302 = vld [vmem:[#allocation2 + $0x240] sm:$0xff]
        %v3303 = vld [vmem:[#allocation2 + $0x248] sm:$0xff]
        %v3304 = vld [vmem:[#allocation2 + $0x250] sm:$0xff]
        %v3305 = vld [vmem:[#allocation2 + $0x258] sm:$0xff]
        %v3306 = vld [vmem:[#allocation2 + $0x260] sm:$0xff]
        %v3307 = vld [vmem:[#allocation2 + $0x268] sm:$0xff]
        %v3308 = vld [vmem:[#allocation2 + $0x270] sm:$0xff]
        %v3309 = vld [vmem:[#allocation2 + $0x278] sm:$0xff]
        %v3310 = vld [vmem:[#allocation2 + $0x280] sm:$0xff]
        %v3311 = vld [vmem:[#allocation2 + $0x288] sm:$0xff]
        %v3312 = vld [vmem:[#allocation2 + $0x290] sm:$0xff]
        %v3313 = vld [vmem:[#allocation2 + $0x298] sm:$0xff]
        %v3314 = vld [vmem:[#allocation2 + $0x2a0] sm:$0xff]
        %v3315 = vld [vmem:[#allocation2 + $0x2a8] sm:$0xff]
        %v3316 = vld [vmem:[#allocation2 + $0x2b0] sm:$0xff]
        %v3317 = vld [vmem:[#allocation2 + $0x2b8] sm:$0xff]
        %v3318 = vld [vmem:[#allocation2 + $0x2c0] sm:$0xff]
        %v3319 = vld [vmem:[#allocation2 + $0x2c8] sm:$0xff]
        %v3320 = vld [vmem:[#allocation2 + $0x2d0] sm:$0xff]
        %v3321 = vld [vmem:[#allocation2 + $0x2d8] sm:$0xff]
        %v3322 = vld [vmem:[#allocation2 + $0x2e0] sm:$0xff]
        %v3323 = vld [vmem:[#allocation2 + $0x2e8] sm:$0xff]
        %v3324 = vld [vmem:[#allocation2 + $0x2f0] sm:$0xff]
        %v3325 = vld [vmem:[#allocation2 + $0x2f8] sm:$0xff]
        %v3326 = vld [vmem:[#allocation2 + $0x300] sm:$0xff]
        %v3327 = vld [vmem:[#allocation2 + $0x308] sm:$0xff]
        %v3328 = vld [vmem:[#allocation2 + $0x310] sm:$0xff]
        %v3329 = vld [vmem:[#allocation2 + $0x318] sm:$0xff]
        %v3330 = vld [vmem:[#allocation2 + $0x320] sm:$0xff]
        %v3331 = vld [vmem:[#allocation2 + $0x328] sm:$0xff]
        %v3332 = vld [vmem:[#allocation2 + $0x330] sm:$0xff]
        %v3333 = vld [vmem:[#allocation2 + $0x338] sm:$0xff]
        %v3334 = vld [vmem:[#allocation2 + $0x340] sm:$0xff]
        %v3335 = vld [vmem:[#allocation2 + $0x348] sm:$0xff]
        %v3336 = vld [vmem:[#allocation2 + $0x350] sm:$0xff]
        %v3337 = vld [vmem:[#allocation2 + $0x358] sm:$0xff]
        %v3338 = vpack.c.bf16 %v3233, %v3230
        %v3339 = vpack.c.bf16 %v3234, %v3231
        %v3340 = vpack.c.bf16 %v3235, %v3232
        %v3341 = vpack.c.bf16 %v3239, %v3236
        %v3342 = vpack.c.bf16 %v3240, %v3237
        %v3343 = vpack.c.bf16 %v3241, %v3238
        %v3344 = vpack.c.bf16 %v3245, %v3242
        %v3345 = vpack.c.bf16 %v3246, %v3243
        %v3346 = vpack.c.bf16 %v3247, %v3244
        %v3347 = vpack.c.bf16 %v3251, %v3248
        %v3348 = vpack.c.bf16 %v3252, %v3249
        %v3349 = vpack.c.bf16 %v3253, %v3250
        %v3350 = vpack.c.bf16 %v3257, %v3254
        %v3351 = vpack.c.bf16 %v3258, %v3255
        %v3352 = vpack.c.bf16 %v3259, %v3256
        %v3353 = vpack.c.bf16 %v3263, %v3260
        %v3354 = vpack.c.bf16 %v3264, %v3261
        %v3355 = vpack.c.bf16 %v3265, %v3262
        %v3356 = vpack.c.bf16 %v3269, %v3266
        %v3357 = vpack.c.bf16 %v3270, %v3267
        %v3358 = vpack.c.bf16 %v3271, %v3268
        %v3359 = vpack.c.bf16 %v3275, %v3272
        %v3360 = vpack.c.bf16 %v3276, %v3273
        %v3361 = vpack.c.bf16 %v3277, %v3274
        %v3362 = vpack.c.bf16 %v3281, %v3278
        %v3363 = vpack.c.bf16 %v3282, %v3279
        %v3364 = vpack.c.bf16 %v3283, %v3280
        %v3365 = vpack.c.bf16 %v3287, %v3284
        %v3366 = vpack.c.bf16 %v3288, %v3285
        %v3367 = vpack.c.bf16 %v3289, %v3286
        %v3368 = vpack.c.bf16 %v3293, %v3290
        %v3369 = vpack.c.bf16 %v3294, %v3291
        %v3370 = vpack.c.bf16 %v3295, %v3292
        %v3371 = vpack.c.bf16 %v3299, %v3296
        %v3372 = vpack.c.bf16 %v3300, %v3297
        %v3373 = vpack.c.bf16 %v3301, %v3298
        %v3374 = vpack.c.bf16 %v3305, %v3302
        %v3375 = vpack.c.bf16 %v3306, %v3303
        %v3376 = vpack.c.bf16 %v3307, %v3304
        %v3377 = vpack.c.bf16 %v3311, %v3308
        %v3378 = vpack.c.bf16 %v3312, %v3309
        %v3379 = vpack.c.bf16 %v3313, %v3310
        %v3380 = vpack.c.bf16 %v3317, %v3314
        %v3381 = vpack.c.bf16 %v3318, %v3315
        %v3382 = vpack.c.bf16 %v3319, %v3316
        %v3383 = vpack.c.bf16 %v3323, %v3320
        %v3384 = vpack.c.bf16 %v3324, %v3321
        %v3385 = vpack.c.bf16 %v3325, %v3322
        %v3386 = vpack.c.bf16 %v3329, %v3326
        %v3387 = vpack.c.bf16 %v3330, %v3327
        %v3388 = vpack.c.bf16 %v3331, %v3328
        %v3389 = vpack.c.bf16 %v3335, %v3332
        %v3390 = vpack.c.bf16 %v3336, %v3333
        %v3391 = vpack.c.bf16 %v3337, %v3334
        %s3392 = scalar_lea.vmem [#allocation3], 48
        %v3393 = vld [vmem:[%s3392] sm:$0x3f]
        %s3394 = scalar_lea.vmem %s3, 32
        %v3395 = vld [vmem:[%s3394] sm:$0xf]
        %3397 = vset.pattern.permute.xlu0 0
        %3398 = vperm.xlu0 %3397, %v3395
        %v3399 = vpop.permute.xlu0 %3398
        %v3402 = vcombine.high %v3393, %v3393
        %v3404 = vunpack.c.l.s4 1983009808
        %v3405 = vunpack.c.0.s8 %v3404
        %v3406 = vlaneseq
        %v3407 = vshrl.u32 %v3406, 7
        %v3408 = vsub.s32 %v3405, %v3407
        %v3409 = vrot.slane %v3393, %v3408
        %v3411 = vunpack.c.l.s4 1983009808
        %v3412 = vunpack.c.0.s8 %v3411
        %v3413 = vlaneseq
        %v3414 = vshrl.u32 %v3413, 7
        %v3415 = vsub.s32 %v3412, %v3414
        %v3416 = vrot.slane %v3402, %v3415
        %v3417 = vcombine.high %v3409, %v3409
        %v3421 = vsel %vm1557, %v3416, 0
        %3423 = vmatprep.subr.bf16.mxu0 %v3339
        %3424 = vmatpush1.bf16.msra.mxu0 %v3338
        %3425 = vmatprep.subr.bf16.mxu0 %v3342
        %3426 = vmatpush1.bf16.msra.mxu0 %v3341
        %3427 = vmatprep.subr.bf16.mxu0 %v3345
        %3428 = vmatpush1.bf16.msra.mxu0 %v3344
        %3429 = vmatprep.subr.bf16.mxu0 %v3348
        %3430 = vmatpush1.bf16.msra.mxu0 %v3347
        %3431 = vmatprep.subr.bf16.mxu0 %v3351
        %3432 = vmatpush1.bf16.msra.mxu0 %v3350
        %3433 = vmatprep.subr.bf16.mxu0 %v3354
        %3434 = vmatpush1.bf16.msra.mxu0 %v3353
        %3435 = vmatprep.subr.bf16.mxu0 %v3357
        %3436 = vmatpush1.bf16.msra.mxu0 %v3356
        %3437 = vmatprep.subr.bf16.mxu0 %v3360
        %3438 = vmatpush1.bf16.msra.mxu0 %v3359
        %3439 = vmatprep.subr.bf16.mxu0 %v3363
        %3440 = vmatpush1.bf16.msra.mxu0 %v3362
        %3441 = vmatprep.subr.bf16.mxu0 %v3366
        %3442 = vmatpush1.bf16.msra.mxu0 %v3365
        %3443 = vmatprep.subr.bf16.mxu0 %v3369
        %3444 = vmatpush1.bf16.msra.mxu0 %v3368
        %3445 = vmatprep.subr.bf16.mxu0 %v3372
        %3446 = vmatpush1.bf16.msra.mxu0 %v3371
        %3447 = vmatprep.subr.bf16.mxu0 %v3375
        %3448 = vmatpush1.bf16.msra.mxu0 %v3374
        %3449 = vmatprep.subr.bf16.mxu0 %v3378
        %3450 = vmatpush1.bf16.msra.mxu0 %v3377
        %3451 = vmatprep.subr.bf16.mxu0 %v3381
        %3452 = vmatpush1.bf16.msra.mxu0 %v3380
        %3453 = vmatprep.subr.bf16.mxu0 %v3384
        %3454 = vmatpush1.bf16.msra.mxu0 %v3383
        %3455 = vmatprep.mubr.bf16.mxu0 %v3417
        %3456 = vmatmul.mubr.bf16.gmra.mrb[0].mxu0 %v3409
        %v3457 = vpop.f32.mrb[0].mxu0
        %v3458 = vadd.f32 %v3399, %v3457
        %v3459 = vpop.f32.mrb[0].mxu0
        %v3460 = vadd.f32 %v3399, %v3459
        %v3461 = vpop.f32.mrb[0].mxu0
        %v3462 = vpop.f32.mrb[0].mxu0
        %3463 = vdwg.mxu0
        %3464 = vmatprep.subr.bf16.mxu0 %v3387
        %3465 = vmatpush1.bf16.msra.mxu0 %v3386
        %3466 = vmatprep.subr.bf16.mxu0 %v3390
        %3467 = vmatpush1.bf16.msra.mxu0 %v3389
        %3468 = vmatprep.subr.bf16.mxu0 0
        %3469 = vmatpush1.bf16.msra.mxu0 0
        %3470 = vmatprep.subr.bf16.mxu0 0
        %3471 = vmatpush1.bf16.msra.mxu0 0
        %3472 = vmatprep.subr.bf16.mxu0 0
        %3473 = vmatpush1.bf16.msra.mxu0 0
        %3474 = vmatprep.subr.bf16.mxu0 0
        %3475 = vmatpush1.bf16.msra.mxu0 0
        %3476 = vmatprep.subr.bf16.mxu0 0
        %3477 = vmatpush1.bf16.msra.mxu0 0
        %3478 = vmatprep.subr.bf16.mxu0 0
        %3479 = vmatpush1.bf16.msra.mxu0 0
        %3480 = vmatprep.subr.bf16.mxu0 0
        %3481 = vmatpush1.bf16.msra.mxu0 0
        %3482 = vmatprep.subr.bf16.mxu0 0
        %3483 = vmatpush1.bf16.msra.mxu0 0
        %3484 = vmatprep.subr.bf16.mxu0 0
        %3485 = vmatpush1.bf16.msra.mxu0 0
        %3486 = vmatprep.subr.bf16.mxu0 0
        %3487 = vmatpush1.bf16.msra.mxu0 0
        %3488 = vmatprep.subr.bf16.mxu0 0
        %3489 = vmatpush1.bf16.msra.mxu0 0
        %3490 = vmatprep.subr.bf16.mxu0 0
        %3491 = vmatpush1.bf16.msra.mxu0 0
        %3492 = vmatprep.subr.bf16.mxu0 0
        %3493 = vmatpush1.bf16.msra.mxu0 0
        %3494 = vmatprep.subr.bf16.mxu0 0
        %3495 = vmatpush1.bf16.msra.mxu0 0
        %3496 = vmatprep.mubr.bf16.mxu0 0
        %3497 = vmatmul.mubr.bf16.gmra.mrb[0].mxu0 %v3421
        %v3498 = vpop.f32.mrb[0].mxu0
        %v3499 = vadd.f32 %v3458, %v3498
        %v3500 = vpop.f32.mrb[0].mxu0
        %v3501 = vadd.f32 %v3460, %v3500
        %v3502 = vpop.f32.mrb[0].mxu0
        %v3503 = vpop.f32.mrb[0].mxu0
        %3504 = vdwg.mxu0
        %3505 = vmatprep.subr.bf16.mxu0 0
        %3506 = vmatpush1.bf16.msra.mxu0 %v3340
        %3507 = vmatprep.subr.bf16.mxu0 0
        %3508 = vmatpush1.bf16.msra.mxu0 %v3343
        %3509 = vmatprep.subr.bf16.mxu0 0
        %3510 = vmatpush1.bf16.msra.mxu0 %v3346
        %3511 = vmatprep.subr.bf16.mxu0 0
        %3512 = vmatpush1.bf16.msra.mxu0 %v3349
        %3513 = vmatprep.subr.bf16.mxu0 0
        %3514 = vmatpush1.bf16.msra.mxu0 %v3352
        %3515 = vmatprep.subr.bf16.mxu0 0
        %3516 = vmatpush1.bf16.msra.mxu0 %v3355
        %3517 = vmatprep.subr.bf16.mxu0 0
        %3518 = vmatpush1.bf16.msra.mxu0 %v3358
        %3519 = vmatprep.subr.bf16.mxu0 0
        %3520 = vmatpush1.bf16.msra.mxu0 %v3361
        %3521 = vmatprep.subr.bf16.mxu0 0
        %3522 = vmatpush1.bf16.msra.mxu0 %v3364
        %3523 = vmatprep.subr.bf16.mxu0 0
        %3524 = vmatpush1.bf16.msra.mxu0 %v3367
        %3525 = vmatprep.subr.bf16.mxu0 0
        %3526 = vmatpush1.bf16.msra.mxu0 %v3370
        %3527 = vmatprep.subr.bf16.mxu0 0
        %3528 = vmatpush1.bf16.msra.mxu0 %v3373
        %3529 = vmatprep.subr.bf16.mxu0 0
        %3530 = vmatpush1.bf16.msra.mxu0 %v3376
        %3531 = vmatprep.subr.bf16.mxu0 0
        %3532 = vmatpush1.bf16.msra.mxu0 %v3379
        %3533 = vmatprep.subr.bf16.mxu0 0
        %3534 = vmatpush1.bf16.msra.mxu0 %v3382
        %3535 = vmatprep.subr.bf16.mxu0 0
        %3536 = vmatpush1.bf16.msra.mxu0 %v3385
        %3537 = vmatprep.mubr.bf16.mxu0 %v3417
        %3538 = vmatmul.mubr.bf16.gmra.mrb[0].mxu0 %v3409
        %v3539 = vpop.f32.mrb[0].mxu0
        %v3540 = vadd.f32 %v3399, %v3539
        %v3541 = vpop.f32.mrb[0].mxu0
        %v3542 = vpop.f32.mrb[0].mxu0
        %v3543 = vpop.f32.mrb[0].mxu0
        %3544 = vdwg.mxu0
        %3545 = vmatprep.subr.bf16.mxu0 0
        %3546 = vmatpush1.bf16.msra.mxu0 %v3388
        %3547 = vmatprep.subr.bf16.mxu0 0
        %3548 = vmatpush1.bf16.msra.mxu0 %v3391
        %3549 = vmatprep.subr.bf16.mxu0 0
        %3550 = vmatpush1.bf16.msra.mxu0 0
        %3551 = vmatprep.subr.bf16.mxu0 0
        %3552 = vmatpush1.bf16.msra.mxu0 0
        %3553 = vmatprep.subr.bf16.mxu0 0
        %3554 = vmatpush1.bf16.msra.mxu0 0
        %3555 = vmatprep.subr.bf16.mxu0 0
        %3556 = vmatpush1.bf16.msra.mxu0 0
        %3557 = vmatprep.subr.bf16.mxu0 0
        %3558 = vmatpush1.bf16.msra.mxu0 0
        %3559 = vmatprep.subr.bf16.mxu0 0
        %3560 = vmatpush1.bf16.msra.mxu0 0
        %3561 = vmatprep.subr.bf16.mxu0 0
        %3562 = vmatpush1.bf16.msra.mxu0 0
        %3563 = vmatprep.subr.bf16.mxu0 0
        %3564 = vmatpush1.bf16.msra.mxu0 0
        %3565 = vmatprep.subr.bf16.mxu0 0
        %3566 = vmatpush1.bf16.msra.mxu0 0
        %3567 = vmatprep.subr.bf16.mxu0 0
        %3568 = vmatpush1.bf16.msra.mxu0 0
        %3569 = vmatprep.subr.bf16.mxu0 0
        %3570 = vmatpush1.bf16.msra.mxu0 0
        %3571 = vmatprep.subr.bf16.mxu0 0
        %3572 = vmatpush1.bf16.msra.mxu0 0
        %3573 = vmatprep.subr.bf16.mxu0 0
        %3574 = vmatpush1.bf16.msra.mxu0 0
        %3575 = vmatprep.subr.bf16.mxu0 0
        %3576 = vmatpush1.bf16.msra.mxu0 0
        %3577 = vmatprep.mubr.bf16.mxu0 0
        %3578 = vmatmul.mubr.bf16.gmra.mrb[0].mxu0 %v3421
        %v3579 = vpop.f32.mrb[0].mxu0
        %v3580 = vadd.f32 %v3540, %v3579
        %v3581 = vpop.f32.mrb[0].mxu0
        %v3582 = vpop.f32.mrb[0].mxu0
        %v3583 = vpop.f32.mrb[0].mxu0
        %3584 = vdwg.mxu0
        %v3585 = vmul.f32 %v3499, 0.01
        %v3586 = vmul.f32 %v3501, 0.01
        %v3587 = vmul.f32 %v3580, 0.01
        %v3588 = vmax.f32 %v3499, %v3585
        %v3589 = vmax.f32 %v3501, %v3586
        %v3590 = vmax.f32 %v3580, %v3587
        %v3591 = vmul.f32 %v3588, %v616
        %v3592 = vmul.f32 %v3589, %v620
        %v3593 = vmul.f32 %v3590, %v624
        %3594 = vrot.lane.b32.xlu0 %v3591, 19
        %v3595 = vpop.permute.xlu0 %3594
        %3596 = vrot.lane.b32.xlu0 %v3592, 19
        %v3597 = vpop.permute.xlu0 %3596
        %3598 = vrot.lane.b32.xlu0 %v3593, 19
        %v3599 = vpop.permute.xlu0 %3598
        %v3600 = vsel %vm361, %v3597, %v3599
        %v3601 = vsel %vm361, %v3595, %v3597
        %v3602 = vsel %vm361, %v3599, %v3595
        %3603 = vst [vmem:[#allocation2 + $0x360] sm:$0xf] %v3602
        %3604 = vst [vmem:[#allocation2 + $0x368] sm:$0xf] %v3601
        %3605 = vst [vmem:[#allocation2 + $0x370] sm:$0xf] %v3600
        %3606 = vrot.lane.b32.xlu0 %v3591, 18
        %v3607 = vpop.permute.xlu0 %3606
        %3608 = vrot.lane.b32.xlu0 %v3592, 18
        %v3609 = vpop.permute.xlu0 %3608
        %3610 = vrot.lane.b32.xlu0 %v3593, 18
        %v3611 = vpop.permute.xlu0 %3610
        %v3612 = vsel %vm374, %v3609, %v3611
        %v3613 = vsel %vm374, %v3607, %v3609
        %v3614 = vsel %vm374, %v3611, %v3607
        %3615 = vst [vmem:[#allocation2 + $0x378] sm:$0xf] %v3614
        %3616 = vst [vmem:[#allocation2 + $0x380] sm:$0xf] %v3613
        %3617 = vst [vmem:[#allocation2 + $0x388] sm:$0xf] %v3612
        %3618 = vrot.lane.b32.xlu0 %v3591, 17
        %v3619 = vpop.permute.xlu0 %3618
        %3620 = vrot.lane.b32.xlu0 %v3592, 17
        %v3621 = vpop.permute.xlu0 %3620
        %3622 = vrot.lane.b32.xlu0 %v3593, 17
        %v3623 = vpop.permute.xlu0 %3622
        %v3624 = vsel %vm387, %v3621, %v3623
        %v3625 = vsel %vm387, %v3619, %v3621
        %v3626 = vsel %vm387, %v3623, %v3619
        %3627 = vst [vmem:[#allocation2 + $0x390] sm:$0xf] %v3626
        %3628 = vst [vmem:[#allocation2 + $0x398] sm:$0xf] %v3625
        %3629 = vst [vmem:[#allocation2 + $0x3a0] sm:$0xf] %v3624
        %3630 = vrot.lane.b32.xlu0 %v3591, 1
        %v3631 = vpop.permute.xlu0 %3630
        %3632 = vrot.lane.b32.xlu0 %v3592, 1
        %v3633 = vpop.permute.xlu0 %3632
        %3634 = vrot.lane.b32.xlu0 %v3593, 1
        %v3635 = vpop.permute.xlu0 %3634
        %v3636 = vsel %vm400, %v3633, %v3635
        %v3637 = vsel %vm400, %v3631, %v3633
        %v3638 = vsel %vm400, %v3635, %v3631
        %3639 = vst [vmem:[#allocation2 + $0x3a8] sm:$0xf] %v3638
        %3640 = vst [vmem:[#allocation2 + $0x3b0] sm:$0xf] %v3637
        %3641 = vst [vmem:[#allocation2 + $0x3b8] sm:$0xf] %v3636
        %3642 = vst [vmem:[#allocation2 + $0x3c0] sm:$0xf] %v3591
        %3643 = vst [vmem:[#allocation2 + $0x3c8] sm:$0xf] %v3592
        %3644 = vst [vmem:[#allocation2 + $0x3d0] sm:$0xf] %v3593
        %3645 = vrot.lane.b32.xlu0 %v3591, 127
        %v3646 = vpop.permute.xlu0 %3645
        %3647 = vrot.lane.b32.xlu0 %v3592, 127
        %v3648 = vpop.permute.xlu0 %3647
        %3649 = vrot.lane.b32.xlu0 %v3593, 127
        %v3650 = vpop.permute.xlu0 %3649
        %v3651 = vsel %vm416, %v3648, %v3650
        %v3652 = vsel %vm416, %v3646, %v3648
        %v3653 = vsel %vm416, %v3650, %v3646
        %3654 = vst [vmem:[#allocation2 + $0x3d8] sm:$0xf] %v3652
        %3655 = vst [vmem:[#allocation2 + $0x3e0] sm:$0xf] %v3651
        %3656 = vst [vmem:[#allocation2 + $0x3e8] sm:$0xf] %v3653
        %3657 = vrot.lane.b32.xlu0 %v3591, 111
        %v3658 = vpop.permute.xlu0 %3657
        %3659 = vrot.lane.b32.xlu0 %v3592, 111
        %v3660 = vpop.permute.xlu0 %3659
        %3661 = vrot.lane.b32.xlu0 %v3593, 111
        %v3662 = vpop.permute.xlu0 %3661
        %v3663 = vsel %vm429, %v3660, %v3662
        %v3664 = vsel %vm429, %v3658, %v3660
        %v3665 = vsel %vm429, %v3662, %v3658
        %3666 = vst [vmem:[#allocation2 + $0x3f0] sm:$0xf] %v3664
        %3667 = vst [vmem:[#allocation2 + $0x3f8] sm:$0xf] %v3663
        %3668 = vst [vmem:[#allocation2 + $0x400] sm:$0xf] %v3665
        %3669 = vrot.lane.b32.xlu0 %v3591, 110
        %v3670 = vpop.permute.xlu0 %3669
        %3671 = vrot.lane.b32.xlu0 %v3592, 110
        %v3672 = vpop.permute.xlu0 %3671
        %3673 = vrot.lane.b32.xlu0 %v3593, 110
        %v3674 = vpop.permute.xlu0 %3673
        %v3675 = vsel %vm442, %v3672, %v3674
        %v3676 = vsel %vm442, %v3670, %v3672
        %v3677 = vsel %vm442, %v3674, %v3670
        %3678 = vst [vmem:[#allocation2 + $0x408] sm:$0xf] %v3676
        %3679 = vst [vmem:[#allocation2 + $0x410] sm:$0xf] %v3675
        %3680 = vst [vmem:[#allocation2 + $0x418] sm:$0xf] %v3677
        %3681 = vrot.lane.b32.xlu0 %v3591, 109
        %v3682 = vpop.permute.xlu0 %3681
        %3683 = vrot.lane.b32.xlu0 %v3592, 109
        %v3684 = vpop.permute.xlu0 %3683
        %3685 = vrot.lane.b32.xlu0 %v3593, 109
        %v3686 = vpop.permute.xlu0 %3685
        %v3687 = vsel %vm455, %v3684, %v3686
        %v3688 = vsel %vm455, %v3682, %v3684
        %v3689 = vsel %vm455, %v3686, %v3682
        %3690 = vst [vmem:[#allocation2 + $0x420] sm:$0xf] %v3688
        %3691 = vst [vmem:[#allocation2 + $0x428] sm:$0xf] %v3687
        %3692 = vst [vmem:[#allocation2 + $0x430] sm:$0xf] %v3689
        %v3693 = vld [vmem:[#allocation2] sm:$0xff]
        %v3694 = vld [vmem:[#allocation2 + $0x8] sm:$0xff]
        %v3695 = vld [vmem:[#allocation2 + $0x10] sm:$0xff]
        %v3696 = vld [vmem:[#allocation2 + $0x18] sm:$0xff]
        %v3697 = vld [vmem:[#allocation2 + $0x20] sm:$0xff]
        %v3698 = vld [vmem:[#allocation2 + $0x28] sm:$0xff]
        %v3699 = vld [vmem:[#allocation2 + $0x30] sm:$0xff]
        %v3700 = vld [vmem:[#allocation2 + $0x38] sm:$0xff]
        %v3701 = vld [vmem:[#allocation2 + $0x40] sm:$0xff]
        %v3702 = vld [vmem:[#allocation2 + $0x48] sm:$0xff]
        %v3703 = vld [vmem:[#allocation2 + $0x50] sm:$0xff]
        %v3704 = vld [vmem:[#allocation2 + $0x58] sm:$0xff]
        %v3705 = vld [vmem:[#allocation2 + $0x60] sm:$0xff]
        %v3706 = vld [vmem:[#allocation2 + $0x68] sm:$0xff]
        %v3707 = vld [vmem:[#allocation2 + $0x70] sm:$0xff]
        %v3708 = vld [vmem:[#allocation2 + $0x78] sm:$0xff]
        %v3709 = vld [vmem:[#allocation2 + $0x80] sm:$0xff]
        %v3710 = vld [vmem:[#allocation2 + $0x88] sm:$0xff]
        %v3711 = vld [vmem:[#allocation2 + $0x90] sm:$0xff]
        %v3712 = vld [vmem:[#allocation2 + $0x98] sm:$0xff]
        %v3713 = vld [vmem:[#allocation2 + $0xa0] sm:$0xff]
        %v3714 = vld [vmem:[#allocation2 + $0xa8] sm:$0xff]
        %v3715 = vld [vmem:[#allocation2 + $0xb0] sm:$0xff]
        %v3716 = vld [vmem:[#allocation2 + $0xb8] sm:$0xff]
        %v3717 = vld [vmem:[#allocation2 + $0xc0] sm:$0xff]
        %v3718 = vld [vmem:[#allocation2 + $0xc8] sm:$0xff]
        %v3719 = vld [vmem:[#allocation2 + $0xd0] sm:$0xff]
        %v3720 = vld [vmem:[#allocation2 + $0xd8] sm:$0xff]
        %v3721 = vld [vmem:[#allocation2 + $0xe0] sm:$0xff]
        %v3722 = vld [vmem:[#allocation2 + $0xe8] sm:$0xff]
        %v3723 = vld [vmem:[#allocation2 + $0xf0] sm:$0xff]
        %v3724 = vld [vmem:[#allocation2 + $0xf8] sm:$0xff]
        %v3725 = vld [vmem:[#allocation2 + $0x100] sm:$0xff]
        %v3726 = vld [vmem:[#allocation2 + $0x108] sm:$0xff]
        %v3727 = vld [vmem:[#allocation2 + $0x110] sm:$0xff]
        %v3728 = vld [vmem:[#allocation2 + $0x118] sm:$0xff]
        %v3729 = vld [vmem:[#allocation2 + $0x120] sm:$0xff]
        %v3730 = vld [vmem:[#allocation2 + $0x128] sm:$0xff]
        %v3731 = vld [vmem:[#allocation2 + $0x130] sm:$0xff]
        %v3732 = vld [vmem:[#allocation2 + $0x138] sm:$0xff]
        %v3733 = vld [vmem:[#allocation2 + $0x140] sm:$0xff]
        %v3734 = vld [vmem:[#allocation2 + $0x148] sm:$0xff]
        %v3735 = vld [vmem:[#allocation2 + $0x150] sm:$0xff]
        %v3736 = vld [vmem:[#allocation2 + $0x158] sm:$0xff]
        %v3737 = vld [vmem:[#allocation2 + $0x160] sm:$0xff]
        %v3738 = vld [vmem:[#allocation2 + $0x168] sm:$0xff]
        %v3739 = vld [vmem:[#allocation2 + $0x170] sm:$0xff]
        %v3740 = vld [vmem:[#allocation2 + $0x178] sm:$0xff]
        %v3741 = vld [vmem:[#allocation2 + $0x180] sm:$0xff]
        %v3742 = vld [vmem:[#allocation2 + $0x188] sm:$0xff]
        %v3743 = vld [vmem:[#allocation2 + $0x190] sm:$0xff]
        %v3744 = vld [vmem:[#allocation2 + $0x198] sm:$0xff]
        %v3745 = vld [vmem:[#allocation2 + $0x1a0] sm:$0xff]
        %v3746 = vld [vmem:[#allocation2 + $0x1a8] sm:$0xff]
        %v3747 = vld [vmem:[#allocation2 + $0x1b0] sm:$0xff]
        %v3748 = vld [vmem:[#allocation2 + $0x1b8] sm:$0xff]
        %v3749 = vld [vmem:[#allocation2 + $0x1c0] sm:$0xff]
        %v3750 = vld [vmem:[#allocation2 + $0x1c8] sm:$0xff]
        %v3751 = vld [vmem:[#allocation2 + $0x1d0] sm:$0xff]
        %v3752 = vld [vmem:[#allocation2 + $0x1d8] sm:$0xff]
        %v3753 = vld [vmem:[#allocation2 + $0x1e0] sm:$0xff]
        %v3754 = vld [vmem:[#allocation2 + $0x1e8] sm:$0xff]
        %v3755 = vld [vmem:[#allocation2 + $0x1f0] sm:$0xff]
        %v3756 = vld [vmem:[#allocation2 + $0x1f8] sm:$0xff]
        %v3757 = vld [vmem:[#allocation2 + $0x200] sm:$0xff]
        %v3758 = vld [vmem:[#allocation2 + $0x208] sm:$0xff]
        %v3759 = vld [vmem:[#allocation2 + $0x210] sm:$0xff]
        %v3760 = vld [vmem:[#allocation2 + $0x218] sm:$0xff]
        %v3761 = vld [vmem:[#allocation2 + $0x220] sm:$0xff]
        %v3762 = vld [vmem:[#allocation2 + $0x228] sm:$0xff]
        %v3763 = vld [vmem:[#allocation2 + $0x230] sm:$0xff]
        %v3764 = vld [vmem:[#allocation2 + $0x238] sm:$0xff]
        %v3765 = vld [vmem:[#allocation2 + $0x240] sm:$0xff]
        %v3766 = vld [vmem:[#allocation2 + $0x248] sm:$0xff]
        %v3767 = vld [vmem:[#allocation2 + $0x250] sm:$0xff]
        %v3768 = vld [vmem:[#allocation2 + $0x258] sm:$0xff]
        %v3769 = vld [vmem:[#allocation2 + $0x260] sm:$0xff]
        %v3770 = vld [vmem:[#allocation2 + $0x268] sm:$0xff]
        %v3771 = vld [vmem:[#allocation2 + $0x270] sm:$0xff]
        %v3772 = vld [vmem:[#allocation2 + $0x278] sm:$0xff]
        %v3773 = vld [vmem:[#allocation2 + $0x280] sm:$0xff]
        %v3774 = vld [vmem:[#allocation2 + $0x288] sm:$0xff]
        %v3775 = vld [vmem:[#allocation2 + $0x290] sm:$0xff]
        %v3776 = vld [vmem:[#allocation2 + $0x298] sm:$0xff]
        %v3777 = vld [vmem:[#allocation2 + $0x2a0] sm:$0xff]
        %v3778 = vld [vmem:[#allocation2 + $0x2a8] sm:$0xff]
        %v3779 = vld [vmem:[#allocation2 + $0x2b0] sm:$0xff]
        %v3780 = vld [vmem:[#allocation2 + $0x2b8] sm:$0xff]
        %v3781 = vld [vmem:[#allocation2 + $0x2c0] sm:$0xff]
        %v3782 = vld [vmem:[#allocation2 + $0x2c8] sm:$0xff]
        %v3783 = vld [vmem:[#allocation2 + $0x2d0] sm:$0xff]
        %v3784 = vld [vmem:[#allocation2 + $0x2d8] sm:$0xff]
        %v3785 = vld [vmem:[#allocation2 + $0x2e0] sm:$0xff]
        %v3786 = vld [vmem:[#allocation2 + $0x2e8] sm:$0xff]
        %v3787 = vld [vmem:[#allocation2 + $0x2f0] sm:$0xff]
        %v3788 = vld [vmem:[#allocation2 + $0x2f8] sm:$0xff]
        %v3789 = vld [vmem:[#allocation2 + $0x300] sm:$0xff]
        %v3790 = vld [vmem:[#allocation2 + $0x308] sm:$0xff]
        %v3791 = vld [vmem:[#allocation2 + $0x310] sm:$0xff]
        %v3792 = vld [vmem:[#allocation2 + $0x318] sm:$0xff]
        %v3793 = vld [vmem:[#allocation2 + $0x320] sm:$0xff]
        %v3794 = vld [vmem:[#allocation2 + $0x328] sm:$0xff]
        %v3795 = vld [vmem:[#allocation2 + $0x330] sm:$0xff]
        %v3796 = vld [vmem:[#allocation2 + $0x338] sm:$0xff]
        %v3797 = vld [vmem:[#allocation2 + $0x340] sm:$0xff]
        %v3798 = vld [vmem:[#allocation2 + $0x348] sm:$0xff]
        %v3799 = vld [vmem:[#allocation2 + $0x350] sm:$0xff]
        %v3800 = vld [vmem:[#allocation2 + $0x358] sm:$0xff]
        %v3801 = vld [vmem:[#allocation2 + $0x360] sm:$0xff]
        %v3802 = vld [vmem:[#allocation2 + $0x368] sm:$0xff]
        %v3803 = vld [vmem:[#allocation2 + $0x370] sm:$0xff]
        %v3804 = vld [vmem:[#allocation2 + $0x378] sm:$0xff]
        %v3805 = vld [vmem:[#allocation2 + $0x380] sm:$0xff]
        %v3806 = vld [vmem:[#allocation2 + $0x388] sm:$0xff]
        %v3807 = vld [vmem:[#allocation2 + $0x390] sm:$0xff]
        %v3808 = vld [vmem:[#allocation2 + $0x398] sm:$0xff]
        %v3809 = vld [vmem:[#allocation2 + $0x3a0] sm:$0xff]
        %v3810 = vld [vmem:[#allocation2 + $0x3a8] sm:$0xff]
        %v3811 = vld [vmem:[#allocation2 + $0x3b0] sm:$0xff]
        %v3812 = vld [vmem:[#allocation2 + $0x3b8] sm:$0xff]
        %v3813 = vld [vmem:[#allocation2 + $0x3c0] sm:$0xff]
        %v3814 = vld [vmem:[#allocation2 + $0x3c8] sm:$0xff]
        %v3815 = vld [vmem:[#allocation2 + $0x3d0] sm:$0xff]
        %v3816 = vld [vmem:[#allocation2 + $0x3d8] sm:$0xff]
        %v3817 = vld [vmem:[#allocation2 + $0x3e0] sm:$0xff]
        %v3818 = vld [vmem:[#allocation2 + $0x3e8] sm:$0xff]
        %v3819 = vld [vmem:[#allocation2 + $0x3f0] sm:$0xff]
        %v3820 = vld [vmem:[#allocation2 + $0x3f8] sm:$0xff]
        %v3821 = vld [vmem:[#allocation2 + $0x400] sm:$0xff]
        %v3822 = vld [vmem:[#allocation2 + $0x408] sm:$0xff]
        %v3823 = vld [vmem:[#allocation2 + $0x410] sm:$0xff]
        %v3824 = vld [vmem:[#allocation2 + $0x418] sm:$0xff]
        %v3825 = vld [vmem:[#allocation2 + $0x420] sm:$0xff]
        %v3826 = vld [vmem:[#allocation2 + $0x428] sm:$0xff]
        %v3827 = vld [vmem:[#allocation2 + $0x430] sm:$0xff]
        %v3828 = vpack.c.bf16 %v3696, %v3693
        %v3829 = vpack.c.bf16 %v3697, %v3694
        %v3830 = vpack.c.bf16 %v3698, %v3695
        %v3831 = vpack.c.bf16 %v3702, %v3699
        %v3832 = vpack.c.bf16 %v3703, %v3700
        %v3833 = vpack.c.bf16 %v3704, %v3701
        %v3834 = vpack.c.bf16 %v3708, %v3705
        %v3835 = vpack.c.bf16 %v3709, %v3706
        %v3836 = vpack.c.bf16 %v3710, %v3707
        %v3837 = vpack.c.bf16 %v3714, %v3711
        %v3838 = vpack.c.bf16 %v3715, %v3712
        %v3839 = vpack.c.bf16 %v3716, %v3713
        %v3840 = vpack.c.bf16 %v3720, %v3717
        %v3841 = vpack.c.bf16 %v3721, %v3718
        %v3842 = vpack.c.bf16 %v3722, %v3719
        %v3843 = vpack.c.bf16 %v3726, %v3723
        %v3844 = vpack.c.bf16 %v3727, %v3724
        %v3845 = vpack.c.bf16 %v3728, %v3725
        %v3846 = vpack.c.bf16 %v3732, %v3729
        %v3847 = vpack.c.bf16 %v3733, %v3730
        %v3848 = vpack.c.bf16 %v3734, %v3731
        %v3849 = vpack.c.bf16 %v3738, %v3735
        %v3850 = vpack.c.bf16 %v3739, %v3736
        %v3851 = vpack.c.bf16 %v3740, %v3737
        %v3852 = vpack.c.bf16 %v3744, %v3741
        %v3853 = vpack.c.bf16 %v3745, %v3742
        %v3854 = vpack.c.bf16 %v3746, %v3743
        %v3855 = vpack.c.bf16 %v3750, %v3747
        %v3856 = vpack.c.bf16 %v3751, %v3748
        %v3857 = vpack.c.bf16 %v3752, %v3749
        %v3858 = vpack.c.bf16 %v3756, %v3753
        %v3859 = vpack.c.bf16 %v3757, %v3754
        %v3860 = vpack.c.bf16 %v3758, %v3755
        %v3861 = vpack.c.bf16 %v3762, %v3759
        %v3862 = vpack.c.bf16 %v3763, %v3760
        %v3863 = vpack.c.bf16 %v3764, %v3761
        %v3864 = vpack.c.bf16 %v3768, %v3765
        %v3865 = vpack.c.bf16 %v3769, %v3766
        %v3866 = vpack.c.bf16 %v3770, %v3767
        %v3867 = vpack.c.bf16 %v3774, %v3771
        %v3868 = vpack.c.bf16 %v3775, %v3772
        %v3869 = vpack.c.bf16 %v3776, %v3773
        %v3870 = vpack.c.bf16 %v3780, %v3777
        %v3871 = vpack.c.bf16 %v3781, %v3778
        %v3872 = vpack.c.bf16 %v3782, %v3779
        %v3873 = vpack.c.bf16 %v3786, %v3783
        %v3874 = vpack.c.bf16 %v3787, %v3784
        %v3875 = vpack.c.bf16 %v3788, %v3785
        %v3876 = vpack.c.bf16 %v3792, %v3789
        %v3877 = vpack.c.bf16 %v3793, %v3790
        %v3878 = vpack.c.bf16 %v3794, %v3791
        %v3879 = vpack.c.bf16 %v3798, %v3795
        %v3880 = vpack.c.bf16 %v3799, %v3796
        %v3881 = vpack.c.bf16 %v3800, %v3797
        %v3882 = vpack.c.bf16 %v3804, %v3801
        %v3883 = vpack.c.bf16 %v3805, %v3802
        %v3884 = vpack.c.bf16 %v3806, %v3803
        %v3885 = vpack.c.bf16 %v3810, %v3807
        %v3886 = vpack.c.bf16 %v3811, %v3808
        %v3887 = vpack.c.bf16 %v3812, %v3809
        %v3888 = vpack.c.bf16 %v3816, %v3813
        %v3889 = vpack.c.bf16 %v3817, %v3814
        %v3890 = vpack.c.bf16 %v3818, %v3815
        %v3891 = vpack.c.bf16 %v3822, %v3819
        %v3892 = vpack.c.bf16 %v3823, %v3820
        %v3893 = vpack.c.bf16 %v3824, %v3821
        %v3894 = vpack.c.bf16 %v3825, %v3825
        %v3895 = vpack.c.bf16 %v3826, %v3826
        %v3896 = vpack.c.bf16 %v3827, %v3827
        %s3897 = scalar_lea.vmem [#allocation3], 54
        %v3898 = vld [vmem:[%s3897] sm:$0x3f]
        %s3899 = scalar_lea.vmem %s3, 36
        %v3900 = vld [vmem:[%s3899] sm:$0xf]
        %3902 = vset.pattern.permute.xlu0 0
        %3903 = vperm.xlu0 %3902, %v3900
        %v3904 = vpop.permute.xlu0 %3903
        %v3907 = vcombine.high %v3898, %v3898
        %v3909 = vunpack.c.l.s4 1983009808
        %v3910 = vunpack.c.0.s8 %v3909
        %v3911 = vlaneseq
        %v3912 = vshrl.u32 %v3911, 7
        %v3913 = vsub.s32 %v3910, %v3912
        %v3914 = vrot.slane %v3898, %v3913
        %v3916 = vunpack.c.l.s4 1983009808
        %v3917 = vunpack.c.0.s8 %v3916
        %v3918 = vlaneseq
        %v3919 = vshrl.u32 %v3918, 7
        %v3920 = vsub.s32 %v3917, %v3919
        %v3921 = vrot.slane %v3907, %v3920
        %v3922 = vcombine.high %v3914, %v3914
        %v3926 = vsel %vm2063, %v3921, 0
        %v3929 = vsel %vm515, %v3894, 0
        %v3932 = vsel %vm515, %v3895, 0
        %v3935 = vsel %vm515, %v3896, 0
        %3937 = vmatprep.subr.bf16.mxu0 %v3829
        %3938 = vmatpush1.bf16.msra.mxu0 %v3828
        %3939 = vmatprep.subr.bf16.mxu0 %v3832
        %3940 = vmatpush1.bf16.msra.mxu0 %v3831
        %3941 = vmatprep.subr.bf16.mxu0 %v3835
        %3942 = vmatpush1.bf16.msra.mxu0 %v3834
        %3943 = vmatprep.subr.bf16.mxu0 %v3838
        %3944 = vmatpush1.bf16.msra.mxu0 %v3837
        %3945 = vmatprep.subr.bf16.mxu0 %v3841
        %3946 = vmatpush1.bf16.msra.mxu0 %v3840
        %3947 = vmatprep.subr.bf16.mxu0 %v3844
        %3948 = vmatpush1.bf16.msra.mxu0 %v3843
        %3949 = vmatprep.subr.bf16.mxu0 %v3847
        %3950 = vmatpush1.bf16.msra.mxu0 %v3846
        %3951 = vmatprep.subr.bf16.mxu0 %v3850
        %3952 = vmatpush1.bf16.msra.mxu0 %v3849
        %3953 = vmatprep.subr.bf16.mxu0 %v3853
        %3954 = vmatpush1.bf16.msra.mxu0 %v3852
        %3955 = vmatprep.subr.bf16.mxu0 %v3856
        %3956 = vmatpush1.bf16.msra.mxu0 %v3855
        %3957 = vmatprep.subr.bf16.mxu0 %v3859
        %3958 = vmatpush1.bf16.msra.mxu0 %v3858
        %3959 = vmatprep.subr.bf16.mxu0 %v3862
        %3960 = vmatpush1.bf16.msra.mxu0 %v3861
        %3961 = vmatprep.subr.bf16.mxu0 %v3865
        %3962 = vmatpush1.bf16.msra.mxu0 %v3864
        %3963 = vmatprep.subr.bf16.mxu0 %v3868
        %3964 = vmatpush1.bf16.msra.mxu0 %v3867
        %3965 = vmatprep.subr.bf16.mxu0 %v3871
        %3966 = vmatpush1.bf16.msra.mxu0 %v3870
        %3967 = vmatprep.subr.bf16.mxu0 %v3874
        %3968 = vmatpush1.bf16.msra.mxu0 %v3873
        %3969 = vmatprep.mubr.bf16.mxu0 %v3922
        %3970 = vmatmul.mubr.bf16.gmra.mrb[0].mxu0 %v3914
        %v3971 = vpop.f32.mrb[0].mxu0
        %v3972 = vadd.f32 %v3904, %v3971
        %v3973 = vpop.f32.mrb[0].mxu0
        %v3974 = vadd.f32 %v3904, %v3973
        %v3975 = vpop.f32.mrb[0].mxu0
        %v3976 = vpop.f32.mrb[0].mxu0
        %3977 = vdwg.mxu0
        %3978 = vmatprep.subr.bf16.mxu0 %v3877
        %3979 = vmatpush1.bf16.msra.mxu0 %v3876
        %3980 = vmatprep.subr.bf16.mxu0 %v3880
        %3981 = vmatpush1.bf16.msra.mxu0 %v3879
        %3982 = vmatprep.subr.bf16.mxu0 %v3883
        %3983 = vmatpush1.bf16.msra.mxu0 %v3882
        %3984 = vmatprep.subr.bf16.mxu0 %v3886
        %3985 = vmatpush1.bf16.msra.mxu0 %v3885
        %3986 = vmatprep.subr.bf16.mxu0 %v3889
        %3987 = vmatpush1.bf16.msra.mxu0 %v3888
        %3988 = vmatprep.subr.bf16.mxu0 %v3892
        %3989 = vmatpush1.bf16.msra.mxu0 %v3891
        %3990 = vmatprep.subr.bf16.mxu0 %v3932
        %3991 = vmatpush1.bf16.msra.mxu0 %v3929
        %3992 = vmatprep.subr.bf16.mxu0 0
        %3993 = vmatpush1.bf16.msra.mxu0 0
        %3994 = vmatprep.subr.bf16.mxu0 0
        %3995 = vmatpush1.bf16.msra.mxu0 0
        %3996 = vmatprep.subr.bf16.mxu0 0
        %3997 = vmatpush1.bf16.msra.mxu0 0
        %3998 = vmatprep.subr.bf16.mxu0 0
        %3999 = vmatpush1.bf16.msra.mxu0 0
        %4000 = vmatprep.subr.bf16.mxu0 0
        %4001 = vmatpush1.bf16.msra.mxu0 0
        %4002 = vmatprep.subr.bf16.mxu0 0
        %4003 = vmatpush1.bf16.msra.mxu0 0
        %4004 = vmatprep.subr.bf16.mxu0 0
        %4005 = vmatpush1.bf16.msra.mxu0 0
        %4006 = vmatprep.subr.bf16.mxu0 0
        %4007 = vmatpush1.bf16.msra.mxu0 0
        %4008 = vmatprep.subr.bf16.mxu0 0
        %4009 = vmatpush1.bf16.msra.mxu0 0
        %4010 = vmatprep.mubr.bf16.mxu0 0
        %4011 = vmatmul.mubr.bf16.gmra.mrb[0].mxu0 %v3926
        %v4012 = vpop.f32.mrb[0].mxu0
        %v4013 = vadd.f32 %v3972, %v4012
        %v4014 = vpop.f32.mrb[0].mxu0
        %v4015 = vadd.f32 %v3974, %v4014
        %v4016 = vpop.f32.mrb[0].mxu0
        %v4017 = vpop.f32.mrb[0].mxu0
        %4018 = vdwg.mxu0
        %4019 = vmatprep.subr.bf16.mxu0 0
        %4020 = vmatpush1.bf16.msra.mxu0 %v3830
        %4021 = vmatprep.subr.bf16.mxu0 0
        %4022 = vmatpush1.bf16.msra.mxu0 %v3833
        %4023 = vmatprep.subr.bf16.mxu0 0
        %4024 = vmatpush1.bf16.msra.mxu0 %v3836
        %4025 = vmatprep.subr.bf16.mxu0 0
        %4026 = vmatpush1.bf16.msra.mxu0 %v3839
        %4027 = vmatprep.subr.bf16.mxu0 0
        %4028 = vmatpush1.bf16.msra.mxu0 %v3842
        %4029 = vmatprep.subr.bf16.mxu0 0
        %4030 = vmatpush1.bf16.msra.mxu0 %v3845
        %4031 = vmatprep.subr.bf16.mxu0 0
        %4032 = vmatpush1.bf16.msra.mxu0 %v3848
        %4033 = vmatprep.subr.bf16.mxu0 0
        %4034 = vmatpush1.bf16.msra.mxu0 %v3851
        %4035 = vmatprep.subr.bf16.mxu0 0
        %4036 = vmatpush1.bf16.msra.mxu0 %v3854
        %4037 = vmatprep.subr.bf16.mxu0 0
        %4038 = vmatpush1.bf16.msra.mxu0 %v3857
        %4039 = vmatprep.subr.bf16.mxu0 0
        %4040 = vmatpush1.bf16.msra.mxu0 %v3860
        %4041 = vmatprep.subr.bf16.mxu0 0
        %4042 = vmatpush1.bf16.msra.mxu0 %v3863
        %4043 = vmatprep.subr.bf16.mxu0 0
        %4044 = vmatpush1.bf16.msra.mxu0 %v3866
        %4045 = vmatprep.subr.bf16.mxu0 0
        %4046 = vmatpush1.bf16.msra.mxu0 %v3869
        %4047 = vmatprep.subr.bf16.mxu0 0
        %4048 = vmatpush1.bf16.msra.mxu0 %v3872
        %4049 = vmatprep.subr.bf16.mxu0 0
        %4050 = vmatpush1.bf16.msra.mxu0 %v3875
        %4051 = vmatprep.mubr.bf16.mxu0 %v3922
        %4052 = vmatmul.mubr.bf16.gmra.mrb[0].mxu0 %v3914
        %v4053 = vpop.f32.mrb[0].mxu0
        %v4054 = vadd.f32 %v3904, %v4053
        %v4055 = vpop.f32.mrb[0].mxu0
        %v4056 = vpop.f32.mrb[0].mxu0
        %v4057 = vpop.f32.mrb[0].mxu0
        %4058 = vdwg.mxu0
        %4059 = vmatprep.subr.bf16.mxu0 0
        %4060 = vmatpush1.bf16.msra.mxu0 %v3878
        %4061 = vmatprep.subr.bf16.mxu0 0
        %4062 = vmatpush1.bf16.msra.mxu0 %v3881
        %4063 = vmatprep.subr.bf16.mxu0 0
        %4064 = vmatpush1.bf16.msra.mxu0 %v3884
        %4065 = vmatprep.subr.bf16.mxu0 0
        %4066 = vmatpush1.bf16.msra.mxu0 %v3887
        %4067 = vmatprep.subr.bf16.mxu0 0
        %4068 = vmatpush1.bf16.msra.mxu0 %v3890
        %4069 = vmatprep.subr.bf16.mxu0 0
        %4070 = vmatpush1.bf16.msra.mxu0 %v3893
        %4071 = vmatprep.subr.bf16.mxu0 0
        %4072 = vmatpush1.bf16.msra.mxu0 %v3935
        %4073 = vmatprep.subr.bf16.mxu0 0
        %4074 = vmatpush1.bf16.msra.mxu0 0
        %4075 = vmatprep.subr.bf16.mxu0 0
        %4076 = vmatpush1.bf16.msra.mxu0 0
        %4077 = vmatprep.subr.bf16.mxu0 0
        %4078 = vmatpush1.bf16.msra.mxu0 0
        %4079 = vmatprep.subr.bf16.mxu0 0
        %4080 = vmatpush1.bf16.msra.mxu0 0
        %4081 = vmatprep.subr.bf16.mxu0 0
        %4082 = vmatpush1.bf16.msra.mxu0 0
        %4083 = vmatprep.subr.bf16.mxu0 0
        %4084 = vmatpush1.bf16.msra.mxu0 0
        %4085 = vmatprep.subr.bf16.mxu0 0
        %4086 = vmatpush1.bf16.msra.mxu0 0
        %4087 = vmatprep.subr.bf16.mxu0 0
        %4088 = vmatpush1.bf16.msra.mxu0 0
        %4089 = vmatprep.subr.bf16.mxu0 0
        %4090 = vmatpush1.bf16.msra.mxu0 0
        %4091 = vmatprep.mubr.bf16.mxu0 0
        %4092 = vmatmul.mubr.bf16.gmra.mrb[0].mxu0 %v3926
        %v4093 = vpop.f32.mrb[0].mxu0
        %v4094 = vadd.f32 %v4054, %v4093
        %v4095 = vpop.f32.mrb[0].mxu0
        %v4096 = vpop.f32.mrb[0].mxu0
        %v4097 = vpop.f32.mrb[0].mxu0
        %4098 = vdwg.mxu0
        %v4099 = vmul.f32 %v4013, %v616
        %v4100 = vmul.f32 %v4015, %v620
        %v4101 = vmul.f32 %v4094, %v624
        %v4102 = vadd.f32 %v4099, %v2241
        %v4103 = vadd.f32 %v4100, %v2242
        %v4104 = vadd.f32 %v4101, %v2243
        %4105 = vrot.lane.b32.xlu0 %v4102, 19
        %v4106 = vpop.permute.xlu0 %4105
        %4107 = vrot.lane.b32.xlu0 %v4103, 19
        %v4108 = vpop.permute.xlu0 %4107
        %4109 = vrot.lane.b32.xlu0 %v4104, 19
        %v4110 = vpop.permute.xlu0 %4109
        %v4111 = vsel %vm361, %v4108, %v4110
        %v4112 = vsel %vm361, %v4106, %v4108
        %v4113 = vsel %vm361, %v4110, %v4106
        %4114 = vst [vmem:[#allocation2] sm:$0xf] %v4113
        %4115 = vst [vmem:[#allocation2 + $0x8] sm:$0xf] %v4112
        %4116 = vst [vmem:[#allocation2 + $0x10] sm:$0xf] %v4111
        %4117 = vrot.lane.b32.xlu0 %v4102, 18
        %v4118 = vpop.permute.xlu0 %4117
        %4119 = vrot.lane.b32.xlu0 %v4103, 18
        %v4120 = vpop.permute.xlu0 %4119
        %4121 = vrot.lane.b32.xlu0 %v4104, 18
        %v4122 = vpop.permute.xlu0 %4121
        %v4123 = vsel %vm374, %v4120, %v4122
        %v4124 = vsel %vm374, %v4118, %v4120
        %v4125 = vsel %vm374, %v4122, %v4118
        %4126 = vst [vmem:[#allocation2 + $0x18] sm:$0xf] %v4125
        %4127 = vst [vmem:[#allocation2 + $0x20] sm:$0xf] %v4124
        %4128 = vst [vmem:[#allocation2 + $0x28] sm:$0xf] %v4123
        %4129 = vrot.lane.b32.xlu0 %v4102, 17
        %v4130 = vpop.permute.xlu0 %4129
        %4131 = vrot.lane.b32.xlu0 %v4103, 17
        %v4132 = vpop.permute.xlu0 %4131
        %4133 = vrot.lane.b32.xlu0 %v4104, 17
        %v4134 = vpop.permute.xlu0 %4133
        %v4135 = vsel %vm387, %v4132, %v4134
        %v4136 = vsel %vm387, %v4130, %v4132
        %v4137 = vsel %vm387, %v4134, %v4130
        %4138 = vst [vmem:[#allocation2 + $0x30] sm:$0xf] %v4137
        %4139 = vst [vmem:[#allocation2 + $0x38] sm:$0xf] %v4136
        %4140 = vst [vmem:[#allocation2 + $0x40] sm:$0xf] %v4135
        %4141 = vrot.lane.b32.xlu0 %v4102, 1
        %v4142 = vpop.permute.xlu0 %4141
        %4143 = vrot.lane.b32.xlu0 %v4103, 1
        %v4144 = vpop.permute.xlu0 %4143
        %4145 = vrot.lane.b32.xlu0 %v4104, 1
        %v4146 = vpop.permute.xlu0 %4145
        %v4147 = vsel %vm400, %v4144, %v4146
        %v4148 = vsel %vm400, %v4142, %v4144
        %v4149 = vsel %vm400, %v4146, %v4142
        %4150 = vst [vmem:[#allocation2 + $0x48] sm:$0xf] %v4149
        %4151 = vst [vmem:[#allocation2 + $0x50] sm:$0xf] %v4148
        %4152 = vst [vmem:[#allocation2 + $0x58] sm:$0xf] %v4147
        %4153 = vst [vmem:[#allocation2 + $0x60] sm:$0xf] %v4102
        %4154 = vst [vmem:[#allocation2 + $0x68] sm:$0xf] %v4103
        %4155 = vst [vmem:[#allocation2 + $0x70] sm:$0xf] %v4104
        %4156 = vrot.lane.b32.xlu0 %v4102, 127
        %v4157 = vpop.permute.xlu0 %4156
        %4158 = vrot.lane.b32.xlu0 %v4103, 127
        %v4159 = vpop.permute.xlu0 %4158
        %4160 = vrot.lane.b32.xlu0 %v4104, 127
        %v4161 = vpop.permute.xlu0 %4160
        %v4162 = vsel %vm416, %v4159, %v4161
        %v4163 = vsel %vm416, %v4157, %v4159
        %v4164 = vsel %vm416, %v4161, %v4157
        %4165 = vst [vmem:[#allocation2 + $0x78] sm:$0xf] %v4163
        %4166 = vst [vmem:[#allocation2 + $0x80] sm:$0xf] %v4162
        %4167 = vst [vmem:[#allocation2 + $0x88] sm:$0xf] %v4164
        %4168 = vrot.lane.b32.xlu0 %v4102, 111
        %v4169 = vpop.permute.xlu0 %4168
        %4170 = vrot.lane.b32.xlu0 %v4103, 111
        %v4171 = vpop.permute.xlu0 %4170
        %4172 = vrot.lane.b32.xlu0 %v4104, 111
        %v4173 = vpop.permute.xlu0 %4172
        %v4174 = vsel %vm429, %v4171, %v4173
        %v4175 = vsel %vm429, %v4169, %v4171
        %v4176 = vsel %vm429, %v4173, %v4169
        %4177 = vst [vmem:[#allocation2 + $0x90] sm:$0xf] %v4175
        %4178 = vst [vmem:[#allocation2 + $0x98] sm:$0xf] %v4174
        %4179 = vst [vmem:[#allocation2 + $0xa0] sm:$0xf] %v4176
        %4180 = vrot.lane.b32.xlu0 %v4102, 110
        %v4181 = vpop.permute.xlu0 %4180
        %4182 = vrot.lane.b32.xlu0 %v4103, 110
        %v4183 = vpop.permute.xlu0 %4182
        %4184 = vrot.lane.b32.xlu0 %v4104, 110
        %v4185 = vpop.permute.xlu0 %4184
        %v4186 = vsel %vm442, %v4183, %v4185
        %v4187 = vsel %vm442, %v4181, %v4183
        %v4188 = vsel %vm442, %v4185, %v4181
        %4189 = vst [vmem:[#allocation2 + $0xa8] sm:$0xf] %v4187
        %4190 = vst [vmem:[#allocation2 + $0xb0] sm:$0xf] %v4186
        %4191 = vst [vmem:[#allocation2 + $0xb8] sm:$0xf] %v4188
        %4192 = vrot.lane.b32.xlu0 %v4102, 109
        %v4193 = vpop.permute.xlu0 %4192
        %4194 = vrot.lane.b32.xlu0 %v4103, 109
        %v4195 = vpop.permute.xlu0 %4194
        %4196 = vrot.lane.b32.xlu0 %v4104, 109
        %v4197 = vpop.permute.xlu0 %4196
        %v4198 = vsel %vm455, %v4195, %v4197
        %v4199 = vsel %vm455, %v4193, %v4195
        %v4200 = vsel %vm455, %v4197, %v4193
        %4201 = vst [vmem:[#allocation2 + $0xc0] sm:$0xf] %v4199
        %4202 = vst [vmem:[#allocation2 + $0xc8] sm:$0xf] %v4198
        %4203 = vst [vmem:[#allocation2 + $0xd0] sm:$0xf] %v4200
        %v4204 = vld [vmem:[#allocation2] sm:$0xff]
        %v4205 = vld [vmem:[#allocation2 + $0x8] sm:$0xff]
        %v4206 = vld [vmem:[#allocation2 + $0x10] sm:$0xff]
        %v4207 = vld [vmem:[#allocation2 + $0x18] sm:$0xff]
        %v4208 = vld [vmem:[#allocation2 + $0x20] sm:$0xff]
        %v4209 = vld [vmem:[#allocation2 + $0x28] sm:$0xff]
        %v4210 = vld [vmem:[#allocation2 + $0x30] sm:$0xff]
        %v4211 = vld [vmem:[#allocation2 + $0x38] sm:$0xff]
        %v4212 = vld [vmem:[#allocation2 + $0x40] sm:$0xff]
        %v4213 = vld [vmem:[#allocation2 + $0x48] sm:$0xff]
        %v4214 = vld [vmem:[#allocation2 + $0x50] sm:$0xff]
        %v4215 = vld [vmem:[#allocation2 + $0x58] sm:$0xff]
        %v4216 = vld [vmem:[#allocation2 + $0x60] sm:$0xff]
        %v4217 = vld [vmem:[#allocation2 + $0x68] sm:$0xff]
        %v4218 = vld [vmem:[#allocation2 + $0x70] sm:$0xff]
        %v4219 = vld [vmem:[#allocation2 + $0x78] sm:$0xff]
        %v4220 = vld [vmem:[#allocation2 + $0x80] sm:$0xff]
        %v4221 = vld [vmem:[#allocation2 + $0x88] sm:$0xff]
        %v4222 = vld [vmem:[#allocation2 + $0x90] sm:$0xff]
        %v4223 = vld [vmem:[#allocation2 + $0x98] sm:$0xff]
        %v4224 = vld [vmem:[#allocation2 + $0xa0] sm:$0xff]
        %v4225 = vld [vmem:[#allocation2 + $0xa8] sm:$0xff]
        %v4226 = vld [vmem:[#allocation2 + $0xb0] sm:$0xff]
        %v4227 = vld [vmem:[#allocation2 + $0xb8] sm:$0xff]
        %v4228 = vld [vmem:[#allocation2 + $0xc0] sm:$0xff]
        %v4229 = vld [vmem:[#allocation2 + $0xc8] sm:$0xff]
        %v4230 = vld [vmem:[#allocation2 + $0xd0] sm:$0xff]
        %v4231 = vpack.c.bf16 %v4207, %v4204
        %v4232 = vpack.c.bf16 %v4208, %v4205
        %v4233 = vpack.c.bf16 %v4209, %v4206
        %v4234 = vpack.c.bf16 %v4213, %v4210
        %v4235 = vpack.c.bf16 %v4214, %v4211
        %v4236 = vpack.c.bf16 %v4215, %v4212
        %v4237 = vpack.c.bf16 %v4219, %v4216
        %v4238 = vpack.c.bf16 %v4220, %v4217
        %v4239 = vpack.c.bf16 %v4221, %v4218
        %v4240 = vpack.c.bf16 %v4225, %v4222
        %v4241 = vpack.c.bf16 %v4226, %v4223
        %v4242 = vpack.c.bf16 %v4227, %v4224
        %v4243 = vpack.c.bf16 %v4228, %v4228
        %v4244 = vpack.c.bf16 %v4229, %v4229
        %v4245 = vpack.c.bf16 %v4230, %v4230
        %s4246 = scalar_lea.vmem [#allocation3], 60
        %v4247 = vld [vmem:[%s4246] sm:$0x3]
        %s4248 = scalar_lea.vmem %s3, 40
        %v4249 = vld [vmem:[%s4248] sm:$0xf]
        %4251 = vset.pattern.permute.xlu0 0
        %4252 = vperm.xlu0 %4251, %v4249
        %v4253 = vpop.permute.xlu0 %4252
        %v4256 = vsel %vm511, %v4247, 0
        %v4259 = vsel %vm515, %v4243, 0
        %v4262 = vsel %vm515, %v4244, 0
        %v4265 = vsel %vm515, %v4245, 0
        %4267 = vmatprep.subr.bf16.mxu0 %v4232
        %4268 = vmatpush1.bf16.msra.mxu0 %v4231
        %4269 = vmatprep.subr.bf16.mxu0 %v4235
        %4270 = vmatpush1.bf16.msra.mxu0 %v4234
        %4271 = vmatprep.subr.bf16.mxu0 %v4238
        %4272 = vmatpush1.bf16.msra.mxu0 %v4237
        %4273 = vmatprep.subr.bf16.mxu0 %v4241
        %4274 = vmatpush1.bf16.msra.mxu0 %v4240
        %4275 = vmatprep.subr.bf16.mxu0 %v4262
        %4276 = vmatpush1.bf16.msra.mxu0 %v4259
        %4277 = vmatprep.subr.bf16.mxu0 0
        %4278 = vmatpush1.bf16.msra.mxu0 0
        %4279 = vmatprep.subr.bf16.mxu0 0
        %4280 = vmatpush1.bf16.msra.mxu0 0
        %4281 = vmatprep.subr.bf16.mxu0 0
        %4282 = vmatpush1.bf16.msra.mxu0 0
        %4283 = vmatprep.subr.bf16.mxu0 0
        %4284 = vmatpush1.bf16.msra.mxu0 0
        %4285 = vmatprep.subr.bf16.mxu0 0
        %4286 = vmatpush1.bf16.msra.mxu0 0
        %4287 = vmatprep.subr.bf16.mxu0 0
        %4288 = vmatpush1.bf16.msra.mxu0 0
        %4289 = vmatprep.subr.bf16.mxu0 0
        %4290 = vmatpush1.bf16.msra.mxu0 0
        %4291 = vmatprep.subr.bf16.mxu0 0
        %4292 = vmatpush1.bf16.msra.mxu0 0
        %4293 = vmatprep.subr.bf16.mxu0 0
        %4294 = vmatpush1.bf16.msra.mxu0 0
        %4295 = vmatprep.subr.bf16.mxu0 0
        %4296 = vmatpush1.bf16.msra.mxu0 0
        %4297 = vmatprep.subr.bf16.mxu0 0
        %4298 = vmatpush1.bf16.msra.mxu0 0
        %4299 = vmatprep.mubr.bf16.mxu0 0
        %4300 = vmatmul.mubr.bf16.gmra.mrb[0].mxu0 %v4256
        %v4301 = vpop.f32.mrb[0].mxu0
        %v4302 = vadd.f32 %v4253, %v4301
        %v4303 = vpop.f32.mrb[0].mxu0
        %v4304 = vadd.f32 %v4253, %v4303
        %v4305 = vpop.f32.mrb[0].mxu0
        %v4306 = vpop.f32.mrb[0].mxu0
        %4307 = vdwg.mxu0
        %4308 = vmatprep.subr.bf16.mxu0 0
        %4309 = vmatpush1.bf16.msra.mxu0 %v4233
        %4310 = vmatprep.subr.bf16.mxu0 0
        %4311 = vmatpush1.bf16.msra.mxu0 %v4236
        %4312 = vmatprep.subr.bf16.mxu0 0
        %4313 = vmatpush1.bf16.msra.mxu0 %v4239
        %4314 = vmatprep.subr.bf16.mxu0 0
        %4315 = vmatpush1.bf16.msra.mxu0 %v4242
        %4316 = vmatprep.subr.bf16.mxu0 0
        %4317 = vmatpush1.bf16.msra.mxu0 %v4265
        %4318 = vmatprep.subr.bf16.mxu0 0
        %4319 = vmatpush1.bf16.msra.mxu0 0
        %4320 = vmatprep.subr.bf16.mxu0 0
        %4321 = vmatpush1.bf16.msra.mxu0 0
        %4322 = vmatprep.subr.bf16.mxu0 0
        %4323 = vmatpush1.bf16.msra.mxu0 0
        %4324 = vmatprep.subr.bf16.mxu0 0
        %4325 = vmatpush1.bf16.msra.mxu0 0
        %4326 = vmatprep.subr.bf16.mxu0 0
        %4327 = vmatpush1.bf16.msra.mxu0 0
        %4328 = vmatprep.subr.bf16.mxu0 0
        %4329 = vmatpush1.bf16.msra.mxu0 0
        %4330 = vmatprep.subr.bf16.mxu0 0
        %4331 = vmatpush1.bf16.msra.mxu0 0
        %4332 = vmatprep.subr.bf16.mxu0 0
        %4333 = vmatpush1.bf16.msra.mxu0 0
        %4334 = vmatprep.subr.bf16.mxu0 0
        %4335 = vmatpush1.bf16.msra.mxu0 0
        %4336 = vmatprep.subr.bf16.mxu0 0
        %4337 = vmatpush1.bf16.msra.mxu0 0
        %4338 = vmatprep.subr.bf16.mxu0 0
        %4339 = vmatpush1.bf16.msra.mxu0 0
        %4340 = vmatprep.mubr.bf16.mxu0 0
        %4341 = vmatmul.mubr.bf16.gmra.mrb[0].mxu0 %v4256
        %v4342 = vpop.f32.mrb[0].mxu0
        %v4343 = vadd.f32 %v4253, %v4342
        %v4344 = vpop.f32.mrb[0].mxu0
        %v4345 = vpop.f32.mrb[0].mxu0
        %v4346 = vpop.f32.mrb[0].mxu0
        %4347 = vdwg.mxu0
        %v4348 = vmul.f32 %v4302, 0.01
        %v4349 = vmul.f32 %v4304, 0.01
        %v4350 = vmul.f32 %v4343, 0.01
        %v4351 = vmax.f32 %v4302, %v4348
        %v4352 = vmax.f32 %v4304, %v4349
        %v4353 = vmax.f32 %v4343, %v4350
        %v4354 = vmul.f32 %v4351, %v616
        %v4355 = vmul.f32 %v4352, %v620
        %v4356 = vmul.f32 %v4353, %v624
        %4357 = vrot.lane.b32.xlu0 %v4354, 19
        %v4358 = vpop.permute.xlu0 %4357
        %4359 = vrot.lane.b32.xlu0 %v4355, 19
        %v4360 = vpop.permute.xlu0 %4359
        %4361 = vrot.lane.b32.xlu0 %v4356, 19
        %v4362 = vpop.permute.xlu0 %4361
        %v4363 = vsel %vm361, %v4360, %v4362
        %v4364 = vsel %vm361, %v4358, %v4360
        %v4365 = vsel %vm361, %v4362, %v4358
        %4366 = vst [vmem:[#allocation2 + $0xd8] sm:$0xf] %v4365
        %4367 = vst [vmem:[#allocation2 + $0xe0] sm:$0xf] %v4364
        %4368 = vst [vmem:[#allocation2 + $0xe8] sm:$0xf] %v4363
        %4369 = vrot.lane.b32.xlu0 %v4354, 18
        %v4370 = vpop.permute.xlu0 %4369
        %4371 = vrot.lane.b32.xlu0 %v4355, 18
        %v4372 = vpop.permute.xlu0 %4371
        %4373 = vrot.lane.b32.xlu0 %v4356, 18
        %v4374 = vpop.permute.xlu0 %4373
        %v4375 = vsel %vm374, %v4372, %v4374
        %v4376 = vsel %vm374, %v4370, %v4372
        %v4377 = vsel %vm374, %v4374, %v4370
        %4378 = vst [vmem:[#allocation2 + $0xf0] sm:$0xf] %v4377
        %4379 = vst [vmem:[#allocation2 + $0xf8] sm:$0xf] %v4376
        %4380 = vst [vmem:[#allocation2 + $0x100] sm:$0xf] %v4375
        %4381 = vrot.lane.b32.xlu0 %v4354, 17
        %v4382 = vpop.permute.xlu0 %4381
        %4383 = vrot.lane.b32.xlu0 %v4355, 17
        %v4384 = vpop.permute.xlu0 %4383
        %4385 = vrot.lane.b32.xlu0 %v4356, 17
        %v4386 = vpop.permute.xlu0 %4385
        %v4387 = vsel %vm387, %v4384, %v4386
        %v4388 = vsel %vm387, %v4382, %v4384
        %v4389 = vsel %vm387, %v4386, %v4382
        %4390 = vst [vmem:[#allocation2 + $0x108] sm:$0xf] %v4389
        %4391 = vst [vmem:[#allocation2 + $0x110] sm:$0xf] %v4388
        %4392 = vst [vmem:[#allocation2 + $0x118] sm:$0xf] %v4387
        %4393 = vrot.lane.b32.xlu0 %v4354, 1
        %v4394 = vpop.permute.xlu0 %4393
        %4395 = vrot.lane.b32.xlu0 %v4355, 1
        %v4396 = vpop.permute.xlu0 %4395
        %4397 = vrot.lane.b32.xlu0 %v4356, 1
        %v4398 = vpop.permute.xlu0 %4397
        %v4399 = vsel %vm400, %v4396, %v4398
        %v4400 = vsel %vm400, %v4394, %v4396
        %v4401 = vsel %vm400, %v4398, %v4394
        %4402 = vst [vmem:[#allocation2 + $0x120] sm:$0xf] %v4401
        %4403 = vst [vmem:[#allocation2 + $0x128] sm:$0xf] %v4400
        %4404 = vst [vmem:[#allocation2 + $0x130] sm:$0xf] %v4399
        %4405 = vst [vmem:[#allocation2 + $0x138] sm:$0xf] %v4354
        %4406 = vst [vmem:[#allocation2 + $0x140] sm:$0xf] %v4355
        %4407 = vst [vmem:[#allocation2 + $0x148] sm:$0xf] %v4356
        %4408 = vrot.lane.b32.xlu0 %v4354, 127
        %v4409 = vpop.permute.xlu0 %4408
        %4410 = vrot.lane.b32.xlu0 %v4355, 127
        %v4411 = vpop.permute.xlu0 %4410
        %4412 = vrot.lane.b32.xlu0 %v4356, 127
        %v4413 = vpop.permute.xlu0 %4412
        %v4414 = vsel %vm416, %v4411, %v4413
        %v4415 = vsel %vm416, %v4409, %v4411
        %v4416 = vsel %vm416, %v4413, %v4409
        %4417 = vst [vmem:[#allocation2 + $0x150] sm:$0xf] %v4415
        %4418 = vst [vmem:[#allocation2 + $0x158] sm:$0xf] %v4414
        %4419 = vst [vmem:[#allocation2 + $0x160] sm:$0xf] %v4416
        %4420 = vrot.lane.b32.xlu0 %v4354, 111
        %v4421 = vpop.permute.xlu0 %4420
        %4422 = vrot.lane.b32.xlu0 %v4355, 111
        %v4423 = vpop.permute.xlu0 %4422
        %4424 = vrot.lane.b32.xlu0 %v4356, 111
        %v4425 = vpop.permute.xlu0 %4424
        %v4426 = vsel %vm429, %v4423, %v4425
        %v4427 = vsel %vm429, %v4421, %v4423
        %v4428 = vsel %vm429, %v4425, %v4421
        %4429 = vst [vmem:[#allocation2 + $0x168] sm:$0xf] %v4427
        %4430 = vst [vmem:[#allocation2 + $0x170] sm:$0xf] %v4426
        %4431 = vst [vmem:[#allocation2 + $0x178] sm:$0xf] %v4428
        %4432 = vrot.lane.b32.xlu0 %v4354, 110
        %v4433 = vpop.permute.xlu0 %4432
        %4434 = vrot.lane.b32.xlu0 %v4355, 110
        %v4435 = vpop.permute.xlu0 %4434
        %4436 = vrot.lane.b32.xlu0 %v4356, 110
        %v4437 = vpop.permute.xlu0 %4436
        %v4438 = vsel %vm442, %v4435, %v4437
        %v4439 = vsel %vm442, %v4433, %v4435
        %v4440 = vsel %vm442, %v4437, %v4433
        %4441 = vst [vmem:[#allocation2 + $0x180] sm:$0xf] %v4439
        %4442 = vst [vmem:[#allocation2 + $0x188] sm:$0xf] %v4438
        %4443 = vst [vmem:[#allocation2 + $0x190] sm:$0xf] %v4440
        %4444 = vrot.lane.b32.xlu0 %v4354, 109
        %v4445 = vpop.permute.xlu0 %4444
        %4446 = vrot.lane.b32.xlu0 %v4355, 109
        %v4447 = vpop.permute.xlu0 %4446
        %4448 = vrot.lane.b32.xlu0 %v4356, 109
        %v4449 = vpop.permute.xlu0 %4448
        %v4450 = vsel %vm455, %v4447, %v4449
        %v4451 = vsel %vm455, %v4445, %v4447
        %v4452 = vsel %vm455, %v4449, %v4445
        %4453 = vst [vmem:[#allocation2 + $0x198] sm:$0xf] %v4451
        %4454 = vst [vmem:[#allocation2 + $0x1a0] sm:$0xf] %v4450
        %4455 = vst [vmem:[#allocation2 + $0x1a8] sm:$0xf] %v4452
        %v4456 = vld [vmem:[#allocation2] sm:$0xff]
        %v4457 = vld [vmem:[#allocation2 + $0x8] sm:$0xff]
        %v4458 = vld [vmem:[#allocation2 + $0x10] sm:$0xff]
        %v4459 = vld [vmem:[#allocation2 + $0x18] sm:$0xff]
        %v4460 = vld [vmem:[#allocation2 + $0x20] sm:$0xff]
        %v4461 = vld [vmem:[#allocation2 + $0x28] sm:$0xff]
        %v4462 = vld [vmem:[#allocation2 + $0x30] sm:$0xff]
        %v4463 = vld [vmem:[#allocation2 + $0x38] sm:$0xff]
        %v4464 = vld [vmem:[#allocation2 + $0x40] sm:$0xff]
        %v4465 = vld [vmem:[#allocation2 + $0x48] sm:$0xff]
        %v4466 = vld [vmem:[#allocation2 + $0x50] sm:$0xff]
        %v4467 = vld [vmem:[#allocation2 + $0x58] sm:$0xff]
        %v4468 = vld [vmem:[#allocation2 + $0x60] sm:$0xff]
        %v4469 = vld [vmem:[#allocation2 + $0x68] sm:$0xff]
        %v4470 = vld [vmem:[#allocation2 + $0x70] sm:$0xff]
        %v4471 = vld [vmem:[#allocation2 + $0x78] sm:$0xff]
        %v4472 = vld [vmem:[#allocation2 + $0x80] sm:$0xff]
        %v4473 = vld [vmem:[#allocation2 + $0x88] sm:$0xff]
        %v4474 = vld [vmem:[#allocation2 + $0x90] sm:$0xff]
        %v4475 = vld [vmem:[#allocation2 + $0x98] sm:$0xff]
        %v4476 = vld [vmem:[#allocation2 + $0xa0] sm:$0xff]
        %v4477 = vld [vmem:[#allocation2 + $0xa8] sm:$0xff]
        %v4478 = vld [vmem:[#allocation2 + $0xb0] sm:$0xff]
        %v4479 = vld [vmem:[#allocation2 + $0xb8] sm:$0xff]
        %v4480 = vld [vmem:[#allocation2 + $0xc0] sm:$0xff]
        %v4481 = vld [vmem:[#allocation2 + $0xc8] sm:$0xff]
        %v4482 = vld [vmem:[#allocation2 + $0xd0] sm:$0xff]
        %v4483 = vld [vmem:[#allocation2 + $0xd8] sm:$0xff]
        %v4484 = vld [vmem:[#allocation2 + $0xe0] sm:$0xff]
        %v4485 = vld [vmem:[#allocation2 + $0xe8] sm:$0xff]
        %v4486 = vld [vmem:[#allocation2 + $0xf0] sm:$0xff]
        %v4487 = vld [vmem:[#allocation2 + $0xf8] sm:$0xff]
        %v4488 = vld [vmem:[#allocation2 + $0x100] sm:$0xff]
        %v4489 = vld [vmem:[#allocation2 + $0x108] sm:$0xff]
        %v4490 = vld [vmem:[#allocation2 + $0x110] sm:$0xff]
        %v4491 = vld [vmem:[#allocation2 + $0x118] sm:$0xff]
        %v4492 = vld [vmem:[#allocation2 + $0x120] sm:$0xff]
        %v4493 = vld [vmem:[#allocation2 + $0x128] sm:$0xff]
        %v4494 = vld [vmem:[#allocation2 + $0x130] sm:$0xff]
        %v4495 = vld [vmem:[#allocation2 + $0x138] sm:$0xff]
        %v4496 = vld [vmem:[#allocation2 + $0x140] sm:$0xff]
        %v4497 = vld [vmem:[#allocation2 + $0x148] sm:$0xff]
        %v4498 = vld [vmem:[#allocation2 + $0x150] sm:$0xff]
        %v4499 = vld [vmem:[#allocation2 + $0x158] sm:$0xff]
        %v4500 = vld [vmem:[#allocation2 + $0x160] sm:$0xff]
        %v4501 = vld [vmem:[#allocation2 + $0x168] sm:$0xff]
        %v4502 = vld [vmem:[#allocation2 + $0x170] sm:$0xff]
        %v4503 = vld [vmem:[#allocation2 + $0x178] sm:$0xff]
        %v4504 = vld [vmem:[#allocation2 + $0x180] sm:$0xff]
        %v4505 = vld [vmem:[#allocation2 + $0x188] sm:$0xff]
        %v4506 = vld [vmem:[#allocation2 + $0x190] sm:$0xff]
        %v4507 = vld [vmem:[#allocation2 + $0x198] sm:$0xff]
        %v4508 = vld [vmem:[#allocation2 + $0x1a0] sm:$0xff]
        %v4509 = vld [vmem:[#allocation2 + $0x1a8] sm:$0xff]
        %v4510 = vpack.c.bf16 %v4459, %v4456
        %v4511 = vpack.c.bf16 %v4460, %v4457
        %v4512 = vpack.c.bf16 %v4461, %v4458
        %v4513 = vpack.c.bf16 %v4465, %v4462
        %v4514 = vpack.c.bf16 %v4466, %v4463
        %v4515 = vpack.c.bf16 %v4467, %v4464
        %v4516 = vpack.c.bf16 %v4471, %v4468
        %v4517 = vpack.c.bf16 %v4472, %v4469
        %v4518 = vpack.c.bf16 %v4473, %v4470
        %v4519 = vpack.c.bf16 %v4477, %v4474
        %v4520 = vpack.c.bf16 %v4478, %v4475
        %v4521 = vpack.c.bf16 %v4479, %v4476
        %v4522 = vpack.c.bf16 %v4483, %v4480
        %v4523 = vpack.c.bf16 %v4484, %v4481
        %v4524 = vpack.c.bf16 %v4485, %v4482
        %v4525 = vpack.c.bf16 %v4489, %v4486
        %v4526 = vpack.c.bf16 %v4490, %v4487
        %v4527 = vpack.c.bf16 %v4491, %v4488
        %v4528 = vpack.c.bf16 %v4495, %v4492
        %v4529 = vpack.c.bf16 %v4496, %v4493
        %v4530 = vpack.c.bf16 %v4497, %v4494
        %v4531 = vpack.c.bf16 %v4501, %v4498
        %v4532 = vpack.c.bf16 %v4502, %v4499
        %v4533 = vpack.c.bf16 %v4503, %v4500
        %v4534 = vpack.c.bf16 %v4507, %v4504
        %v4535 = vpack.c.bf16 %v4508, %v4505
        %v4536 = vpack.c.bf16 %v4509, %v4506
        %s4537 = scalar_lea.vmem [#allocation3], 66
        %v4538 = vld [vmem:[%s4537] sm:$0xf]
        %s4539 = scalar_lea.vmem %s3, 44
        %v4540 = vld [vmem:[%s4539] sm:$0xf]
        %4542 = vset.pattern.permute.xlu0 0
        %4543 = vperm.xlu0 %4542, %v4540
        %v4544 = vpop.permute.xlu0 %4543
        %v4548 = vunpack.c.l.s4 1983009808
        %v4549 = vunpack.c.0.s8 %v4548
        %v4550 = vlaneseq
        %v4551 = vshrl.u32 %v4550, 7
        %v4552 = vsub.s32 %v4549, %v4551
        %v4553 = vrot.slane %v4538, %v4552
        %v4554 = vcombine.high %v4553, %v4553
        %v4557 = vsel %vm830, %v4554, 0
        %4559 = vmatprep.subr.bf16.mxu0 %v4511
        %4560 = vmatpush1.bf16.msra.mxu0 %v4510
        %4561 = vmatprep.subr.bf16.mxu0 %v4514
        %4562 = vmatpush1.bf16.msra.mxu0 %v4513
        %4563 = vmatprep.subr.bf16.mxu0 %v4517
        %4564 = vmatpush1.bf16.msra.mxu0 %v4516
        %4565 = vmatprep.subr.bf16.mxu0 %v4520
        %4566 = vmatpush1.bf16.msra.mxu0 %v4519
        %4567 = vmatprep.subr.bf16.mxu0 %v4523
        %4568 = vmatpush1.bf16.msra.mxu0 %v4522
        %4569 = vmatprep.subr.bf16.mxu0 %v4526
        %4570 = vmatpush1.bf16.msra.mxu0 %v4525
        %4571 = vmatprep.subr.bf16.mxu0 %v4529
        %4572 = vmatpush1.bf16.msra.mxu0 %v4528
        %4573 = vmatprep.subr.bf16.mxu0 %v4532
        %4574 = vmatpush1.bf16.msra.mxu0 %v4531
        %4575 = vmatprep.subr.bf16.mxu0 %v4535
        %4576 = vmatpush1.bf16.msra.mxu0 %v4534
        %4577 = vmatprep.subr.bf16.mxu0 0
        %4578 = vmatpush1.bf16.msra.mxu0 0
        %4579 = vmatprep.subr.bf16.mxu0 0
        %4580 = vmatpush1.bf16.msra.mxu0 0
        %4581 = vmatprep.subr.bf16.mxu0 0
        %4582 = vmatpush1.bf16.msra.mxu0 0
        %4583 = vmatprep.subr.bf16.mxu0 0
        %4584 = vmatpush1.bf16.msra.mxu0 0
        %4585 = vmatprep.subr.bf16.mxu0 0
        %4586 = vmatpush1.bf16.msra.mxu0 0
        %4587 = vmatprep.subr.bf16.mxu0 0
        %4588 = vmatpush1.bf16.msra.mxu0 0
        %4589 = vmatprep.subr.bf16.mxu0 0
        %4590 = vmatpush1.bf16.msra.mxu0 0
        %4591 = vmatprep.mubr.bf16.mxu0 %v4557
        %4592 = vmatmul.mubr.bf16.gmra.mrb[0].mxu0 %v4553
        %v4593 = vpop.f32.mrb[0].mxu0
        %v4594 = vadd.f32 %v4544, %v4593
        %v4595 = vpop.f32.mrb[0].mxu0
        %v4596 = vadd.f32 %v4544, %v4595
        %v4597 = vpop.f32.mrb[0].mxu0
        %v4598 = vpop.f32.mrb[0].mxu0
        %4599 = vdwg.mxu0
        %4600 = vmatprep.subr.bf16.mxu0 0
        %4601 = vmatpush1.bf16.msra.mxu0 %v4512
        %4602 = vmatprep.subr.bf16.mxu0 0
        %4603 = vmatpush1.bf16.msra.mxu0 %v4515
        %4604 = vmatprep.subr.bf16.mxu0 0
        %4605 = vmatpush1.bf16.msra.mxu0 %v4518
        %4606 = vmatprep.subr.bf16.mxu0 0
        %4607 = vmatpush1.bf16.msra.mxu0 %v4521
        %4608 = vmatprep.subr.bf16.mxu0 0
        %4609 = vmatpush1.bf16.msra.mxu0 %v4524
        %4610 = vmatprep.subr.bf16.mxu0 0
        %4611 = vmatpush1.bf16.msra.mxu0 %v4527
        %4612 = vmatprep.subr.bf16.mxu0 0
        %4613 = vmatpush1.bf16.msra.mxu0 %v4530
        %4614 = vmatprep.subr.bf16.mxu0 0
        %4615 = vmatpush1.bf16.msra.mxu0 %v4533
        %4616 = vmatprep.subr.bf16.mxu0 0
        %4617 = vmatpush1.bf16.msra.mxu0 %v4536
        %4618 = vmatprep.subr.bf16.mxu0 0
        %4619 = vmatpush1.bf16.msra.mxu0 0
        %4620 = vmatprep.subr.bf16.mxu0 0
        %4621 = vmatpush1.bf16.msra.mxu0 0
        %4622 = vmatprep.subr.bf16.mxu0 0
        %4623 = vmatpush1.bf16.msra.mxu0 0
        %4624 = vmatprep.subr.bf16.mxu0 0
        %4625 = vmatpush1.bf16.msra.mxu0 0
        %4626 = vmatprep.subr.bf16.mxu0 0
        %4627 = vmatpush1.bf16.msra.mxu0 0
        %4628 = vmatprep.subr.bf16.mxu0 0
        %4629 = vmatpush1.bf16.msra.mxu0 0
        %4630 = vmatprep.subr.bf16.mxu0 0
        %4631 = vmatpush1.bf16.msra.mxu0 0
        %4632 = vmatprep.mubr.bf16.mxu0 %v4557
        %4633 = vmatmul.mubr.bf16.gmra.mrb[0].mxu0 %v4553
        %v4634 = vpop.f32.mrb[0].mxu0
        %v4635 = vadd.f32 %v4544, %v4634
        %v4636 = vpop.f32.mrb[0].mxu0
        %v4637 = vpop.f32.mrb[0].mxu0
        %v4638 = vpop.f32.mrb[0].mxu0
        %4639 = vdwg.mxu0
        %v4640 = vmul.f32 %v4594, 0.01
        %v4641 = vmul.f32 %v4596, 0.01
        %v4642 = vmul.f32 %v4635, 0.01
        %v4643 = vmax.f32 %v4594, %v4640
        %v4644 = vmax.f32 %v4596, %v4641
        %v4645 = vmax.f32 %v4635, %v4642
        %v4646 = vmul.f32 %v4643, %v616
        %v4647 = vmul.f32 %v4644, %v620
        %v4648 = vmul.f32 %v4645, %v624
        %4649 = vrot.lane.b32.xlu0 %v4646, 19
        %v4650 = vpop.permute.xlu0 %4649
        %4651 = vrot.lane.b32.xlu0 %v4647, 19
        %v4652 = vpop.permute.xlu0 %4651
        %4653 = vrot.lane.b32.xlu0 %v4648, 19
        %v4654 = vpop.permute.xlu0 %4653
        %v4655 = vsel %vm361, %v4652, %v4654
        %v4656 = vsel %vm361, %v4650, %v4652
        %v4657 = vsel %vm361, %v4654, %v4650
        %4658 = vst [vmem:[#allocation2 + $0x1b0] sm:$0xf] %v4657
        %4659 = vst [vmem:[#allocation2 + $0x1b8] sm:$0xf] %v4656
        %4660 = vst [vmem:[#allocation2 + $0x1c0] sm:$0xf] %v4655
        %4661 = vrot.lane.b32.xlu0 %v4646, 18
        %v4662 = vpop.permute.xlu0 %4661
        %4663 = vrot.lane.b32.xlu0 %v4647, 18
        %v4664 = vpop.permute.xlu0 %4663
        %4665 = vrot.lane.b32.xlu0 %v4648, 18
        %v4666 = vpop.permute.xlu0 %4665
        %v4667 = vsel %vm374, %v4664, %v4666
        %v4668 = vsel %vm374, %v4662, %v4664
        %v4669 = vsel %vm374, %v4666, %v4662
        %4670 = vst [vmem:[#allocation2 + $0x1c8] sm:$0xf] %v4669
        %4671 = vst [vmem:[#allocation2 + $0x1d0] sm:$0xf] %v4668
        %4672 = vst [vmem:[#allocation2 + $0x1d8] sm:$0xf] %v4667
        %4673 = vrot.lane.b32.xlu0 %v4646, 17
        %v4674 = vpop.permute.xlu0 %4673
        %4675 = vrot.lane.b32.xlu0 %v4647, 17
        %v4676 = vpop.permute.xlu0 %4675
        %4677 = vrot.lane.b32.xlu0 %v4648, 17
        %v4678 = vpop.permute.xlu0 %4677
        %v4679 = vsel %vm387, %v4676, %v4678
        %v4680 = vsel %vm387, %v4674, %v4676
        %v4681 = vsel %vm387, %v4678, %v4674
        %4682 = vst [vmem:[#allocation2 + $0x1e0] sm:$0xf] %v4681
        %4683 = vst [vmem:[#allocation2 + $0x1e8] sm:$0xf] %v4680
        %4684 = vst [vmem:[#allocation2 + $0x1f0] sm:$0xf] %v4679
        %4685 = vrot.lane.b32.xlu0 %v4646, 1
        %v4686 = vpop.permute.xlu0 %4685
        %4687 = vrot.lane.b32.xlu0 %v4647, 1
        %v4688 = vpop.permute.xlu0 %4687
        %4689 = vrot.lane.b32.xlu0 %v4648, 1
        %v4690 = vpop.permute.xlu0 %4689
        %v4691 = vsel %vm400, %v4688, %v4690
        %v4692 = vsel %vm400, %v4686, %v4688
        %v4693 = vsel %vm400, %v4690, %v4686
        %4694 = vst [vmem:[#allocation2 + $0x1f8] sm:$0xf] %v4693
        %4695 = vst [vmem:[#allocation2 + $0x200] sm:$0xf] %v4692
        %4696 = vst [vmem:[#allocation2 + $0x208] sm:$0xf] %v4691
        %4697 = vst [vmem:[#allocation2 + $0x210] sm:$0xf] %v4646
        %4698 = vst [vmem:[#allocation2 + $0x218] sm:$0xf] %v4647
        %4699 = vst [vmem:[#allocation2 + $0x220] sm:$0xf] %v4648
        %4700 = vrot.lane.b32.xlu0 %v4646, 127
        %v4701 = vpop.permute.xlu0 %4700
        %4702 = vrot.lane.b32.xlu0 %v4647, 127
        %v4703 = vpop.permute.xlu0 %4702
        %4704 = vrot.lane.b32.xlu0 %v4648, 127
        %v4705 = vpop.permute.xlu0 %4704
        %v4706 = vsel %vm416, %v4703, %v4705
        %v4707 = vsel %vm416, %v4701, %v4703
        %v4708 = vsel %vm416, %v4705, %v4701
        %4709 = vst [vmem:[#allocation2 + $0x228] sm:$0xf] %v4707
        %4710 = vst [vmem:[#allocation2 + $0x230] sm:$0xf] %v4706
        %4711 = vst [vmem:[#allocation2 + $0x238] sm:$0xf] %v4708
        %4712 = vrot.lane.b32.xlu0 %v4646, 111
        %v4713 = vpop.permute.xlu0 %4712
        %4714 = vrot.lane.b32.xlu0 %v4647, 111
        %v4715 = vpop.permute.xlu0 %4714
        %4716 = vrot.lane.b32.xlu0 %v4648, 111
        %v4717 = vpop.permute.xlu0 %4716
        %v4718 = vsel %vm429, %v4715, %v4717
        %v4719 = vsel %vm429, %v4713, %v4715
        %v4720 = vsel %vm429, %v4717, %v4713
        %4721 = vst [vmem:[#allocation2 + $0x240] sm:$0xf] %v4719
        %4722 = vst [vmem:[#allocation2 + $0x248] sm:$0xf] %v4718
        %4723 = vst [vmem:[#allocation2 + $0x250] sm:$0xf] %v4720
        %4724 = vrot.lane.b32.xlu0 %v4646, 110
        %v4725 = vpop.permute.xlu0 %4724
        %4726 = vrot.lane.b32.xlu0 %v4647, 110
        %v4727 = vpop.permute.xlu0 %4726
        %4728 = vrot.lane.b32.xlu0 %v4648, 110
        %v4729 = vpop.permute.xlu0 %4728
        %v4730 = vsel %vm442, %v4727, %v4729
        %v4731 = vsel %vm442, %v4725, %v4727
        %v4732 = vsel %vm442, %v4729, %v4725
        %4733 = vst [vmem:[#allocation2 + $0x258] sm:$0xf] %v4731
        %4734 = vst [vmem:[#allocation2 + $0x260] sm:$0xf] %v4730
        %4735 = vst [vmem:[#allocation2 + $0x268] sm:$0xf] %v4732
        %4736 = vrot.lane.b32.xlu0 %v4646, 109
        %v4737 = vpop.permute.xlu0 %4736
        %4738 = vrot.lane.b32.xlu0 %v4647, 109
        %v4739 = vpop.permute.xlu0 %4738
        %4740 = vrot.lane.b32.xlu0 %v4648, 109
        %v4741 = vpop.permute.xlu0 %4740
        %v4742 = vsel %vm455, %v4739, %v4741
        %v4743 = vsel %vm455, %v4737, %v4739
        %v4744 = vsel %vm455, %v4741, %v4737
        %4745 = vst [vmem:[#allocation2 + $0x270] sm:$0xf] %v4743
        %4746 = vst [vmem:[#allocation2 + $0x278] sm:$0xf] %v4742
        %4747 = vst [vmem:[#allocation2 + $0x280] sm:$0xf] %v4744
        %v4748 = vld [vmem:[#allocation2] sm:$0xff]
        %v4749 = vld [vmem:[#allocation2 + $0x8] sm:$0xff]
        %v4750 = vld [vmem:[#allocation2 + $0x10] sm:$0xff]
        %v4751 = vld [vmem:[#allocation2 + $0x18] sm:$0xff]
        %v4752 = vld [vmem:[#allocation2 + $0x20] sm:$0xff]
        %v4753 = vld [vmem:[#allocation2 + $0x28] sm:$0xff]
        %v4754 = vld [vmem:[#allocation2 + $0x30] sm:$0xff]
        %v4755 = vld [vmem:[#allocation2 + $0x38] sm:$0xff]
        %v4756 = vld [vmem:[#allocation2 + $0x40] sm:$0xff]
        %v4757 = vld [vmem:[#allocation2 + $0x48] sm:$0xff]
        %v4758 = vld [vmem:[#allocation2 + $0x50] sm:$0xff]
        %v4759 = vld [vmem:[#allocation2 + $0x58] sm:$0xff]
        %v4760 = vld [vmem:[#allocation2 + $0x60] sm:$0xff]
        %v4761 = vld [vmem:[#allocation2 + $0x68] sm:$0xff]
        %v4762 = vld [vmem:[#allocation2 + $0x70] sm:$0xff]
        %v4763 = vld [vmem:[#allocation2 + $0x78] sm:$0xff]
        %v4764 = vld [vmem:[#allocation2 + $0x80] sm:$0xff]
        %v4765 = vld [vmem:[#allocation2 + $0x88] sm:$0xff]
        %v4766 = vld [vmem:[#allocation2 + $0x90] sm:$0xff]
        %v4767 = vld [vmem:[#allocation2 + $0x98] sm:$0xff]
        %v4768 = vld [vmem:[#allocation2 + $0xa0] sm:$0xff]
        %v4769 = vld [vmem:[#allocation2 + $0xa8] sm:$0xff]
        %v4770 = vld [vmem:[#allocation2 + $0xb0] sm:$0xff]
        %v4771 = vld [vmem:[#allocation2 + $0xb8] sm:$0xff]
        %v4772 = vld [vmem:[#allocation2 + $0xc0] sm:$0xff]
        %v4773 = vld [vmem:[#allocation2 + $0xc8] sm:$0xff]
        %v4774 = vld [vmem:[#allocation2 + $0xd0] sm:$0xff]
        %v4775 = vld [vmem:[#allocation2 + $0xd8] sm:$0xff]
        %v4776 = vld [vmem:[#allocation2 + $0xe0] sm:$0xff]
        %v4777 = vld [vmem:[#allocation2 + $0xe8] sm:$0xff]
        %v4778 = vld [vmem:[#allocation2 + $0xf0] sm:$0xff]
        %v4779 = vld [vmem:[#allocation2 + $0xf8] sm:$0xff]
        %v4780 = vld [vmem:[#allocation2 + $0x100] sm:$0xff]
        %v4781 = vld [vmem:[#allocation2 + $0x108] sm:$0xff]
        %v4782 = vld [vmem:[#allocation2 + $0x110] sm:$0xff]
        %v4783 = vld [vmem:[#allocation2 + $0x118] sm:$0xff]
        %v4784 = vld [vmem:[#allocation2 + $0x120] sm:$0xff]
        %v4785 = vld [vmem:[#allocation2 + $0x128] sm:$0xff]
        %v4786 = vld [vmem:[#allocation2 + $0x130] sm:$0xff]
        %v4787 = vld [vmem:[#allocation2 + $0x138] sm:$0xff]
        %v4788 = vld [vmem:[#allocation2 + $0x140] sm:$0xff]
        %v4789 = vld [vmem:[#allocation2 + $0x148] sm:$0xff]
        %v4790 = vld [vmem:[#allocation2 + $0x150] sm:$0xff]
        %v4791 = vld [vmem:[#allocation2 + $0x158] sm:$0xff]
        %v4792 = vld [vmem:[#allocation2 + $0x160] sm:$0xff]
        %v4793 = vld [vmem:[#allocation2 + $0x168] sm:$0xff]
        %v4794 = vld [vmem:[#allocation2 + $0x170] sm:$0xff]
        %v4795 = vld [vmem:[#allocation2 + $0x178] sm:$0xff]
        %v4796 = vld [vmem:[#allocation2 + $0x180] sm:$0xff]
        %v4797 = vld [vmem:[#allocation2 + $0x188] sm:$0xff]
        %v4798 = vld [vmem:[#allocation2 + $0x190] sm:$0xff]
        %v4799 = vld [vmem:[#allocation2 + $0x198] sm:$0xff]
        %v4800 = vld [vmem:[#allocation2 + $0x1a0] sm:$0xff]
        %v4801 = vld [vmem:[#allocation2 + $0x1a8] sm:$0xff]
        %v4802 = vld [vmem:[#allocation2 + $0x1b0] sm:$0xff]
        %v4803 = vld [vmem:[#allocation2 + $0x1b8] sm:$0xff]
        %v4804 = vld [vmem:[#allocation2 + $0x1c0] sm:$0xff]
        %v4805 = vld [vmem:[#allocation2 + $0x1c8] sm:$0xff]
        %v4806 = vld [vmem:[#allocation2 + $0x1d0] sm:$0xff]
        %v4807 = vld [vmem:[#allocation2 + $0x1d8] sm:$0xff]
        %v4808 = vld [vmem:[#allocation2 + $0x1e0] sm:$0xff]
        %v4809 = vld [vmem:[#allocation2 + $0x1e8] sm:$0xff]
        %v4810 = vld [vmem:[#allocation2 + $0x1f0] sm:$0xff]
        %v4811 = vld [vmem:[#allocation2 + $0x1f8] sm:$0xff]
        %v4812 = vld [vmem:[#allocation2 + $0x200] sm:$0xff]
        %v4813 = vld [vmem:[#allocation2 + $0x208] sm:$0xff]
        %v4814 = vld [vmem:[#allocation2 + $0x210] sm:$0xff]
        %v4815 = vld [vmem:[#allocation2 + $0x218] sm:$0xff]
        %v4816 = vld [vmem:[#allocation2 + $0x220] sm:$0xff]
        %v4817 = vld [vmem:[#allocation2 + $0x228] sm:$0xff]
        %v4818 = vld [vmem:[#allocation2 + $0x230] sm:$0xff]
        %v4819 = vld [vmem:[#allocation2 + $0x238] sm:$0xff]
        %v4820 = vld [vmem:[#allocation2 + $0x240] sm:$0xff]
        %v4821 = vld [vmem:[#allocation2 + $0x248] sm:$0xff]
        %v4822 = vld [vmem:[#allocation2 + $0x250] sm:$0xff]
        %v4823 = vld [vmem:[#allocation2 + $0x258] sm:$0xff]
        %v4824 = vld [vmem:[#allocation2 + $0x260] sm:$0xff]
        %v4825 = vld [vmem:[#allocation2 + $0x268] sm:$0xff]
        %v4826 = vld [vmem:[#allocation2 + $0x270] sm:$0xff]
        %v4827 = vld [vmem:[#allocation2 + $0x278] sm:$0xff]
        %v4828 = vld [vmem:[#allocation2 + $0x280] sm:$0xff]
        %v4829 = vpack.c.bf16 %v4751, %v4748
        %v4830 = vpack.c.bf16 %v4752, %v4749
        %v4831 = vpack.c.bf16 %v4753, %v4750
        %v4832 = vpack.c.bf16 %v4757, %v4754
        %v4833 = vpack.c.bf16 %v4758, %v4755
        %v4834 = vpack.c.bf16 %v4759, %v4756
        %v4835 = vpack.c.bf16 %v4763, %v4760
        %v4836 = vpack.c.bf16 %v4764, %v4761
        %v4837 = vpack.c.bf16 %v4765, %v4762
        %v4838 = vpack.c.bf16 %v4769, %v4766
        %v4839 = vpack.c.bf16 %v4770, %v4767
        %v4840 = vpack.c.bf16 %v4771, %v4768
        %v4841 = vpack.c.bf16 %v4775, %v4772
        %v4842 = vpack.c.bf16 %v4776, %v4773
        %v4843 = vpack.c.bf16 %v4777, %v4774
        %v4844 = vpack.c.bf16 %v4781, %v4778
        %v4845 = vpack.c.bf16 %v4782, %v4779
        %v4846 = vpack.c.bf16 %v4783, %v4780
        %v4847 = vpack.c.bf16 %v4787, %v4784
        %v4848 = vpack.c.bf16 %v4788, %v4785
        %v4849 = vpack.c.bf16 %v4789, %v4786
        %v4850 = vpack.c.bf16 %v4793, %v4790
        %v4851 = vpack.c.bf16 %v4794, %v4791
        %v4852 = vpack.c.bf16 %v4795, %v4792
        %v4853 = vpack.c.bf16 %v4799, %v4796
        %v4854 = vpack.c.bf16 %v4800, %v4797
        %v4855 = vpack.c.bf16 %v4801, %v4798
        %v4856 = vpack.c.bf16 %v4805, %v4802
        %v4857 = vpack.c.bf16 %v4806, %v4803
        %v4858 = vpack.c.bf16 %v4807, %v4804
        %v4859 = vpack.c.bf16 %v4811, %v4808
        %v4860 = vpack.c.bf16 %v4812, %v4809
        %v4861 = vpack.c.bf16 %v4813, %v4810
        %v4862 = vpack.c.bf16 %v4817, %v4814
        %v4863 = vpack.c.bf16 %v4818, %v4815
        %v4864 = vpack.c.bf16 %v4819, %v4816
        %v4865 = vpack.c.bf16 %v4823, %v4820
        %v4866 = vpack.c.bf16 %v4824, %v4821
        %v4867 = vpack.c.bf16 %v4825, %v4822
        %v4868 = vpack.c.bf16 %v4826, %v4826
        %v4869 = vpack.c.bf16 %v4827, %v4827
        %v4870 = vpack.c.bf16 %v4828, %v4828
        %s4871 = scalar_lea.vmem [#allocation3], 72
        %v4872 = vld [vmem:[%s4871] sm:$0xf]
        %s4873 = scalar_lea.vmem %s3, 48
        %v4874 = vld [vmem:[%s4873] sm:$0xf]
        %4876 = vset.pattern.permute.xlu0 0
        %4877 = vperm.xlu0 %4876, %v4874
        %v4878 = vpop.permute.xlu0 %4877
        %v4882 = vunpack.c.l.s4 1983009808
        %v4883 = vunpack.c.0.s8 %v4882
        %v4884 = vlaneseq
        %v4885 = vshrl.u32 %v4884, 7
        %v4886 = vsub.s32 %v4883, %v4885
        %v4887 = vrot.slane %v4872, %v4886
        %v4888 = vcombine.high %v4887, %v4887
        %v4891 = vsel %vm1165, %v4888, 0
        %v4894 = vsel %vm515, %v4868, 0
        %v4897 = vsel %vm515, %v4869, 0
        %v4900 = vsel %vm515, %v4870, 0
        %4902 = vmatprep.subr.bf16.mxu0 %v4830
        %4903 = vmatpush1.bf16.msra.mxu0 %v4829
        %4904 = vmatprep.subr.bf16.mxu0 %v4833
        %4905 = vmatpush1.bf16.msra.mxu0 %v4832
        %4906 = vmatprep.subr.bf16.mxu0 %v4836
        %4907 = vmatpush1.bf16.msra.mxu0 %v4835
        %4908 = vmatprep.subr.bf16.mxu0 %v4839
        %4909 = vmatpush1.bf16.msra.mxu0 %v4838
        %4910 = vmatprep.subr.bf16.mxu0 %v4842
        %4911 = vmatpush1.bf16.msra.mxu0 %v4841
        %4912 = vmatprep.subr.bf16.mxu0 %v4845
        %4913 = vmatpush1.bf16.msra.mxu0 %v4844
        %4914 = vmatprep.subr.bf16.mxu0 %v4848
        %4915 = vmatpush1.bf16.msra.mxu0 %v4847
        %4916 = vmatprep.subr.bf16.mxu0 %v4851
        %4917 = vmatpush1.bf16.msra.mxu0 %v4850
        %4918 = vmatprep.subr.bf16.mxu0 %v4854
        %4919 = vmatpush1.bf16.msra.mxu0 %v4853
        %4920 = vmatprep.subr.bf16.mxu0 %v4857
        %4921 = vmatpush1.bf16.msra.mxu0 %v4856
        %4922 = vmatprep.subr.bf16.mxu0 %v4860
        %4923 = vmatpush1.bf16.msra.mxu0 %v4859
        %4924 = vmatprep.subr.bf16.mxu0 %v4863
        %4925 = vmatpush1.bf16.msra.mxu0 %v4862
        %4926 = vmatprep.subr.bf16.mxu0 %v4866
        %4927 = vmatpush1.bf16.msra.mxu0 %v4865
        %4928 = vmatprep.subr.bf16.mxu0 %v4897
        %4929 = vmatpush1.bf16.msra.mxu0 %v4894
        %4930 = vmatprep.subr.bf16.mxu0 0
        %4931 = vmatpush1.bf16.msra.mxu0 0
        %4932 = vmatprep.subr.bf16.mxu0 0
        %4933 = vmatpush1.bf16.msra.mxu0 0
        %4934 = vmatprep.mubr.bf16.mxu0 %v4891
        %4935 = vmatmul.mubr.bf16.gmra.mrb[0].mxu0 %v4887
        %v4936 = vpop.f32.mrb[0].mxu0
        %v4937 = vadd.f32 %v4878, %v4936
        %v4938 = vpop.f32.mrb[0].mxu0
        %v4939 = vadd.f32 %v4878, %v4938
        %v4940 = vpop.f32.mrb[0].mxu0
        %v4941 = vpop.f32.mrb[0].mxu0
        %4942 = vdwg.mxu0
        %4943 = vmatprep.subr.bf16.mxu0 0
        %4944 = vmatpush1.bf16.msra.mxu0 %v4831
        %4945 = vmatprep.subr.bf16.mxu0 0
        %4946 = vmatpush1.bf16.msra.mxu0 %v4834
        %4947 = vmatprep.subr.bf16.mxu0 0
        %4948 = vmatpush1.bf16.msra.mxu0 %v4837
        %4949 = vmatprep.subr.bf16.mxu0 0
        %4950 = vmatpush1.bf16.msra.mxu0 %v4840
        %4951 = vmatprep.subr.bf16.mxu0 0
        %4952 = vmatpush1.bf16.msra.mxu0 %v4843
        %4953 = vmatprep.subr.bf16.mxu0 0
        %4954 = vmatpush1.bf16.msra.mxu0 %v4846
        %4955 = vmatprep.subr.bf16.mxu0 0
        %4956 = vmatpush1.bf16.msra.mxu0 %v4849
        %4957 = vmatprep.subr.bf16.mxu0 0
        %4958 = vmatpush1.bf16.msra.mxu0 %v4852
        %4959 = vmatprep.subr.bf16.mxu0 0
        %4960 = vmatpush1.bf16.msra.mxu0 %v4855
        %4961 = vmatprep.subr.bf16.mxu0 0
        %4962 = vmatpush1.bf16.msra.mxu0 %v4858
        %4963 = vmatprep.subr.bf16.mxu0 0
        %4964 = vmatpush1.bf16.msra.mxu0 %v4861
        %4965 = vmatprep.subr.bf16.mxu0 0
        %4966 = vmatpush1.bf16.msra.mxu0 %v4864
        %4967 = vmatprep.subr.bf16.mxu0 0
        %4968 = vmatpush1.bf16.msra.mxu0 %v4867
        %4969 = vmatprep.subr.bf16.mxu0 0
        %4970 = vmatpush1.bf16.msra.mxu0 %v4900
        %4971 = vmatprep.subr.bf16.mxu0 0
        %4972 = vmatpush1.bf16.msra.mxu0 0
        %4973 = vmatprep.subr.bf16.mxu0 0
        %4974 = vmatpush1.bf16.msra.mxu0 0
        %4975 = vmatprep.mubr.bf16.mxu0 %v4891
        %4976 = vmatmul.mubr.bf16.gmra.mrb[0].mxu0 %v4887
        %v4977 = vpop.f32.mrb[0].mxu0
        %v4978 = vadd.f32 %v4878, %v4977
        %v4979 = vpop.f32.mrb[0].mxu0
        %v4980 = vpop.f32.mrb[0].mxu0
        %v4981 = vpop.f32.mrb[0].mxu0
        %4982 = vdwg.mxu0
        %v4983 = vmul.f32 %v4937, 0.01
        %v4984 = vmul.f32 %v4939, 0.01
        %v4985 = vmul.f32 %v4978, 0.01
        %v4986 = vmax.f32 %v4937, %v4983
        %v4987 = vmax.f32 %v4939, %v4984
        %v4988 = vmax.f32 %v4978, %v4985
        %v4989 = vmul.f32 %v4986, %v616
        %v4990 = vmul.f32 %v4987, %v620
        %v4991 = vmul.f32 %v4988, %v624
        %4992 = vrot.lane.b32.xlu0 %v4989, 19
        %v4993 = vpop.permute.xlu0 %4992
        %4994 = vrot.lane.b32.xlu0 %v4990, 19
        %v4995 = vpop.permute.xlu0 %4994
        %4996 = vrot.lane.b32.xlu0 %v4991, 19
        %v4997 = vpop.permute.xlu0 %4996
        %v4998 = vsel %vm361, %v4995, %v4997
        %v4999 = vsel %vm361, %v4993, %v4995
        %v5000 = vsel %vm361, %v4997, %v4993
        %5001 = vst [vmem:[#allocation2 + $0x288] sm:$0xf] %v5000
        %5002 = vst [vmem:[#allocation2 + $0x290] sm:$0xf] %v4999
        %5003 = vst [vmem:[#allocation2 + $0x298] sm:$0xf] %v4998
        %5004 = vrot.lane.b32.xlu0 %v4989, 18
        %v5005 = vpop.permute.xlu0 %5004
        %5006 = vrot.lane.b32.xlu0 %v4990, 18
        %v5007 = vpop.permute.xlu0 %5006
        %5008 = vrot.lane.b32.xlu0 %v4991, 18
        %v5009 = vpop.permute.xlu0 %5008
        %v5010 = vsel %vm374, %v5007, %v5009
        %v5011 = vsel %vm374, %v5005, %v5007
        %v5012 = vsel %vm374, %v5009, %v5005
        %5013 = vst [vmem:[#allocation2 + $0x2a0] sm:$0xf] %v5012
        %5014 = vst [vmem:[#allocation2 + $0x2a8] sm:$0xf] %v5011
        %5015 = vst [vmem:[#allocation2 + $0x2b0] sm:$0xf] %v5010
        %5016 = vrot.lane.b32.xlu0 %v4989, 17
        %v5017 = vpop.permute.xlu0 %5016
        %5018 = vrot.lane.b32.xlu0 %v4990, 17
        %v5019 = vpop.permute.xlu0 %5018
        %5020 = vrot.lane.b32.xlu0 %v4991, 17
        %v5021 = vpop.permute.xlu0 %5020
        %v5022 = vsel %vm387, %v5019, %v5021
        %v5023 = vsel %vm387, %v5017, %v5019
        %v5024 = vsel %vm387, %v5021, %v5017
        %5025 = vst [vmem:[#allocation2 + $0x2b8] sm:$0xf] %v5024
        %5026 = vst [vmem:[#allocation2 + $0x2c0] sm:$0xf] %v5023
        %5027 = vst [vmem:[#allocation2 + $0x2c8] sm:$0xf] %v5022
        %5028 = vrot.lane.b32.xlu0 %v4989, 1
        %v5029 = vpop.permute.xlu0 %5028
        %5030 = vrot.lane.b32.xlu0 %v4990, 1
        %v5031 = vpop.permute.xlu0 %5030
        %5032 = vrot.lane.b32.xlu0 %v4991, 1
        %v5033 = vpop.permute.xlu0 %5032
        %v5034 = vsel %vm400, %v5031, %v5033
        %v5035 = vsel %vm400, %v5029, %v5031
        %v5036 = vsel %vm400, %v5033, %v5029
        %5037 = vst [vmem:[#allocation2 + $0x2d0] sm:$0xf] %v5036
        %5038 = vst [vmem:[#allocation2 + $0x2d8] sm:$0xf] %v5035
        %5039 = vst [vmem:[#allocation2 + $0x2e0] sm:$0xf] %v5034
        %5040 = vst [vmem:[#allocation2 + $0x2e8] sm:$0xf] %v4989
        %5041 = vst [vmem:[#allocation2 + $0x2f0] sm:$0xf] %v4990
        %5042 = vst [vmem:[#allocation2 + $0x2f8] sm:$0xf] %v4991
        %5043 = vrot.lane.b32.xlu0 %v4989, 127
        %v5044 = vpop.permute.xlu0 %5043
        %5045 = vrot.lane.b32.xlu0 %v4990, 127
        %v5046 = vpop.permute.xlu0 %5045
        %5047 = vrot.lane.b32.xlu0 %v4991, 127
        %v5048 = vpop.permute.xlu0 %5047
        %v5049 = vsel %vm416, %v5046, %v5048
        %v5050 = vsel %vm416, %v5044, %v5046
        %v5051 = vsel %vm416, %v5048, %v5044
        %5052 = vst [vmem:[#allocation2 + $0x300] sm:$0xf] %v5050
        %5053 = vst [vmem:[#allocation2 + $0x308] sm:$0xf] %v5049
        %5054 = vst [vmem:[#allocation2 + $0x310] sm:$0xf] %v5051
        %5055 = vrot.lane.b32.xlu0 %v4989, 111
        %v5056 = vpop.permute.xlu0 %5055
        %5057 = vrot.lane.b32.xlu0 %v4990, 111
        %v5058 = vpop.permute.xlu0 %5057
        %5059 = vrot.lane.b32.xlu0 %v4991, 111
        %v5060 = vpop.permute.xlu0 %5059
        %v5061 = vsel %vm429, %v5058, %v5060
        %v5062 = vsel %vm429, %v5056, %v5058
        %v5063 = vsel %vm429, %v5060, %v5056
        %5064 = vst [vmem:[#allocation2 + $0x318] sm:$0xf] %v5062
        %5065 = vst [vmem:[#allocation2 + $0x320] sm:$0xf] %v5061
        %5066 = vst [vmem:[#allocation2 + $0x328] sm:$0xf] %v5063
        %5067 = vrot.lane.b32.xlu0 %v4989, 110
        %v5068 = vpop.permute.xlu0 %5067
        %5069 = vrot.lane.b32.xlu0 %v4990, 110
        %v5070 = vpop.permute.xlu0 %5069
        %5071 = vrot.lane.b32.xlu0 %v4991, 110
        %v5072 = vpop.permute.xlu0 %5071
        %v5073 = vsel %vm442, %v5070, %v5072
        %v5074 = vsel %vm442, %v5068, %v5070
        %v5075 = vsel %vm442, %v5072, %v5068
        %5076 = vst [vmem:[#allocation2 + $0x330] sm:$0xf] %v5074
        %5077 = vst [vmem:[#allocation2 + $0x338] sm:$0xf] %v5073
        %5078 = vst [vmem:[#allocation2 + $0x340] sm:$0xf] %v5075
        %5079 = vrot.lane.b32.xlu0 %v4989, 109
        %v5080 = vpop.permute.xlu0 %5079
        %5081 = vrot.lane.b32.xlu0 %v4990, 109
        %v5082 = vpop.permute.xlu0 %5081
        %5083 = vrot.lane.b32.xlu0 %v4991, 109
        %v5084 = vpop.permute.xlu0 %5083
        %v5085 = vsel %vm455, %v5082, %v5084
        %v5086 = vsel %vm455, %v5080, %v5082
        %v5087 = vsel %vm455, %v5084, %v5080
        %5088 = vst [vmem:[#allocation2 + $0x348] sm:$0xf] %v5086
        %5089 = vst [vmem:[#allocation2 + $0x350] sm:$0xf] %v5085
        %5090 = vst [vmem:[#allocation2 + $0x358] sm:$0xf] %v5087
        %v5091 = vld [vmem:[#allocation2] sm:$0xff]
        %v5092 = vld [vmem:[#allocation2 + $0x8] sm:$0xff]
        %v5093 = vld [vmem:[#allocation2 + $0x10] sm:$0xff]
        %v5094 = vld [vmem:[#allocation2 + $0x18] sm:$0xff]
        %v5095 = vld [vmem:[#allocation2 + $0x20] sm:$0xff]
        %v5096 = vld [vmem:[#allocation2 + $0x28] sm:$0xff]
        %v5097 = vld [vmem:[#allocation2 + $0x30] sm:$0xff]
        %v5098 = vld [vmem:[#allocation2 + $0x38] sm:$0xff]
        %v5099 = vld [vmem:[#allocation2 + $0x40] sm:$0xff]
        %v5100 = vld [vmem:[#allocation2 + $0x48] sm:$0xff]
        %v5101 = vld [vmem:[#allocation2 + $0x50] sm:$0xff]
        %v5102 = vld [vmem:[#allocation2 + $0x58] sm:$0xff]
        %v5103 = vld [vmem:[#allocation2 + $0x60] sm:$0xff]
        %v5104 = vld [vmem:[#allocation2 + $0x68] sm:$0xff]
        %v5105 = vld [vmem:[#allocation2 + $0x70] sm:$0xff]
        %v5106 = vld [vmem:[#allocation2 + $0x78] sm:$0xff]
        %v5107 = vld [vmem:[#allocation2 + $0x80] sm:$0xff]
        %v5108 = vld [vmem:[#allocation2 + $0x88] sm:$0xff]
        %v5109 = vld [vmem:[#allocation2 + $0x90] sm:$0xff]
        %v5110 = vld [vmem:[#allocation2 + $0x98] sm:$0xff]
        %v5111 = vld [vmem:[#allocation2 + $0xa0] sm:$0xff]
        %v5112 = vld [vmem:[#allocation2 + $0xa8] sm:$0xff]
        %v5113 = vld [vmem:[#allocation2 + $0xb0] sm:$0xff]
        %v5114 = vld [vmem:[#allocation2 + $0xb8] sm:$0xff]
        %v5115 = vld [vmem:[#allocation2 + $0xc0] sm:$0xff]
        %v5116 = vld [vmem:[#allocation2 + $0xc8] sm:$0xff]
        %v5117 = vld [vmem:[#allocation2 + $0xd0] sm:$0xff]
        %v5118 = vld [vmem:[#allocation2 + $0xd8] sm:$0xff]
        %v5119 = vld [vmem:[#allocation2 + $0xe0] sm:$0xff]
        %v5120 = vld [vmem:[#allocation2 + $0xe8] sm:$0xff]
        %v5121 = vld [vmem:[#allocation2 + $0xf0] sm:$0xff]
        %v5122 = vld [vmem:[#allocation2 + $0xf8] sm:$0xff]
        %v5123 = vld [vmem:[#allocation2 + $0x100] sm:$0xff]
        %v5124 = vld [vmem:[#allocation2 + $0x108] sm:$0xff]
        %v5125 = vld [vmem:[#allocation2 + $0x110] sm:$0xff]
        %v5126 = vld [vmem:[#allocation2 + $0x118] sm:$0xff]
        %v5127 = vld [vmem:[#allocation2 + $0x120] sm:$0xff]
        %v5128 = vld [vmem:[#allocation2 + $0x128] sm:$0xff]
        %v5129 = vld [vmem:[#allocation2 + $0x130] sm:$0xff]
        %v5130 = vld [vmem:[#allocation2 + $0x138] sm:$0xff]
        %v5131 = vld [vmem:[#allocation2 + $0x140] sm:$0xff]
        %v5132 = vld [vmem:[#allocation2 + $0x148] sm:$0xff]
        %v5133 = vld [vmem:[#allocation2 + $0x150] sm:$0xff]
        %v5134 = vld [vmem:[#allocation2 + $0x158] sm:$0xff]
        %v5135 = vld [vmem:[#allocation2 + $0x160] sm:$0xff]
        %v5136 = vld [vmem:[#allocation2 + $0x168] sm:$0xff]
        %v5137 = vld [vmem:[#allocation2 + $0x170] sm:$0xff]
        %v5138 = vld [vmem:[#allocation2 + $0x178] sm:$0xff]
        %v5139 = vld [vmem:[#allocation2 + $0x180] sm:$0xff]
        %v5140 = vld [vmem:[#allocation2 + $0x188] sm:$0xff]
        %v5141 = vld [vmem:[#allocation2 + $0x190] sm:$0xff]
        %v5142 = vld [vmem:[#allocation2 + $0x198] sm:$0xff]
        %v5143 = vld [vmem:[#allocation2 + $0x1a0] sm:$0xff]
        %v5144 = vld [vmem:[#allocation2 + $0x1a8] sm:$0xff]
        %v5145 = vld [vmem:[#allocation2 + $0x1b0] sm:$0xff]
        %v5146 = vld [vmem:[#allocation2 + $0x1b8] sm:$0xff]
        %v5147 = vld [vmem:[#allocation2 + $0x1c0] sm:$0xff]
        %v5148 = vld [vmem:[#allocation2 + $0x1c8] sm:$0xff]
        %v5149 = vld [vmem:[#allocation2 + $0x1d0] sm:$0xff]
        %v5150 = vld [vmem:[#allocation2 + $0x1d8] sm:$0xff]
        %v5151 = vld [vmem:[#allocation2 + $0x1e0] sm:$0xff]
        %v5152 = vld [vmem:[#allocation2 + $0x1e8] sm:$0xff]
        %v5153 = vld [vmem:[#allocation2 + $0x1f0] sm:$0xff]
        %v5154 = vld [vmem:[#allocation2 + $0x1f8] sm:$0xff]
        %v5155 = vld [vmem:[#allocation2 + $0x200] sm:$0xff]
        %v5156 = vld [vmem:[#allocation2 + $0x208] sm:$0xff]
        %v5157 = vld [vmem:[#allocation2 + $0x210] sm:$0xff]
        %v5158 = vld [vmem:[#allocation2 + $0x218] sm:$0xff]
        %v5159 = vld [vmem:[#allocation2 + $0x220] sm:$0xff]
        %v5160 = vld [vmem:[#allocation2 + $0x228] sm:$0xff]
        %v5161 = vld [vmem:[#allocation2 + $0x230] sm:$0xff]
        %v5162 = vld [vmem:[#allocation2 + $0x238] sm:$0xff]
        %v5163 = vld [vmem:[#allocation2 + $0x240] sm:$0xff]
        %v5164 = vld [vmem:[#allocation2 + $0x248] sm:$0xff]
        %v5165 = vld [vmem:[#allocation2 + $0x250] sm:$0xff]
        %v5166 = vld [vmem:[#allocation2 + $0x258] sm:$0xff]
        %v5167 = vld [vmem:[#allocation2 + $0x260] sm:$0xff]
        %v5168 = vld [vmem:[#allocation2 + $0x268] sm:$0xff]
        %v5169 = vld [vmem:[#allocation2 + $0x270] sm:$0xff]
        %v5170 = vld [vmem:[#allocation2 + $0x278] sm:$0xff]
        %v5171 = vld [vmem:[#allocation2 + $0x280] sm:$0xff]
        %v5172 = vld [vmem:[#allocation2 + $0x288] sm:$0xff]
        %v5173 = vld [vmem:[#allocation2 + $0x290] sm:$0xff]
        %v5174 = vld [vmem:[#allocation2 + $0x298] sm:$0xff]
        %v5175 = vld [vmem:[#allocation2 + $0x2a0] sm:$0xff]
        %v5176 = vld [vmem:[#allocation2 + $0x2a8] sm:$0xff]
        %v5177 = vld [vmem:[#allocation2 + $0x2b0] sm:$0xff]
        %v5178 = vld [vmem:[#allocation2 + $0x2b8] sm:$0xff]
        %v5179 = vld [vmem:[#allocation2 + $0x2c0] sm:$0xff]
        %v5180 = vld [vmem:[#allocation2 + $0x2c8] sm:$0xff]
        %v5181 = vld [vmem:[#allocation2 + $0x2d0] sm:$0xff]
        %v5182 = vld [vmem:[#allocation2 + $0x2d8] sm:$0xff]
        %v5183 = vld [vmem:[#allocation2 + $0x2e0] sm:$0xff]
        %v5184 = vld [vmem:[#allocation2 + $0x2e8] sm:$0xff]
        %v5185 = vld [vmem:[#allocation2 + $0x2f0] sm:$0xff]
        %v5186 = vld [vmem:[#allocation2 + $0x2f8] sm:$0xff]
        %v5187 = vld [vmem:[#allocation2 + $0x300] sm:$0xff]
        %v5188 = vld [vmem:[#allocation2 + $0x308] sm:$0xff]
        %v5189 = vld [vmem:[#allocation2 + $0x310] sm:$0xff]
        %v5190 = vld [vmem:[#allocation2 + $0x318] sm:$0xff]
        %v5191 = vld [vmem:[#allocation2 + $0x320] sm:$0xff]
        %v5192 = vld [vmem:[#allocation2 + $0x328] sm:$0xff]
        %v5193 = vld [vmem:[#allocation2 + $0x330] sm:$0xff]
        %v5194 = vld [vmem:[#allocation2 + $0x338] sm:$0xff]
        %v5195 = vld [vmem:[#allocation2 + $0x340] sm:$0xff]
        %v5196 = vld [vmem:[#allocation2 + $0x348] sm:$0xff]
        %v5197 = vld [vmem:[#allocation2 + $0x350] sm:$0xff]
        %v5198 = vld [vmem:[#allocation2 + $0x358] sm:$0xff]
        %v5199 = vpack.c.bf16 %v5094, %v5091
        %v5200 = vpack.c.bf16 %v5095, %v5092
        %v5201 = vpack.c.bf16 %v5096, %v5093
        %v5202 = vpack.c.bf16 %v5100, %v5097
        %v5203 = vpack.c.bf16 %v5101, %v5098
        %v5204 = vpack.c.bf16 %v5102, %v5099
        %v5205 = vpack.c.bf16 %v5106, %v5103
        %v5206 = vpack.c.bf16 %v5107, %v5104
        %v5207 = vpack.c.bf16 %v5108, %v5105
        %v5208 = vpack.c.bf16 %v5112, %v5109
        %v5209 = vpack.c.bf16 %v5113, %v5110
        %v5210 = vpack.c.bf16 %v5114, %v5111
        %v5211 = vpack.c.bf16 %v5118, %v5115
        %v5212 = vpack.c.bf16 %v5119, %v5116
        %v5213 = vpack.c.bf16 %v5120, %v5117
        %v5214 = vpack.c.bf16 %v5124, %v5121
        %v5215 = vpack.c.bf16 %v5125, %v5122
        %v5216 = vpack.c.bf16 %v5126, %v5123
        %v5217 = vpack.c.bf16 %v5130, %v5127
        %v5218 = vpack.c.bf16 %v5131, %v5128
        %v5219 = vpack.c.bf16 %v5132, %v5129
        %v5220 = vpack.c.bf16 %v5136, %v5133
        %v5221 = vpack.c.bf16 %v5137, %v5134
        %v5222 = vpack.c.bf16 %v5138, %v5135
        %v5223 = vpack.c.bf16 %v5142, %v5139
        %v5224 = vpack.c.bf16 %v5143, %v5140
        %v5225 = vpack.c.bf16 %v5144, %v5141
        %v5226 = vpack.c.bf16 %v5148, %v5145
        %v5227 = vpack.c.bf16 %v5149, %v5146
        %v5228 = vpack.c.bf16 %v5150, %v5147
        %v5229 = vpack.c.bf16 %v5154, %v5151
        %v5230 = vpack.c.bf16 %v5155, %v5152
        %v5231 = vpack.c.bf16 %v5156, %v5153
        %v5232 = vpack.c.bf16 %v5160, %v5157
        %v5233 = vpack.c.bf16 %v5161, %v5158
        %v5234 = vpack.c.bf16 %v5162, %v5159
        %v5235 = vpack.c.bf16 %v5166, %v5163
        %v5236 = vpack.c.bf16 %v5167, %v5164
        %v5237 = vpack.c.bf16 %v5168, %v5165
        %v5238 = vpack.c.bf16 %v5172, %v5169
        %v5239 = vpack.c.bf16 %v5173, %v5170
        %v5240 = vpack.c.bf16 %v5174, %v5171
        %v5241 = vpack.c.bf16 %v5178, %v5175
        %v5242 = vpack.c.bf16 %v5179, %v5176
        %v5243 = vpack.c.bf16 %v5180, %v5177
        %v5244 = vpack.c.bf16 %v5184, %v5181
        %v5245 = vpack.c.bf16 %v5185, %v5182
        %v5246 = vpack.c.bf16 %v5186, %v5183
        %v5247 = vpack.c.bf16 %v5190, %v5187
        %v5248 = vpack.c.bf16 %v5191, %v5188
        %v5249 = vpack.c.bf16 %v5192, %v5189
        %v5250 = vpack.c.bf16 %v5196, %v5193
        %v5251 = vpack.c.bf16 %v5197, %v5194
        %v5252 = vpack.c.bf16 %v5198, %v5195
        %s5253 = scalar_lea.vmem [#allocation3], 78
        %v5254 = vld [vmem:[%s5253] sm:$0x3f]
        %s5255 = scalar_lea.vmem %s3, 52
        %v5256 = vld [vmem:[%s5255] sm:$0xf]
        %5258 = vset.pattern.permute.xlu0 0
        %5259 = vperm.xlu0 %5258, %v5256
        %v5260 = vpop.permute.xlu0 %5259
        %v5263 = vcombine.high %v5254, %v5254
        %v5265 = vunpack.c.l.s4 1983009808
        %v5266 = vunpack.c.0.s8 %v5265
        %v5267 = vlaneseq
        %v5268 = vshrl.u32 %v5267, 7
        %v5269 = vsub.s32 %v5266, %v5268
        %v5270 = vrot.slane %v5254, %v5269
        %v5272 = vunpack.c.l.s4 1983009808
        %v5273 = vunpack.c.0.s8 %v5272
        %v5274 = vlaneseq
        %v5275 = vshrl.u32 %v5274, 7
        %v5276 = vsub.s32 %v5273, %v5275
        %v5277 = vrot.slane %v5263, %v5276
        %v5278 = vcombine.high %v5270, %v5270
        %v5282 = vsel %vm1557, %v5277, 0
        %5284 = vmatprep.subr.bf16.mxu0 %v5200
        %5285 = vmatpush1.bf16.msra.mxu0 %v5199
        %5286 = vmatprep.subr.bf16.mxu0 %v5203
        %5287 = vmatpush1.bf16.msra.mxu0 %v5202
        %5288 = vmatprep.subr.bf16.mxu0 %v5206
        %5289 = vmatpush1.bf16.msra.mxu0 %v5205
        %5290 = vmatprep.subr.bf16.mxu0 %v5209
        %5291 = vmatpush1.bf16.msra.mxu0 %v5208
        %5292 = vmatprep.subr.bf16.mxu0 %v5212
        %5293 = vmatpush1.bf16.msra.mxu0 %v5211
        %5294 = vmatprep.subr.bf16.mxu0 %v5215
        %5295 = vmatpush1.bf16.msra.mxu0 %v5214
        %5296 = vmatprep.subr.bf16.mxu0 %v5218
        %5297 = vmatpush1.bf16.msra.mxu0 %v5217
        %5298 = vmatprep.subr.bf16.mxu0 %v5221
        %5299 = vmatpush1.bf16.msra.mxu0 %v5220
        %5300 = vmatprep.subr.bf16.mxu0 %v5224
        %5301 = vmatpush1.bf16.msra.mxu0 %v5223
        %5302 = vmatprep.subr.bf16.mxu0 %v5227
        %5303 = vmatpush1.bf16.msra.mxu0 %v5226
        %5304 = vmatprep.subr.bf16.mxu0 %v5230
        %5305 = vmatpush1.bf16.msra.mxu0 %v5229
        %5306 = vmatprep.subr.bf16.mxu0 %v5233
        %5307 = vmatpush1.bf16.msra.mxu0 %v5232
        %5308 = vmatprep.subr.bf16.mxu0 %v5236
        %5309 = vmatpush1.bf16.msra.mxu0 %v5235
        %5310 = vmatprep.subr.bf16.mxu0 %v5239
        %5311 = vmatpush1.bf16.msra.mxu0 %v5238
        %5312 = vmatprep.subr.bf16.mxu0 %v5242
        %5313 = vmatpush1.bf16.msra.mxu0 %v5241
        %5314 = vmatprep.subr.bf16.mxu0 %v5245
        %5315 = vmatpush1.bf16.msra.mxu0 %v5244
        %5316 = vmatprep.mubr.bf16.mxu0 %v5278
        %5317 = vmatmul.mubr.bf16.gmra.mrb[0].mxu0 %v5270
        %v5318 = vpop.f32.mrb[0].mxu0
        %v5319 = vadd.f32 %v5260, %v5318
        %v5320 = vpop.f32.mrb[0].mxu0
        %v5321 = vadd.f32 %v5260, %v5320
        %v5322 = vpop.f32.mrb[0].mxu0
        %v5323 = vpop.f32.mrb[0].mxu0
        %5324 = vdwg.mxu0
        %5325 = vmatprep.subr.bf16.mxu0 %v5248
        %5326 = vmatpush1.bf16.msra.mxu0 %v5247
        %5327 = vmatprep.subr.bf16.mxu0 %v5251
        %5328 = vmatpush1.bf16.msra.mxu0 %v5250
        %5329 = vmatprep.subr.bf16.mxu0 0
        %5330 = vmatpush1.bf16.msra.mxu0 0
        %5331 = vmatprep.subr.bf16.mxu0 0
        %5332 = vmatpush1.bf16.msra.mxu0 0
        %5333 = vmatprep.subr.bf16.mxu0 0
        %5334 = vmatpush1.bf16.msra.mxu0 0
        %5335 = vmatprep.subr.bf16.mxu0 0
        %5336 = vmatpush1.bf16.msra.mxu0 0
        %5337 = vmatprep.subr.bf16.mxu0 0
        %5338 = vmatpush1.bf16.msra.mxu0 0
        %5339 = vmatprep.subr.bf16.mxu0 0
        %5340 = vmatpush1.bf16.msra.mxu0 0
        %5341 = vmatprep.subr.bf16.mxu0 0
        %5342 = vmatpush1.bf16.msra.mxu0 0
        %5343 = vmatprep.subr.bf16.mxu0 0
        %5344 = vmatpush1.bf16.msra.mxu0 0
        %5345 = vmatprep.subr.bf16.mxu0 0
        %5346 = vmatpush1.bf16.msra.mxu0 0
        %5347 = vmatprep.subr.bf16.mxu0 0
        %5348 = vmatpush1.bf16.msra.mxu0 0
        %5349 = vmatprep.subr.bf16.mxu0 0
        %5350 = vmatpush1.bf16.msra.mxu0 0
        %5351 = vmatprep.subr.bf16.mxu0 0
        %5352 = vmatpush1.bf16.msra.mxu0 0
        %5353 = vmatprep.subr.bf16.mxu0 0
        %5354 = vmatpush1.bf16.msra.mxu0 0
        %5355 = vmatprep.subr.bf16.mxu0 0
        %5356 = vmatpush1.bf16.msra.mxu0 0
        %5357 = vmatprep.mubr.bf16.mxu0 0
        %5358 = vmatmul.mubr.bf16.gmra.mrb[0].mxu0 %v5282
        %v5359 = vpop.f32.mrb[0].mxu0
        %v5360 = vadd.f32 %v5319, %v5359
        %v5361 = vpop.f32.mrb[0].mxu0
        %v5362 = vadd.f32 %v5321, %v5361
        %v5363 = vpop.f32.mrb[0].mxu0
        %v5364 = vpop.f32.mrb[0].mxu0
        %5365 = vdwg.mxu0
        %5366 = vmatprep.subr.bf16.mxu0 0
        %5367 = vmatpush1.bf16.msra.mxu0 %v5201
        %5368 = vmatprep.subr.bf16.mxu0 0
        %5369 = vmatpush1.bf16.msra.mxu0 %v5204
        %5370 = vmatprep.subr.bf16.mxu0 0
        %5371 = vmatpush1.bf16.msra.mxu0 %v5207
        %5372 = vmatprep.subr.bf16.mxu0 0
        %5373 = vmatpush1.bf16.msra.mxu0 %v5210
        %5374 = vmatprep.subr.bf16.mxu0 0
        %5375 = vmatpush1.bf16.msra.mxu0 %v5213
        %5376 = vmatprep.subr.bf16.mxu0 0
        %5377 = vmatpush1.bf16.msra.mxu0 %v5216
        %5378 = vmatprep.subr.bf16.mxu0 0
        %5379 = vmatpush1.bf16.msra.mxu0 %v5219
        %5380 = vmatprep.subr.bf16.mxu0 0
        %5381 = vmatpush1.bf16.msra.mxu0 %v5222
        %5382 = vmatprep.subr.bf16.mxu0 0
        %5383 = vmatpush1.bf16.msra.mxu0 %v5225
        %5384 = vmatprep.subr.bf16.mxu0 0
        %5385 = vmatpush1.bf16.msra.mxu0 %v5228
        %5386 = vmatprep.subr.bf16.mxu0 0
        %5387 = vmatpush1.bf16.msra.mxu0 %v5231
        %5388 = vmatprep.subr.bf16.mxu0 0
        %5389 = vmatpush1.bf16.msra.mxu0 %v5234
        %5390 = vmatprep.subr.bf16.mxu0 0
        %5391 = vmatpush1.bf16.msra.mxu0 %v5237
        %5392 = vmatprep.subr.bf16.mxu0 0
        %5393 = vmatpush1.bf16.msra.mxu0 %v5240
        %5394 = vmatprep.subr.bf16.mxu0 0
        %5395 = vmatpush1.bf16.msra.mxu0 %v5243
        %5396 = vmatprep.subr.bf16.mxu0 0
        %5397 = vmatpush1.bf16.msra.mxu0 %v5246
        %5398 = vmatprep.mubr.bf16.mxu0 %v5278
        %5399 = vmatmul.mubr.bf16.gmra.mrb[0].mxu0 %v5270
        %v5400 = vpop.f32.mrb[0].mxu0
        %v5401 = vadd.f32 %v5260, %v5400
        %v5402 = vpop.f32.mrb[0].mxu0
        %v5403 = vpop.f32.mrb[0].mxu0
        %v5404 = vpop.f32.mrb[0].mxu0
        %5405 = vdwg.mxu0
        %5406 = vmatprep.subr.bf16.mxu0 0
        %5407 = vmatpush1.bf16.msra.mxu0 %v5249
        %5408 = vmatprep.subr.bf16.mxu0 0
        %5409 = vmatpush1.bf16.msra.mxu0 %v5252
        %5410 = vmatprep.subr.bf16.mxu0 0
        %5411 = vmatpush1.bf16.msra.mxu0 0
        %5412 = vmatprep.subr.bf16.mxu0 0
        %5413 = vmatpush1.bf16.msra.mxu0 0
        %5414 = vmatprep.subr.bf16.mxu0 0
        %5415 = vmatpush1.bf16.msra.mxu0 0
        %5416 = vmatprep.subr.bf16.mxu0 0
        %5417 = vmatpush1.bf16.msra.mxu0 0
        %5418 = vmatprep.subr.bf16.mxu0 0
        %5419 = vmatpush1.bf16.msra.mxu0 0
        %5420 = vmatprep.subr.bf16.mxu0 0
        %5421 = vmatpush1.bf16.msra.mxu0 0
        %5422 = vmatprep.subr.bf16.mxu0 0
        %5423 = vmatpush1.bf16.msra.mxu0 0
        %5424 = vmatprep.subr.bf16.mxu0 0
        %5425 = vmatpush1.bf16.msra.mxu0 0
        %5426 = vmatprep.subr.bf16.mxu0 0
        %5427 = vmatpush1.bf16.msra.mxu0 0
        %5428 = vmatprep.subr.bf16.mxu0 0
        %5429 = vmatpush1.bf16.msra.mxu0 0
        %5430 = vmatprep.subr.bf16.mxu0 0
        %5431 = vmatpush1.bf16.msra.mxu0 0
        %5432 = vmatprep.subr.bf16.mxu0 0
        %5433 = vmatpush1.bf16.msra.mxu0 0
        %5434 = vmatprep.subr.bf16.mxu0 0
        %5435 = vmatpush1.bf16.msra.mxu0 0
        %5436 = vmatprep.subr.bf16.mxu0 0
        %5437 = vmatpush1.bf16.msra.mxu0 0
        %5438 = vmatprep.mubr.bf16.mxu0 0
        %5439 = vmatmul.mubr.bf16.gmra.mrb[0].mxu0 %v5282
        %v5440 = vpop.f32.mrb[0].mxu0
        %v5441 = vadd.f32 %v5401, %v5440
        %v5442 = vpop.f32.mrb[0].mxu0
        %v5443 = vpop.f32.mrb[0].mxu0
        %v5444 = vpop.f32.mrb[0].mxu0
        %5445 = vdwg.mxu0
        %v5446 = vmul.f32 %v5360, 0.01
        %v5447 = vmul.f32 %v5362, 0.01
        %v5448 = vmul.f32 %v5441, 0.01
        %v5449 = vmax.f32 %v5360, %v5446
        %v5450 = vmax.f32 %v5362, %v5447
        %v5451 = vmax.f32 %v5441, %v5448
        %v5452 = vmul.f32 %v5449, %v616
        %v5453 = vmul.f32 %v5450, %v620
        %v5454 = vmul.f32 %v5451, %v624
        %5455 = vrot.lane.b32.xlu0 %v5452, 19
        %v5456 = vpop.permute.xlu0 %5455
        %5457 = vrot.lane.b32.xlu0 %v5453, 19
        %v5458 = vpop.permute.xlu0 %5457
        %5459 = vrot.lane.b32.xlu0 %v5454, 19
        %v5460 = vpop.permute.xlu0 %5459
        %v5461 = vsel %vm361, %v5458, %v5460
        %v5462 = vsel %vm361, %v5456, %v5458
        %v5463 = vsel %vm361, %v5460, %v5456
        %5464 = vst [vmem:[#allocation2 + $0x360] sm:$0xf] %v5463
        %5465 = vst [vmem:[#allocation2 + $0x368] sm:$0xf] %v5462
        %5466 = vst [vmem:[#allocation2 + $0x370] sm:$0xf] %v5461
        %5467 = vrot.lane.b32.xlu0 %v5452, 18
        %v5468 = vpop.permute.xlu0 %5467
        %5469 = vrot.lane.b32.xlu0 %v5453, 18
        %v5470 = vpop.permute.xlu0 %5469
        %5471 = vrot.lane.b32.xlu0 %v5454, 18
        %v5472 = vpop.permute.xlu0 %5471
        %v5473 = vsel %vm374, %v5470, %v5472
        %v5474 = vsel %vm374, %v5468, %v5470
        %v5475 = vsel %vm374, %v5472, %v5468
        %5476 = vst [vmem:[#allocation2 + $0x378] sm:$0xf] %v5475
        %5477 = vst [vmem:[#allocation2 + $0x380] sm:$0xf] %v5474
        %5478 = vst [vmem:[#allocation2 + $0x388] sm:$0xf] %v5473
        %5479 = vrot.lane.b32.xlu0 %v5452, 17
        %v5480 = vpop.permute.xlu0 %5479
        %5481 = vrot.lane.b32.xlu0 %v5453, 17
        %v5482 = vpop.permute.xlu0 %5481
        %5483 = vrot.lane.b32.xlu0 %v5454, 17
        %v5484 = vpop.permute.xlu0 %5483
        %v5485 = vsel %vm387, %v5482, %v5484
        %v5486 = vsel %vm387, %v5480, %v5482
        %v5487 = vsel %vm387, %v5484, %v5480
        %5488 = vst [vmem:[#allocation2 + $0x390] sm:$0xf] %v5487
        %5489 = vst [vmem:[#allocation2 + $0x398] sm:$0xf] %v5486
        %5490 = vst [vmem:[#allocation2 + $0x3a0] sm:$0xf] %v5485
        %5491 = vrot.lane.b32.xlu0 %v5452, 1
        %v5492 = vpop.permute.xlu0 %5491
        %5493 = vrot.lane.b32.xlu0 %v5453, 1
        %v5494 = vpop.permute.xlu0 %5493
        %5495 = vrot.lane.b32.xlu0 %v5454, 1
        %v5496 = vpop.permute.xlu0 %5495
        %v5497 = vsel %vm400, %v5494, %v5496
        %v5498 = vsel %vm400, %v5492, %v5494
        %v5499 = vsel %vm400, %v5496, %v5492
        %5500 = vst [vmem:[#allocation2 + $0x3a8] sm:$0xf] %v5499
        %5501 = vst [vmem:[#allocation2 + $0x3b0] sm:$0xf] %v5498
        %5502 = vst [vmem:[#allocation2 + $0x3b8] sm:$0xf] %v5497
        %5503 = vst [vmem:[#allocation2 + $0x3c0] sm:$0xf] %v5452
        %5504 = vst [vmem:[#allocation2 + $0x3c8] sm:$0xf] %v5453
        %5505 = vst [vmem:[#allocation2 + $0x3d0] sm:$0xf] %v5454
        %5506 = vrot.lane.b32.xlu0 %v5452, 127
        %v5507 = vpop.permute.xlu0 %5506
        %5508 = vrot.lane.b32.xlu0 %v5453, 127
        %v5509 = vpop.permute.xlu0 %5508
        %5510 = vrot.lane.b32.xlu0 %v5454, 127
        %v5511 = vpop.permute.xlu0 %5510
        %v5512 = vsel %vm416, %v5509, %v5511
        %v5513 = vsel %vm416, %v5507, %v5509
        %v5514 = vsel %vm416, %v5511, %v5507
        %5515 = vst [vmem:[#allocation2 + $0x3d8] sm:$0xf] %v5513
        %5516 = vst [vmem:[#allocation2 + $0x3e0] sm:$0xf] %v5512
        %5517 = vst [vmem:[#allocation2 + $0x3e8] sm:$0xf] %v5514
        %5518 = vrot.lane.b32.xlu0 %v5452, 111
        %v5519 = vpop.permute.xlu0 %5518
        %5520 = vrot.lane.b32.xlu0 %v5453, 111
        %v5521 = vpop.permute.xlu0 %5520
        %5522 = vrot.lane.b32.xlu0 %v5454, 111
        %v5523 = vpop.permute.xlu0 %5522
        %v5524 = vsel %vm429, %v5521, %v5523
        %v5525 = vsel %vm429, %v5519, %v5521
        %v5526 = vsel %vm429, %v5523, %v5519
        %5527 = vst [vmem:[#allocation2 + $0x3f0] sm:$0xf] %v5525
        %5528 = vst [vmem:[#allocation2 + $0x3f8] sm:$0xf] %v5524
        %5529 = vst [vmem:[#allocation2 + $0x400] sm:$0xf] %v5526
        %5530 = vrot.lane.b32.xlu0 %v5452, 110
        %v5531 = vpop.permute.xlu0 %5530
        %5532 = vrot.lane.b32.xlu0 %v5453, 110
        %v5533 = vpop.permute.xlu0 %5532
        %5534 = vrot.lane.b32.xlu0 %v5454, 110
        %v5535 = vpop.permute.xlu0 %5534
        %v5536 = vsel %vm442, %v5533, %v5535
        %v5537 = vsel %vm442, %v5531, %v5533
        %v5538 = vsel %vm442, %v5535, %v5531
        %5539 = vst [vmem:[#allocation2 + $0x408] sm:$0xf] %v5537
        %5540 = vst [vmem:[#allocation2 + $0x410] sm:$0xf] %v5536
        %5541 = vst [vmem:[#allocation2 + $0x418] sm:$0xf] %v5538
        %5542 = vrot.lane.b32.xlu0 %v5452, 109
        %v5543 = vpop.permute.xlu0 %5542
        %5544 = vrot.lane.b32.xlu0 %v5453, 109
        %v5545 = vpop.permute.xlu0 %5544
        %5546 = vrot.lane.b32.xlu0 %v5454, 109
        %v5547 = vpop.permute.xlu0 %5546
        %v5548 = vsel %vm455, %v5545, %v5547
        %v5549 = vsel %vm455, %v5543, %v5545
        %v5550 = vsel %vm455, %v5547, %v5543
        %5551 = vst [vmem:[#allocation2 + $0x420] sm:$0xf] %v5549
        %5552 = vst [vmem:[#allocation2 + $0x428] sm:$0xf] %v5548
        %5553 = vst [vmem:[#allocation2 + $0x430] sm:$0xf] %v5550
        %v5554 = vld [vmem:[#allocation2] sm:$0xff]
        %v5555 = vld [vmem:[#allocation2 + $0x8] sm:$0xff]
        %v5556 = vld [vmem:[#allocation2 + $0x10] sm:$0xff]
        %v5557 = vld [vmem:[#allocation2 + $0x18] sm:$0xff]
        %v5558 = vld [vmem:[#allocation2 + $0x20] sm:$0xff]
        %v5559 = vld [vmem:[#allocation2 + $0x28] sm:$0xff]
        %v5560 = vld [vmem:[#allocation2 + $0x30] sm:$0xff]
        %v5561 = vld [vmem:[#allocation2 + $0x38] sm:$0xff]
        %v5562 = vld [vmem:[#allocation2 + $0x40] sm:$0xff]
        %v5563 = vld [vmem:[#allocation2 + $0x48] sm:$0xff]
        %v5564 = vld [vmem:[#allocation2 + $0x50] sm:$0xff]
        %v5565 = vld [vmem:[#allocation2 + $0x58] sm:$0xff]
        %v5566 = vld [vmem:[#allocation2 + $0x60] sm:$0xff]
        %v5567 = vld [vmem:[#allocation2 + $0x68] sm:$0xff]
        %v5568 = vld [vmem:[#allocation2 + $0x70] sm:$0xff]
        %v5569 = vld [vmem:[#allocation2 + $0x78] sm:$0xff]
        %v5570 = vld [vmem:[#allocation2 + $0x80] sm:$0xff]
        %v5571 = vld [vmem:[#allocation2 + $0x88] sm:$0xff]
        %v5572 = vld [vmem:[#allocation2 + $0x90] sm:$0xff]
        %v5573 = vld [vmem:[#allocation2 + $0x98] sm:$0xff]
        %v5574 = vld [vmem:[#allocation2 + $0xa0] sm:$0xff]
        %v5575 = vld [vmem:[#allocation2 + $0xa8] sm:$0xff]
        %v5576 = vld [vmem:[#allocation2 + $0xb0] sm:$0xff]
        %v5577 = vld [vmem:[#allocation2 + $0xb8] sm:$0xff]
        %v5578 = vld [vmem:[#allocation2 + $0xc0] sm:$0xff]
        %v5579 = vld [vmem:[#allocation2 + $0xc8] sm:$0xff]
        %v5580 = vld [vmem:[#allocation2 + $0xd0] sm:$0xff]
        %v5581 = vld [vmem:[#allocation2 + $0xd8] sm:$0xff]
        %v5582 = vld [vmem:[#allocation2 + $0xe0] sm:$0xff]
        %v5583 = vld [vmem:[#allocation2 + $0xe8] sm:$0xff]
        %v5584 = vld [vmem:[#allocation2 + $0xf0] sm:$0xff]
        %v5585 = vld [vmem:[#allocation2 + $0xf8] sm:$0xff]
        %v5586 = vld [vmem:[#allocation2 + $0x100] sm:$0xff]
        %v5587 = vld [vmem:[#allocation2 + $0x108] sm:$0xff]
        %v5588 = vld [vmem:[#allocation2 + $0x110] sm:$0xff]
        %v5589 = vld [vmem:[#allocation2 + $0x118] sm:$0xff]
        %v5590 = vld [vmem:[#allocation2 + $0x120] sm:$0xff]
        %v5591 = vld [vmem:[#allocation2 + $0x128] sm:$0xff]
        %v5592 = vld [vmem:[#allocation2 + $0x130] sm:$0xff]
        %v5593 = vld [vmem:[#allocation2 + $0x138] sm:$0xff]
        %v5594 = vld [vmem:[#allocation2 + $0x140] sm:$0xff]
        %v5595 = vld [vmem:[#allocation2 + $0x148] sm:$0xff]
        %v5596 = vld [vmem:[#allocation2 + $0x150] sm:$0xff]
        %v5597 = vld [vmem:[#allocation2 + $0x158] sm:$0xff]
        %v5598 = vld [vmem:[#allocation2 + $0x160] sm:$0xff]
        %v5599 = vld [vmem:[#allocation2 + $0x168] sm:$0xff]
        %v5600 = vld [vmem:[#allocation2 + $0x170] sm:$0xff]
        %v5601 = vld [vmem:[#allocation2 + $0x178] sm:$0xff]
        %v5602 = vld [vmem:[#allocation2 + $0x180] sm:$0xff]
        %v5603 = vld [vmem:[#allocation2 + $0x188] sm:$0xff]
        %v5604 = vld [vmem:[#allocation2 + $0x190] sm:$0xff]
        %v5605 = vld [vmem:[#allocation2 + $0x198] sm:$0xff]
        %v5606 = vld [vmem:[#allocation2 + $0x1a0] sm:$0xff]
        %v5607 = vld [vmem:[#allocation2 + $0x1a8] sm:$0xff]
        %v5608 = vld [vmem:[#allocation2 + $0x1b0] sm:$0xff]
        %v5609 = vld [vmem:[#allocation2 + $0x1b8] sm:$0xff]
        %v5610 = vld [vmem:[#allocation2 + $0x1c0] sm:$0xff]
        %v5611 = vld [vmem:[#allocation2 + $0x1c8] sm:$0xff]
        %v5612 = vld [vmem:[#allocation2 + $0x1d0] sm:$0xff]
        %v5613 = vld [vmem:[#allocation2 + $0x1d8] sm:$0xff]
        %v5614 = vld [vmem:[#allocation2 + $0x1e0] sm:$0xff]
        %v5615 = vld [vmem:[#allocation2 + $0x1e8] sm:$0xff]
        %v5616 = vld [vmem:[#allocation2 + $0x1f0] sm:$0xff]
        %v5617 = vld [vmem:[#allocation2 + $0x1f8] sm:$0xff]
        %v5618 = vld [vmem:[#allocation2 + $0x200] sm:$0xff]
        %v5619 = vld [vmem:[#allocation2 + $0x208] sm:$0xff]
        %v5620 = vld [vmem:[#allocation2 + $0x210] sm:$0xff]
        %v5621 = vld [vmem:[#allocation2 + $0x218] sm:$0xff]
        %v5622 = vld [vmem:[#allocation2 + $0x220] sm:$0xff]
        %v5623 = vld [vmem:[#allocation2 + $0x228] sm:$0xff]
        %v5624 = vld [vmem:[#allocation2 + $0x230] sm:$0xff]
        %v5625 = vld [vmem:[#allocation2 + $0x238] sm:$0xff]
        %v5626 = vld [vmem:[#allocation2 + $0x240] sm:$0xff]
        %v5627 = vld [vmem:[#allocation2 + $0x248] sm:$0xff]
        %v5628 = vld [vmem:[#allocation2 + $0x250] sm:$0xff]
        %v5629 = vld [vmem:[#allocation2 + $0x258] sm:$0xff]
        %v5630 = vld [vmem:[#allocation2 + $0x260] sm:$0xff]
        %v5631 = vld [vmem:[#allocation2 + $0x268] sm:$0xff]
        %v5632 = vld [vmem:[#allocation2 + $0x270] sm:$0xff]
        %v5633 = vld [vmem:[#allocation2 + $0x278] sm:$0xff]
        %v5634 = vld [vmem:[#allocation2 + $0x280] sm:$0xff]
        %v5635 = vld [vmem:[#allocation2 + $0x288] sm:$0xff]
        %v5636 = vld [vmem:[#allocation2 + $0x290] sm:$0xff]
        %v5637 = vld [vmem:[#allocation2 + $0x298] sm:$0xff]
        %v5638 = vld [vmem:[#allocation2 + $0x2a0] sm:$0xff]
        %v5639 = vld [vmem:[#allocation2 + $0x2a8] sm:$0xff]
        %v5640 = vld [vmem:[#allocation2 + $0x2b0] sm:$0xff]
        %v5641 = vld [vmem:[#allocation2 + $0x2b8] sm:$0xff]
        %v5642 = vld [vmem:[#allocation2 + $0x2c0] sm:$0xff]
        %v5643 = vld [vmem:[#allocation2 + $0x2c8] sm:$0xff]
        %v5644 = vld [vmem:[#allocation2 + $0x2d0] sm:$0xff]
        %v5645 = vld [vmem:[#allocation2 + $0x2d8] sm:$0xff]
        %v5646 = vld [vmem:[#allocation2 + $0x2e0] sm:$0xff]
        %v5647 = vld [vmem:[#allocation2 + $0x2e8] sm:$0xff]
        %v5648 = vld [vmem:[#allocation2 + $0x2f0] sm:$0xff]
        %v5649 = vld [vmem:[#allocation2 + $0x2f8] sm:$0xff]
        %v5650 = vld [vmem:[#allocation2 + $0x300] sm:$0xff]
        %v5651 = vld [vmem:[#allocation2 + $0x308] sm:$0xff]
        %v5652 = vld [vmem:[#allocation2 + $0x310] sm:$0xff]
        %v5653 = vld [vmem:[#allocation2 + $0x318] sm:$0xff]
        %v5654 = vld [vmem:[#allocation2 + $0x320] sm:$0xff]
        %v5655 = vld [vmem:[#allocation2 + $0x328] sm:$0xff]
        %v5656 = vld [vmem:[#allocation2 + $0x330] sm:$0xff]
        %v5657 = vld [vmem:[#allocation2 + $0x338] sm:$0xff]
        %v5658 = vld [vmem:[#allocation2 + $0x340] sm:$0xff]
        %v5659 = vld [vmem:[#allocation2 + $0x348] sm:$0xff]
        %v5660 = vld [vmem:[#allocation2 + $0x350] sm:$0xff]
        %v5661 = vld [vmem:[#allocation2 + $0x358] sm:$0xff]
        %v5662 = vld [vmem:[#allocation2 + $0x360] sm:$0xff]
        %v5663 = vld [vmem:[#allocation2 + $0x368] sm:$0xff]
        %v5664 = vld [vmem:[#allocation2 + $0x370] sm:$0xff]
        %v5665 = vld [vmem:[#allocation2 + $0x378] sm:$0xff]
        %v5666 = vld [vmem:[#allocation2 + $0x380] sm:$0xff]
        %v5667 = vld [vmem:[#allocation2 + $0x388] sm:$0xff]
        %v5668 = vld [vmem:[#allocation2 + $0x390] sm:$0xff]
        %v5669 = vld [vmem:[#allocation2 + $0x398] sm:$0xff]
        %v5670 = vld [vmem:[#allocation2 + $0x3a0] sm:$0xff]
        %v5671 = vld [vmem:[#allocation2 + $0x3a8] sm:$0xff]
        %v5672 = vld [vmem:[#allocation2 + $0x3b0] sm:$0xff]
        %v5673 = vld [vmem:[#allocation2 + $0x3b8] sm:$0xff]
        %v5674 = vld [vmem:[#allocation2 + $0x3c0] sm:$0xff]
        %v5675 = vld [vmem:[#allocation2 + $0x3c8] sm:$0xff]
        %v5676 = vld [vmem:[#allocation2 + $0x3d0] sm:$0xff]
        %v5677 = vld [vmem:[#allocation2 + $0x3d8] sm:$0xff]
        %v5678 = vld [vmem:[#allocation2 + $0x3e0] sm:$0xff]
        %v5679 = vld [vmem:[#allocation2 + $0x3e8] sm:$0xff]
        %v5680 = vld [vmem:[#allocation2 + $0x3f0] sm:$0xff]
        %v5681 = vld [vmem:[#allocation2 + $0x3f8] sm:$0xff]
        %v5682 = vld [vmem:[#allocation2 + $0x400] sm:$0xff]
        %v5683 = vld [vmem:[#allocation2 + $0x408] sm:$0xff]
        %v5684 = vld [vmem:[#allocation2 + $0x410] sm:$0xff]
        %v5685 = vld [vmem:[#allocation2 + $0x418] sm:$0xff]
        %v5686 = vld [vmem:[#allocation2 + $0x420] sm:$0xff]
        %v5687 = vld [vmem:[#allocation2 + $0x428] sm:$0xff]
        %v5688 = vld [vmem:[#allocation2 + $0x430] sm:$0xff]
        %v5689 = vpack.c.bf16 %v5557, %v5554
        %v5690 = vpack.c.bf16 %v5558, %v5555
        %v5691 = vpack.c.bf16 %v5559, %v5556
        %v5692 = vpack.c.bf16 %v5563, %v5560
        %v5693 = vpack.c.bf16 %v5564, %v5561
        %v5694 = vpack.c.bf16 %v5565, %v5562
        %v5695 = vpack.c.bf16 %v5569, %v5566
        %v5696 = vpack.c.bf16 %v5570, %v5567
        %v5697 = vpack.c.bf16 %v5571, %v5568
        %v5698 = vpack.c.bf16 %v5575, %v5572
        %v5699 = vpack.c.bf16 %v5576, %v5573
        %v5700 = vpack.c.bf16 %v5577, %v5574
        %v5701 = vpack.c.bf16 %v5581, %v5578
        %v5702 = vpack.c.bf16 %v5582, %v5579
        %v5703 = vpack.c.bf16 %v5583, %v5580
        %v5704 = vpack.c.bf16 %v5587, %v5584
        %v5705 = vpack.c.bf16 %v5588, %v5585
        %v5706 = vpack.c.bf16 %v5589, %v5586
        %v5707 = vpack.c.bf16 %v5593, %v5590
        %v5708 = vpack.c.bf16 %v5594, %v5591
        %v5709 = vpack.c.bf16 %v5595, %v5592
        %v5710 = vpack.c.bf16 %v5599, %v5596
        %v5711 = vpack.c.bf16 %v5600, %v5597
        %v5712 = vpack.c.bf16 %v5601, %v5598
        %v5713 = vpack.c.bf16 %v5605, %v5602
        %v5714 = vpack.c.bf16 %v5606, %v5603
        %v5715 = vpack.c.bf16 %v5607, %v5604
        %v5716 = vpack.c.bf16 %v5611, %v5608
        %v5717 = vpack.c.bf16 %v5612, %v5609
        %v5718 = vpack.c.bf16 %v5613, %v5610
        %v5719 = vpack.c.bf16 %v5617, %v5614
        %v5720 = vpack.c.bf16 %v5618, %v5615
        %v5721 = vpack.c.bf16 %v5619, %v5616
        %v5722 = vpack.c.bf16 %v5623, %v5620
        %v5723 = vpack.c.bf16 %v5624, %v5621
        %v5724 = vpack.c.bf16 %v5625, %v5622
        %v5725 = vpack.c.bf16 %v5629, %v5626
        %v5726 = vpack.c.bf16 %v5630, %v5627
        %v5727 = vpack.c.bf16 %v5631, %v5628
        %v5728 = vpack.c.bf16 %v5635, %v5632
        %v5729 = vpack.c.bf16 %v5636, %v5633
        %v5730 = vpack.c.bf16 %v5637, %v5634
        %v5731 = vpack.c.bf16 %v5641, %v5638
        %v5732 = vpack.c.bf16 %v5642, %v5639
        %v5733 = vpack.c.bf16 %v5643, %v5640
        %v5734 = vpack.c.bf16 %v5647, %v5644
        %v5735 = vpack.c.bf16 %v5648, %v5645
        %v5736 = vpack.c.bf16 %v5649, %v5646
        %v5737 = vpack.c.bf16 %v5653, %v5650
        %v5738 = vpack.c.bf16 %v5654, %v5651
        %v5739 = vpack.c.bf16 %v5655, %v5652
        %v5740 = vpack.c.bf16 %v5659, %v5656
        %v5741 = vpack.c.bf16 %v5660, %v5657
        %v5742 = vpack.c.bf16 %v5661, %v5658
        %v5743 = vpack.c.bf16 %v5665, %v5662
        %v5744 = vpack.c.bf16 %v5666, %v5663
        %v5745 = vpack.c.bf16 %v5667, %v5664
        %v5746 = vpack.c.bf16 %v5671, %v5668
        %v5747 = vpack.c.bf16 %v5672, %v5669
        %v5748 = vpack.c.bf16 %v5673, %v5670
        %v5749 = vpack.c.bf16 %v5677, %v5674
        %v5750 = vpack.c.bf16 %v5678, %v5675
        %v5751 = vpack.c.bf16 %v5679, %v5676
        %v5752 = vpack.c.bf16 %v5683, %v5680
        %v5753 = vpack.c.bf16 %v5684, %v5681
        %v5754 = vpack.c.bf16 %v5685, %v5682
        %v5755 = vpack.c.bf16 %v5686, %v5686
        %v5756 = vpack.c.bf16 %v5687, %v5687
        %v5757 = vpack.c.bf16 %v5688, %v5688
        %s5758 = scalar_lea.vmem [#allocation3], 84
        %v5759 = vld [vmem:[%s5758] sm:$0x3f]
        %s5760 = scalar_lea.vmem %s3, 56
        %v5761 = vld [vmem:[%s5760] sm:$0xf]
        %5763 = vset.pattern.permute.xlu0 0
        %5764 = vperm.xlu0 %5763, %v5761
        %v5765 = vpop.permute.xlu0 %5764
        %v5768 = vcombine.high %v5759, %v5759
        %v5770 = vunpack.c.l.s4 1983009808
        %v5771 = vunpack.c.0.s8 %v5770
        %v5772 = vlaneseq
        %v5773 = vshrl.u32 %v5772, 7
        %v5774 = vsub.s32 %v5771, %v5773
        %v5775 = vrot.slane %v5759, %v5774
        %v5777 = vunpack.c.l.s4 1983009808
        %v5778 = vunpack.c.0.s8 %v5777
        %v5779 = vlaneseq
        %v5780 = vshrl.u32 %v5779, 7
        %v5781 = vsub.s32 %v5778, %v5780
        %v5782 = vrot.slane %v5768, %v5781
        %v5783 = vcombine.high %v5775, %v5775
        %v5787 = vsel %vm2063, %v5782, 0
        %v5790 = vsel %vm515, %v5755, 0
        %v5793 = vsel %vm515, %v5756, 0
        %v5796 = vsel %vm515, %v5757, 0
        %5798 = vmatprep.subr.bf16.mxu0 %v5690
        %5799 = vmatpush1.bf16.msra.mxu0 %v5689
        %5800 = vmatprep.subr.bf16.mxu0 %v5693
        %5801 = vmatpush1.bf16.msra.mxu0 %v5692
        %5802 = vmatprep.subr.bf16.mxu0 %v5696
        %5803 = vmatpush1.bf16.msra.mxu0 %v5695
        %5804 = vmatprep.subr.bf16.mxu0 %v5699
        %5805 = vmatpush1.bf16.msra.mxu0 %v5698
        %5806 = vmatprep.subr.bf16.mxu0 %v5702
        %5807 = vmatpush1.bf16.msra.mxu0 %v5701
        %5808 = vmatprep.subr.bf16.mxu0 %v5705
        %5809 = vmatpush1.bf16.msra.mxu0 %v5704
        %5810 = vmatprep.subr.bf16.mxu0 %v5708
        %5811 = vmatpush1.bf16.msra.mxu0 %v5707
        %5812 = vmatprep.subr.bf16.mxu0 %v5711
        %5813 = vmatpush1.bf16.msra.mxu0 %v5710
        %5814 = vmatprep.subr.bf16.mxu0 %v5714
        %5815 = vmatpush1.bf16.msra.mxu0 %v5713
        %5816 = vmatprep.subr.bf16.mxu0 %v5717
        %5817 = vmatpush1.bf16.msra.mxu0 %v5716
        %5818 = vmatprep.subr.bf16.mxu0 %v5720
        %5819 = vmatpush1.bf16.msra.mxu0 %v5719
        %5820 = vmatprep.subr.bf16.mxu0 %v5723
        %5821 = vmatpush1.bf16.msra.mxu0 %v5722
        %5822 = vmatprep.subr.bf16.mxu0 %v5726
        %5823 = vmatpush1.bf16.msra.mxu0 %v5725
        %5824 = vmatprep.subr.bf16.mxu0 %v5729
        %5825 = vmatpush1.bf16.msra.mxu0 %v5728
        %5826 = vmatprep.subr.bf16.mxu0 %v5732
        %5827 = vmatpush1.bf16.msra.mxu0 %v5731
        %5828 = vmatprep.subr.bf16.mxu0 %v5735
        %5829 = vmatpush1.bf16.msra.mxu0 %v5734
        %5830 = vmatprep.mubr.bf16.mxu0 %v5783
        %5831 = vmatmul.mubr.bf16.gmra.mrb[0].mxu0 %v5775
        %v5832 = vpop.f32.mrb[0].mxu0
        %v5833 = vadd.f32 %v5765, %v5832
        %v5834 = vpop.f32.mrb[0].mxu0
        %v5835 = vadd.f32 %v5765, %v5834
        %v5836 = vpop.f32.mrb[0].mxu0
        %v5837 = vpop.f32.mrb[0].mxu0
        %5838 = vdwg.mxu0
        %5839 = vmatprep.subr.bf16.mxu0 %v5738
        %5840 = vmatpush1.bf16.msra.mxu0 %v5737
        %5841 = vmatprep.subr.bf16.mxu0 %v5741
        %5842 = vmatpush1.bf16.msra.mxu0 %v5740
        %5843 = vmatprep.subr.bf16.mxu0 %v5744
        %5844 = vmatpush1.bf16.msra.mxu0 %v5743
        %5845 = vmatprep.subr.bf16.mxu0 %v5747
        %5846 = vmatpush1.bf16.msra.mxu0 %v5746
        %5847 = vmatprep.subr.bf16.mxu0 %v5750
        %5848 = vmatpush1.bf16.msra.mxu0 %v5749
        %5849 = vmatprep.subr.bf16.mxu0 %v5753
        %5850 = vmatpush1.bf16.msra.mxu0 %v5752
        %5851 = vmatprep.subr.bf16.mxu0 %v5793
        %5852 = vmatpush1.bf16.msra.mxu0 %v5790
        %5853 = vmatprep.subr.bf16.mxu0 0
        %5854 = vmatpush1.bf16.msra.mxu0 0
        %5855 = vmatprep.subr.bf16.mxu0 0
        %5856 = vmatpush1.bf16.msra.mxu0 0
        %5857 = vmatprep.subr.bf16.mxu0 0
        %5858 = vmatpush1.bf16.msra.mxu0 0
        %5859 = vmatprep.subr.bf16.mxu0 0
        %5860 = vmatpush1.bf16.msra.mxu0 0
        %5861 = vmatprep.subr.bf16.mxu0 0
        %5862 = vmatpush1.bf16.msra.mxu0 0
        %5863 = vmatprep.subr.bf16.mxu0 0
        %5864 = vmatpush1.bf16.msra.mxu0 0
        %5865 = vmatprep.subr.bf16.mxu0 0
        %5866 = vmatpush1.bf16.msra.mxu0 0
        %5867 = vmatprep.subr.bf16.mxu0 0
        %5868 = vmatpush1.bf16.msra.mxu0 0
        %5869 = vmatprep.subr.bf16.mxu0 0
        %5870 = vmatpush1.bf16.msra.mxu0 0
        %5871 = vmatprep.mubr.bf16.mxu0 0
        %5872 = vmatmul.mubr.bf16.gmra.mrb[0].mxu0 %v5787
        %v5873 = vpop.f32.mrb[0].mxu0
        %v5874 = vadd.f32 %v5833, %v5873
        %v5875 = vpop.f32.mrb[0].mxu0
        %v5876 = vadd.f32 %v5835, %v5875
        %v5877 = vpop.f32.mrb[0].mxu0
        %v5878 = vpop.f32.mrb[0].mxu0
        %5879 = vdwg.mxu0
        %5880 = vmatprep.subr.bf16.mxu0 0
        %5881 = vmatpush1.bf16.msra.mxu0 %v5691
        %5882 = vmatprep.subr.bf16.mxu0 0
        %5883 = vmatpush1.bf16.msra.mxu0 %v5694
        %5884 = vmatprep.subr.bf16.mxu0 0
        %5885 = vmatpush1.bf16.msra.mxu0 %v5697
        %5886 = vmatprep.subr.bf16.mxu0 0
        %5887 = vmatpush1.bf16.msra.mxu0 %v5700
        %5888 = vmatprep.subr.bf16.mxu0 0
        %5889 = vmatpush1.bf16.msra.mxu0 %v5703
        %5890 = vmatprep.subr.bf16.mxu0 0
        %5891 = vmatpush1.bf16.msra.mxu0 %v5706
        %5892 = vmatprep.subr.bf16.mxu0 0
        %5893 = vmatpush1.bf16.msra.mxu0 %v5709
        %5894 = vmatprep.subr.bf16.mxu0 0
        %5895 = vmatpush1.bf16.msra.mxu0 %v5712
        %5896 = vmatprep.subr.bf16.mxu0 0
        %5897 = vmatpush1.bf16.msra.mxu0 %v5715
        %5898 = vmatprep.subr.bf16.mxu0 0
        %5899 = vmatpush1.bf16.msra.mxu0 %v5718
        %5900 = vmatprep.subr.bf16.mxu0 0
        %5901 = vmatpush1.bf16.msra.mxu0 %v5721
        %5902 = vmatprep.subr.bf16.mxu0 0
        %5903 = vmatpush1.bf16.msra.mxu0 %v5724
        %5904 = vmatprep.subr.bf16.mxu0 0
        %5905 = vmatpush1.bf16.msra.mxu0 %v5727
        %5906 = vmatprep.subr.bf16.mxu0 0
        %5907 = vmatpush1.bf16.msra.mxu0 %v5730
        %5908 = vmatprep.subr.bf16.mxu0 0
        %5909 = vmatpush1.bf16.msra.mxu0 %v5733
        %5910 = vmatprep.subr.bf16.mxu0 0
        %5911 = vmatpush1.bf16.msra.mxu0 %v5736
        %5912 = vmatprep.mubr.bf16.mxu0 %v5783
        %5913 = vmatmul.mubr.bf16.gmra.mrb[0].mxu0 %v5775
        %v5914 = vpop.f32.mrb[0].mxu0
        %v5915 = vadd.f32 %v5765, %v5914
        %v5916 = vpop.f32.mrb[0].mxu0
        %v5917 = vpop.f32.mrb[0].mxu0
        %v5918 = vpop.f32.mrb[0].mxu0
        %5919 = vdwg.mxu0
        %5920 = vmatprep.subr.bf16.mxu0 0
        %5921 = vmatpush1.bf16.msra.mxu0 %v5739
        %5922 = vmatprep.subr.bf16.mxu0 0
        %5923 = vmatpush1.bf16.msra.mxu0 %v5742
        %5924 = vmatprep.subr.bf16.mxu0 0
        %5925 = vmatpush1.bf16.msra.mxu0 %v5745
        %5926 = vmatprep.subr.bf16.mxu0 0
        %5927 = vmatpush1.bf16.msra.mxu0 %v5748
        %5928 = vmatprep.subr.bf16.mxu0 0
        %5929 = vmatpush1.bf16.msra.mxu0 %v5751
        %5930 = vmatprep.subr.bf16.mxu0 0
        %5931 = vmatpush1.bf16.msra.mxu0 %v5754
        %5932 = vmatprep.subr.bf16.mxu0 0
        %5933 = vmatpush1.bf16.msra.mxu0 %v5796
        %5934 = vmatprep.subr.bf16.mxu0 0
        %5935 = vmatpush1.bf16.msra.mxu0 0
        %5936 = vmatprep.subr.bf16.mxu0 0
        %5937 = vmatpush1.bf16.msra.mxu0 0
        %5938 = vmatprep.subr.bf16.mxu0 0
        %5939 = vmatpush1.bf16.msra.mxu0 0
        %5940 = vmatprep.subr.bf16.mxu0 0
        %5941 = vmatpush1.bf16.msra.mxu0 0
        %5942 = vmatprep.subr.bf16.mxu0 0
        %5943 = vmatpush1.bf16.msra.mxu0 0
        %5944 = vmatprep.subr.bf16.mxu0 0
        %5945 = vmatpush1.bf16.msra.mxu0 0
        %5946 = vmatprep.subr.bf16.mxu0 0
        %5947 = vmatpush1.bf16.msra.mxu0 0
        %5948 = vmatprep.subr.bf16.mxu0 0
        %5949 = vmatpush1.bf16.msra.mxu0 0
        %5950 = vmatprep.subr.bf16.mxu0 0
        %5951 = vmatpush1.bf16.msra.mxu0 0
        %5952 = vmatprep.mubr.bf16.mxu0 0
        %5953 = vmatmul.mubr.bf16.gmra.mrb[0].mxu0 %v5787
        %v5954 = vpop.f32.mrb[0].mxu0
        %v5955 = vadd.f32 %v5915, %v5954
        %v5956 = vpop.f32.mrb[0].mxu0
        %v5957 = vpop.f32.mrb[0].mxu0
        %v5958 = vpop.f32.mrb[0].mxu0
        %5959 = vdwg.mxu0
        %v5960 = vmul.f32 %v5874, %v616
        %v5961 = vmul.f32 %v5876, %v620
        %v5962 = vmul.f32 %v5955, %v624
        %v5963 = vadd.f32 %v5960, %v4102
        %v5964 = vadd.f32 %v5961, %v4103
        %v5965 = vadd.f32 %v5962, %v4104
        %v5966 = vmul.f32 %v5963, 0.2
        %v5967 = vmul.f32 %v5964, 0.2
        %v5968 = vmul.f32 %v5965, 0.2
        %v5969 = vadd.f32 %v5966, %v348
        %v5970 = vadd.f32 %v5967, %v351
        %v5971 = vadd.f32 %v5968, %v349
        %v5974 = vcombine.low %v5969, %v5970
        %5976 = vst [vmem:[%s205] sm:$0xff] %v5974
        %5977 = vst [vmem:[%s205 + $0x8] sm:$0xf] %v5971
        %s5978 = sand.u32 %s116, 1
        %s5979 = scalar_lea.sflag [#allocation5], %s5978
        %s5980 = sand.u32 %s116, 1
        %s5981 = smul.addr %s5980, 12
        %s5982 = scalar_lea.vmem [#allocation6], %s5981
        // Predicated region
        $region41: #{tpu_custom_call.1} parent=35 // pred_check
          %p5983 = pneg %p126
        $region42: #{tpu_custom_call.1} parent=35 // pred_check_branch
          %5985 = sbr.rel (%p5983) target = $region44
        $region43: #{tpu_custom_call.1} parent=35 // pred_region
          %s5987 = ssub.s32 192, 192
          %5988 = vsyncadd %s5979, %s5987
          %s5989 = smul.addr %s19, 3
          %s5990 = smul.addr %s5989, 64
          %s5991 = scalar_lea.hbm %s4, %s5990
          %s5993 = sshll.u32 %s5982, 4
          %s5994 = int_to_ptr.vmem [resolvable:$true] %s5993
          %5996 = dma.vmem_to_hbm [thread:$0]  %s5994, 192, %s5991, %s5979
        $region44: #{tpu_custom_call.1} parent=35 // pred_fallthru
          _
      $region36: #{tpu_custom_call.1} parent=5 // pred_fallthru
        _
      %p5997 = scmp.le.s32.totalorder 2, %s14
      // Predicated region
      $region45: #{tpu_custom_call.1} parent=5 // pred_check
        %p5998 = pneg %p5997
      $region46: #{tpu_custom_call.1} parent=5 // pred_check_branch
        %6000 = sbr.rel (%p5998) target = $region48
      $region47: #{tpu_custom_call.1} parent=5 // pred_region
        %s6001 = ssub.s32 %s14, 2
        // Predicated region
        $region49: #{tpu_custom_call.1} parent=47 // pred_check
          %p6002 = pneg %p132
        $region50: #{tpu_custom_call.1} parent=47 // pred_check_branch
          %6004 = sbr.rel (%p6002) target = $region52
        $region51: #{tpu_custom_call.1} parent=47 // pred_region
          %s6005 = sand.u32 %s117, 1
          %s6006 = scalar_lea.sflag [#allocation5], %s6005
          %s6007 = sand.u32 %s117, 1
          %s6008 = smul.addr %s6007, 12
          %s6009 = scalar_lea.vmem [#allocation6], %s6008
          %6010 = dma.done %s6006, 192
        $region52: #{tpu_custom_call.1} parent=47 // pred_fallthru
          _
      $region48: #{tpu_custom_call.1} parent=5 // pred_fallthru
        _
    $region6: #{tpu_custom_call.1} parent=1 // loop_footer
      %s18 = sadd.s32 1, %s14
    $region7: #{tpu_custom_call.1} parent=1 // loop_footer_branch
      %13 = sbr.rel target = $region3
    $region8: #{tpu_custom_call.1} parent=1 // loop_exit
      _
    %6011 = vsyncpa [#allocation4], 1
    %s6012 = scalar_lea.sflag [#allocation4], 1
    %6013 = vsyncpa %s6012, 1
    %6014 = vsyncpa [#allocation5], 1
    %s6015 = scalar_lea.sflag [#allocation5], 1
    %6016 = vsyncpa %s6015, 1

</llo_original>
